<compile_context>
chip_gen: v7x
topology: tpu7x:2x2x1
jax: 0.10.0
libtpu: 0.0.40
codegen_flags: <defaults>
</compile_context>

<pallas_src>
import functools

import jax
import jax.numpy as jnp
from jax.experimental import pallas as pl
from jax.experimental.pallas import tpu as pltpu

_LANES = 128
_SUBLANES = 8


def _round_up(x, m):
    return (x + m - 1) // m * m


def linear_kernel(x_ref, w_ref, b_ref, o_ref):
    # (Bp, Kp) @ (Kp, Np) on the MXU with f32 accumulation.
    # x may arrive as f32 (no-pad fast path) or bf16 (padded path); the cast
    # below is a cheap VPU op in the first case and a no-op in the second.
    x = x_ref[...].astype(jnp.bfloat16)
    acc = jnp.dot(x, w_ref[...], preferred_element_type=jnp.float32)
    o_ref[...] = (acc + b_ref[...]).astype(o_ref.dtype)


def prepare_params(w, b):
    """One-time conversion of PyTorch-layout nn.Linear params.

    w: (emb_dim, in_dim) -> w_t: (in_dim_pad, emb_pad) bf16, pre-transposed and
    zero-padded (contraction dim 128-aligned, lane-dense output).
    b: (emb_dim,) -> b2: (1, emb_pad) f32.
    Done at parameter-load time, NOT per forward call, so no transpose or pad
    is materialized in front of every kernel invocation.
    """
    emb_dim, in_dim = w.shape
    kp = _round_up(in_dim, _LANES)
    np_ = _round_up(emb_dim, _LANES)
    w_t = (
        jnp.zeros((kp, np_), jnp.bfloat16)
        .at[:in_dim, :emb_dim]
        .set(w.T.astype(jnp.bfloat16))
    )
    b2 = jnp.zeros((1, np_), jnp.float32).at[0, :emb_dim].set(b.astype(jnp.float32))
    return w_t, b2


def speaker_encoder_forward(x, w_t, b2, *, emb_dim):
    """x: (B, in_dim) f32; w_t/b2 from prepare_params. Returns (B, emb_dim) f32."""
    B, K = x.shape
    Kp, Np = w_t.shape
    assert K <= Kp, "x feature dim larger than prepared weight"

    Bp = _round_up(max(B, _SUBLANES), _SUBLANES)
    if (Bp, Kp) != (B, K):
        # Padding needed: fuse the bf16 cast into the single pad op.
        x_in = jnp.zeros((Bp, Kp), jnp.bfloat16).at[:B, :K].set(
            x.astype(jnp.bfloat16))
        x_bytes = Bp * Kp * 2
    else:
        # Aligned fast path: hand f32 straight to the kernel, cast in VMEM.
        x_in = x
        x_bytes = Bp * Kp * 4

    # Everything (x, w, b, out) lives in VMEM as single full-array blocks.
    vmem_bytes = x_bytes + Kp * Np * 2 + Np * 4 + Bp * Np * 4
    assert vmem_bytes < 16 * 1024 * 1024, "single-step path requires VMEM fit"
    # TODO(synk): for in_dim/batch far beyond VMEM, add a grid with a
    # 'parallel' batch axis (v7x: 2 TensorCores) and an 'arbitrary' K axis.

    cost = pl.CostEstimate(
        flops=2 * Bp * Kp * Np,
        transcendentals=0,
        bytes_accessed=vmem_bytes,
    )

    out = pl.pallas_call(
        linear_kernel,
        out_shape=jax.ShapeDtypeStruct((Bp, Np), jnp.float32),
        in_specs=[
            pl.BlockSpec(memory_space=pltpu.MemorySpace.VMEM),  # x  (Bp, Kp)
            pl.BlockSpec(memory_space=pltpu.MemorySpace.VMEM),  # w  (Kp, Np)
            pl.BlockSpec(memory_space=pltpu.MemorySpace.VMEM),  # b  (1, Np)
        ],
        out_specs=pl.BlockSpec(memory_space=pltpu.MemorySpace.VMEM),
        cost_estimate=cost,
    )(x_in, w_t, b2)

    return out[:B, :emb_dim]


if __name__ == "__main__":
    # Module defaults: Linear(in_dim=16000, emb_dim=64); small batch.
    B, in_dim, emb_dim = 8, 16000, 64

    key = jax.random.PRNGKey(0)
    kx, kw, kb = jax.random.split(key, 3)

    x = jax.random.normal(kx, (B, in_dim), dtype=jnp.float32)
    # PyTorch nn.Linear stores weight as (emb_dim, in_dim).
    w = jax.random.normal(kw, (emb_dim, in_dim), dtype=jnp.float32) * 0.02
    b = jax.random.normal(kb, (emb_dim,), dtype=jnp.float32) * 0.01

    w_t, b2 = prepare_params(w, b)  # one-time canonical layout

    fwd = jax.jit(functools.partial(speaker_encoder_forward, emb_dim=emb_dim))
    out = jax.block_until_ready(fwd(x, w_t, b2))
    assert out.shape == (B, emb_dim)

    # Reference 1: identical bf16-input / f32-accumulate math in plain JAX.
    ref_bf = (
        jnp.dot(
            x.astype(jnp.bfloat16),
            w.T.astype(jnp.bfloat16),
            preferred_element_type=jnp.float32,
        )
        + b[None, :]
    )
    assert jnp.allclose(out, ref_bf, atol=2e-3, rtol=2e-3)

    # Reference 2: full-precision nn.Linear semantics (looser tol: bf16 inputs).
    ref_f32 = x @ w.T + b[None, :]
    assert jnp.allclose(out, ref_f32, atol=1e-1, rtol=5e-2)

    print("KERNEL_OK")
</pallas_src>

<mosaic_0001>
module attributes {stable_mosaic.version = 11 : i64} {
  func.func @linear_kernel(%arg0: memref<8x16000xf32, #tpu.memory_space<vmem>>, %arg1: memref<16000x128xbf16, #tpu.memory_space<vmem>>, %arg2: memref<1x128xf32, #tpu.memory_space<vmem>>, %arg3: memref<8x128xf32, #tpu.memory_space<vmem>>) attributes {dimension_semantics = [], scalar_prefetch = 0 : i64, scratch_operands = 0 : i64, tpu.core_type = #tpu.core_type<tc>} {
    %c0 = arith.constant 0 : index
    %c0_0 = arith.constant 0 : index
    %0 = vector.load %arg0[%c0, %c0_0] : memref<8x16000xf32, #tpu.memory_space<vmem>>, vector<8x16000xf32>
    %1 = arith.truncf %0 : vector<8x16000xf32> to vector<8x16000xbf16>
    %c0_1 = arith.constant 0 : index
    %c0_2 = arith.constant 0 : index
    %2 = vector.load %arg1[%c0_1, %c0_2] : memref<16000x128xbf16, #tpu.memory_space<vmem>>, vector<16000x128xbf16>
    %cst = arith.constant dense<0.000000e+00> : vector<8x128xf32>
    %3 = tpu.matmul %1, %2, %cst {dimension_numbers = #tpu.dot_dimension_numbers<[1], [0], [0], [1], [0, 0, 1, 1], [], []>} : vector<8x16000xbf16>, vector<16000x128xbf16>, vector<8x128xf32> -> vector<8x128xf32>
    %c0_3 = arith.constant 0 : index
    %c0_4 = arith.constant 0 : index
    %4 = vector.load %arg2[%c0_3, %c0_4] : memref<1x128xf32, #tpu.memory_space<vmem>>, vector<1x128xf32>
    %5 = vector.broadcast %4 : vector<1x128xf32> to vector<8x128xf32>
    %6 = arith.addf %3, %5 : vector<8x128xf32>
    %c0_5 = arith.constant 0 : index
    %c0_6 = arith.constant 0 : index
    %7 = vector.load %arg3[%c0_5, %c0_6] : memref<8x128xf32, #tpu.memory_space<vmem>>, vector<8x128xf32>
    tpu.vector_store %arg3[%c0_5, %c0_6], %6 {strides = array<i32>} : memref<8x128xf32, #tpu.memory_space<vmem>>, vector<8x128xf32>,
    return
  }
}

</mosaic_0001>

<llo_original>
// kernel: speaker_encoder_forward.1
$region0: #{speaker_encoder_forward.1}
  #allocation0 [shape = 'u32[]', space=smem, size = 0x4, offset = 0x4, fixed_abs, tag = 'smem constant byte address 0x4 - core index']
  #allocation1 [shape = 'u32[144,128]{1,0:T(1,128)}', space=vmem, size = 0x12000, scoped, tag = 'internal scratch']
  %s0 = inlined_call_operand.hbm [shape: f32[8,16000], index: 0, kind: input, shape index: {}]
  %s1 = inlined_call_operand.hbm [shape: bf16[16000,128], index: 1, kind: input, shape index: {}]
  %s2 = inlined_call_operand.hbm [shape: f32[1,128], index: 2, kind: input, shape index: {}]
  %s3 = inlined_call_operand.hbm [shape: f32[8,128], index: 3, kind: output, shape index: {}]
  %s4 = sld [smem:[#allocation0]]
  $region34: #{speaker_encoder_forward.1} parent=0
    _
  %s6 = ssub.s32 1, %s4
  %s7 = scalar_select 0, %s6, %s4
  $region1: #{speaker_encoder_forward.1} parent=0
    #allocation2 [shape = 'u8[512000]{0}', space=vmem, size = 0x7d000, scoped, tag = 'input window, operand 0, single buffered']
    #allocation3 [shape = 's32[1]{0}', space=sflag, size = 0x4, scoped, tag = 'scoped memory for speaker_encoder_forward.1']
    #allocation4 [shape = 's32[1]{0}', space=sflag, size = 0x4, scoped, tag = 'scoped memory for speaker_encoder_forward.1']
    #allocation5 [shape = 'u8[4096000]{0}', space=vmem, size = 0x3e8000, scoped, tag = 'input window, operand 1, single buffered']
    #allocation6 [shape = 's32[1]{0}', space=sflag, size = 0x4, scoped, tag = 'scoped memory for speaker_encoder_forward.1']
    #allocation7 [shape = 'u8[512]{0}', space=vmem, size = 0x400, scoped, tag = 'input window, operand 2, single buffered']
    #allocation8 [shape = 'u8[4096]{0}', space=vmem, size = 0x1000, scoped, tag = 'output window, operand 0, single buffered']
    %8 = vsyncpa [#allocation3], 0
    %9 = vsyncpa [#allocation6], 0
    %10 = vsyncpa [#allocation4], 0
    // Predicated region
    $region2: #{speaker_encoder_forward.1} parent=1 // pred_check
      _
    $region3: #{speaker_encoder_forward.1} parent=1 // pred_check_branch
      %12 = sbr.rel (0) target = $region5
    $region4: #{speaker_encoder_forward.1} parent=1 // pred_region
      %s14 = ssub.s32 16000, 16000
      %15 = vsyncadd [#allocation3], %s14
      %s17 = sshll.u32 [#allocation2], 4
      %s18 = int_to_ptr.vmem [resolvable:$true] %s17
      %20 = dma.hbm_to_vmem [thread:$0]  %s0, 16000, %s18, [#allocation3]
    $region5: #{speaker_encoder_forward.1} parent=1 // pred_fallthru
      _
    // Predicated region
    $region6: #{speaker_encoder_forward.1} parent=1 // pred_check
      _
    $region7: #{speaker_encoder_forward.1} parent=1 // pred_check_branch
      %22 = sbr.rel (0) target = $region9
    $region8: #{speaker_encoder_forward.1} parent=1 // pred_region
      %s24 = ssub.s32 128000, 128000
      %25 = vsyncadd [#allocation6], %s24
      %s26 = sshll.u32 [#allocation5], 4
      %s27 = int_to_ptr.vmem [resolvable:$true] %s26
      %32 = dma.hbm_to_vmem [thread:$0]  %s1, 128000, %s27, [#allocation6], 64, 64, 4
    $region9: #{speaker_encoder_forward.1} parent=1 // pred_fallthru
      _
    // Predicated region
    $region10: #{speaker_encoder_forward.1} parent=1 // pred_check
      _
    $region11: #{speaker_encoder_forward.1} parent=1 // pred_check_branch
      %34 = sbr.rel (0) target = $region13
    $region12: #{speaker_encoder_forward.1} parent=1 // pred_region
      %s36 = ssub.s32 16, 16
      %37 = vsyncadd [#allocation6], %s36
      %s39 = sshll.u32 [#allocation7], 4
      %s40 = int_to_ptr.vmem [resolvable:$true] %s39
      %42 = dma.hbm_to_vmem [thread:$0]  %s2, 16, %s40, [#allocation6]
    $region13: #{speaker_encoder_forward.1} parent=1 // pred_fallthru
      _
    // Predicated region
    $region14: #{speaker_encoder_forward.1} parent=1 // pred_check
      _
    $region15: #{speaker_encoder_forward.1} parent=1 // pred_check_branch
      %44 = sbr.rel (0) target = $region17
    $region16: #{speaker_encoder_forward.1} parent=1 // pred_region
      %45 = dma.done [#allocation3], 16000
    $region17: #{speaker_encoder_forward.1} parent=1 // pred_fallthru
      _
    // Predicated region
    $region18: #{speaker_encoder_forward.1} parent=1 // pred_check
      _
    $region19: #{speaker_encoder_forward.1} parent=1 // pred_check_branch
      %47 = sbr.rel (0) target = $region21
    $region20: #{speaker_encoder_forward.1} parent=1 // pred_region
      %48 = dma.done [#allocation6], 128000
    $region21: #{speaker_encoder_forward.1} parent=1 // pred_fallthru
      _
    // Predicated region
    $region22: #{speaker_encoder_forward.1} parent=1 // pred_check
      _
    $region23: #{speaker_encoder_forward.1} parent=1 // pred_check_branch
      %50 = sbr.rel (0) target = $region25
    $region24: #{speaker_encoder_forward.1} parent=1 // pred_region
      %51 = dma.done [#allocation6], 16
    $region25: #{speaker_encoder_forward.1} parent=1 // pred_fallthru
      _
    %v53 = vld [vmem:[#allocation2] sm:$0xff]
    %v54 = vld [vmem:[#allocation2 + $0x8] sm:$0xff]
    %v55 = vld [vmem:[#allocation2 + $0x10] sm:$0xff]
    %v56 = vld [vmem:[#allocation2 + $0x18] sm:$0xff]
    %v57 = vld [vmem:[#allocation2 + $0x20] sm:$0xff]
    %v58 = vld [vmem:[#allocation2 + $0x28] sm:$0xff]
    %v59 = vld [vmem:[#allocation2 + $0x30] sm:$0xff]
    %v60 = vld [vmem:[#allocation2 + $0x38] sm:$0xff]
    %v61 = vld [vmem:[#allocation2 + $0x40] sm:$0xff]
    %v62 = vld [vmem:[#allocation2 + $0x48] sm:$0xff]
    %v63 = vld [vmem:[#allocation2 + $0x50] sm:$0xff]
    %v64 = vld [vmem:[#allocation2 + $0x58] sm:$0xff]
    %v65 = vld [vmem:[#allocation2 + $0x60] sm:$0xff]
    %v66 = vld [vmem:[#allocation2 + $0x68] sm:$0xff]
    %v67 = vld [vmem:[#allocation2 + $0x70] sm:$0xff]
    %v68 = vld [vmem:[#allocation2 + $0x78] sm:$0xff]
    %v69 = vld [vmem:[#allocation2 + $0x80] sm:$0xff]
    %v70 = vld [vmem:[#allocation2 + $0x88] sm:$0xff]
    %v71 = vld [vmem:[#allocation2 + $0x90] sm:$0xff]
    %v72 = vld [vmem:[#allocation2 + $0x98] sm:$0xff]
    %v73 = vld [vmem:[#allocation2 + $0xa0] sm:$0xff]
    %v74 = vld [vmem:[#allocation2 + $0xa8] sm:$0xff]
    %v75 = vld [vmem:[#allocation2 + $0xb0] sm:$0xff]
    %v76 = vld [vmem:[#allocation2 + $0xb8] sm:$0xff]
    %v77 = vld [vmem:[#allocation2 + $0xc0] sm:$0xff]
    %v78 = vld [vmem:[#allocation2 + $0xc8] sm:$0xff]
    %v79 = vld [vmem:[#allocation2 + $0xd0] sm:$0xff]
    %v80 = vld [vmem:[#allocation2 + $0xd8] sm:$0xff]
    %v81 = vld [vmem:[#allocation2 + $0xe0] sm:$0xff]
    %v82 = vld [vmem:[#allocation2 + $0xe8] sm:$0xff]
    %v83 = vld [vmem:[#allocation2 + $0xf0] sm:$0xff]
    %v84 = vld [vmem:[#allocation2 + $0xf8] sm:$0xff]
    %v85 = vld [vmem:[#allocation2 + $0x100] sm:$0xff]
    %v86 = vld [vmem:[#allocation2 + $0x108] sm:$0xff]
    %v87 = vld [vmem:[#allocation2 + $0x110] sm:$0xff]
    %v88 = vld [vmem:[#allocation2 + $0x118] sm:$0xff]
    %v89 = vld [vmem:[#allocation2 + $0x120] sm:$0xff]
    %v90 = vld [vmem:[#allocation2 + $0x128] sm:$0xff]
    %v91 = vld [vmem:[#allocation2 + $0x130] sm:$0xff]
    %v92 = vld [vmem:[#allocation2 + $0x138] sm:$0xff]
    %v93 = vld [vmem:[#allocation2 + $0x140] sm:$0xff]
    %v94 = vld [vmem:[#allocation2 + $0x148] sm:$0xff]
    %v95 = vld [vmem:[#allocation2 + $0x150] sm:$0xff]
    %v96 = vld [vmem:[#allocation2 + $0x158] sm:$0xff]
    %v97 = vld [vmem:[#allocation2 + $0x160] sm:$0xff]
    %v98 = vld [vmem:[#allocation2 + $0x168] sm:$0xff]
    %v99 = vld [vmem:[#allocation2 + $0x170] sm:$0xff]
    %v100 = vld [vmem:[#allocation2 + $0x178] sm:$0xff]
    %v101 = vld [vmem:[#allocation2 + $0x180] sm:$0xff]
    %v102 = vld [vmem:[#allocation2 + $0x188] sm:$0xff]
    %v103 = vld [vmem:[#allocation2 + $0x190] sm:$0xff]
    %v104 = vld [vmem:[#allocation2 + $0x198] sm:$0xff]
    %v105 = vld [vmem:[#allocation2 + $0x1a0] sm:$0xff]
    %v106 = vld [vmem:[#allocation2 + $0x1a8] sm:$0xff]
    %v107 = vld [vmem:[#allocation2 + $0x1b0] sm:$0xff]
    %v108 = vld [vmem:[#allocation2 + $0x1b8] sm:$0xff]
    %v109 = vld [vmem:[#allocation2 + $0x1c0] sm:$0xff]
    %v110 = vld [vmem:[#allocation2 + $0x1c8] sm:$0xff]
    %v111 = vld [vmem:[#allocation2 + $0x1d0] sm:$0xff]
    %v112 = vld [vmem:[#allocation2 + $0x1d8] sm:$0xff]
    %v113 = vld [vmem:[#allocation2 + $0x1e0] sm:$0xff]
    %v114 = vld [vmem:[#allocation2 + $0x1e8] sm:$0xff]
    %v115 = vld [vmem:[#allocation2 + $0x1f0] sm:$0xff]
    %v116 = vld [vmem:[#allocation2 + $0x1f8] sm:$0xff]
    %v117 = vld [vmem:[#allocation2 + $0x200] sm:$0xff]
    %v118 = vld [vmem:[#allocation2 + $0x208] sm:$0xff]
    %v119 = vld [vmem:[#allocation2 + $0x210] sm:$0xff]
    %v120 = vld [vmem:[#allocation2 + $0x218] sm:$0xff]
    %v121 = vld [vmem:[#allocation2 + $0x220] sm:$0xff]
    %v122 = vld [vmem:[#allocation2 + $0x228] sm:$0xff]
    %v123 = vld [vmem:[#allocation2 + $0x230] sm:$0xff]
    %v124 = vld [vmem:[#allocation2 + $0x238] sm:$0xff]
    %v125 = vld [vmem:[#allocation2 + $0x240] sm:$0xff]
    %v126 = vld [vmem:[#allocation2 + $0x248] sm:$0xff]
    %v127 = vld [vmem:[#allocation2 + $0x250] sm:$0xff]
    %v128 = vld [vmem:[#allocation2 + $0x258] sm:$0xff]
    %v129 = vld [vmem:[#allocation2 + $0x260] sm:$0xff]
    %v130 = vld [vmem:[#allocation2 + $0x268] sm:$0xff]
    %v131 = vld [vmem:[#allocation2 + $0x270] sm:$0xff]
    %v132 = vld [vmem:[#allocation2 + $0x278] sm:$0xff]
    %v133 = vld [vmem:[#allocation2 + $0x280] sm:$0xff]
    %v134 = vld [vmem:[#allocation2 + $0x288] sm:$0xff]
    %v135 = vld [vmem:[#allocation2 + $0x290] sm:$0xff]
    %v136 = vld [vmem:[#allocation2 + $0x298] sm:$0xff]
    %v137 = vld [vmem:[#allocation2 + $0x2a0] sm:$0xff]
    %v138 = vld [vmem:[#allocation2 + $0x2a8] sm:$0xff]
    %v139 = vld [vmem:[#allocation2 + $0x2b0] sm:$0xff]
    %v140 = vld [vmem:[#allocation2 + $0x2b8] sm:$0xff]
    %v141 = vld [vmem:[#allocation2 + $0x2c0] sm:$0xff]
    %v142 = vld [vmem:[#allocation2 + $0x2c8] sm:$0xff]
    %v143 = vld [vmem:[#allocation2 + $0x2d0] sm:$0xff]
    %v144 = vld [vmem:[#allocation2 + $0x2d8] sm:$0xff]
    %v145 = vld [vmem:[#allocation2 + $0x2e0] sm:$0xff]
    %v146 = vld [vmem:[#allocation2 + $0x2e8] sm:$0xff]
    %v147 = vld [vmem:[#allocation2 + $0x2f0] sm:$0xff]
    %v148 = vld [vmem:[#allocation2 + $0x2f8] sm:$0xff]
    %v149 = vld [vmem:[#allocation2 + $0x300] sm:$0xff]
    %v150 = vld [vmem:[#allocation2 + $0x308] sm:$0xff]
    %v151 = vld [vmem:[#allocation2 + $0x310] sm:$0xff]
    %v152 = vld [vmem:[#allocation2 + $0x318] sm:$0xff]
    %v153 = vld [vmem:[#allocation2 + $0x320] sm:$0xff]
    %v154 = vld [vmem:[#allocation2 + $0x328] sm:$0xff]
    %v155 = vld [vmem:[#allocation2 + $0x330] sm:$0xff]
    %v156 = vld [vmem:[#allocation2 + $0x338] sm:$0xff]
    %v157 = vld [vmem:[#allocation2 + $0x340] sm:$0xff]
    %v158 = vld [vmem:[#allocation2 + $0x348] sm:$0xff]
    %v159 = vld [vmem:[#allocation2 + $0x350] sm:$0xff]
    %v160 = vld [vmem:[#allocation2 + $0x358] sm:$0xff]
    %v161 = vld [vmem:[#allocation2 + $0x360] sm:$0xff]
    %v162 = vld [vmem:[#allocation2 + $0x368] sm:$0xff]
    %v163 = vld [vmem:[#allocation2 + $0x370] sm:$0xff]
    %v164 = vld [vmem:[#allocation2 + $0x378] sm:$0xff]
    %v165 = vld [vmem:[#allocation2 + $0x380] sm:$0xff]
    %v166 = vld [vmem:[#allocation2 + $0x388] sm:$0xff]
    %v167 = vld [vmem:[#allocation2 + $0x390] sm:$0xff]
    %v168 = vld [vmem:[#allocation2 + $0x398] sm:$0xff]
    %v169 = vld [vmem:[#allocation2 + $0x3a0] sm:$0xff]
    %v170 = vld [vmem:[#allocation2 + $0x3a8] sm:$0xff]
    %v171 = vld [vmem:[#allocation2 + $0x3b0] sm:$0xff]
    %v172 = vld [vmem:[#allocation2 + $0x3b8] sm:$0xff]
    %v173 = vld [vmem:[#allocation2 + $0x3c0] sm:$0xff]
    %v174 = vld [vmem:[#allocation2 + $0x3c8] sm:$0xff]
    %v175 = vld [vmem:[#allocation2 + $0x3d0] sm:$0xff]
    %v176 = vld [vmem:[#allocation2 + $0x3d8] sm:$0xff]
    %v177 = vld [vmem:[#allocation2 + $0x3e0] sm:$0xff]
    %v178 = vpack.c.bf16 %v53, %v53
    %v179 = vpack.c.bf16 %v54, %v54
    %v180 = vpack.c.bf16 %v55, %v55
    %v181 = vpack.c.bf16 %v56, %v56
    %v182 = vpack.c.bf16 %v57, %v57
    %v183 = vpack.c.bf16 %v58, %v58
    %v184 = vpack.c.bf16 %v59, %v59
    %v185 = vpack.c.bf16 %v60, %v60
    %v186 = vpack.c.bf16 %v61, %v61
    %v187 = vpack.c.bf16 %v62, %v62
    %v188 = vpack.c.bf16 %v63, %v63
    %v189 = vpack.c.bf16 %v64, %v64
    %v190 = vpack.c.bf16 %v65, %v65
    %v191 = vpack.c.bf16 %v66, %v66
    %v192 = vpack.c.bf16 %v67, %v67
    %v193 = vpack.c.bf16 %v68, %v68
    %v194 = vpack.c.bf16 %v69, %v69
    %v195 = vpack.c.bf16 %v70, %v70
    %v196 = vpack.c.bf16 %v71, %v71
    %v197 = vpack.c.bf16 %v72, %v72
    %v198 = vpack.c.bf16 %v73, %v73
    %v199 = vpack.c.bf16 %v74, %v74
    %v200 = vpack.c.bf16 %v75, %v75
    %v201 = vpack.c.bf16 %v76, %v76
    %v202 = vpack.c.bf16 %v77, %v77
    %v203 = vpack.c.bf16 %v78, %v78
    %v204 = vpack.c.bf16 %v79, %v79
    %v205 = vpack.c.bf16 %v80, %v80
    %v206 = vpack.c.bf16 %v81, %v81
    %v207 = vpack.c.bf16 %v82, %v82
    %v208 = vpack.c.bf16 %v83, %v83
    %v209 = vpack.c.bf16 %v84, %v84
    %v210 = vpack.c.bf16 %v85, %v85
    %v211 = vpack.c.bf16 %v86, %v86
    %v212 = vpack.c.bf16 %v87, %v87
    %v213 = vpack.c.bf16 %v88, %v88
    %v214 = vpack.c.bf16 %v89, %v89
    %v215 = vpack.c.bf16 %v90, %v90
    %v216 = vpack.c.bf16 %v91, %v91
    %v217 = vpack.c.bf16 %v92, %v92
    %v218 = vpack.c.bf16 %v93, %v93
    %v219 = vpack.c.bf16 %v94, %v94
    %v220 = vpack.c.bf16 %v95, %v95
    %v221 = vpack.c.bf16 %v96, %v96
    %v222 = vpack.c.bf16 %v97, %v97
    %v223 = vpack.c.bf16 %v98, %v98
    %v224 = vpack.c.bf16 %v99, %v99
    %v225 = vpack.c.bf16 %v100, %v100
    %v226 = vpack.c.bf16 %v101, %v101
    %v227 = vpack.c.bf16 %v102, %v102
    %v228 = vpack.c.bf16 %v103, %v103
    %v229 = vpack.c.bf16 %v104, %v104
    %v230 = vpack.c.bf16 %v105, %v105
    %v231 = vpack.c.bf16 %v106, %v106
    %v232 = vpack.c.bf16 %v107, %v107
    %v233 = vpack.c.bf16 %v108, %v108
    %v234 = vpack.c.bf16 %v109, %v109
    %v235 = vpack.c.bf16 %v110, %v110
    %v236 = vpack.c.bf16 %v111, %v111
    %v237 = vpack.c.bf16 %v112, %v112
    %v238 = vpack.c.bf16 %v113, %v113
    %v239 = vpack.c.bf16 %v114, %v114
    %v240 = vpack.c.bf16 %v115, %v115
    %v241 = vpack.c.bf16 %v116, %v116
    %v242 = vpack.c.bf16 %v117, %v117
    %v243 = vpack.c.bf16 %v118, %v118
    %v244 = vpack.c.bf16 %v119, %v119
    %v245 = vpack.c.bf16 %v120, %v120
    %v246 = vpack.c.bf16 %v121, %v121
    %v247 = vpack.c.bf16 %v122, %v122
    %v248 = vpack.c.bf16 %v123, %v123
    %v249 = vpack.c.bf16 %v124, %v124
    %v250 = vpack.c.bf16 %v125, %v125
    %v251 = vpack.c.bf16 %v126, %v126
    %v252 = vpack.c.bf16 %v127, %v127
    %v253 = vpack.c.bf16 %v128, %v128
    %v254 = vpack.c.bf16 %v129, %v129
    %v255 = vpack.c.bf16 %v130, %v130
    %v256 = vpack.c.bf16 %v131, %v131
    %v257 = vpack.c.bf16 %v132, %v132
    %v258 = vpack.c.bf16 %v133, %v133
    %v259 = vpack.c.bf16 %v134, %v134
    %v260 = vpack.c.bf16 %v135, %v135
    %v261 = vpack.c.bf16 %v136, %v136
    %v262 = vpack.c.bf16 %v137, %v137
    %v263 = vpack.c.bf16 %v138, %v138
    %v264 = vpack.c.bf16 %v139, %v139
    %v265 = vpack.c.bf16 %v140, %v140
    %v266 = vpack.c.bf16 %v141, %v141
    %v267 = vpack.c.bf16 %v142, %v142
    %v268 = vpack.c.bf16 %v143, %v143
    %v269 = vpack.c.bf16 %v144, %v144
    %v270 = vpack.c.bf16 %v145, %v145
    %v271 = vpack.c.bf16 %v146, %v146
    %v272 = vpack.c.bf16 %v147, %v147
    %v273 = vpack.c.bf16 %v148, %v148
    %v274 = vpack.c.bf16 %v149, %v149
    %v275 = vpack.c.bf16 %v150, %v150
    %v276 = vpack.c.bf16 %v151, %v151
    %v277 = vpack.c.bf16 %v152, %v152
    %v278 = vpack.c.bf16 %v153, %v153
    %v279 = vpack.c.bf16 %v154, %v154
    %v280 = vpack.c.bf16 %v155, %v155
    %v281 = vpack.c.bf16 %v156, %v156
    %v282 = vpack.c.bf16 %v157, %v157
    %v283 = vpack.c.bf16 %v158, %v158
    %v284 = vpack.c.bf16 %v159, %v159
    %v285 = vpack.c.bf16 %v160, %v160
    %v286 = vpack.c.bf16 %v161, %v161
    %v287 = vpack.c.bf16 %v162, %v162
    %v288 = vpack.c.bf16 %v163, %v163
    %v289 = vpack.c.bf16 %v164, %v164
    %v290 = vpack.c.bf16 %v165, %v165
    %v291 = vpack.c.bf16 %v166, %v166
    %v292 = vpack.c.bf16 %v167, %v167
    %v293 = vpack.c.bf16 %v168, %v168
    %v294 = vpack.c.bf16 %v169, %v169
    %v295 = vpack.c.bf16 %v170, %v170
    %v296 = vpack.c.bf16 %v171, %v171
    %v297 = vpack.c.bf16 %v172, %v172
    %v298 = vpack.c.bf16 %v173, %v173
    %v299 = vpack.c.bf16 %v174, %v174
    %v300 = vpack.c.bf16 %v175, %v175
    %v301 = vpack.c.bf16 %v176, %v176
    %v302 = vpack.c.bf16 %v177, %v177
    %v303 = vld [vmem:[#allocation5] sm:$0xf]
    %v304 = vld [vmem:[#allocation5 + $0x4] sm:$0xf]
    %v305 = vld [vmem:[#allocation5 + $0x8] sm:$0xf]
    %v306 = vld [vmem:[#allocation5 + $0xc] sm:$0xf]
    %v307 = vld [vmem:[#allocation5 + $0x10] sm:$0xf]
    %v308 = vld [vmem:[#allocation5 + $0x14] sm:$0xf]
    %v309 = vld [vmem:[#allocation5 + $0x18] sm:$0xf]
    %v310 = vld [vmem:[#allocation5 + $0x1c] sm:$0xf]
    %v311 = vld [vmem:[#allocation5 + $0x20] sm:$0xf]
    %v312 = vld [vmem:[#allocation5 + $0x24] sm:$0xf]
    %v313 = vld [vmem:[#allocation5 + $0x28] sm:$0xf]
    %v314 = vld [vmem:[#allocation5 + $0x2c] sm:$0xf]
    %v315 = vld [vmem:[#allocation5 + $0x30] sm:$0xf]
    %v316 = vld [vmem:[#allocation5 + $0x34] sm:$0xf]
    %v317 = vld [vmem:[#allocation5 + $0x38] sm:$0xf]
    %v318 = vld [vmem:[#allocation5 + $0x3c] sm:$0xf]
    %v319 = vld [vmem:[#allocation5 + $0x40] sm:$0xf]
    %v320 = vld [vmem:[#allocation5 + $0x44] sm:$0xf]
    %v321 = vld [vmem:[#allocation5 + $0x48] sm:$0xf]
    %v322 = vld [vmem:[#allocation5 + $0x4c] sm:$0xf]
    %v323 = vld [vmem:[#allocation5 + $0x50] sm:$0xf]
    %v324 = vld [vmem:[#allocation5 + $0x54] sm:$0xf]
    %v325 = vld [vmem:[#allocation5 + $0x58] sm:$0xf]
    %v326 = vld [vmem:[#allocation5 + $0x5c] sm:$0xf]
    %v327 = vld [vmem:[#allocation5 + $0x60] sm:$0xf]
    %v328 = vld [vmem:[#allocation5 + $0x64] sm:$0xf]
    %v329 = vld [vmem:[#allocation5 + $0x68] sm:$0xf]
    %v330 = vld [vmem:[#allocation5 + $0x6c] sm:$0xf]
    %v331 = vld [vmem:[#allocation5 + $0x70] sm:$0xf]
    %v332 = vld [vmem:[#allocation5 + $0x74] sm:$0xf]
    %v333 = vld [vmem:[#allocation5 + $0x78] sm:$0xf]
    %v334 = vld [vmem:[#allocation5 + $0x7c] sm:$0xf]
    %v335 = vld [vmem:[#allocation5 + $0x80] sm:$0xf]
    %v336 = vld [vmem:[#allocation5 + $0x84] sm:$0xf]
    %v337 = vld [vmem:[#allocation5 + $0x88] sm:$0xf]
    %v338 = vld [vmem:[#allocation5 + $0x8c] sm:$0xf]
    %v339 = vld [vmem:[#allocation5 + $0x90] sm:$0xf]
    %v340 = vld [vmem:[#allocation5 + $0x94] sm:$0xf]
    %v341 = vld [vmem:[#allocation5 + $0x98] sm:$0xf]
    %v342 = vld [vmem:[#allocation5 + $0x9c] sm:$0xf]
    %v343 = vld [vmem:[#allocation5 + $0xa0] sm:$0xf]
    %v344 = vld [vmem:[#allocation5 + $0xa4] sm:$0xf]
    %v345 = vld [vmem:[#allocation5 + $0xa8] sm:$0xf]
    %v346 = vld [vmem:[#allocation5 + $0xac] sm:$0xf]
    %v347 = vld [vmem:[#allocation5 + $0xb0] sm:$0xf]
    %v348 = vld [vmem:[#allocation5 + $0xb4] sm:$0xf]
    %v349 = vld [vmem:[#allocation5 + $0xb8] sm:$0xf]
    %v350 = vld [vmem:[#allocation5 + $0xbc] sm:$0xf]
    %v351 = vld [vmem:[#allocation5 + $0xc0] sm:$0xf]
    %v352 = vld [vmem:[#allocation5 + $0xc4] sm:$0xf]
    %v353 = vld [vmem:[#allocation5 + $0xc8] sm:$0xf]
    %v354 = vld [vmem:[#allocation5 + $0xcc] sm:$0xf]
    %v355 = vld [vmem:[#allocation5 + $0xd0] sm:$0xf]
    %v356 = vld [vmem:[#allocation5 + $0xd4] sm:$0xf]
    %v357 = vld [vmem:[#allocation5 + $0xd8] sm:$0xf]
    %v358 = vld [vmem:[#allocation5 + $0xdc] sm:$0xf]
    %v359 = vld [vmem:[#allocation5 + $0xe0] sm:$0xf]
    %v360 = vld [vmem:[#allocation5 + $0xe4] sm:$0xf]
    %v361 = vld [vmem:[#allocation5 + $0xe8] sm:$0xf]
    %v362 = vld [vmem:[#allocation5 + $0xec] sm:$0xf]
    %v363 = vld [vmem:[#allocation5 + $0xf0] sm:$0xf]
    %v364 = vld [vmem:[#allocation5 + $0xf4] sm:$0xf]
    %v365 = vld [vmem:[#allocation5 + $0xf8] sm:$0xf]
    %v366 = vld [vmem:[#allocation5 + $0xfc] sm:$0xf]
    %v367 = vld [vmem:[#allocation5 + $0x100] sm:$0xf]
    %v368 = vld [vmem:[#allocation5 + $0x104] sm:$0xf]
    %v369 = vld [vmem:[#allocation5 + $0x108] sm:$0xf]
    %v370 = vld [vmem:[#allocation5 + $0x10c] sm:$0xf]
    %v371 = vld [vmem:[#allocation5 + $0x110] sm:$0xf]
    %v372 = vld [vmem:[#allocation5 + $0x114] sm:$0xf]
    %v373 = vld [vmem:[#allocation5 + $0x118] sm:$0xf]
    %v374 = vld [vmem:[#allocation5 + $0x11c] sm:$0xf]
    %v375 = vld [vmem:[#allocation5 + $0x120] sm:$0xf]
    %v376 = vld [vmem:[#allocation5 + $0x124] sm:$0xf]
    %v377 = vld [vmem:[#allocation5 + $0x128] sm:$0xf]
    %v378 = vld [vmem:[#allocation5 + $0x12c] sm:$0xf]
    %v379 = vld [vmem:[#allocation5 + $0x130] sm:$0xf]
    %v380 = vld [vmem:[#allocation5 + $0x134] sm:$0xf]
    %v381 = vld [vmem:[#allocation5 + $0x138] sm:$0xf]
    %v382 = vld [vmem:[#allocation5 + $0x13c] sm:$0xf]
    %v383 = vld [vmem:[#allocation5 + $0x140] sm:$0xf]
    %v384 = vld [vmem:[#allocation5 + $0x144] sm:$0xf]
    %v385 = vld [vmem:[#allocation5 + $0x148] sm:$0xf]
    %v386 = vld [vmem:[#allocation5 + $0x14c] sm:$0xf]
    %v387 = vld [vmem:[#allocation5 + $0x150] sm:$0xf]
    %v388 = vld [vmem:[#allocation5 + $0x154] sm:$0xf]
    %v389 = vld [vmem:[#allocation5 + $0x158] sm:$0xf]
    %v390 = vld [vmem:[#allocation5 + $0x15c] sm:$0xf]
    %v391 = vld [vmem:[#allocation5 + $0x160] sm:$0xf]
    %v392 = vld [vmem:[#allocation5 + $0x164] sm:$0xf]
    %v393 = vld [vmem:[#allocation5 + $0x168] sm:$0xf]
    %v394 = vld [vmem:[#allocation5 + $0x16c] sm:$0xf]
    %v395 = vld [vmem:[#allocation5 + $0x170] sm:$0xf]
    %v396 = vld [vmem:[#allocation5 + $0x174] sm:$0xf]
    %v397 = vld [vmem:[#allocation5 + $0x178] sm:$0xf]
    %v398 = vld [vmem:[#allocation5 + $0x17c] sm:$0xf]
    %v399 = vld [vmem:[#allocation5 + $0x180] sm:$0xf]
    %v400 = vld [vmem:[#allocation5 + $0x184] sm:$0xf]
    %v401 = vld [vmem:[#allocation5 + $0x188] sm:$0xf]
    %v402 = vld [vmem:[#allocation5 + $0x18c] sm:$0xf]
    %v403 = vld [vmem:[#allocation5 + $0x190] sm:$0xf]
    %v404 = vld [vmem:[#allocation5 + $0x194] sm:$0xf]
    %v405 = vld [vmem:[#allocation5 + $0x198] sm:$0xf]
    %v406 = vld [vmem:[#allocation5 + $0x19c] sm:$0xf]
    %v407 = vld [vmem:[#allocation5 + $0x1a0] sm:$0xf]
    %v408 = vld [vmem:[#allocation5 + $0x1a4] sm:$0xf]
    %v409 = vld [vmem:[#allocation5 + $0x1a8] sm:$0xf]
    %v410 = vld [vmem:[#allocation5 + $0x1ac] sm:$0xf]
    %v411 = vld [vmem:[#allocation5 + $0x1b0] sm:$0xf]
    %v412 = vld [vmem:[#allocation5 + $0x1b4] sm:$0xf]
    %v413 = vld [vmem:[#allocation5 + $0x1b8] sm:$0xf]
    %v414 = vld [vmem:[#allocation5 + $0x1bc] sm:$0xf]
    %v415 = vld [vmem:[#allocation5 + $0x1c0] sm:$0xf]
    %v416 = vld [vmem:[#allocation5 + $0x1c4] sm:$0xf]
    %v417 = vld [vmem:[#allocation5 + $0x1c8] sm:$0xf]
    %v418 = vld [vmem:[#allocation5 + $0x1cc] sm:$0xf]
    %v419 = vld [vmem:[#allocation5 + $0x1d0] sm:$0xf]
    %v420 = vld [vmem:[#allocation5 + $0x1d4] sm:$0xf]
    %v421 = vld [vmem:[#allocation5 + $0x1d8] sm:$0xf]
    %v422 = vld [vmem:[#allocation5 + $0x1dc] sm:$0xf]
    %v423 = vld [vmem:[#allocation5 + $0x1e0] sm:$0xf]
    %v424 = vld [vmem:[#allocation5 + $0x1e4] sm:$0xf]
    %v425 = vld [vmem:[#allocation5 + $0x1e8] sm:$0xf]
    %v426 = vld [vmem:[#allocation5 + $0x1ec] sm:$0xf]
    %v427 = vld [vmem:[#allocation5 + $0x1f0] sm:$0xf]
    %v428 = vld [vmem:[#allocation5 + $0x1f4] sm:$0xf]
    %v429 = vld [vmem:[#allocation5 + $0x1f8] sm:$0xf]
    %v430 = vld [vmem:[#allocation5 + $0x1fc] sm:$0xf]
    %v431 = vld [vmem:[#allocation5 + $0x200] sm:$0xf]
    %v432 = vld [vmem:[#allocation5 + $0x204] sm:$0xf]
    %v433 = vld [vmem:[#allocation5 + $0x208] sm:$0xf]
    %v434 = vld [vmem:[#allocation5 + $0x20c] sm:$0xf]
    %v435 = vld [vmem:[#allocation5 + $0x210] sm:$0xf]
    %v436 = vld [vmem:[#allocation5 + $0x214] sm:$0xf]
    %v437 = vld [vmem:[#allocation5 + $0x218] sm:$0xf]
    %v438 = vld [vmem:[#allocation5 + $0x21c] sm:$0xf]
    %v439 = vld [vmem:[#allocation5 + $0x220] sm:$0xf]
    %v440 = vld [vmem:[#allocation5 + $0x224] sm:$0xf]
    %v441 = vld [vmem:[#allocation5 + $0x228] sm:$0xf]
    %v442 = vld [vmem:[#allocation5 + $0x22c] sm:$0xf]
    %v443 = vld [vmem:[#allocation5 + $0x230] sm:$0xf]
    %v444 = vld [vmem:[#allocation5 + $0x234] sm:$0xf]
    %v445 = vld [vmem:[#allocation5 + $0x238] sm:$0xf]
    %v446 = vld [vmem:[#allocation5 + $0x23c] sm:$0xf]
    %v447 = vld [vmem:[#allocation5 + $0x240] sm:$0xf]
    %v448 = vld [vmem:[#allocation5 + $0x244] sm:$0xf]
    %v449 = vld [vmem:[#allocation5 + $0x248] sm:$0xf]
    %v450 = vld [vmem:[#allocation5 + $0x24c] sm:$0xf]
    %v451 = vld [vmem:[#allocation5 + $0x250] sm:$0xf]
    %v452 = vld [vmem:[#allocation5 + $0x254] sm:$0xf]
    %v453 = vld [vmem:[#allocation5 + $0x258] sm:$0xf]
    %v454 = vld [vmem:[#allocation5 + $0x25c] sm:$0xf]
    %v455 = vld [vmem:[#allocation5 + $0x260] sm:$0xf]
    %v456 = vld [vmem:[#allocation5 + $0x264] sm:$0xf]
    %v457 = vld [vmem:[#allocation5 + $0x268] sm:$0xf]
    %v458 = vld [vmem:[#allocation5 + $0x26c] sm:$0xf]
    %v459 = vld [vmem:[#allocation5 + $0x270] sm:$0xf]
    %v460 = vld [vmem:[#allocation5 + $0x274] sm:$0xf]
    %v461 = vld [vmem:[#allocation5 + $0x278] sm:$0xf]
    %v462 = vld [vmem:[#allocation5 + $0x27c] sm:$0xf]
    %v463 = vld [vmem:[#allocation5 + $0x280] sm:$0xf]
    %v464 = vld [vmem:[#allocation5 + $0x284] sm:$0xf]
    %v465 = vld [vmem:[#allocation5 + $0x288] sm:$0xf]
    %v466 = vld [vmem:[#allocation5 + $0x28c] sm:$0xf]
    %v467 = vld [vmem:[#allocation5 + $0x290] sm:$0xf]
    %v468 = vld [vmem:[#allocation5 + $0x294] sm:$0xf]
    %v469 = vld [vmem:[#allocation5 + $0x298] sm:$0xf]
    %v470 = vld [vmem:[#allocation5 + $0x29c] sm:$0xf]
    %v471 = vld [vmem:[#allocation5 + $0x2a0] sm:$0xf]
    %v472 = vld [vmem:[#allocation5 + $0x2a4] sm:$0xf]
    %v473 = vld [vmem:[#allocation5 + $0x2a8] sm:$0xf]
    %v474 = vld [vmem:[#allocation5 + $0x2ac] sm:$0xf]
    %v475 = vld [vmem:[#allocation5 + $0x2b0] sm:$0xf]
    %v476 = vld [vmem:[#allocation5 + $0x2b4] sm:$0xf]
    %v477 = vld [vmem:[#allocation5 + $0x2b8] sm:$0xf]
    %v478 = vld [vmem:[#allocation5 + $0x2bc] sm:$0xf]
    %v479 = vld [vmem:[#allocation5 + $0x2c0] sm:$0xf]
    %v480 = vld [vmem:[#allocation5 + $0x2c4] sm:$0xf]
    %v481 = vld [vmem:[#allocation5 + $0x2c8] sm:$0xf]
    %v482 = vld [vmem:[#allocation5 + $0x2cc] sm:$0xf]
    %v483 = vld [vmem:[#allocation5 + $0x2d0] sm:$0xf]
    %v484 = vld [vmem:[#allocation5 + $0x2d4] sm:$0xf]
    %v485 = vld [vmem:[#allocation5 + $0x2d8] sm:$0xf]
    %v486 = vld [vmem:[#allocation5 + $0x2dc] sm:$0xf]
    %v487 = vld [vmem:[#allocation5 + $0x2e0] sm:$0xf]
    %v488 = vld [vmem:[#allocation5 + $0x2e4] sm:$0xf]
    %v489 = vld [vmem:[#allocation5 + $0x2e8] sm:$0xf]
    %v490 = vld [vmem:[#allocation5 + $0x2ec] sm:$0xf]
    %v491 = vld [vmem:[#allocation5 + $0x2f0] sm:$0xf]
    %v492 = vld [vmem:[#allocation5 + $0x2f4] sm:$0xf]
    %v493 = vld [vmem:[#allocation5 + $0x2f8] sm:$0xf]
    %v494 = vld [vmem:[#allocation5 + $0x2fc] sm:$0xf]
    %v495 = vld [vmem:[#allocation5 + $0x300] sm:$0xf]
    %v496 = vld [vmem:[#allocation5 + $0x304] sm:$0xf]
    %v497 = vld [vmem:[#allocation5 + $0x308] sm:$0xf]
    %v498 = vld [vmem:[#allocation5 + $0x30c] sm:$0xf]
    %v499 = vld [vmem:[#allocation5 + $0x310] sm:$0xf]
    %v500 = vld [vmem:[#allocation5 + $0x314] sm:$0xf]
    %v501 = vld [vmem:[#allocation5 + $0x318] sm:$0xf]
    %v502 = vld [vmem:[#allocation5 + $0x31c] sm:$0xf]
    %v503 = vld [vmem:[#allocation5 + $0x320] sm:$0xf]
    %v504 = vld [vmem:[#allocation5 + $0x324] sm:$0xf]
    %v505 = vld [vmem:[#allocation5 + $0x328] sm:$0xf]
    %v506 = vld [vmem:[#allocation5 + $0x32c] sm:$0xf]
    %v507 = vld [vmem:[#allocation5 + $0x330] sm:$0xf]
    %v508 = vld [vmem:[#allocation5 + $0x334] sm:$0xf]
    %v509 = vld [vmem:[#allocation5 + $0x338] sm:$0xf]
    %v510 = vld [vmem:[#allocation5 + $0x33c] sm:$0xf]
    %v511 = vld [vmem:[#allocation5 + $0x340] sm:$0xf]
    %v512 = vld [vmem:[#allocation5 + $0x344] sm:$0xf]
    %v513 = vld [vmem:[#allocation5 + $0x348] sm:$0xf]
    %v514 = vld [vmem:[#allocation5 + $0x34c] sm:$0xf]
    %v515 = vld [vmem:[#allocation5 + $0x350] sm:$0xf]
    %v516 = vld [vmem:[#allocation5 + $0x354] sm:$0xf]
    %v517 = vld [vmem:[#allocation5 + $0x358] sm:$0xf]
    %v518 = vld [vmem:[#allocation5 + $0x35c] sm:$0xf]
    %v519 = vld [vmem:[#allocation5 + $0x360] sm:$0xf]
    %v520 = vld [vmem:[#allocation5 + $0x364] sm:$0xf]
    %v521 = vld [vmem:[#allocation5 + $0x368] sm:$0xf]
    %v522 = vld [vmem:[#allocation5 + $0x36c] sm:$0xf]
    %v523 = vld [vmem:[#allocation5 + $0x370] sm:$0xf]
    %v524 = vld [vmem:[#allocation5 + $0x374] sm:$0xf]
    %v525 = vld [vmem:[#allocation5 + $0x378] sm:$0xf]
    %v526 = vld [vmem:[#allocation5 + $0x37c] sm:$0xf]
    %v527 = vld [vmem:[#allocation5 + $0x380] sm:$0xf]
    %v528 = vld [vmem:[#allocation5 + $0x384] sm:$0xf]
    %v529 = vld [vmem:[#allocation5 + $0x388] sm:$0xf]
    %v530 = vld [vmem:[#allocation5 + $0x38c] sm:$0xf]
    %v531 = vld [vmem:[#allocation5 + $0x390] sm:$0xf]
    %v532 = vld [vmem:[#allocation5 + $0x394] sm:$0xf]
    %v533 = vld [vmem:[#allocation5 + $0x398] sm:$0xf]
    %v534 = vld [vmem:[#allocation5 + $0x39c] sm:$0xf]
    %v535 = vld [vmem:[#allocation5 + $0x3a0] sm:$0xf]
    %v536 = vld [vmem:[#allocation5 + $0x3a4] sm:$0xf]
    %v537 = vld [vmem:[#allocation5 + $0x3a8] sm:$0xf]
    %v538 = vld [vmem:[#allocation5 + $0x3ac] sm:$0xf]
    %v539 = vld [vmem:[#allocation5 + $0x3b0] sm:$0xf]
    %v540 = vld [vmem:[#allocation5 + $0x3b4] sm:$0xf]
    %v541 = vld [vmem:[#allocation5 + $0x3b8] sm:$0xf]
    %v542 = vld [vmem:[#allocation5 + $0x3bc] sm:$0xf]
    %v543 = vld [vmem:[#allocation5 + $0x3c0] sm:$0xf]
    %v544 = vld [vmem:[#allocation5 + $0x3c4] sm:$0xf]
    %v545 = vld [vmem:[#allocation5 + $0x3c8] sm:$0xf]
    %v546 = vld [vmem:[#allocation5 + $0x3cc] sm:$0xf]
    %v547 = vld [vmem:[#allocation5 + $0x3d0] sm:$0xf]
    %v548 = vld [vmem:[#allocation5 + $0x3d4] sm:$0xf]
    %v549 = vld [vmem:[#allocation5 + $0x3d8] sm:$0xf]
    %v550 = vld [vmem:[#allocation5 + $0x3dc] sm:$0xf]
    %v551 = vld [vmem:[#allocation5 + $0x3e0] sm:$0xf]
    %v552 = vld [vmem:[#allocation5 + $0x3e4] sm:$0xf]
    %v553 = vld [vmem:[#allocation5 + $0x3e8] sm:$0xf]
    %v554 = vld [vmem:[#allocation5 + $0x3ec] sm:$0xf]
    %v555 = vld [vmem:[#allocation5 + $0x3f0] sm:$0xf]
    %v556 = vld [vmem:[#allocation5 + $0x3f4] sm:$0xf]
    %v557 = vld [vmem:[#allocation5 + $0x3f8] sm:$0xf]
    %v558 = vld [vmem:[#allocation5 + $0x3fc] sm:$0xf]
    %v559 = vld [vmem:[#allocation5 + $0x400] sm:$0xf]
    %v560 = vld [vmem:[#allocation5 + $0x404] sm:$0xf]
    %v561 = vld [vmem:[#allocation5 + $0x408] sm:$0xf]
    %v562 = vld [vmem:[#allocation5 + $0x40c] sm:$0xf]
    %v563 = vld [vmem:[#allocation5 + $0x410] sm:$0xf]
    %v564 = vld [vmem:[#allocation5 + $0x414] sm:$0xf]
    %v565 = vld [vmem:[#allocation5 + $0x418] sm:$0xf]
    %v566 = vld [vmem:[#allocation5 + $0x41c] sm:$0xf]
    %v567 = vld [vmem:[#allocation5 + $0x420] sm:$0xf]
    %v568 = vld [vmem:[#allocation5 + $0x424] sm:$0xf]
    %v569 = vld [vmem:[#allocation5 + $0x428] sm:$0xf]
    %v570 = vld [vmem:[#allocation5 + $0x42c] sm:$0xf]
    %v571 = vld [vmem:[#allocation5 + $0x430] sm:$0xf]
    %v572 = vld [vmem:[#allocation5 + $0x434] sm:$0xf]
    %v573 = vld [vmem:[#allocation5 + $0x438] sm:$0xf]
    %v574 = vld [vmem:[#allocation5 + $0x43c] sm:$0xf]
    %v575 = vld [vmem:[#allocation5 + $0x440] sm:$0xf]
    %v576 = vld [vmem:[#allocation5 + $0x444] sm:$0xf]
    %v577 = vld [vmem:[#allocation5 + $0x448] sm:$0xf]
    %v578 = vld [vmem:[#allocation5 + $0x44c] sm:$0xf]
    %v579 = vld [vmem:[#allocation5 + $0x450] sm:$0xf]
    %v580 = vld [vmem:[#allocation5 + $0x454] sm:$0xf]
    %v581 = vld [vmem:[#allocation5 + $0x458] sm:$0xf]
    %v582 = vld [vmem:[#allocation5 + $0x45c] sm:$0xf]
    %v583 = vld [vmem:[#allocation5 + $0x460] sm:$0xf]
    %v584 = vld [vmem:[#allocation5 + $0x464] sm:$0xf]
    %v585 = vld [vmem:[#allocation5 + $0x468] sm:$0xf]
    %v586 = vld [vmem:[#allocation5 + $0x46c] sm:$0xf]
    %v587 = vld [vmem:[#allocation5 + $0x470] sm:$0xf]
    %v588 = vld [vmem:[#allocation5 + $0x474] sm:$0xf]
    %v589 = vld [vmem:[#allocation5 + $0x478] sm:$0xf]
    %v590 = vld [vmem:[#allocation5 + $0x47c] sm:$0xf]
    %v591 = vld [vmem:[#allocation5 + $0x480] sm:$0xf]
    %v592 = vld [vmem:[#allocation5 + $0x484] sm:$0xf]
    %v593 = vld [vmem:[#allocation5 + $0x488] sm:$0xf]
    %v594 = vld [vmem:[#allocation5 + $0x48c] sm:$0xf]
    %v595 = vld [vmem:[#allocation5 + $0x490] sm:$0xf]
    %v596 = vld [vmem:[#allocation5 + $0x494] sm:$0xf]
    %v597 = vld [vmem:[#allocation5 + $0x498] sm:$0xf]
    %v598 = vld [vmem:[#allocation5 + $0x49c] sm:$0xf]
    %v599 = vld [vmem:[#allocation5 + $0x4a0] sm:$0xf]
    %v600 = vld [vmem:[#allocation5 + $0x4a4] sm:$0xf]
    %v601 = vld [vmem:[#allocation5 + $0x4a8] sm:$0xf]
    %v602 = vld [vmem:[#allocation5 + $0x4ac] sm:$0xf]
    %v603 = vld [vmem:[#allocation5 + $0x4b0] sm:$0xf]
    %v604 = vld [vmem:[#allocation5 + $0x4b4] sm:$0xf]
    %v605 = vld [vmem:[#allocation5 + $0x4b8] sm:$0xf]
    %v606 = vld [vmem:[#allocation5 + $0x4bc] sm:$0xf]
    %v607 = vld [vmem:[#allocation5 + $0x4c0] sm:$0xf]
    %v608 = vld [vmem:[#allocation5 + $0x4c4] sm:$0xf]
    %v609 = vld [vmem:[#allocation5 + $0x4c8] sm:$0xf]
    %v610 = vld [vmem:[#allocation5 + $0x4cc] sm:$0xf]
    %v611 = vld [vmem:[#allocation5 + $0x4d0] sm:$0xf]
    %v612 = vld [vmem:[#allocation5 + $0x4d4] sm:$0xf]
    %v613 = vld [vmem:[#allocation5 + $0x4d8] sm:$0xf]
    %v614 = vld [vmem:[#allocation5 + $0x4dc] sm:$0xf]
    %v615 = vld [vmem:[#allocation5 + $0x4e0] sm:$0xf]
    %v616 = vld [vmem:[#allocation5 + $0x4e4] sm:$0xf]
    %v617 = vld [vmem:[#allocation5 + $0x4e8] sm:$0xf]
    %v618 = vld [vmem:[#allocation5 + $0x4ec] sm:$0xf]
    %v619 = vld [vmem:[#allocation5 + $0x4f0] sm:$0xf]
    %v620 = vld [vmem:[#allocation5 + $0x4f4] sm:$0xf]
    %v621 = vld [vmem:[#allocation5 + $0x4f8] sm:$0xf]
    %v622 = vld [vmem:[#allocation5 + $0x4fc] sm:$0xf]
    %v623 = vld [vmem:[#allocation5 + $0x500] sm:$0xf]
    %v624 = vld [vmem:[#allocation5 + $0x504] sm:$0xf]
    %v625 = vld [vmem:[#allocation5 + $0x508] sm:$0xf]
    %v626 = vld [vmem:[#allocation5 + $0x50c] sm:$0xf]
    %v627 = vld [vmem:[#allocation5 + $0x510] sm:$0xf]
    %v628 = vld [vmem:[#allocation5 + $0x514] sm:$0xf]
    %v629 = vld [vmem:[#allocation5 + $0x518] sm:$0xf]
    %v630 = vld [vmem:[#allocation5 + $0x51c] sm:$0xf]
    %v631 = vld [vmem:[#allocation5 + $0x520] sm:$0xf]
    %v632 = vld [vmem:[#allocation5 + $0x524] sm:$0xf]
    %v633 = vld [vmem:[#allocation5 + $0x528] sm:$0xf]
    %v634 = vld [vmem:[#allocation5 + $0x52c] sm:$0xf]
    %v635 = vld [vmem:[#allocation5 + $0x530] sm:$0xf]
    %v636 = vld [vmem:[#allocation5 + $0x534] sm:$0xf]
    %v637 = vld [vmem:[#allocation5 + $0x538] sm:$0xf]
    %v638 = vld [vmem:[#allocation5 + $0x53c] sm:$0xf]
    %v639 = vld [vmem:[#allocation5 + $0x540] sm:$0xf]
    %v640 = vld [vmem:[#allocation5 + $0x544] sm:$0xf]
    %v641 = vld [vmem:[#allocation5 + $0x548] sm:$0xf]
    %v642 = vld [vmem:[#allocation5 + $0x54c] sm:$0xf]
    %v643 = vld [vmem:[#allocation5 + $0x550] sm:$0xf]
    %v644 = vld [vmem:[#allocation5 + $0x554] sm:$0xf]
    %v645 = vld [vmem:[#allocation5 + $0x558] sm:$0xf]
    %v646 = vld [vmem:[#allocation5 + $0x55c] sm:$0xf]
    %v647 = vld [vmem:[#allocation5 + $0x560] sm:$0xf]
    %v648 = vld [vmem:[#allocation5 + $0x564] sm:$0xf]
    %v649 = vld [vmem:[#allocation5 + $0x568] sm:$0xf]
    %v650 = vld [vmem:[#allocation5 + $0x56c] sm:$0xf]
    %v651 = vld [vmem:[#allocation5 + $0x570] sm:$0xf]
    %v652 = vld [vmem:[#allocation5 + $0x574] sm:$0xf]
    %v653 = vld [vmem:[#allocation5 + $0x578] sm:$0xf]
    %v654 = vld [vmem:[#allocation5 + $0x57c] sm:$0xf]
    %v655 = vld [vmem:[#allocation5 + $0x580] sm:$0xf]
    %v656 = vld [vmem:[#allocation5 + $0x584] sm:$0xf]
    %v657 = vld [vmem:[#allocation5 + $0x588] sm:$0xf]
    %v658 = vld [vmem:[#allocation5 + $0x58c] sm:$0xf]
    %v659 = vld [vmem:[#allocation5 + $0x590] sm:$0xf]
    %v660 = vld [vmem:[#allocation5 + $0x594] sm:$0xf]
    %v661 = vld [vmem:[#allocation5 + $0x598] sm:$0xf]
    %v662 = vld [vmem:[#allocation5 + $0x59c] sm:$0xf]
    %v663 = vld [vmem:[#allocation5 + $0x5a0] sm:$0xf]
    %v664 = vld [vmem:[#allocation5 + $0x5a4] sm:$0xf]
    %v665 = vld [vmem:[#allocation5 + $0x5a8] sm:$0xf]
    %v666 = vld [vmem:[#allocation5 + $0x5ac] sm:$0xf]
    %v667 = vld [vmem:[#allocation5 + $0x5b0] sm:$0xf]
    %v668 = vld [vmem:[#allocation5 + $0x5b4] sm:$0xf]
    %v669 = vld [vmem:[#allocation5 + $0x5b8] sm:$0xf]
    %v670 = vld [vmem:[#allocation5 + $0x5bc] sm:$0xf]
    %v671 = vld [vmem:[#allocation5 + $0x5c0] sm:$0xf]
    %v672 = vld [vmem:[#allocation5 + $0x5c4] sm:$0xf]
    %v673 = vld [vmem:[#allocation5 + $0x5c8] sm:$0xf]
    %v674 = vld [vmem:[#allocation5 + $0x5cc] sm:$0xf]
    %v675 = vld [vmem:[#allocation5 + $0x5d0] sm:$0xf]
    %v676 = vld [vmem:[#allocation5 + $0x5d4] sm:$0xf]
    %v677 = vld [vmem:[#allocation5 + $0x5d8] sm:$0xf]
    %v678 = vld [vmem:[#allocation5 + $0x5dc] sm:$0xf]
    %v679 = vld [vmem:[#allocation5 + $0x5e0] sm:$0xf]
    %v680 = vld [vmem:[#allocation5 + $0x5e4] sm:$0xf]
    %v681 = vld [vmem:[#allocation5 + $0x5e8] sm:$0xf]
    %v682 = vld [vmem:[#allocation5 + $0x5ec] sm:$0xf]
    %v683 = vld [vmem:[#allocation5 + $0x5f0] sm:$0xf]
    %v684 = vld [vmem:[#allocation5 + $0x5f4] sm:$0xf]
    %v685 = vld [vmem:[#allocation5 + $0x5f8] sm:$0xf]
    %v686 = vld [vmem:[#allocation5 + $0x5fc] sm:$0xf]
    %v687 = vld [vmem:[#allocation5 + $0x600] sm:$0xf]
    %v688 = vld [vmem:[#allocation5 + $0x604] sm:$0xf]
    %v689 = vld [vmem:[#allocation5 + $0x608] sm:$0xf]
    %v690 = vld [vmem:[#allocation5 + $0x60c] sm:$0xf]
    %v691 = vld [vmem:[#allocation5 + $0x610] sm:$0xf]
    %v692 = vld [vmem:[#allocation5 + $0x614] sm:$0xf]
    %v693 = vld [vmem:[#allocation5 + $0x618] sm:$0xf]
    %v694 = vld [vmem:[#allocation5 + $0x61c] sm:$0xf]
    %v695 = vld [vmem:[#allocation5 + $0x620] sm:$0xf]
    %v696 = vld [vmem:[#allocation5 + $0x624] sm:$0xf]
    %v697 = vld [vmem:[#allocation5 + $0x628] sm:$0xf]
    %v698 = vld [vmem:[#allocation5 + $0x62c] sm:$0xf]
    %v699 = vld [vmem:[#allocation5 + $0x630] sm:$0xf]
    %v700 = vld [vmem:[#allocation5 + $0x634] sm:$0xf]
    %v701 = vld [vmem:[#allocation5 + $0x638] sm:$0xf]
    %v702 = vld [vmem:[#allocation5 + $0x63c] sm:$0xf]
    %v703 = vld [vmem:[#allocation5 + $0x640] sm:$0xf]
    %v704 = vld [vmem:[#allocation5 + $0x644] sm:$0xf]
    %v705 = vld [vmem:[#allocation5 + $0x648] sm:$0xf]
    %v706 = vld [vmem:[#allocation5 + $0x64c] sm:$0xf]
    %v707 = vld [vmem:[#allocation5 + $0x650] sm:$0xf]
    %v708 = vld [vmem:[#allocation5 + $0x654] sm:$0xf]
    %v709 = vld [vmem:[#allocation5 + $0x658] sm:$0xf]
    %v710 = vld [vmem:[#allocation5 + $0x65c] sm:$0xf]
    %v711 = vld [vmem:[#allocation5 + $0x660] sm:$0xf]
    %v712 = vld [vmem:[#allocation5 + $0x664] sm:$0xf]
    %v713 = vld [vmem:[#allocation5 + $0x668] sm:$0xf]
    %v714 = vld [vmem:[#allocation5 + $0x66c] sm:$0xf]
    %v715 = vld [vmem:[#allocation5 + $0x670] sm:$0xf]
    %v716 = vld [vmem:[#allocation5 + $0x674] sm:$0xf]
    %v717 = vld [vmem:[#allocation5 + $0x678] sm:$0xf]
    %v718 = vld [vmem:[#allocation5 + $0x67c] sm:$0xf]
    %v719 = vld [vmem:[#allocation5 + $0x680] sm:$0xf]
    %v720 = vld [vmem:[#allocation5 + $0x684] sm:$0xf]
    %v721 = vld [vmem:[#allocation5 + $0x688] sm:$0xf]
    %v722 = vld [vmem:[#allocation5 + $0x68c] sm:$0xf]
    %v723 = vld [vmem:[#allocation5 + $0x690] sm:$0xf]
    %v724 = vld [vmem:[#allocation5 + $0x694] sm:$0xf]
    %v725 = vld [vmem:[#allocation5 + $0x698] sm:$0xf]
    %v726 = vld [vmem:[#allocation5 + $0x69c] sm:$0xf]
    %v727 = vld [vmem:[#allocation5 + $0x6a0] sm:$0xf]
    %v728 = vld [vmem:[#allocation5 + $0x6a4] sm:$0xf]
    %v729 = vld [vmem:[#allocation5 + $0x6a8] sm:$0xf]
    %v730 = vld [vmem:[#allocation5 + $0x6ac] sm:$0xf]
    %v731 = vld [vmem:[#allocation5 + $0x6b0] sm:$0xf]
    %v732 = vld [vmem:[#allocation5 + $0x6b4] sm:$0xf]
    %v733 = vld [vmem:[#allocation5 + $0x6b8] sm:$0xf]
    %v734 = vld [vmem:[#allocation5 + $0x6bc] sm:$0xf]
    %v735 = vld [vmem:[#allocation5 + $0x6c0] sm:$0xf]
    %v736 = vld [vmem:[#allocation5 + $0x6c4] sm:$0xf]
    %v737 = vld [vmem:[#allocation5 + $0x6c8] sm:$0xf]
    %v738 = vld [vmem:[#allocation5 + $0x6cc] sm:$0xf]
    %v739 = vld [vmem:[#allocation5 + $0x6d0] sm:$0xf]
    %v740 = vld [vmem:[#allocation5 + $0x6d4] sm:$0xf]
    %v741 = vld [vmem:[#allocation5 + $0x6d8] sm:$0xf]
    %v742 = vld [vmem:[#allocation5 + $0x6dc] sm:$0xf]
    %v743 = vld [vmem:[#allocation5 + $0x6e0] sm:$0xf]
    %v744 = vld [vmem:[#allocation5 + $0x6e4] sm:$0xf]
    %v745 = vld [vmem:[#allocation5 + $0x6e8] sm:$0xf]
    %v746 = vld [vmem:[#allocation5 + $0x6ec] sm:$0xf]
    %v747 = vld [vmem:[#allocation5 + $0x6f0] sm:$0xf]
    %v748 = vld [vmem:[#allocation5 + $0x6f4] sm:$0xf]
    %v749 = vld [vmem:[#allocation5 + $0x6f8] sm:$0xf]
    %v750 = vld [vmem:[#allocation5 + $0x6fc] sm:$0xf]
    %v751 = vld [vmem:[#allocation5 + $0x700] sm:$0xf]
    %v752 = vld [vmem:[#allocation5 + $0x704] sm:$0xf]
    %v753 = vld [vmem:[#allocation5 + $0x708] sm:$0xf]
    %v754 = vld [vmem:[#allocation5 + $0x70c] sm:$0xf]
    %v755 = vld [vmem:[#allocation5 + $0x710] sm:$0xf]
    %v756 = vld [vmem:[#allocation5 + $0x714] sm:$0xf]
    %v757 = vld [vmem:[#allocation5 + $0x718] sm:$0xf]
    %v758 = vld [vmem:[#allocation5 + $0x71c] sm:$0xf]
    %v759 = vld [vmem:[#allocation5 + $0x720] sm:$0xf]
    %v760 = vld [vmem:[#allocation5 + $0x724] sm:$0xf]
    %v761 = vld [vmem:[#allocation5 + $0x728] sm:$0xf]
    %v762 = vld [vmem:[#allocation5 + $0x72c] sm:$0xf]
    %v763 = vld [vmem:[#allocation5 + $0x730] sm:$0xf]
    %v764 = vld [vmem:[#allocation5 + $0x734] sm:$0xf]
    %v765 = vld [vmem:[#allocation5 + $0x738] sm:$0xf]
    %v766 = vld [vmem:[#allocation5 + $0x73c] sm:$0xf]
    %v767 = vld [vmem:[#allocation5 + $0x740] sm:$0xf]
    %v768 = vld [vmem:[#allocation5 + $0x744] sm:$0xf]
    %v769 = vld [vmem:[#allocation5 + $0x748] sm:$0xf]
    %v770 = vld [vmem:[#allocation5 + $0x74c] sm:$0xf]
    %v771 = vld [vmem:[#allocation5 + $0x750] sm:$0xf]
    %v772 = vld [vmem:[#allocation5 + $0x754] sm:$0xf]
    %v773 = vld [vmem:[#allocation5 + $0x758] sm:$0xf]
    %v774 = vld [vmem:[#allocation5 + $0x75c] sm:$0xf]
    %v775 = vld [vmem:[#allocation5 + $0x760] sm:$0xf]
    %v776 = vld [vmem:[#allocation5 + $0x764] sm:$0xf]
    %v777 = vld [vmem:[#allocation5 + $0x768] sm:$0xf]
    %v778 = vld [vmem:[#allocation5 + $0x76c] sm:$0xf]
    %v779 = vld [vmem:[#allocation5 + $0x770] sm:$0xf]
    %v780 = vld [vmem:[#allocation5 + $0x774] sm:$0xf]
    %v781 = vld [vmem:[#allocation5 + $0x778] sm:$0xf]
    %v782 = vld [vmem:[#allocation5 + $0x77c] sm:$0xf]
    %v783 = vld [vmem:[#allocation5 + $0x780] sm:$0xf]
    %v784 = vld [vmem:[#allocation5 + $0x784] sm:$0xf]
    %v785 = vld [vmem:[#allocation5 + $0x788] sm:$0xf]
    %v786 = vld [vmem:[#allocation5 + $0x78c] sm:$0xf]
    %v787 = vld [vmem:[#allocation5 + $0x790] sm:$0xf]
    %v788 = vld [vmem:[#allocation5 + $0x794] sm:$0xf]
    %v789 = vld [vmem:[#allocation5 + $0x798] sm:$0xf]
    %v790 = vld [vmem:[#allocation5 + $0x79c] sm:$0xf]
    %v791 = vld [vmem:[#allocation5 + $0x7a0] sm:$0xf]
    %v792 = vld [vmem:[#allocation5 + $0x7a4] sm:$0xf]
    %v793 = vld [vmem:[#allocation5 + $0x7a8] sm:$0xf]
    %v794 = vld [vmem:[#allocation5 + $0x7ac] sm:$0xf]
    %v795 = vld [vmem:[#allocation5 + $0x7b0] sm:$0xf]
    %v796 = vld [vmem:[#allocation5 + $0x7b4] sm:$0xf]
    %v797 = vld [vmem:[#allocation5 + $0x7b8] sm:$0xf]
    %v798 = vld [vmem:[#allocation5 + $0x7bc] sm:$0xf]
    %v799 = vld [vmem:[#allocation5 + $0x7c0] sm:$0xf]
    %v800 = vld [vmem:[#allocation5 + $0x7c4] sm:$0xf]
    %v801 = vld [vmem:[#allocation5 + $0x7c8] sm:$0xf]
    %v802 = vld [vmem:[#allocation5 + $0x7cc] sm:$0xf]
    %v803 = vld [vmem:[#allocation5 + $0x7d0] sm:$0xf]
    %v804 = vld [vmem:[#allocation5 + $0x7d4] sm:$0xf]
    %v805 = vld [vmem:[#allocation5 + $0x7d8] sm:$0xf]
    %v806 = vld [vmem:[#allocation5 + $0x7dc] sm:$0xf]
    %v807 = vld [vmem:[#allocation5 + $0x7e0] sm:$0xf]
    %v808 = vld [vmem:[#allocation5 + $0x7e4] sm:$0xf]
    %v809 = vld [vmem:[#allocation5 + $0x7e8] sm:$0xf]
    %v810 = vld [vmem:[#allocation5 + $0x7ec] sm:$0xf]
    %v811 = vld [vmem:[#allocation5 + $0x7f0] sm:$0xf]
    %v812 = vld [vmem:[#allocation5 + $0x7f4] sm:$0xf]
    %v813 = vld [vmem:[#allocation5 + $0x7f8] sm:$0xf]
    %v814 = vld [vmem:[#allocation5 + $0x7fc] sm:$0xf]
    %v815 = vld [vmem:[#allocation5 + $0x800] sm:$0xf]
    %v816 = vld [vmem:[#allocation5 + $0x804] sm:$0xf]
    %v817 = vld [vmem:[#allocation5 + $0x808] sm:$0xf]
    %v818 = vld [vmem:[#allocation5 + $0x80c] sm:$0xf]
    %v819 = vld [vmem:[#allocation5 + $0x810] sm:$0xf]
    %v820 = vld [vmem:[#allocation5 + $0x814] sm:$0xf]
    %v821 = vld [vmem:[#allocation5 + $0x818] sm:$0xf]
    %v822 = vld [vmem:[#allocation5 + $0x81c] sm:$0xf]
    %v823 = vld [vmem:[#allocation5 + $0x820] sm:$0xf]
    %v824 = vld [vmem:[#allocation5 + $0x824] sm:$0xf]
    %v825 = vld [vmem:[#allocation5 + $0x828] sm:$0xf]
    %v826 = vld [vmem:[#allocation5 + $0x82c] sm:$0xf]
    %v827 = vld [vmem:[#allocation5 + $0x830] sm:$0xf]
    %v828 = vld [vmem:[#allocation5 + $0x834] sm:$0xf]
    %v829 = vld [vmem:[#allocation5 + $0x838] sm:$0xf]
    %v830 = vld [vmem:[#allocation5 + $0x83c] sm:$0xf]
    %v831 = vld [vmem:[#allocation5 + $0x840] sm:$0xf]
    %v832 = vld [vmem:[#allocation5 + $0x844] sm:$0xf]
    %v833 = vld [vmem:[#allocation5 + $0x848] sm:$0xf]
    %v834 = vld [vmem:[#allocation5 + $0x84c] sm:$0xf]
    %v835 = vld [vmem:[#allocation5 + $0x850] sm:$0xf]
    %v836 = vld [vmem:[#allocation5 + $0x854] sm:$0xf]
    %v837 = vld [vmem:[#allocation5 + $0x858] sm:$0xf]
    %v838 = vld [vmem:[#allocation5 + $0x85c] sm:$0xf]
    %v839 = vld [vmem:[#allocation5 + $0x860] sm:$0xf]
    %v840 = vld [vmem:[#allocation5 + $0x864] sm:$0xf]
    %v841 = vld [vmem:[#allocation5 + $0x868] sm:$0xf]
    %v842 = vld [vmem:[#allocation5 + $0x86c] sm:$0xf]
    %v843 = vld [vmem:[#allocation5 + $0x870] sm:$0xf]
    %v844 = vld [vmem:[#allocation5 + $0x874] sm:$0xf]
    %v845 = vld [vmem:[#allocation5 + $0x878] sm:$0xf]
    %v846 = vld [vmem:[#allocation5 + $0x87c] sm:$0xf]
    %v847 = vld [vmem:[#allocation5 + $0x880] sm:$0xf]
    %v848 = vld [vmem:[#allocation5 + $0x884] sm:$0xf]
    %v849 = vld [vmem:[#allocation5 + $0x888] sm:$0xf]
    %v850 = vld [vmem:[#allocation5 + $0x88c] sm:$0xf]
    %v851 = vld [vmem:[#allocation5 + $0x890] sm:$0xf]
    %v852 = vld [vmem:[#allocation5 + $0x894] sm:$0xf]
    %v853 = vld [vmem:[#allocation5 + $0x898] sm:$0xf]
    %v854 = vld [vmem:[#allocation5 + $0x89c] sm:$0xf]
    %v855 = vld [vmem:[#allocation5 + $0x8a0] sm:$0xf]
    %v856 = vld [vmem:[#allocation5 + $0x8a4] sm:$0xf]
    %v857 = vld [vmem:[#allocation5 + $0x8a8] sm:$0xf]
    %v858 = vld [vmem:[#allocation5 + $0x8ac] sm:$0xf]
    %v859 = vld [vmem:[#allocation5 + $0x8b0] sm:$0xf]
    %v860 = vld [vmem:[#allocation5 + $0x8b4] sm:$0xf]
    %v861 = vld [vmem:[#allocation5 + $0x8b8] sm:$0xf]
    %v862 = vld [vmem:[#allocation5 + $0x8bc] sm:$0xf]
    %v863 = vld [vmem:[#allocation5 + $0x8c0] sm:$0xf]
    %v864 = vld [vmem:[#allocation5 + $0x8c4] sm:$0xf]
    %v865 = vld [vmem:[#allocation5 + $0x8c8] sm:$0xf]
    %v866 = vld [vmem:[#allocation5 + $0x8cc] sm:$0xf]
    %v867 = vld [vmem:[#allocation5 + $0x8d0] sm:$0xf]
    %v868 = vld [vmem:[#allocation5 + $0x8d4] sm:$0xf]
    %v869 = vld [vmem:[#allocation5 + $0x8d8] sm:$0xf]
    %v870 = vld [vmem:[#allocation5 + $0x8dc] sm:$0xf]
    %v871 = vld [vmem:[#allocation5 + $0x8e0] sm:$0xf]
    %v872 = vld [vmem:[#allocation5 + $0x8e4] sm:$0xf]
    %v873 = vld [vmem:[#allocation5 + $0x8e8] sm:$0xf]
    %v874 = vld [vmem:[#allocation5 + $0x8ec] sm:$0xf]
    %v875 = vld [vmem:[#allocation5 + $0x8f0] sm:$0xf]
    %v876 = vld [vmem:[#allocation5 + $0x8f4] sm:$0xf]
    %v877 = vld [vmem:[#allocation5 + $0x8f8] sm:$0xf]
    %v878 = vld [vmem:[#allocation5 + $0x8fc] sm:$0xf]
    %v879 = vld [vmem:[#allocation5 + $0x900] sm:$0xf]
    %v880 = vld [vmem:[#allocation5 + $0x904] sm:$0xf]
    %v881 = vld [vmem:[#allocation5 + $0x908] sm:$0xf]
    %v882 = vld [vmem:[#allocation5 + $0x90c] sm:$0xf]
    %v883 = vld [vmem:[#allocation5 + $0x910] sm:$0xf]
    %v884 = vld [vmem:[#allocation5 + $0x914] sm:$0xf]
    %v885 = vld [vmem:[#allocation5 + $0x918] sm:$0xf]
    %v886 = vld [vmem:[#allocation5 + $0x91c] sm:$0xf]
    %v887 = vld [vmem:[#allocation5 + $0x920] sm:$0xf]
    %v888 = vld [vmem:[#allocation5 + $0x924] sm:$0xf]
    %v889 = vld [vmem:[#allocation5 + $0x928] sm:$0xf]
    %v890 = vld [vmem:[#allocation5 + $0x92c] sm:$0xf]
    %v891 = vld [vmem:[#allocation5 + $0x930] sm:$0xf]
    %v892 = vld [vmem:[#allocation5 + $0x934] sm:$0xf]
    %v893 = vld [vmem:[#allocation5 + $0x938] sm:$0xf]
    %v894 = vld [vmem:[#allocation5 + $0x93c] sm:$0xf]
    %v895 = vld [vmem:[#allocation5 + $0x940] sm:$0xf]
    %v896 = vld [vmem:[#allocation5 + $0x944] sm:$0xf]
    %v897 = vld [vmem:[#allocation5 + $0x948] sm:$0xf]
    %v898 = vld [vmem:[#allocation5 + $0x94c] sm:$0xf]
    %v899 = vld [vmem:[#allocation5 + $0x950] sm:$0xf]
    %v900 = vld [vmem:[#allocation5 + $0x954] sm:$0xf]
    %v901 = vld [vmem:[#allocation5 + $0x958] sm:$0xf]
    %v902 = vld [vmem:[#allocation5 + $0x95c] sm:$0xf]
    %v903 = vld [vmem:[#allocation5 + $0x960] sm:$0xf]
    %v904 = vld [vmem:[#allocation5 + $0x964] sm:$0xf]
    %v905 = vld [vmem:[#allocation5 + $0x968] sm:$0xf]
    %v906 = vld [vmem:[#allocation5 + $0x96c] sm:$0xf]
    %v907 = vld [vmem:[#allocation5 + $0x970] sm:$0xf]
    %v908 = vld [vmem:[#allocation5 + $0x974] sm:$0xf]
    %v909 = vld [vmem:[#allocation5 + $0x978] sm:$0xf]
    %v910 = vld [vmem:[#allocation5 + $0x97c] sm:$0xf]
    %v911 = vld [vmem:[#allocation5 + $0x980] sm:$0xf]
    %v912 = vld [vmem:[#allocation5 + $0x984] sm:$0xf]
    %v913 = vld [vmem:[#allocation5 + $0x988] sm:$0xf]
    %v914 = vld [vmem:[#allocation5 + $0x98c] sm:$0xf]
    %v915 = vld [vmem:[#allocation5 + $0x990] sm:$0xf]
    %v916 = vld [vmem:[#allocation5 + $0x994] sm:$0xf]
    %v917 = vld [vmem:[#allocation5 + $0x998] sm:$0xf]
    %v918 = vld [vmem:[#allocation5 + $0x99c] sm:$0xf]
    %v919 = vld [vmem:[#allocation5 + $0x9a0] sm:$0xf]
    %v920 = vld [vmem:[#allocation5 + $0x9a4] sm:$0xf]
    %v921 = vld [vmem:[#allocation5 + $0x9a8] sm:$0xf]
    %v922 = vld [vmem:[#allocation5 + $0x9ac] sm:$0xf]
    %v923 = vld [vmem:[#allocation5 + $0x9b0] sm:$0xf]
    %v924 = vld [vmem:[#allocation5 + $0x9b4] sm:$0xf]
    %v925 = vld [vmem:[#allocation5 + $0x9b8] sm:$0xf]
    %v926 = vld [vmem:[#allocation5 + $0x9bc] sm:$0xf]
    %v927 = vld [vmem:[#allocation5 + $0x9c0] sm:$0xf]
    %v928 = vld [vmem:[#allocation5 + $0x9c4] sm:$0xf]
    %v929 = vld [vmem:[#allocation5 + $0x9c8] sm:$0xf]
    %v930 = vld [vmem:[#allocation5 + $0x9cc] sm:$0xf]
    %v931 = vld [vmem:[#allocation5 + $0x9d0] sm:$0xf]
    %v932 = vld [vmem:[#allocation5 + $0x9d4] sm:$0xf]
    %v933 = vld [vmem:[#allocation5 + $0x9d8] sm:$0xf]
    %v934 = vld [vmem:[#allocation5 + $0x9dc] sm:$0xf]
    %v935 = vld [vmem:[#allocation5 + $0x9e0] sm:$0xf]
    %v936 = vld [vmem:[#allocation5 + $0x9e4] sm:$0xf]
    %v937 = vld [vmem:[#allocation5 + $0x9e8] sm:$0xf]
    %v938 = vld [vmem:[#allocation5 + $0x9ec] sm:$0xf]
    %v939 = vld [vmem:[#allocation5 + $0x9f0] sm:$0xf]
    %v940 = vld [vmem:[#allocation5 + $0x9f4] sm:$0xf]
    %v941 = vld [vmem:[#allocation5 + $0x9f8] sm:$0xf]
    %v942 = vld [vmem:[#allocation5 + $0x9fc] sm:$0xf]
    %v943 = vld [vmem:[#allocation5 + $0xa00] sm:$0xf]
    %v944 = vld [vmem:[#allocation5 + $0xa04] sm:$0xf]
    %v945 = vld [vmem:[#allocation5 + $0xa08] sm:$0xf]
    %v946 = vld [vmem:[#allocation5 + $0xa0c] sm:$0xf]
    %v947 = vld [vmem:[#allocation5 + $0xa10] sm:$0xf]
    %v948 = vld [vmem:[#allocation5 + $0xa14] sm:$0xf]
    %v949 = vld [vmem:[#allocation5 + $0xa18] sm:$0xf]
    %v950 = vld [vmem:[#allocation5 + $0xa1c] sm:$0xf]
    %v951 = vld [vmem:[#allocation5 + $0xa20] sm:$0xf]
    %v952 = vld [vmem:[#allocation5 + $0xa24] sm:$0xf]
    %v953 = vld [vmem:[#allocation5 + $0xa28] sm:$0xf]
    %v954 = vld [vmem:[#allocation5 + $0xa2c] sm:$0xf]
    %v955 = vld [vmem:[#allocation5 + $0xa30] sm:$0xf]
    %v956 = vld [vmem:[#allocation5 + $0xa34] sm:$0xf]
    %v957 = vld [vmem:[#allocation5 + $0xa38] sm:$0xf]
    %v958 = vld [vmem:[#allocation5 + $0xa3c] sm:$0xf]
    %v959 = vld [vmem:[#allocation5 + $0xa40] sm:$0xf]
    %v960 = vld [vmem:[#allocation5 + $0xa44] sm:$0xf]
    %v961 = vld [vmem:[#allocation5 + $0xa48] sm:$0xf]
    %v962 = vld [vmem:[#allocation5 + $0xa4c] sm:$0xf]
    %v963 = vld [vmem:[#allocation5 + $0xa50] sm:$0xf]
    %v964 = vld [vmem:[#allocation5 + $0xa54] sm:$0xf]
    %v965 = vld [vmem:[#allocation5 + $0xa58] sm:$0xf]
    %v966 = vld [vmem:[#allocation5 + $0xa5c] sm:$0xf]
    %v967 = vld [vmem:[#allocation5 + $0xa60] sm:$0xf]
    %v968 = vld [vmem:[#allocation5 + $0xa64] sm:$0xf]
    %v969 = vld [vmem:[#allocation5 + $0xa68] sm:$0xf]
    %v970 = vld [vmem:[#allocation5 + $0xa6c] sm:$0xf]
    %v971 = vld [vmem:[#allocation5 + $0xa70] sm:$0xf]
    %v972 = vld [vmem:[#allocation5 + $0xa74] sm:$0xf]
    %v973 = vld [vmem:[#allocation5 + $0xa78] sm:$0xf]
    %v974 = vld [vmem:[#allocation5 + $0xa7c] sm:$0xf]
    %v975 = vld [vmem:[#allocation5 + $0xa80] sm:$0xf]
    %v976 = vld [vmem:[#allocation5 + $0xa84] sm:$0xf]
    %v977 = vld [vmem:[#allocation5 + $0xa88] sm:$0xf]
    %v978 = vld [vmem:[#allocation5 + $0xa8c] sm:$0xf]
    %v979 = vld [vmem:[#allocation5 + $0xa90] sm:$0xf]
    %v980 = vld [vmem:[#allocation5 + $0xa94] sm:$0xf]
    %v981 = vld [vmem:[#allocation5 + $0xa98] sm:$0xf]
    %v982 = vld [vmem:[#allocation5 + $0xa9c] sm:$0xf]
    %v983 = vld [vmem:[#allocation5 + $0xaa0] sm:$0xf]
    %v984 = vld [vmem:[#allocation5 + $0xaa4] sm:$0xf]
    %v985 = vld [vmem:[#allocation5 + $0xaa8] sm:$0xf]
    %v986 = vld [vmem:[#allocation5 + $0xaac] sm:$0xf]
    %v987 = vld [vmem:[#allocation5 + $0xab0] sm:$0xf]
    %v988 = vld [vmem:[#allocation5 + $0xab4] sm:$0xf]
    %v989 = vld [vmem:[#allocation5 + $0xab8] sm:$0xf]
    %v990 = vld [vmem:[#allocation5 + $0xabc] sm:$0xf]
    %v991 = vld [vmem:[#allocation5 + $0xac0] sm:$0xf]
    %v992 = vld [vmem:[#allocation5 + $0xac4] sm:$0xf]
    %v993 = vld [vmem:[#allocation5 + $0xac8] sm:$0xf]
    %v994 = vld [vmem:[#allocation5 + $0xacc] sm:$0xf]
    %v995 = vld [vmem:[#allocation5 + $0xad0] sm:$0xf]
    %v996 = vld [vmem:[#allocation5 + $0xad4] sm:$0xf]
    %v997 = vld [vmem:[#allocation5 + $0xad8] sm:$0xf]
    %v998 = vld [vmem:[#allocation5 + $0xadc] sm:$0xf]
    %v999 = vld [vmem:[#allocation5 + $0xae0] sm:$0xf]
    %v1000 = vld [vmem:[#allocation5 + $0xae4] sm:$0xf]
    %v1001 = vld [vmem:[#allocation5 + $0xae8] sm:$0xf]
    %v1002 = vld [vmem:[#allocation5 + $0xaec] sm:$0xf]
    %v1003 = vld [vmem:[#allocation5 + $0xaf0] sm:$0xf]
    %v1004 = vld [vmem:[#allocation5 + $0xaf4] sm:$0xf]
    %v1005 = vld [vmem:[#allocation5 + $0xaf8] sm:$0xf]
    %v1006 = vld [vmem:[#allocation5 + $0xafc] sm:$0xf]
    %v1007 = vld [vmem:[#allocation5 + $0xb00] sm:$0xf]
    %v1008 = vld [vmem:[#allocation5 + $0xb04] sm:$0xf]
    %v1009 = vld [vmem:[#allocation5 + $0xb08] sm:$0xf]
    %v1010 = vld [vmem:[#allocation5 + $0xb0c] sm:$0xf]
    %v1011 = vld [vmem:[#allocation5 + $0xb10] sm:$0xf]
    %v1012 = vld [vmem:[#allocation5 + $0xb14] sm:$0xf]
    %v1013 = vld [vmem:[#allocation5 + $0xb18] sm:$0xf]
    %v1014 = vld [vmem:[#allocation5 + $0xb1c] sm:$0xf]
    %v1015 = vld [vmem:[#allocation5 + $0xb20] sm:$0xf]
    %v1016 = vld [vmem:[#allocation5 + $0xb24] sm:$0xf]
    %v1017 = vld [vmem:[#allocation5 + $0xb28] sm:$0xf]
    %v1018 = vld [vmem:[#allocation5 + $0xb2c] sm:$0xf]
    %v1019 = vld [vmem:[#allocation5 + $0xb30] sm:$0xf]
    %v1020 = vld [vmem:[#allocation5 + $0xb34] sm:$0xf]
    %v1021 = vld [vmem:[#allocation5 + $0xb38] sm:$0xf]
    %v1022 = vld [vmem:[#allocation5 + $0xb3c] sm:$0xf]
    %v1023 = vld [vmem:[#allocation5 + $0xb40] sm:$0xf]
    %v1024 = vld [vmem:[#allocation5 + $0xb44] sm:$0xf]
    %v1025 = vld [vmem:[#allocation5 + $0xb48] sm:$0xf]
    %v1026 = vld [vmem:[#allocation5 + $0xb4c] sm:$0xf]
    %v1027 = vld [vmem:[#allocation5 + $0xb50] sm:$0xf]
    %v1028 = vld [vmem:[#allocation5 + $0xb54] sm:$0xf]
    %v1029 = vld [vmem:[#allocation5 + $0xb58] sm:$0xf]
    %v1030 = vld [vmem:[#allocation5 + $0xb5c] sm:$0xf]
    %v1031 = vld [vmem:[#allocation5 + $0xb60] sm:$0xf]
    %v1032 = vld [vmem:[#allocation5 + $0xb64] sm:$0xf]
    %v1033 = vld [vmem:[#allocation5 + $0xb68] sm:$0xf]
    %v1034 = vld [vmem:[#allocation5 + $0xb6c] sm:$0xf]
    %v1035 = vld [vmem:[#allocation5 + $0xb70] sm:$0xf]
    %v1036 = vld [vmem:[#allocation5 + $0xb74] sm:$0xf]
    %v1037 = vld [vmem:[#allocation5 + $0xb78] sm:$0xf]
    %v1038 = vld [vmem:[#allocation5 + $0xb7c] sm:$0xf]
    %v1039 = vld [vmem:[#allocation5 + $0xb80] sm:$0xf]
    %v1040 = vld [vmem:[#allocation5 + $0xb84] sm:$0xf]
    %v1041 = vld [vmem:[#allocation5 + $0xb88] sm:$0xf]
    %v1042 = vld [vmem:[#allocation5 + $0xb8c] sm:$0xf]
    %v1043 = vld [vmem:[#allocation5 + $0xb90] sm:$0xf]
    %v1044 = vld [vmem:[#allocation5 + $0xb94] sm:$0xf]
    %v1045 = vld [vmem:[#allocation5 + $0xb98] sm:$0xf]
    %v1046 = vld [vmem:[#allocation5 + $0xb9c] sm:$0xf]
    %v1047 = vld [vmem:[#allocation5 + $0xba0] sm:$0xf]
    %v1048 = vld [vmem:[#allocation5 + $0xba4] sm:$0xf]
    %v1049 = vld [vmem:[#allocation5 + $0xba8] sm:$0xf]
    %v1050 = vld [vmem:[#allocation5 + $0xbac] sm:$0xf]
    %v1051 = vld [vmem:[#allocation5 + $0xbb0] sm:$0xf]
    %v1052 = vld [vmem:[#allocation5 + $0xbb4] sm:$0xf]
    %v1053 = vld [vmem:[#allocation5 + $0xbb8] sm:$0xf]
    %v1054 = vld [vmem:[#allocation5 + $0xbbc] sm:$0xf]
    %v1055 = vld [vmem:[#allocation5 + $0xbc0] sm:$0xf]
    %v1056 = vld [vmem:[#allocation5 + $0xbc4] sm:$0xf]
    %v1057 = vld [vmem:[#allocation5 + $0xbc8] sm:$0xf]
    %v1058 = vld [vmem:[#allocation5 + $0xbcc] sm:$0xf]
    %v1059 = vld [vmem:[#allocation5 + $0xbd0] sm:$0xf]
    %v1060 = vld [vmem:[#allocation5 + $0xbd4] sm:$0xf]
    %v1061 = vld [vmem:[#allocation5 + $0xbd8] sm:$0xf]
    %v1062 = vld [vmem:[#allocation5 + $0xbdc] sm:$0xf]
    %v1063 = vld [vmem:[#allocation5 + $0xbe0] sm:$0xf]
    %v1064 = vld [vmem:[#allocation5 + $0xbe4] sm:$0xf]
    %v1065 = vld [vmem:[#allocation5 + $0xbe8] sm:$0xf]
    %v1066 = vld [vmem:[#allocation5 + $0xbec] sm:$0xf]
    %v1067 = vld [vmem:[#allocation5 + $0xbf0] sm:$0xf]
    %v1068 = vld [vmem:[#allocation5 + $0xbf4] sm:$0xf]
    %v1069 = vld [vmem:[#allocation5 + $0xbf8] sm:$0xf]
    %v1070 = vld [vmem:[#allocation5 + $0xbfc] sm:$0xf]
    %v1071 = vld [vmem:[#allocation5 + $0xc00] sm:$0xf]
    %v1072 = vld [vmem:[#allocation5 + $0xc04] sm:$0xf]
    %v1073 = vld [vmem:[#allocation5 + $0xc08] sm:$0xf]
    %v1074 = vld [vmem:[#allocation5 + $0xc0c] sm:$0xf]
    %v1075 = vld [vmem:[#allocation5 + $0xc10] sm:$0xf]
    %v1076 = vld [vmem:[#allocation5 + $0xc14] sm:$0xf]
    %v1077 = vld [vmem:[#allocation5 + $0xc18] sm:$0xf]
    %v1078 = vld [vmem:[#allocation5 + $0xc1c] sm:$0xf]
    %v1079 = vld [vmem:[#allocation5 + $0xc20] sm:$0xf]
    %v1080 = vld [vmem:[#allocation5 + $0xc24] sm:$0xf]
    %v1081 = vld [vmem:[#allocation5 + $0xc28] sm:$0xf]
    %v1082 = vld [vmem:[#allocation5 + $0xc2c] sm:$0xf]
    %v1083 = vld [vmem:[#allocation5 + $0xc30] sm:$0xf]
    %v1084 = vld [vmem:[#allocation5 + $0xc34] sm:$0xf]
    %v1085 = vld [vmem:[#allocation5 + $0xc38] sm:$0xf]
    %v1086 = vld [vmem:[#allocation5 + $0xc3c] sm:$0xf]
    %v1087 = vld [vmem:[#allocation5 + $0xc40] sm:$0xf]
    %v1088 = vld [vmem:[#allocation5 + $0xc44] sm:$0xf]
    %v1089 = vld [vmem:[#allocation5 + $0xc48] sm:$0xf]
    %v1090 = vld [vmem:[#allocation5 + $0xc4c] sm:$0xf]
    %v1091 = vld [vmem:[#allocation5 + $0xc50] sm:$0xf]
    %v1092 = vld [vmem:[#allocation5 + $0xc54] sm:$0xf]
    %v1093 = vld [vmem:[#allocation5 + $0xc58] sm:$0xf]
    %v1094 = vld [vmem:[#allocation5 + $0xc5c] sm:$0xf]
    %v1095 = vld [vmem:[#allocation5 + $0xc60] sm:$0xf]
    %v1096 = vld [vmem:[#allocation5 + $0xc64] sm:$0xf]
    %v1097 = vld [vmem:[#allocation5 + $0xc68] sm:$0xf]
    %v1098 = vld [vmem:[#allocation5 + $0xc6c] sm:$0xf]
    %v1099 = vld [vmem:[#allocation5 + $0xc70] sm:$0xf]
    %v1100 = vld [vmem:[#allocation5 + $0xc74] sm:$0xf]
    %v1101 = vld [vmem:[#allocation5 + $0xc78] sm:$0xf]
    %v1102 = vld [vmem:[#allocation5 + $0xc7c] sm:$0xf]
    %v1103 = vld [vmem:[#allocation5 + $0xc80] sm:$0xf]
    %v1104 = vld [vmem:[#allocation5 + $0xc84] sm:$0xf]
    %v1105 = vld [vmem:[#allocation5 + $0xc88] sm:$0xf]
    %v1106 = vld [vmem:[#allocation5 + $0xc8c] sm:$0xf]
    %v1107 = vld [vmem:[#allocation5 + $0xc90] sm:$0xf]
    %v1108 = vld [vmem:[#allocation5 + $0xc94] sm:$0xf]
    %v1109 = vld [vmem:[#allocation5 + $0xc98] sm:$0xf]
    %v1110 = vld [vmem:[#allocation5 + $0xc9c] sm:$0xf]
    %v1111 = vld [vmem:[#allocation5 + $0xca0] sm:$0xf]
    %v1112 = vld [vmem:[#allocation5 + $0xca4] sm:$0xf]
    %v1113 = vld [vmem:[#allocation5 + $0xca8] sm:$0xf]
    %v1114 = vld [vmem:[#allocation5 + $0xcac] sm:$0xf]
    %v1115 = vld [vmem:[#allocation5 + $0xcb0] sm:$0xf]
    %v1116 = vld [vmem:[#allocation5 + $0xcb4] sm:$0xf]
    %v1117 = vld [vmem:[#allocation5 + $0xcb8] sm:$0xf]
    %v1118 = vld [vmem:[#allocation5 + $0xcbc] sm:$0xf]
    %v1119 = vld [vmem:[#allocation5 + $0xcc0] sm:$0xf]
    %v1120 = vld [vmem:[#allocation5 + $0xcc4] sm:$0xf]
    %v1121 = vld [vmem:[#allocation5 + $0xcc8] sm:$0xf]
    %v1122 = vld [vmem:[#allocation5 + $0xccc] sm:$0xf]
    %v1123 = vld [vmem:[#allocation5 + $0xcd0] sm:$0xf]
    %v1124 = vld [vmem:[#allocation5 + $0xcd4] sm:$0xf]
    %v1125 = vld [vmem:[#allocation5 + $0xcd8] sm:$0xf]
    %v1126 = vld [vmem:[#allocation5 + $0xcdc] sm:$0xf]
    %v1127 = vld [vmem:[#allocation5 + $0xce0] sm:$0xf]
    %v1128 = vld [vmem:[#allocation5 + $0xce4] sm:$0xf]
    %v1129 = vld [vmem:[#allocation5 + $0xce8] sm:$0xf]
    %v1130 = vld [vmem:[#allocation5 + $0xcec] sm:$0xf]
    %v1131 = vld [vmem:[#allocation5 + $0xcf0] sm:$0xf]
    %v1132 = vld [vmem:[#allocation5 + $0xcf4] sm:$0xf]
    %v1133 = vld [vmem:[#allocation5 + $0xcf8] sm:$0xf]
    %v1134 = vld [vmem:[#allocation5 + $0xcfc] sm:$0xf]
    %v1135 = vld [vmem:[#allocation5 + $0xd00] sm:$0xf]
    %v1136 = vld [vmem:[#allocation5 + $0xd04] sm:$0xf]
    %v1137 = vld [vmem:[#allocation5 + $0xd08] sm:$0xf]
    %v1138 = vld [vmem:[#allocation5 + $0xd0c] sm:$0xf]
    %v1139 = vld [vmem:[#allocation5 + $0xd10] sm:$0xf]
    %v1140 = vld [vmem:[#allocation5 + $0xd14] sm:$0xf]
    %v1141 = vld [vmem:[#allocation5 + $0xd18] sm:$0xf]
    %v1142 = vld [vmem:[#allocation5 + $0xd1c] sm:$0xf]
    %v1143 = vld [vmem:[#allocation5 + $0xd20] sm:$0xf]
    %v1144 = vld [vmem:[#allocation5 + $0xd24] sm:$0xf]
    %v1145 = vld [vmem:[#allocation5 + $0xd28] sm:$0xf]
    %v1146 = vld [vmem:[#allocation5 + $0xd2c] sm:$0xf]
    %v1147 = vld [vmem:[#allocation5 + $0xd30] sm:$0xf]
    %v1148 = vld [vmem:[#allocation5 + $0xd34] sm:$0xf]
    %v1149 = vld [vmem:[#allocation5 + $0xd38] sm:$0xf]
    %v1150 = vld [vmem:[#allocation5 + $0xd3c] sm:$0xf]
    %v1151 = vld [vmem:[#allocation5 + $0xd40] sm:$0xf]
    %v1152 = vld [vmem:[#allocation5 + $0xd44] sm:$0xf]
    %v1153 = vld [vmem:[#allocation5 + $0xd48] sm:$0xf]
    %v1154 = vld [vmem:[#allocation5 + $0xd4c] sm:$0xf]
    %v1155 = vld [vmem:[#allocation5 + $0xd50] sm:$0xf]
    %v1156 = vld [vmem:[#allocation5 + $0xd54] sm:$0xf]
    %v1157 = vld [vmem:[#allocation5 + $0xd58] sm:$0xf]
    %v1158 = vld [vmem:[#allocation5 + $0xd5c] sm:$0xf]
    %v1159 = vld [vmem:[#allocation5 + $0xd60] sm:$0xf]
    %v1160 = vld [vmem:[#allocation5 + $0xd64] sm:$0xf]
    %v1161 = vld [vmem:[#allocation5 + $0xd68] sm:$0xf]
    %v1162 = vld [vmem:[#allocation5 + $0xd6c] sm:$0xf]
    %v1163 = vld [vmem:[#allocation5 + $0xd70] sm:$0xf]
    %v1164 = vld [vmem:[#allocation5 + $0xd74] sm:$0xf]
    %v1165 = vld [vmem:[#allocation5 + $0xd78] sm:$0xf]
    %v1166 = vld [vmem:[#allocation5 + $0xd7c] sm:$0xf]
    %v1167 = vld [vmem:[#allocation5 + $0xd80] sm:$0xf]
    %v1168 = vld [vmem:[#allocation5 + $0xd84] sm:$0xf]
    %v1169 = vld [vmem:[#allocation5 + $0xd88] sm:$0xf]
    %v1170 = vld [vmem:[#allocation5 + $0xd8c] sm:$0xf]
    %v1171 = vld [vmem:[#allocation5 + $0xd90] sm:$0xf]
    %v1172 = vld [vmem:[#allocation5 + $0xd94] sm:$0xf]
    %v1173 = vld [vmem:[#allocation5 + $0xd98] sm:$0xf]
    %v1174 = vld [vmem:[#allocation5 + $0xd9c] sm:$0xf]
    %v1175 = vld [vmem:[#allocation5 + $0xda0] sm:$0xf]
    %v1176 = vld [vmem:[#allocation5 + $0xda4] sm:$0xf]
    %v1177 = vld [vmem:[#allocation5 + $0xda8] sm:$0xf]
    %v1178 = vld [vmem:[#allocation5 + $0xdac] sm:$0xf]
    %v1179 = vld [vmem:[#allocation5 + $0xdb0] sm:$0xf]
    %v1180 = vld [vmem:[#allocation5 + $0xdb4] sm:$0xf]
    %v1181 = vld [vmem:[#allocation5 + $0xdb8] sm:$0xf]
    %v1182 = vld [vmem:[#allocation5 + $0xdbc] sm:$0xf]
    %v1183 = vld [vmem:[#allocation5 + $0xdc0] sm:$0xf]
    %v1184 = vld [vmem:[#allocation5 + $0xdc4] sm:$0xf]
    %v1185 = vld [vmem:[#allocation5 + $0xdc8] sm:$0xf]
    %v1186 = vld [vmem:[#allocation5 + $0xdcc] sm:$0xf]
    %v1187 = vld [vmem:[#allocation5 + $0xdd0] sm:$0xf]
    %v1188 = vld [vmem:[#allocation5 + $0xdd4] sm:$0xf]
    %v1189 = vld [vmem:[#allocation5 + $0xdd8] sm:$0xf]
    %v1190 = vld [vmem:[#allocation5 + $0xddc] sm:$0xf]
    %v1191 = vld [vmem:[#allocation5 + $0xde0] sm:$0xf]
    %v1192 = vld [vmem:[#allocation5 + $0xde4] sm:$0xf]
    %v1193 = vld [vmem:[#allocation5 + $0xde8] sm:$0xf]
    %v1194 = vld [vmem:[#allocation5 + $0xdec] sm:$0xf]
    %v1195 = vld [vmem:[#allocation5 + $0xdf0] sm:$0xf]
    %v1196 = vld [vmem:[#allocation5 + $0xdf4] sm:$0xf]
    %v1197 = vld [vmem:[#allocation5 + $0xdf8] sm:$0xf]
    %v1198 = vld [vmem:[#allocation5 + $0xdfc] sm:$0xf]
    %v1199 = vld [vmem:[#allocation5 + $0xe00] sm:$0xf]
    %v1200 = vld [vmem:[#allocation5 + $0xe04] sm:$0xf]
    %v1201 = vld [vmem:[#allocation5 + $0xe08] sm:$0xf]
    %v1202 = vld [vmem:[#allocation5 + $0xe0c] sm:$0xf]
    %v1203 = vld [vmem:[#allocation5 + $0xe10] sm:$0xf]
    %v1204 = vld [vmem:[#allocation5 + $0xe14] sm:$0xf]
    %v1205 = vld [vmem:[#allocation5 + $0xe18] sm:$0xf]
    %v1206 = vld [vmem:[#allocation5 + $0xe1c] sm:$0xf]
    %v1207 = vld [vmem:[#allocation5 + $0xe20] sm:$0xf]
    %v1208 = vld [vmem:[#allocation5 + $0xe24] sm:$0xf]
    %v1209 = vld [vmem:[#allocation5 + $0xe28] sm:$0xf]
    %v1210 = vld [vmem:[#allocation5 + $0xe2c] sm:$0xf]
    %v1211 = vld [vmem:[#allocation5 + $0xe30] sm:$0xf]
    %v1212 = vld [vmem:[#allocation5 + $0xe34] sm:$0xf]
    %v1213 = vld [vmem:[#allocation5 + $0xe38] sm:$0xf]
    %v1214 = vld [vmem:[#allocation5 + $0xe3c] sm:$0xf]
    %v1215 = vld [vmem:[#allocation5 + $0xe40] sm:$0xf]
    %v1216 = vld [vmem:[#allocation5 + $0xe44] sm:$0xf]
    %v1217 = vld [vmem:[#allocation5 + $0xe48] sm:$0xf]
    %v1218 = vld [vmem:[#allocation5 + $0xe4c] sm:$0xf]
    %v1219 = vld [vmem:[#allocation5 + $0xe50] sm:$0xf]
    %v1220 = vld [vmem:[#allocation5 + $0xe54] sm:$0xf]
    %v1221 = vld [vmem:[#allocation5 + $0xe58] sm:$0xf]
    %v1222 = vld [vmem:[#allocation5 + $0xe5c] sm:$0xf]
    %v1223 = vld [vmem:[#allocation5 + $0xe60] sm:$0xf]
    %v1224 = vld [vmem:[#allocation5 + $0xe64] sm:$0xf]
    %v1225 = vld [vmem:[#allocation5 + $0xe68] sm:$0xf]
    %v1226 = vld [vmem:[#allocation5 + $0xe6c] sm:$0xf]
    %v1227 = vld [vmem:[#allocation5 + $0xe70] sm:$0xf]
    %v1228 = vld [vmem:[#allocation5 + $0xe74] sm:$0xf]
    %v1229 = vld [vmem:[#allocation5 + $0xe78] sm:$0xf]
    %v1230 = vld [vmem:[#allocation5 + $0xe7c] sm:$0xf]
    %v1231 = vld [vmem:[#allocation5 + $0xe80] sm:$0xf]
    %v1232 = vld [vmem:[#allocation5 + $0xe84] sm:$0xf]
    %v1233 = vld [vmem:[#allocation5 + $0xe88] sm:$0xf]
    %v1234 = vld [vmem:[#allocation5 + $0xe8c] sm:$0xf]
    %v1235 = vld [vmem:[#allocation5 + $0xe90] sm:$0xf]
    %v1236 = vld [vmem:[#allocation5 + $0xe94] sm:$0xf]
    %v1237 = vld [vmem:[#allocation5 + $0xe98] sm:$0xf]
    %v1238 = vld [vmem:[#allocation5 + $0xe9c] sm:$0xf]
    %v1239 = vld [vmem:[#allocation5 + $0xea0] sm:$0xf]
    %v1240 = vld [vmem:[#allocation5 + $0xea4] sm:$0xf]
    %v1241 = vld [vmem:[#allocation5 + $0xea8] sm:$0xf]
    %v1242 = vld [vmem:[#allocation5 + $0xeac] sm:$0xf]
    %v1243 = vld [vmem:[#allocation5 + $0xeb0] sm:$0xf]
    %v1244 = vld [vmem:[#allocation5 + $0xeb4] sm:$0xf]
    %v1245 = vld [vmem:[#allocation5 + $0xeb8] sm:$0xf]
    %v1246 = vld [vmem:[#allocation5 + $0xebc] sm:$0xf]
    %v1247 = vld [vmem:[#allocation5 + $0xec0] sm:$0xf]
    %v1248 = vld [vmem:[#allocation5 + $0xec4] sm:$0xf]
    %v1249 = vld [vmem:[#allocation5 + $0xec8] sm:$0xf]
    %v1250 = vld [vmem:[#allocation5 + $0xecc] sm:$0xf]
    %v1251 = vld [vmem:[#allocation5 + $0xed0] sm:$0xf]
    %v1252 = vld [vmem:[#allocation5 + $0xed4] sm:$0xf]
    %v1253 = vld [vmem:[#allocation5 + $0xed8] sm:$0xf]
    %v1254 = vld [vmem:[#allocation5 + $0xedc] sm:$0xf]
    %v1255 = vld [vmem:[#allocation5 + $0xee0] sm:$0xf]
    %v1256 = vld [vmem:[#allocation5 + $0xee4] sm:$0xf]
    %v1257 = vld [vmem:[#allocation5 + $0xee8] sm:$0xf]
    %v1258 = vld [vmem:[#allocation5 + $0xeec] sm:$0xf]
    %v1259 = vld [vmem:[#allocation5 + $0xef0] sm:$0xf]
    %v1260 = vld [vmem:[#allocation5 + $0xef4] sm:$0xf]
    %v1261 = vld [vmem:[#allocation5 + $0xef8] sm:$0xf]
    %v1262 = vld [vmem:[#allocation5 + $0xefc] sm:$0xf]
    %v1263 = vld [vmem:[#allocation5 + $0xf00] sm:$0xf]
    %v1264 = vld [vmem:[#allocation5 + $0xf04] sm:$0xf]
    %v1265 = vld [vmem:[#allocation5 + $0xf08] sm:$0xf]
    %v1266 = vld [vmem:[#allocation5 + $0xf0c] sm:$0xf]
    %v1267 = vld [vmem:[#allocation5 + $0xf10] sm:$0xf]
    %v1268 = vld [vmem:[#allocation5 + $0xf14] sm:$0xf]
    %v1269 = vld [vmem:[#allocation5 + $0xf18] sm:$0xf]
    %v1270 = vld [vmem:[#allocation5 + $0xf1c] sm:$0xf]
    %v1271 = vld [vmem:[#allocation5 + $0xf20] sm:$0xf]
    %v1272 = vld [vmem:[#allocation5 + $0xf24] sm:$0xf]
    %v1273 = vld [vmem:[#allocation5 + $0xf28] sm:$0xf]
    %v1274 = vld [vmem:[#allocation5 + $0xf2c] sm:$0xf]
    %v1275 = vld [vmem:[#allocation5 + $0xf30] sm:$0xf]
    %v1276 = vld [vmem:[#allocation5 + $0xf34] sm:$0xf]
    %v1277 = vld [vmem:[#allocation5 + $0xf38] sm:$0xf]
    %v1278 = vld [vmem:[#allocation5 + $0xf3c] sm:$0xf]
    %v1279 = vld [vmem:[#allocation5 + $0xf40] sm:$0xf]
    %v1280 = vld [vmem:[#allocation5 + $0xf44] sm:$0xf]
    %v1281 = vld [vmem:[#allocation5 + $0xf48] sm:$0xf]
    %v1282 = vld [vmem:[#allocation5 + $0xf4c] sm:$0xf]
    %v1283 = vld [vmem:[#allocation5 + $0xf50] sm:$0xf]
    %v1284 = vld [vmem:[#allocation5 + $0xf54] sm:$0xf]
    %v1285 = vld [vmem:[#allocation5 + $0xf58] sm:$0xf]
    %v1286 = vld [vmem:[#allocation5 + $0xf5c] sm:$0xf]
    %v1287 = vld [vmem:[#allocation5 + $0xf60] sm:$0xf]
    %v1288 = vld [vmem:[#allocation5 + $0xf64] sm:$0xf]
    %v1289 = vld [vmem:[#allocation5 + $0xf68] sm:$0xf]
    %v1290 = vld [vmem:[#allocation5 + $0xf6c] sm:$0xf]
    %v1291 = vld [vmem:[#allocation5 + $0xf70] sm:$0xf]
    %v1292 = vld [vmem:[#allocation5 + $0xf74] sm:$0xf]
    %v1293 = vld [vmem:[#allocation5 + $0xf78] sm:$0xf]
    %v1294 = vld [vmem:[#allocation5 + $0xf7c] sm:$0xf]
    %v1295 = vld [vmem:[#allocation5 + $0xf80] sm:$0xf]
    %v1296 = vld [vmem:[#allocation5 + $0xf84] sm:$0xf]
    %v1297 = vld [vmem:[#allocation5 + $0xf88] sm:$0xf]
    %v1298 = vld [vmem:[#allocation5 + $0xf8c] sm:$0xf]
    %v1299 = vld [vmem:[#allocation5 + $0xf90] sm:$0xf]
    %v1300 = vld [vmem:[#allocation5 + $0xf94] sm:$0xf]
    %v1301 = vld [vmem:[#allocation5 + $0xf98] sm:$0xf]
    %v1302 = vld [vmem:[#allocation5 + $0xf9c] sm:$0xf]
    %v1303 = vld [vmem:[#allocation5 + $0xfa0] sm:$0xf]
    %v1304 = vld [vmem:[#allocation5 + $0xfa4] sm:$0xf]
    %v1305 = vld [vmem:[#allocation5 + $0xfa8] sm:$0xf]
    %v1306 = vld [vmem:[#allocation5 + $0xfac] sm:$0xf]
    %v1307 = vld [vmem:[#allocation5 + $0xfb0] sm:$0xf]
    %v1308 = vld [vmem:[#allocation5 + $0xfb4] sm:$0xf]
    %v1309 = vld [vmem:[#allocation5 + $0xfb8] sm:$0xf]
    %v1310 = vld [vmem:[#allocation5 + $0xfbc] sm:$0xf]
    %v1311 = vld [vmem:[#allocation5 + $0xfc0] sm:$0xf]
    %v1312 = vld [vmem:[#allocation5 + $0xfc4] sm:$0xf]
    %v1313 = vld [vmem:[#allocation5 + $0xfc8] sm:$0xf]
    %v1314 = vld [vmem:[#allocation5 + $0xfcc] sm:$0xf]
    %v1315 = vld [vmem:[#allocation5 + $0xfd0] sm:$0xf]
    %v1316 = vld [vmem:[#allocation5 + $0xfd4] sm:$0xf]
    %v1317 = vld [vmem:[#allocation5 + $0xfd8] sm:$0xf]
    %v1318 = vld [vmem:[#allocation5 + $0xfdc] sm:$0xf]
    %v1319 = vld [vmem:[#allocation5 + $0xfe0] sm:$0xf]
    %v1320 = vld [vmem:[#allocation5 + $0xfe4] sm:$0xf]
    %v1321 = vld [vmem:[#allocation5 + $0xfe8] sm:$0xf]
    %v1322 = vld [vmem:[#allocation5 + $0xfec] sm:$0xf]
    %v1323 = vld [vmem:[#allocation5 + $0xff0] sm:$0xf]
    %v1324 = vld [vmem:[#allocation5 + $0xff4] sm:$0xf]
    %v1325 = vld [vmem:[#allocation5 + $0xff8] sm:$0xf]
    %v1326 = vld [vmem:[#allocation5 + $0xffc] sm:$0xf]
    %v1327 = vld [vmem:[#allocation5 + $0x1000] sm:$0xf]
    %v1328 = vld [vmem:[#allocation5 + $0x1004] sm:$0xf]
    %v1329 = vld [vmem:[#allocation5 + $0x1008] sm:$0xf]
    %v1330 = vld [vmem:[#allocation5 + $0x100c] sm:$0xf]
    %v1331 = vld [vmem:[#allocation5 + $0x1010] sm:$0xf]
    %v1332 = vld [vmem:[#allocation5 + $0x1014] sm:$0xf]
    %v1333 = vld [vmem:[#allocation5 + $0x1018] sm:$0xf]
    %v1334 = vld [vmem:[#allocation5 + $0x101c] sm:$0xf]
    %v1335 = vld [vmem:[#allocation5 + $0x1020] sm:$0xf]
    %v1336 = vld [vmem:[#allocation5 + $0x1024] sm:$0xf]
    %v1337 = vld [vmem:[#allocation5 + $0x1028] sm:$0xf]
    %v1338 = vld [vmem:[#allocation5 + $0x102c] sm:$0xf]
    %v1339 = vld [vmem:[#allocation5 + $0x1030] sm:$0xf]
    %v1340 = vld [vmem:[#allocation5 + $0x1034] sm:$0xf]
    %v1341 = vld [vmem:[#allocation5 + $0x1038] sm:$0xf]
    %v1342 = vld [vmem:[#allocation5 + $0x103c] sm:$0xf]
    %v1343 = vld [vmem:[#allocation5 + $0x1040] sm:$0xf]
    %v1344 = vld [vmem:[#allocation5 + $0x1044] sm:$0xf]
    %v1345 = vld [vmem:[#allocation5 + $0x1048] sm:$0xf]
    %v1346 = vld [vmem:[#allocation5 + $0x104c] sm:$0xf]
    %v1347 = vld [vmem:[#allocation5 + $0x1050] sm:$0xf]
    %v1348 = vld [vmem:[#allocation5 + $0x1054] sm:$0xf]
    %v1349 = vld [vmem:[#allocation5 + $0x1058] sm:$0xf]
    %v1350 = vld [vmem:[#allocation5 + $0x105c] sm:$0xf]
    %v1351 = vld [vmem:[#allocation5 + $0x1060] sm:$0xf]
    %v1352 = vld [vmem:[#allocation5 + $0x1064] sm:$0xf]
    %v1353 = vld [vmem:[#allocation5 + $0x1068] sm:$0xf]
    %v1354 = vld [vmem:[#allocation5 + $0x106c] sm:$0xf]
    %v1355 = vld [vmem:[#allocation5 + $0x1070] sm:$0xf]
    %v1356 = vld [vmem:[#allocation5 + $0x1074] sm:$0xf]
    %v1357 = vld [vmem:[#allocation5 + $0x1078] sm:$0xf]
    %v1358 = vld [vmem:[#allocation5 + $0x107c] sm:$0xf]
    %v1359 = vld [vmem:[#allocation5 + $0x1080] sm:$0xf]
    %v1360 = vld [vmem:[#allocation5 + $0x1084] sm:$0xf]
    %v1361 = vld [vmem:[#allocation5 + $0x1088] sm:$0xf]
    %v1362 = vld [vmem:[#allocation5 + $0x108c] sm:$0xf]
    %v1363 = vld [vmem:[#allocation5 + $0x1090] sm:$0xf]
    %v1364 = vld [vmem:[#allocation5 + $0x1094] sm:$0xf]
    %v1365 = vld [vmem:[#allocation5 + $0x1098] sm:$0xf]
    %v1366 = vld [vmem:[#allocation5 + $0x109c] sm:$0xf]
    %v1367 = vld [vmem:[#allocation5 + $0x10a0] sm:$0xf]
    %v1368 = vld [vmem:[#allocation5 + $0x10a4] sm:$0xf]
    %v1369 = vld [vmem:[#allocation5 + $0x10a8] sm:$0xf]
    %v1370 = vld [vmem:[#allocation5 + $0x10ac] sm:$0xf]
    %v1371 = vld [vmem:[#allocation5 + $0x10b0] sm:$0xf]
    %v1372 = vld [vmem:[#allocation5 + $0x10b4] sm:$0xf]
    %v1373 = vld [vmem:[#allocation5 + $0x10b8] sm:$0xf]
    %v1374 = vld [vmem:[#allocation5 + $0x10bc] sm:$0xf]
    %v1375 = vld [vmem:[#allocation5 + $0x10c0] sm:$0xf]
    %v1376 = vld [vmem:[#allocation5 + $0x10c4] sm:$0xf]
    %v1377 = vld [vmem:[#allocation5 + $0x10c8] sm:$0xf]
    %v1378 = vld [vmem:[#allocation5 + $0x10cc] sm:$0xf]
    %v1379 = vld [vmem:[#allocation5 + $0x10d0] sm:$0xf]
    %v1380 = vld [vmem:[#allocation5 + $0x10d4] sm:$0xf]
    %v1381 = vld [vmem:[#allocation5 + $0x10d8] sm:$0xf]
    %v1382 = vld [vmem:[#allocation5 + $0x10dc] sm:$0xf]
    %v1383 = vld [vmem:[#allocation5 + $0x10e0] sm:$0xf]
    %v1384 = vld [vmem:[#allocation5 + $0x10e4] sm:$0xf]
    %v1385 = vld [vmem:[#allocation5 + $0x10e8] sm:$0xf]
    %v1386 = vld [vmem:[#allocation5 + $0x10ec] sm:$0xf]
    %v1387 = vld [vmem:[#allocation5 + $0x10f0] sm:$0xf]
    %v1388 = vld [vmem:[#allocation5 + $0x10f4] sm:$0xf]
    %v1389 = vld [vmem:[#allocation5 + $0x10f8] sm:$0xf]
    %v1390 = vld [vmem:[#allocation5 + $0x10fc] sm:$0xf]
    %v1391 = vld [vmem:[#allocation5 + $0x1100] sm:$0xf]
    %v1392 = vld [vmem:[#allocation5 + $0x1104] sm:$0xf]
    %v1393 = vld [vmem:[#allocation5 + $0x1108] sm:$0xf]
    %v1394 = vld [vmem:[#allocation5 + $0x110c] sm:$0xf]
    %v1395 = vld [vmem:[#allocation5 + $0x1110] sm:$0xf]
    %v1396 = vld [vmem:[#allocation5 + $0x1114] sm:$0xf]
    %v1397 = vld [vmem:[#allocation5 + $0x1118] sm:$0xf]
    %v1398 = vld [vmem:[#allocation5 + $0x111c] sm:$0xf]
    %v1399 = vld [vmem:[#allocation5 + $0x1120] sm:$0xf]
    %v1400 = vld [vmem:[#allocation5 + $0x1124] sm:$0xf]
    %v1401 = vld [vmem:[#allocation5 + $0x1128] sm:$0xf]
    %v1402 = vld [vmem:[#allocation5 + $0x112c] sm:$0xf]
    %v1403 = vld [vmem:[#allocation5 + $0x1130] sm:$0xf]
    %v1404 = vld [vmem:[#allocation5 + $0x1134] sm:$0xf]
    %v1405 = vld [vmem:[#allocation5 + $0x1138] sm:$0xf]
    %v1406 = vld [vmem:[#allocation5 + $0x113c] sm:$0xf]
    %v1407 = vld [vmem:[#allocation5 + $0x1140] sm:$0xf]
    %v1408 = vld [vmem:[#allocation5 + $0x1144] sm:$0xf]
    %v1409 = vld [vmem:[#allocation5 + $0x1148] sm:$0xf]
    %v1410 = vld [vmem:[#allocation5 + $0x114c] sm:$0xf]
    %v1411 = vld [vmem:[#allocation5 + $0x1150] sm:$0xf]
    %v1412 = vld [vmem:[#allocation5 + $0x1154] sm:$0xf]
    %v1413 = vld [vmem:[#allocation5 + $0x1158] sm:$0xf]
    %v1414 = vld [vmem:[#allocation5 + $0x115c] sm:$0xf]
    %v1415 = vld [vmem:[#allocation5 + $0x1160] sm:$0xf]
    %v1416 = vld [vmem:[#allocation5 + $0x1164] sm:$0xf]
    %v1417 = vld [vmem:[#allocation5 + $0x1168] sm:$0xf]
    %v1418 = vld [vmem:[#allocation5 + $0x116c] sm:$0xf]
    %v1419 = vld [vmem:[#allocation5 + $0x1170] sm:$0xf]
    %v1420 = vld [vmem:[#allocation5 + $0x1174] sm:$0xf]
    %v1421 = vld [vmem:[#allocation5 + $0x1178] sm:$0xf]
    %v1422 = vld [vmem:[#allocation5 + $0x117c] sm:$0xf]
    %v1423 = vld [vmem:[#allocation5 + $0x1180] sm:$0xf]
    %v1424 = vld [vmem:[#allocation5 + $0x1184] sm:$0xf]
    %v1425 = vld [vmem:[#allocation5 + $0x1188] sm:$0xf]
    %v1426 = vld [vmem:[#allocation5 + $0x118c] sm:$0xf]
    %v1427 = vld [vmem:[#allocation5 + $0x1190] sm:$0xf]
    %v1428 = vld [vmem:[#allocation5 + $0x1194] sm:$0xf]
    %v1429 = vld [vmem:[#allocation5 + $0x1198] sm:$0xf]
    %v1430 = vld [vmem:[#allocation5 + $0x119c] sm:$0xf]
    %v1431 = vld [vmem:[#allocation5 + $0x11a0] sm:$0xf]
    %v1432 = vld [vmem:[#allocation5 + $0x11a4] sm:$0xf]
    %v1433 = vld [vmem:[#allocation5 + $0x11a8] sm:$0xf]
    %v1434 = vld [vmem:[#allocation5 + $0x11ac] sm:$0xf]
    %v1435 = vld [vmem:[#allocation5 + $0x11b0] sm:$0xf]
    %v1436 = vld [vmem:[#allocation5 + $0x11b4] sm:$0xf]
    %v1437 = vld [vmem:[#allocation5 + $0x11b8] sm:$0xf]
    %v1438 = vld [vmem:[#allocation5 + $0x11bc] sm:$0xf]
    %v1439 = vld [vmem:[#allocation5 + $0x11c0] sm:$0xf]
    %v1440 = vld [vmem:[#allocation5 + $0x11c4] sm:$0xf]
    %v1441 = vld [vmem:[#allocation5 + $0x11c8] sm:$0xf]
    %v1442 = vld [vmem:[#allocation5 + $0x11cc] sm:$0xf]
    %v1443 = vld [vmem:[#allocation5 + $0x11d0] sm:$0xf]
    %v1444 = vld [vmem:[#allocation5 + $0x11d4] sm:$0xf]
    %v1445 = vld [vmem:[#allocation5 + $0x11d8] sm:$0xf]
    %v1446 = vld [vmem:[#allocation5 + $0x11dc] sm:$0xf]
    %v1447 = vld [vmem:[#allocation5 + $0x11e0] sm:$0xf]
    %v1448 = vld [vmem:[#allocation5 + $0x11e4] sm:$0xf]
    %v1449 = vld [vmem:[#allocation5 + $0x11e8] sm:$0xf]
    %v1450 = vld [vmem:[#allocation5 + $0x11ec] sm:$0xf]
    %v1451 = vld [vmem:[#allocation5 + $0x11f0] sm:$0xf]
    %v1452 = vld [vmem:[#allocation5 + $0x11f4] sm:$0xf]
    %v1453 = vld [vmem:[#allocation5 + $0x11f8] sm:$0xf]
    %v1454 = vld [vmem:[#allocation5 + $0x11fc] sm:$0xf]
    %v1455 = vld [vmem:[#allocation5 + $0x1200] sm:$0xf]
    %v1456 = vld [vmem:[#allocation5 + $0x1204] sm:$0xf]
    %v1457 = vld [vmem:[#allocation5 + $0x1208] sm:$0xf]
    %v1458 = vld [vmem:[#allocation5 + $0x120c] sm:$0xf]
    %v1459 = vld [vmem:[#allocation5 + $0x1210] sm:$0xf]
    %v1460 = vld [vmem:[#allocation5 + $0x1214] sm:$0xf]
    %v1461 = vld [vmem:[#allocation5 + $0x1218] sm:$0xf]
    %v1462 = vld [vmem:[#allocation5 + $0x121c] sm:$0xf]
    %v1463 = vld [vmem:[#allocation5 + $0x1220] sm:$0xf]
    %v1464 = vld [vmem:[#allocation5 + $0x1224] sm:$0xf]
    %v1465 = vld [vmem:[#allocation5 + $0x1228] sm:$0xf]
    %v1466 = vld [vmem:[#allocation5 + $0x122c] sm:$0xf]
    %v1467 = vld [vmem:[#allocation5 + $0x1230] sm:$0xf]
    %v1468 = vld [vmem:[#allocation5 + $0x1234] sm:$0xf]
    %v1469 = vld [vmem:[#allocation5 + $0x1238] sm:$0xf]
    %v1470 = vld [vmem:[#allocation5 + $0x123c] sm:$0xf]
    %v1471 = vld [vmem:[#allocation5 + $0x1240] sm:$0xf]
    %v1472 = vld [vmem:[#allocation5 + $0x1244] sm:$0xf]
    %v1473 = vld [vmem:[#allocation5 + $0x1248] sm:$0xf]
    %v1474 = vld [vmem:[#allocation5 + $0x124c] sm:$0xf]
    %v1475 = vld [vmem:[#allocation5 + $0x1250] sm:$0xf]
    %v1476 = vld [vmem:[#allocation5 + $0x1254] sm:$0xf]
    %v1477 = vld [vmem:[#allocation5 + $0x1258] sm:$0xf]
    %v1478 = vld [vmem:[#allocation5 + $0x125c] sm:$0xf]
    %v1479 = vld [vmem:[#allocation5 + $0x1260] sm:$0xf]
    %v1480 = vld [vmem:[#allocation5 + $0x1264] sm:$0xf]
    %v1481 = vld [vmem:[#allocation5 + $0x1268] sm:$0xf]
    %v1482 = vld [vmem:[#allocation5 + $0x126c] sm:$0xf]
    %v1483 = vld [vmem:[#allocation5 + $0x1270] sm:$0xf]
    %v1484 = vld [vmem:[#allocation5 + $0x1274] sm:$0xf]
    %v1485 = vld [vmem:[#allocation5 + $0x1278] sm:$0xf]
    %v1486 = vld [vmem:[#allocation5 + $0x127c] sm:$0xf]
    %v1487 = vld [vmem:[#allocation5 + $0x1280] sm:$0xf]
    %v1488 = vld [vmem:[#allocation5 + $0x1284] sm:$0xf]
    %v1489 = vld [vmem:[#allocation5 + $0x1288] sm:$0xf]
    %v1490 = vld [vmem:[#allocation5 + $0x128c] sm:$0xf]
    %v1491 = vld [vmem:[#allocation5 + $0x1290] sm:$0xf]
    %v1492 = vld [vmem:[#allocation5 + $0x1294] sm:$0xf]
    %v1493 = vld [vmem:[#allocation5 + $0x1298] sm:$0xf]
    %v1494 = vld [vmem:[#allocation5 + $0x129c] sm:$0xf]
    %v1495 = vld [vmem:[#allocation5 + $0x12a0] sm:$0xf]
    %v1496 = vld [vmem:[#allocation5 + $0x12a4] sm:$0xf]
    %v1497 = vld [vmem:[#allocation5 + $0x12a8] sm:$0xf]
    %v1498 = vld [vmem:[#allocation5 + $0x12ac] sm:$0xf]
    %v1499 = vld [vmem:[#allocation5 + $0x12b0] sm:$0xf]
    %v1500 = vld [vmem:[#allocation5 + $0x12b4] sm:$0xf]
    %v1501 = vld [vmem:[#allocation5 + $0x12b8] sm:$0xf]
    %v1502 = vld [vmem:[#allocation5 + $0x12bc] sm:$0xf]
    %v1503 = vld [vmem:[#allocation5 + $0x12c0] sm:$0xf]
    %v1504 = vld [vmem:[#allocation5 + $0x12c4] sm:$0xf]
    %v1505 = vld [vmem:[#allocation5 + $0x12c8] sm:$0xf]
    %v1506 = vld [vmem:[#allocation5 + $0x12cc] sm:$0xf]
    %v1507 = vld [vmem:[#allocation5 + $0x12d0] sm:$0xf]
    %v1508 = vld [vmem:[#allocation5 + $0x12d4] sm:$0xf]
    %v1509 = vld [vmem:[#allocation5 + $0x12d8] sm:$0xf]
    %v1510 = vld [vmem:[#allocation5 + $0x12dc] sm:$0xf]
    %v1511 = vld [vmem:[#allocation5 + $0x12e0] sm:$0xf]
    %v1512 = vld [vmem:[#allocation5 + $0x12e4] sm:$0xf]
    %v1513 = vld [vmem:[#allocation5 + $0x12e8] sm:$0xf]
    %v1514 = vld [vmem:[#allocation5 + $0x12ec] sm:$0xf]
    %v1515 = vld [vmem:[#allocation5 + $0x12f0] sm:$0xf]
    %v1516 = vld [vmem:[#allocation5 + $0x12f4] sm:$0xf]
    %v1517 = vld [vmem:[#allocation5 + $0x12f8] sm:$0xf]
    %v1518 = vld [vmem:[#allocation5 + $0x12fc] sm:$0xf]
    %v1519 = vld [vmem:[#allocation5 + $0x1300] sm:$0xf]
    %v1520 = vld [vmem:[#allocation5 + $0x1304] sm:$0xf]
    %v1521 = vld [vmem:[#allocation5 + $0x1308] sm:$0xf]
    %v1522 = vld [vmem:[#allocation5 + $0x130c] sm:$0xf]
    %v1523 = vld [vmem:[#allocation5 + $0x1310] sm:$0xf]
    %v1524 = vld [vmem:[#allocation5 + $0x1314] sm:$0xf]
    %v1525 = vld [vmem:[#allocation5 + $0x1318] sm:$0xf]
    %v1526 = vld [vmem:[#allocation5 + $0x131c] sm:$0xf]
    %v1527 = vld [vmem:[#allocation5 + $0x1320] sm:$0xf]
    %v1528 = vld [vmem:[#allocation5 + $0x1324] sm:$0xf]
    %v1529 = vld [vmem:[#allocation5 + $0x1328] sm:$0xf]
    %v1530 = vld [vmem:[#allocation5 + $0x132c] sm:$0xf]
    %v1531 = vld [vmem:[#allocation5 + $0x1330] sm:$0xf]
    %v1532 = vld [vmem:[#allocation5 + $0x1334] sm:$0xf]
    %v1533 = vld [vmem:[#allocation5 + $0x1338] sm:$0xf]
    %v1534 = vld [vmem:[#allocation5 + $0x133c] sm:$0xf]
    %v1535 = vld [vmem:[#allocation5 + $0x1340] sm:$0xf]
    %v1536 = vld [vmem:[#allocation5 + $0x1344] sm:$0xf]
    %v1537 = vld [vmem:[#allocation5 + $0x1348] sm:$0xf]
    %v1538 = vld [vmem:[#allocation5 + $0x134c] sm:$0xf]
    %v1539 = vld [vmem:[#allocation5 + $0x1350] sm:$0xf]
    %v1540 = vld [vmem:[#allocation5 + $0x1354] sm:$0xf]
    %v1541 = vld [vmem:[#allocation5 + $0x1358] sm:$0xf]
    %v1542 = vld [vmem:[#allocation5 + $0x135c] sm:$0xf]
    %v1543 = vld [vmem:[#allocation5 + $0x1360] sm:$0xf]
    %v1544 = vld [vmem:[#allocation5 + $0x1364] sm:$0xf]
    %v1545 = vld [vmem:[#allocation5 + $0x1368] sm:$0xf]
    %v1546 = vld [vmem:[#allocation5 + $0x136c] sm:$0xf]
    %v1547 = vld [vmem:[#allocation5 + $0x1370] sm:$0xf]
    %v1548 = vld [vmem:[#allocation5 + $0x1374] sm:$0xf]
    %v1549 = vld [vmem:[#allocation5 + $0x1378] sm:$0xf]
    %v1550 = vld [vmem:[#allocation5 + $0x137c] sm:$0xf]
    %v1551 = vld [vmem:[#allocation5 + $0x1380] sm:$0xf]
    %v1552 = vld [vmem:[#allocation5 + $0x1384] sm:$0xf]
    %v1553 = vld [vmem:[#allocation5 + $0x1388] sm:$0xf]
    %v1554 = vld [vmem:[#allocation5 + $0x138c] sm:$0xf]
    %v1555 = vld [vmem:[#allocation5 + $0x1390] sm:$0xf]
    %v1556 = vld [vmem:[#allocation5 + $0x1394] sm:$0xf]
    %v1557 = vld [vmem:[#allocation5 + $0x1398] sm:$0xf]
    %v1558 = vld [vmem:[#allocation5 + $0x139c] sm:$0xf]
    %v1559 = vld [vmem:[#allocation5 + $0x13a0] sm:$0xf]
    %v1560 = vld [vmem:[#allocation5 + $0x13a4] sm:$0xf]
    %v1561 = vld [vmem:[#allocation5 + $0x13a8] sm:$0xf]
    %v1562 = vld [vmem:[#allocation5 + $0x13ac] sm:$0xf]
    %v1563 = vld [vmem:[#allocation5 + $0x13b0] sm:$0xf]
    %v1564 = vld [vmem:[#allocation5 + $0x13b4] sm:$0xf]
    %v1565 = vld [vmem:[#allocation5 + $0x13b8] sm:$0xf]
    %v1566 = vld [vmem:[#allocation5 + $0x13bc] sm:$0xf]
    %v1567 = vld [vmem:[#allocation5 + $0x13c0] sm:$0xf]
    %v1568 = vld [vmem:[#allocation5 + $0x13c4] sm:$0xf]
    %v1569 = vld [vmem:[#allocation5 + $0x13c8] sm:$0xf]
    %v1570 = vld [vmem:[#allocation5 + $0x13cc] sm:$0xf]
    %v1571 = vld [vmem:[#allocation5 + $0x13d0] sm:$0xf]
    %v1572 = vld [vmem:[#allocation5 + $0x13d4] sm:$0xf]
    %v1573 = vld [vmem:[#allocation5 + $0x13d8] sm:$0xf]
    %v1574 = vld [vmem:[#allocation5 + $0x13dc] sm:$0xf]
    %v1575 = vld [vmem:[#allocation5 + $0x13e0] sm:$0xf]
    %v1576 = vld [vmem:[#allocation5 + $0x13e4] sm:$0xf]
    %v1577 = vld [vmem:[#allocation5 + $0x13e8] sm:$0xf]
    %v1578 = vld [vmem:[#allocation5 + $0x13ec] sm:$0xf]
    %v1579 = vld [vmem:[#allocation5 + $0x13f0] sm:$0xf]
    %v1580 = vld [vmem:[#allocation5 + $0x13f4] sm:$0xf]
    %v1581 = vld [vmem:[#allocation5 + $0x13f8] sm:$0xf]
    %v1582 = vld [vmem:[#allocation5 + $0x13fc] sm:$0xf]
    %v1583 = vld [vmem:[#allocation5 + $0x1400] sm:$0xf]
    %v1584 = vld [vmem:[#allocation5 + $0x1404] sm:$0xf]
    %v1585 = vld [vmem:[#allocation5 + $0x1408] sm:$0xf]
    %v1586 = vld [vmem:[#allocation5 + $0x140c] sm:$0xf]
    %v1587 = vld [vmem:[#allocation5 + $0x1410] sm:$0xf]
    %v1588 = vld [vmem:[#allocation5 + $0x1414] sm:$0xf]
    %v1589 = vld [vmem:[#allocation5 + $0x1418] sm:$0xf]
    %v1590 = vld [vmem:[#allocation5 + $0x141c] sm:$0xf]
    %v1591 = vld [vmem:[#allocation5 + $0x1420] sm:$0xf]
    %v1592 = vld [vmem:[#allocation5 + $0x1424] sm:$0xf]
    %v1593 = vld [vmem:[#allocation5 + $0x1428] sm:$0xf]
    %v1594 = vld [vmem:[#allocation5 + $0x142c] sm:$0xf]
    %v1595 = vld [vmem:[#allocation5 + $0x1430] sm:$0xf]
    %v1596 = vld [vmem:[#allocation5 + $0x1434] sm:$0xf]
    %v1597 = vld [vmem:[#allocation5 + $0x1438] sm:$0xf]
    %v1598 = vld [vmem:[#allocation5 + $0x143c] sm:$0xf]
    %v1599 = vld [vmem:[#allocation5 + $0x1440] sm:$0xf]
    %v1600 = vld [vmem:[#allocation5 + $0x1444] sm:$0xf]
    %v1601 = vld [vmem:[#allocation5 + $0x1448] sm:$0xf]
    %v1602 = vld [vmem:[#allocation5 + $0x144c] sm:$0xf]
    %v1603 = vld [vmem:[#allocation5 + $0x1450] sm:$0xf]
    %v1604 = vld [vmem:[#allocation5 + $0x1454] sm:$0xf]
    %v1605 = vld [vmem:[#allocation5 + $0x1458] sm:$0xf]
    %v1606 = vld [vmem:[#allocation5 + $0x145c] sm:$0xf]
    %v1607 = vld [vmem:[#allocation5 + $0x1460] sm:$0xf]
    %v1608 = vld [vmem:[#allocation5 + $0x1464] sm:$0xf]
    %v1609 = vld [vmem:[#allocation5 + $0x1468] sm:$0xf]
    %v1610 = vld [vmem:[#allocation5 + $0x146c] sm:$0xf]
    %v1611 = vld [vmem:[#allocation5 + $0x1470] sm:$0xf]
    %v1612 = vld [vmem:[#allocation5 + $0x1474] sm:$0xf]
    %v1613 = vld [vmem:[#allocation5 + $0x1478] sm:$0xf]
    %v1614 = vld [vmem:[#allocation5 + $0x147c] sm:$0xf]
    %v1615 = vld [vmem:[#allocation5 + $0x1480] sm:$0xf]
    %v1616 = vld [vmem:[#allocation5 + $0x1484] sm:$0xf]
    %v1617 = vld [vmem:[#allocation5 + $0x1488] sm:$0xf]
    %v1618 = vld [vmem:[#allocation5 + $0x148c] sm:$0xf]
    %v1619 = vld [vmem:[#allocation5 + $0x1490] sm:$0xf]
    %v1620 = vld [vmem:[#allocation5 + $0x1494] sm:$0xf]
    %v1621 = vld [vmem:[#allocation5 + $0x1498] sm:$0xf]
    %v1622 = vld [vmem:[#allocation5 + $0x149c] sm:$0xf]
    %v1623 = vld [vmem:[#allocation5 + $0x14a0] sm:$0xf]
    %v1624 = vld [vmem:[#allocation5 + $0x14a4] sm:$0xf]
    %v1625 = vld [vmem:[#allocation5 + $0x14a8] sm:$0xf]
    %v1626 = vld [vmem:[#allocation5 + $0x14ac] sm:$0xf]
    %v1627 = vld [vmem:[#allocation5 + $0x14b0] sm:$0xf]
    %v1628 = vld [vmem:[#allocation5 + $0x14b4] sm:$0xf]
    %v1629 = vld [vmem:[#allocation5 + $0x14b8] sm:$0xf]
    %v1630 = vld [vmem:[#allocation5 + $0x14bc] sm:$0xf]
    %v1631 = vld [vmem:[#allocation5 + $0x14c0] sm:$0xf]
    %v1632 = vld [vmem:[#allocation5 + $0x14c4] sm:$0xf]
    %v1633 = vld [vmem:[#allocation5 + $0x14c8] sm:$0xf]
    %v1634 = vld [vmem:[#allocation5 + $0x14cc] sm:$0xf]
    %v1635 = vld [vmem:[#allocation5 + $0x14d0] sm:$0xf]
    %v1636 = vld [vmem:[#allocation5 + $0x14d4] sm:$0xf]
    %v1637 = vld [vmem:[#allocation5 + $0x14d8] sm:$0xf]
    %v1638 = vld [vmem:[#allocation5 + $0x14dc] sm:$0xf]
    %v1639 = vld [vmem:[#allocation5 + $0x14e0] sm:$0xf]
    %v1640 = vld [vmem:[#allocation5 + $0x14e4] sm:$0xf]
    %v1641 = vld [vmem:[#allocation5 + $0x14e8] sm:$0xf]
    %v1642 = vld [vmem:[#allocation5 + $0x14ec] sm:$0xf]
    %v1643 = vld [vmem:[#allocation5 + $0x14f0] sm:$0xf]
    %v1644 = vld [vmem:[#allocation5 + $0x14f4] sm:$0xf]
    %v1645 = vld [vmem:[#allocation5 + $0x14f8] sm:$0xf]
    %v1646 = vld [vmem:[#allocation5 + $0x14fc] sm:$0xf]
    %v1647 = vld [vmem:[#allocation5 + $0x1500] sm:$0xf]
    %v1648 = vld [vmem:[#allocation5 + $0x1504] sm:$0xf]
    %v1649 = vld [vmem:[#allocation5 + $0x1508] sm:$0xf]
    %v1650 = vld [vmem:[#allocation5 + $0x150c] sm:$0xf]
    %v1651 = vld [vmem:[#allocation5 + $0x1510] sm:$0xf]
    %v1652 = vld [vmem:[#allocation5 + $0x1514] sm:$0xf]
    %v1653 = vld [vmem:[#allocation5 + $0x1518] sm:$0xf]
    %v1654 = vld [vmem:[#allocation5 + $0x151c] sm:$0xf]
    %v1655 = vld [vmem:[#allocation5 + $0x1520] sm:$0xf]
    %v1656 = vld [vmem:[#allocation5 + $0x1524] sm:$0xf]
    %v1657 = vld [vmem:[#allocation5 + $0x1528] sm:$0xf]
    %v1658 = vld [vmem:[#allocation5 + $0x152c] sm:$0xf]
    %v1659 = vld [vmem:[#allocation5 + $0x1530] sm:$0xf]
    %v1660 = vld [vmem:[#allocation5 + $0x1534] sm:$0xf]
    %v1661 = vld [vmem:[#allocation5 + $0x1538] sm:$0xf]
    %v1662 = vld [vmem:[#allocation5 + $0x153c] sm:$0xf]
    %v1663 = vld [vmem:[#allocation5 + $0x1540] sm:$0xf]
    %v1664 = vld [vmem:[#allocation5 + $0x1544] sm:$0xf]
    %v1665 = vld [vmem:[#allocation5 + $0x1548] sm:$0xf]
    %v1666 = vld [vmem:[#allocation5 + $0x154c] sm:$0xf]
    %v1667 = vld [vmem:[#allocation5 + $0x1550] sm:$0xf]
    %v1668 = vld [vmem:[#allocation5 + $0x1554] sm:$0xf]
    %v1669 = vld [vmem:[#allocation5 + $0x1558] sm:$0xf]
    %v1670 = vld [vmem:[#allocation5 + $0x155c] sm:$0xf]
    %v1671 = vld [vmem:[#allocation5 + $0x1560] sm:$0xf]
    %v1672 = vld [vmem:[#allocation5 + $0x1564] sm:$0xf]
    %v1673 = vld [vmem:[#allocation5 + $0x1568] sm:$0xf]
    %v1674 = vld [vmem:[#allocation5 + $0x156c] sm:$0xf]
    %v1675 = vld [vmem:[#allocation5 + $0x1570] sm:$0xf]
    %v1676 = vld [vmem:[#allocation5 + $0x1574] sm:$0xf]
    %v1677 = vld [vmem:[#allocation5 + $0x1578] sm:$0xf]
    %v1678 = vld [vmem:[#allocation5 + $0x157c] sm:$0xf]
    %v1679 = vld [vmem:[#allocation5 + $0x1580] sm:$0xf]
    %v1680 = vld [vmem:[#allocation5 + $0x1584] sm:$0xf]
    %v1681 = vld [vmem:[#allocation5 + $0x1588] sm:$0xf]
    %v1682 = vld [vmem:[#allocation5 + $0x158c] sm:$0xf]
    %v1683 = vld [vmem:[#allocation5 + $0x1590] sm:$0xf]
    %v1684 = vld [vmem:[#allocation5 + $0x1594] sm:$0xf]
    %v1685 = vld [vmem:[#allocation5 + $0x1598] sm:$0xf]
    %v1686 = vld [vmem:[#allocation5 + $0x159c] sm:$0xf]
    %v1687 = vld [vmem:[#allocation5 + $0x15a0] sm:$0xf]
    %v1688 = vld [vmem:[#allocation5 + $0x15a4] sm:$0xf]
    %v1689 = vld [vmem:[#allocation5 + $0x15a8] sm:$0xf]
    %v1690 = vld [vmem:[#allocation5 + $0x15ac] sm:$0xf]
    %v1691 = vld [vmem:[#allocation5 + $0x15b0] sm:$0xf]
    %v1692 = vld [vmem:[#allocation5 + $0x15b4] sm:$0xf]
    %v1693 = vld [vmem:[#allocation5 + $0x15b8] sm:$0xf]
    %v1694 = vld [vmem:[#allocation5 + $0x15bc] sm:$0xf]
    %v1695 = vld [vmem:[#allocation5 + $0x15c0] sm:$0xf]
    %v1696 = vld [vmem:[#allocation5 + $0x15c4] sm:$0xf]
    %v1697 = vld [vmem:[#allocation5 + $0x15c8] sm:$0xf]
    %v1698 = vld [vmem:[#allocation5 + $0x15cc] sm:$0xf]
    %v1699 = vld [vmem:[#allocation5 + $0x15d0] sm:$0xf]
    %v1700 = vld [vmem:[#allocation5 + $0x15d4] sm:$0xf]
    %v1701 = vld [vmem:[#allocation5 + $0x15d8] sm:$0xf]
    %v1702 = vld [vmem:[#allocation5 + $0x15dc] sm:$0xf]
    %v1703 = vld [vmem:[#allocation5 + $0x15e0] sm:$0xf]
    %v1704 = vld [vmem:[#allocation5 + $0x15e4] sm:$0xf]
    %v1705 = vld [vmem:[#allocation5 + $0x15e8] sm:$0xf]
    %v1706 = vld [vmem:[#allocation5 + $0x15ec] sm:$0xf]
    %v1707 = vld [vmem:[#allocation5 + $0x15f0] sm:$0xf]
    %v1708 = vld [vmem:[#allocation5 + $0x15f4] sm:$0xf]
    %v1709 = vld [vmem:[#allocation5 + $0x15f8] sm:$0xf]
    %v1710 = vld [vmem:[#allocation5 + $0x15fc] sm:$0xf]
    %v1711 = vld [vmem:[#allocation5 + $0x1600] sm:$0xf]
    %v1712 = vld [vmem:[#allocation5 + $0x1604] sm:$0xf]
    %v1713 = vld [vmem:[#allocation5 + $0x1608] sm:$0xf]
    %v1714 = vld [vmem:[#allocation5 + $0x160c] sm:$0xf]
    %v1715 = vld [vmem:[#allocation5 + $0x1610] sm:$0xf]
    %v1716 = vld [vmem:[#allocation5 + $0x1614] sm:$0xf]
    %v1717 = vld [vmem:[#allocation5 + $0x1618] sm:$0xf]
    %v1718 = vld [vmem:[#allocation5 + $0x161c] sm:$0xf]
    %v1719 = vld [vmem:[#allocation5 + $0x1620] sm:$0xf]
    %v1720 = vld [vmem:[#allocation5 + $0x1624] sm:$0xf]
    %v1721 = vld [vmem:[#allocation5 + $0x1628] sm:$0xf]
    %v1722 = vld [vmem:[#allocation5 + $0x162c] sm:$0xf]
    %v1723 = vld [vmem:[#allocation5 + $0x1630] sm:$0xf]
    %v1724 = vld [vmem:[#allocation5 + $0x1634] sm:$0xf]
    %v1725 = vld [vmem:[#allocation5 + $0x1638] sm:$0xf]
    %v1726 = vld [vmem:[#allocation5 + $0x163c] sm:$0xf]
    %v1727 = vld [vmem:[#allocation5 + $0x1640] sm:$0xf]
    %v1728 = vld [vmem:[#allocation5 + $0x1644] sm:$0xf]
    %v1729 = vld [vmem:[#allocation5 + $0x1648] sm:$0xf]
    %v1730 = vld [vmem:[#allocation5 + $0x164c] sm:$0xf]
    %v1731 = vld [vmem:[#allocation5 + $0x1650] sm:$0xf]
    %v1732 = vld [vmem:[#allocation5 + $0x1654] sm:$0xf]
    %v1733 = vld [vmem:[#allocation5 + $0x1658] sm:$0xf]
    %v1734 = vld [vmem:[#allocation5 + $0x165c] sm:$0xf]
    %v1735 = vld [vmem:[#allocation5 + $0x1660] sm:$0xf]
    %v1736 = vld [vmem:[#allocation5 + $0x1664] sm:$0xf]
    %v1737 = vld [vmem:[#allocation5 + $0x1668] sm:$0xf]
    %v1738 = vld [vmem:[#allocation5 + $0x166c] sm:$0xf]
    %v1739 = vld [vmem:[#allocation5 + $0x1670] sm:$0xf]
    %v1740 = vld [vmem:[#allocation5 + $0x1674] sm:$0xf]
    %v1741 = vld [vmem:[#allocation5 + $0x1678] sm:$0xf]
    %v1742 = vld [vmem:[#allocation5 + $0x167c] sm:$0xf]
    %v1743 = vld [vmem:[#allocation5 + $0x1680] sm:$0xf]
    %v1744 = vld [vmem:[#allocation5 + $0x1684] sm:$0xf]
    %v1745 = vld [vmem:[#allocation5 + $0x1688] sm:$0xf]
    %v1746 = vld [vmem:[#allocation5 + $0x168c] sm:$0xf]
    %v1747 = vld [vmem:[#allocation5 + $0x1690] sm:$0xf]
    %v1748 = vld [vmem:[#allocation5 + $0x1694] sm:$0xf]
    %v1749 = vld [vmem:[#allocation5 + $0x1698] sm:$0xf]
    %v1750 = vld [vmem:[#allocation5 + $0x169c] sm:$0xf]
    %v1751 = vld [vmem:[#allocation5 + $0x16a0] sm:$0xf]
    %v1752 = vld [vmem:[#allocation5 + $0x16a4] sm:$0xf]
    %v1753 = vld [vmem:[#allocation5 + $0x16a8] sm:$0xf]
    %v1754 = vld [vmem:[#allocation5 + $0x16ac] sm:$0xf]
    %v1755 = vld [vmem:[#allocation5 + $0x16b0] sm:$0xf]
    %v1756 = vld [vmem:[#allocation5 + $0x16b4] sm:$0xf]
    %v1757 = vld [vmem:[#allocation5 + $0x16b8] sm:$0xf]
    %v1758 = vld [vmem:[#allocation5 + $0x16bc] sm:$0xf]
    %v1759 = vld [vmem:[#allocation5 + $0x16c0] sm:$0xf]
    %v1760 = vld [vmem:[#allocation5 + $0x16c4] sm:$0xf]
    %v1761 = vld [vmem:[#allocation5 + $0x16c8] sm:$0xf]
    %v1762 = vld [vmem:[#allocation5 + $0x16cc] sm:$0xf]
    %v1763 = vld [vmem:[#allocation5 + $0x16d0] sm:$0xf]
    %v1764 = vld [vmem:[#allocation5 + $0x16d4] sm:$0xf]
    %v1765 = vld [vmem:[#allocation5 + $0x16d8] sm:$0xf]
    %v1766 = vld [vmem:[#allocation5 + $0x16dc] sm:$0xf]
    %v1767 = vld [vmem:[#allocation5 + $0x16e0] sm:$0xf]
    %v1768 = vld [vmem:[#allocation5 + $0x16e4] sm:$0xf]
    %v1769 = vld [vmem:[#allocation5 + $0x16e8] sm:$0xf]
    %v1770 = vld [vmem:[#allocation5 + $0x16ec] sm:$0xf]
    %v1771 = vld [vmem:[#allocation5 + $0x16f0] sm:$0xf]
    %v1772 = vld [vmem:[#allocation5 + $0x16f4] sm:$0xf]
    %v1773 = vld [vmem:[#allocation5 + $0x16f8] sm:$0xf]
    %v1774 = vld [vmem:[#allocation5 + $0x16fc] sm:$0xf]
    %v1775 = vld [vmem:[#allocation5 + $0x1700] sm:$0xf]
    %v1776 = vld [vmem:[#allocation5 + $0x1704] sm:$0xf]
    %v1777 = vld [vmem:[#allocation5 + $0x1708] sm:$0xf]
    %v1778 = vld [vmem:[#allocation5 + $0x170c] sm:$0xf]
    %v1779 = vld [vmem:[#allocation5 + $0x1710] sm:$0xf]
    %v1780 = vld [vmem:[#allocation5 + $0x1714] sm:$0xf]
    %v1781 = vld [vmem:[#allocation5 + $0x1718] sm:$0xf]
    %v1782 = vld [vmem:[#allocation5 + $0x171c] sm:$0xf]
    %v1783 = vld [vmem:[#allocation5 + $0x1720] sm:$0xf]
    %v1784 = vld [vmem:[#allocation5 + $0x1724] sm:$0xf]
    %v1785 = vld [vmem:[#allocation5 + $0x1728] sm:$0xf]
    %v1786 = vld [vmem:[#allocation5 + $0x172c] sm:$0xf]
    %v1787 = vld [vmem:[#allocation5 + $0x1730] sm:$0xf]
    %v1788 = vld [vmem:[#allocation5 + $0x1734] sm:$0xf]
    %v1789 = vld [vmem:[#allocation5 + $0x1738] sm:$0xf]
    %v1790 = vld [vmem:[#allocation5 + $0x173c] sm:$0xf]
    %v1791 = vld [vmem:[#allocation5 + $0x1740] sm:$0xf]
    %v1792 = vld [vmem:[#allocation5 + $0x1744] sm:$0xf]
    %v1793 = vld [vmem:[#allocation5 + $0x1748] sm:$0xf]
    %v1794 = vld [vmem:[#allocation5 + $0x174c] sm:$0xf]
    %v1795 = vld [vmem:[#allocation5 + $0x1750] sm:$0xf]
    %v1796 = vld [vmem:[#allocation5 + $0x1754] sm:$0xf]
    %v1797 = vld [vmem:[#allocation5 + $0x1758] sm:$0xf]
    %v1798 = vld [vmem:[#allocation5 + $0x175c] sm:$0xf]
    %v1799 = vld [vmem:[#allocation5 + $0x1760] sm:$0xf]
    %v1800 = vld [vmem:[#allocation5 + $0x1764] sm:$0xf]
    %v1801 = vld [vmem:[#allocation5 + $0x1768] sm:$0xf]
    %v1802 = vld [vmem:[#allocation5 + $0x176c] sm:$0xf]
    %v1803 = vld [vmem:[#allocation5 + $0x1770] sm:$0xf]
    %v1804 = vld [vmem:[#allocation5 + $0x1774] sm:$0xf]
    %v1805 = vld [vmem:[#allocation5 + $0x1778] sm:$0xf]
    %v1806 = vld [vmem:[#allocation5 + $0x177c] sm:$0xf]
    %v1807 = vld [vmem:[#allocation5 + $0x1780] sm:$0xf]
    %v1808 = vld [vmem:[#allocation5 + $0x1784] sm:$0xf]
    %v1809 = vld [vmem:[#allocation5 + $0x1788] sm:$0xf]
    %v1810 = vld [vmem:[#allocation5 + $0x178c] sm:$0xf]
    %v1811 = vld [vmem:[#allocation5 + $0x1790] sm:$0xf]
    %v1812 = vld [vmem:[#allocation5 + $0x1794] sm:$0xf]
    %v1813 = vld [vmem:[#allocation5 + $0x1798] sm:$0xf]
    %v1814 = vld [vmem:[#allocation5 + $0x179c] sm:$0xf]
    %v1815 = vld [vmem:[#allocation5 + $0x17a0] sm:$0xf]
    %v1816 = vld [vmem:[#allocation5 + $0x17a4] sm:$0xf]
    %v1817 = vld [vmem:[#allocation5 + $0x17a8] sm:$0xf]
    %v1818 = vld [vmem:[#allocation5 + $0x17ac] sm:$0xf]
    %v1819 = vld [vmem:[#allocation5 + $0x17b0] sm:$0xf]
    %v1820 = vld [vmem:[#allocation5 + $0x17b4] sm:$0xf]
    %v1821 = vld [vmem:[#allocation5 + $0x17b8] sm:$0xf]
    %v1822 = vld [vmem:[#allocation5 + $0x17bc] sm:$0xf]
    %v1823 = vld [vmem:[#allocation5 + $0x17c0] sm:$0xf]
    %v1824 = vld [vmem:[#allocation5 + $0x17c4] sm:$0xf]
    %v1825 = vld [vmem:[#allocation5 + $0x17c8] sm:$0xf]
    %v1826 = vld [vmem:[#allocation5 + $0x17cc] sm:$0xf]
    %v1827 = vld [vmem:[#allocation5 + $0x17d0] sm:$0xf]
    %v1828 = vld [vmem:[#allocation5 + $0x17d4] sm:$0xf]
    %v1829 = vld [vmem:[#allocation5 + $0x17d8] sm:$0xf]
    %v1830 = vld [vmem:[#allocation5 + $0x17dc] sm:$0xf]
    %v1831 = vld [vmem:[#allocation5 + $0x17e0] sm:$0xf]
    %v1832 = vld [vmem:[#allocation5 + $0x17e4] sm:$0xf]
    %v1833 = vld [vmem:[#allocation5 + $0x17e8] sm:$0xf]
    %v1834 = vld [vmem:[#allocation5 + $0x17ec] sm:$0xf]
    %v1835 = vld [vmem:[#allocation5 + $0x17f0] sm:$0xf]
    %v1836 = vld [vmem:[#allocation5 + $0x17f4] sm:$0xf]
    %v1837 = vld [vmem:[#allocation5 + $0x17f8] sm:$0xf]
    %v1838 = vld [vmem:[#allocation5 + $0x17fc] sm:$0xf]
    %v1839 = vld [vmem:[#allocation5 + $0x1800] sm:$0xf]
    %v1840 = vld [vmem:[#allocation5 + $0x1804] sm:$0xf]
    %v1841 = vld [vmem:[#allocation5 + $0x1808] sm:$0xf]
    %v1842 = vld [vmem:[#allocation5 + $0x180c] sm:$0xf]
    %v1843 = vld [vmem:[#allocation5 + $0x1810] sm:$0xf]
    %v1844 = vld [vmem:[#allocation5 + $0x1814] sm:$0xf]
    %v1845 = vld [vmem:[#allocation5 + $0x1818] sm:$0xf]
    %v1846 = vld [vmem:[#allocation5 + $0x181c] sm:$0xf]
    %v1847 = vld [vmem:[#allocation5 + $0x1820] sm:$0xf]
    %v1848 = vld [vmem:[#allocation5 + $0x1824] sm:$0xf]
    %v1849 = vld [vmem:[#allocation5 + $0x1828] sm:$0xf]
    %v1850 = vld [vmem:[#allocation5 + $0x182c] sm:$0xf]
    %v1851 = vld [vmem:[#allocation5 + $0x1830] sm:$0xf]
    %v1852 = vld [vmem:[#allocation5 + $0x1834] sm:$0xf]
    %v1853 = vld [vmem:[#allocation5 + $0x1838] sm:$0xf]
    %v1854 = vld [vmem:[#allocation5 + $0x183c] sm:$0xf]
    %v1855 = vld [vmem:[#allocation5 + $0x1840] sm:$0xf]
    %v1856 = vld [vmem:[#allocation5 + $0x1844] sm:$0xf]
    %v1857 = vld [vmem:[#allocation5 + $0x1848] sm:$0xf]
    %v1858 = vld [vmem:[#allocation5 + $0x184c] sm:$0xf]
    %v1859 = vld [vmem:[#allocation5 + $0x1850] sm:$0xf]
    %v1860 = vld [vmem:[#allocation5 + $0x1854] sm:$0xf]
    %v1861 = vld [vmem:[#allocation5 + $0x1858] sm:$0xf]
    %v1862 = vld [vmem:[#allocation5 + $0x185c] sm:$0xf]
    %v1863 = vld [vmem:[#allocation5 + $0x1860] sm:$0xf]
    %v1864 = vld [vmem:[#allocation5 + $0x1864] sm:$0xf]
    %v1865 = vld [vmem:[#allocation5 + $0x1868] sm:$0xf]
    %v1866 = vld [vmem:[#allocation5 + $0x186c] sm:$0xf]
    %v1867 = vld [vmem:[#allocation5 + $0x1870] sm:$0xf]
    %v1868 = vld [vmem:[#allocation5 + $0x1874] sm:$0xf]
    %v1869 = vld [vmem:[#allocation5 + $0x1878] sm:$0xf]
    %v1870 = vld [vmem:[#allocation5 + $0x187c] sm:$0xf]
    %v1871 = vld [vmem:[#allocation5 + $0x1880] sm:$0xf]
    %v1872 = vld [vmem:[#allocation5 + $0x1884] sm:$0xf]
    %v1873 = vld [vmem:[#allocation5 + $0x1888] sm:$0xf]
    %v1874 = vld [vmem:[#allocation5 + $0x188c] sm:$0xf]
    %v1875 = vld [vmem:[#allocation5 + $0x1890] sm:$0xf]
    %v1876 = vld [vmem:[#allocation5 + $0x1894] sm:$0xf]
    %v1877 = vld [vmem:[#allocation5 + $0x1898] sm:$0xf]
    %v1878 = vld [vmem:[#allocation5 + $0x189c] sm:$0xf]
    %v1879 = vld [vmem:[#allocation5 + $0x18a0] sm:$0xf]
    %v1880 = vld [vmem:[#allocation5 + $0x18a4] sm:$0xf]
    %v1881 = vld [vmem:[#allocation5 + $0x18a8] sm:$0xf]
    %v1882 = vld [vmem:[#allocation5 + $0x18ac] sm:$0xf]
    %v1883 = vld [vmem:[#allocation5 + $0x18b0] sm:$0xf]
    %v1884 = vld [vmem:[#allocation5 + $0x18b4] sm:$0xf]
    %v1885 = vld [vmem:[#allocation5 + $0x18b8] sm:$0xf]
    %v1886 = vld [vmem:[#allocation5 + $0x18bc] sm:$0xf]
    %v1887 = vld [vmem:[#allocation5 + $0x18c0] sm:$0xf]
    %v1888 = vld [vmem:[#allocation5 + $0x18c4] sm:$0xf]
    %v1889 = vld [vmem:[#allocation5 + $0x18c8] sm:$0xf]
    %v1890 = vld [vmem:[#allocation5 + $0x18cc] sm:$0xf]
    %v1891 = vld [vmem:[#allocation5 + $0x18d0] sm:$0xf]
    %v1892 = vld [vmem:[#allocation5 + $0x18d4] sm:$0xf]
    %v1893 = vld [vmem:[#allocation5 + $0x18d8] sm:$0xf]
    %v1894 = vld [vmem:[#allocation5 + $0x18dc] sm:$0xf]
    %v1895 = vld [vmem:[#allocation5 + $0x18e0] sm:$0xf]
    %v1896 = vld [vmem:[#allocation5 + $0x18e4] sm:$0xf]
    %v1897 = vld [vmem:[#allocation5 + $0x18e8] sm:$0xf]
    %v1898 = vld [vmem:[#allocation5 + $0x18ec] sm:$0xf]
    %v1899 = vld [vmem:[#allocation5 + $0x18f0] sm:$0xf]
    %v1900 = vld [vmem:[#allocation5 + $0x18f4] sm:$0xf]
    %v1901 = vld [vmem:[#allocation5 + $0x18f8] sm:$0xf]
    %v1902 = vld [vmem:[#allocation5 + $0x18fc] sm:$0xf]
    %v1903 = vld [vmem:[#allocation5 + $0x1900] sm:$0xf]
    %v1904 = vld [vmem:[#allocation5 + $0x1904] sm:$0xf]
    %v1905 = vld [vmem:[#allocation5 + $0x1908] sm:$0xf]
    %v1906 = vld [vmem:[#allocation5 + $0x190c] sm:$0xf]
    %v1907 = vld [vmem:[#allocation5 + $0x1910] sm:$0xf]
    %v1908 = vld [vmem:[#allocation5 + $0x1914] sm:$0xf]
    %v1909 = vld [vmem:[#allocation5 + $0x1918] sm:$0xf]
    %v1910 = vld [vmem:[#allocation5 + $0x191c] sm:$0xf]
    %v1911 = vld [vmem:[#allocation5 + $0x1920] sm:$0xf]
    %v1912 = vld [vmem:[#allocation5 + $0x1924] sm:$0xf]
    %v1913 = vld [vmem:[#allocation5 + $0x1928] sm:$0xf]
    %v1914 = vld [vmem:[#allocation5 + $0x192c] sm:$0xf]
    %v1915 = vld [vmem:[#allocation5 + $0x1930] sm:$0xf]
    %v1916 = vld [vmem:[#allocation5 + $0x1934] sm:$0xf]
    %v1917 = vld [vmem:[#allocation5 + $0x1938] sm:$0xf]
    %v1918 = vld [vmem:[#allocation5 + $0x193c] sm:$0xf]
    %v1919 = vld [vmem:[#allocation5 + $0x1940] sm:$0xf]
    %v1920 = vld [vmem:[#allocation5 + $0x1944] sm:$0xf]
    %v1921 = vld [vmem:[#allocation5 + $0x1948] sm:$0xf]
    %v1922 = vld [vmem:[#allocation5 + $0x194c] sm:$0xf]
    %v1923 = vld [vmem:[#allocation5 + $0x1950] sm:$0xf]
    %v1924 = vld [vmem:[#allocation5 + $0x1954] sm:$0xf]
    %v1925 = vld [vmem:[#allocation5 + $0x1958] sm:$0xf]
    %v1926 = vld [vmem:[#allocation5 + $0x195c] sm:$0xf]
    %v1927 = vld [vmem:[#allocation5 + $0x1960] sm:$0xf]
    %v1928 = vld [vmem:[#allocation5 + $0x1964] sm:$0xf]
    %v1929 = vld [vmem:[#allocation5 + $0x1968] sm:$0xf]
    %v1930 = vld [vmem:[#allocation5 + $0x196c] sm:$0xf]
    %v1931 = vld [vmem:[#allocation5 + $0x1970] sm:$0xf]
    %v1932 = vld [vmem:[#allocation5 + $0x1974] sm:$0xf]
    %v1933 = vld [vmem:[#allocation5 + $0x1978] sm:$0xf]
    %v1934 = vld [vmem:[#allocation5 + $0x197c] sm:$0xf]
    %v1935 = vld [vmem:[#allocation5 + $0x1980] sm:$0xf]
    %v1936 = vld [vmem:[#allocation5 + $0x1984] sm:$0xf]
    %v1937 = vld [vmem:[#allocation5 + $0x1988] sm:$0xf]
    %v1938 = vld [vmem:[#allocation5 + $0x198c] sm:$0xf]
    %v1939 = vld [vmem:[#allocation5 + $0x1990] sm:$0xf]
    %v1940 = vld [vmem:[#allocation5 + $0x1994] sm:$0xf]
    %v1941 = vld [vmem:[#allocation5 + $0x1998] sm:$0xf]
    %v1942 = vld [vmem:[#allocation5 + $0x199c] sm:$0xf]
    %v1943 = vld [vmem:[#allocation5 + $0x19a0] sm:$0xf]
    %v1944 = vld [vmem:[#allocation5 + $0x19a4] sm:$0xf]
    %v1945 = vld [vmem:[#allocation5 + $0x19a8] sm:$0xf]
    %v1946 = vld [vmem:[#allocation5 + $0x19ac] sm:$0xf]
    %v1947 = vld [vmem:[#allocation5 + $0x19b0] sm:$0xf]
    %v1948 = vld [vmem:[#allocation5 + $0x19b4] sm:$0xf]
    %v1949 = vld [vmem:[#allocation5 + $0x19b8] sm:$0xf]
    %v1950 = vld [vmem:[#allocation5 + $0x19bc] sm:$0xf]
    %v1951 = vld [vmem:[#allocation5 + $0x19c0] sm:$0xf]
    %v1952 = vld [vmem:[#allocation5 + $0x19c4] sm:$0xf]
    %v1953 = vld [vmem:[#allocation5 + $0x19c8] sm:$0xf]
    %v1954 = vld [vmem:[#allocation5 + $0x19cc] sm:$0xf]
    %v1955 = vld [vmem:[#allocation5 + $0x19d0] sm:$0xf]
    %v1956 = vld [vmem:[#allocation5 + $0x19d4] sm:$0xf]
    %v1957 = vld [vmem:[#allocation5 + $0x19d8] sm:$0xf]
    %v1958 = vld [vmem:[#allocation5 + $0x19dc] sm:$0xf]
    %v1959 = vld [vmem:[#allocation5 + $0x19e0] sm:$0xf]
    %v1960 = vld [vmem:[#allocation5 + $0x19e4] sm:$0xf]
    %v1961 = vld [vmem:[#allocation5 + $0x19e8] sm:$0xf]
    %v1962 = vld [vmem:[#allocation5 + $0x19ec] sm:$0xf]
    %v1963 = vld [vmem:[#allocation5 + $0x19f0] sm:$0xf]
    %v1964 = vld [vmem:[#allocation5 + $0x19f4] sm:$0xf]
    %v1965 = vld [vmem:[#allocation5 + $0x19f8] sm:$0xf]
    %v1966 = vld [vmem:[#allocation5 + $0x19fc] sm:$0xf]
    %v1967 = vld [vmem:[#allocation5 + $0x1a00] sm:$0xf]
    %v1968 = vld [vmem:[#allocation5 + $0x1a04] sm:$0xf]
    %v1969 = vld [vmem:[#allocation5 + $0x1a08] sm:$0xf]
    %v1970 = vld [vmem:[#allocation5 + $0x1a0c] sm:$0xf]
    %v1971 = vld [vmem:[#allocation5 + $0x1a10] sm:$0xf]
    %v1972 = vld [vmem:[#allocation5 + $0x1a14] sm:$0xf]
    %v1973 = vld [vmem:[#allocation5 + $0x1a18] sm:$0xf]
    %v1974 = vld [vmem:[#allocation5 + $0x1a1c] sm:$0xf]
    %v1975 = vld [vmem:[#allocation5 + $0x1a20] sm:$0xf]
    %v1976 = vld [vmem:[#allocation5 + $0x1a24] sm:$0xf]
    %v1977 = vld [vmem:[#allocation5 + $0x1a28] sm:$0xf]
    %v1978 = vld [vmem:[#allocation5 + $0x1a2c] sm:$0xf]
    %v1979 = vld [vmem:[#allocation5 + $0x1a30] sm:$0xf]
    %v1980 = vld [vmem:[#allocation5 + $0x1a34] sm:$0xf]
    %v1981 = vld [vmem:[#allocation5 + $0x1a38] sm:$0xf]
    %v1982 = vld [vmem:[#allocation5 + $0x1a3c] sm:$0xf]
    %v1983 = vld [vmem:[#allocation5 + $0x1a40] sm:$0xf]
    %v1984 = vld [vmem:[#allocation5 + $0x1a44] sm:$0xf]
    %v1985 = vld [vmem:[#allocation5 + $0x1a48] sm:$0xf]
    %v1986 = vld [vmem:[#allocation5 + $0x1a4c] sm:$0xf]
    %v1987 = vld [vmem:[#allocation5 + $0x1a50] sm:$0xf]
    %v1988 = vld [vmem:[#allocation5 + $0x1a54] sm:$0xf]
    %v1989 = vld [vmem:[#allocation5 + $0x1a58] sm:$0xf]
    %v1990 = vld [vmem:[#allocation5 + $0x1a5c] sm:$0xf]
    %v1991 = vld [vmem:[#allocation5 + $0x1a60] sm:$0xf]
    %v1992 = vld [vmem:[#allocation5 + $0x1a64] sm:$0xf]
    %v1993 = vld [vmem:[#allocation5 + $0x1a68] sm:$0xf]
    %v1994 = vld [vmem:[#allocation5 + $0x1a6c] sm:$0xf]
    %v1995 = vld [vmem:[#allocation5 + $0x1a70] sm:$0xf]
    %v1996 = vld [vmem:[#allocation5 + $0x1a74] sm:$0xf]
    %v1997 = vld [vmem:[#allocation5 + $0x1a78] sm:$0xf]
    %v1998 = vld [vmem:[#allocation5 + $0x1a7c] sm:$0xf]
    %v1999 = vld [vmem:[#allocation5 + $0x1a80] sm:$0xf]
    %v2000 = vld [vmem:[#allocation5 + $0x1a84] sm:$0xf]
    %v2001 = vld [vmem:[#allocation5 + $0x1a88] sm:$0xf]
    %v2002 = vld [vmem:[#allocation5 + $0x1a8c] sm:$0xf]
    %v2003 = vld [vmem:[#allocation5 + $0x1a90] sm:$0xf]
    %v2004 = vld [vmem:[#allocation5 + $0x1a94] sm:$0xf]
    %v2005 = vld [vmem:[#allocation5 + $0x1a98] sm:$0xf]
    %v2006 = vld [vmem:[#allocation5 + $0x1a9c] sm:$0xf]
    %v2007 = vld [vmem:[#allocation5 + $0x1aa0] sm:$0xf]
    %v2008 = vld [vmem:[#allocation5 + $0x1aa4] sm:$0xf]
    %v2009 = vld [vmem:[#allocation5 + $0x1aa8] sm:$0xf]
    %v2010 = vld [vmem:[#allocation5 + $0x1aac] sm:$0xf]
    %v2011 = vld [vmem:[#allocation5 + $0x1ab0] sm:$0xf]
    %v2012 = vld [vmem:[#allocation5 + $0x1ab4] sm:$0xf]
    %v2013 = vld [vmem:[#allocation5 + $0x1ab8] sm:$0xf]
    %v2014 = vld [vmem:[#allocation5 + $0x1abc] sm:$0xf]
    %v2015 = vld [vmem:[#allocation5 + $0x1ac0] sm:$0xf]
    %v2016 = vld [vmem:[#allocation5 + $0x1ac4] sm:$0xf]
    %v2017 = vld [vmem:[#allocation5 + $0x1ac8] sm:$0xf]
    %v2018 = vld [vmem:[#allocation5 + $0x1acc] sm:$0xf]
    %v2019 = vld [vmem:[#allocation5 + $0x1ad0] sm:$0xf]
    %v2020 = vld [vmem:[#allocation5 + $0x1ad4] sm:$0xf]
    %v2021 = vld [vmem:[#allocation5 + $0x1ad8] sm:$0xf]
    %v2022 = vld [vmem:[#allocation5 + $0x1adc] sm:$0xf]
    %v2023 = vld [vmem:[#allocation5 + $0x1ae0] sm:$0xf]
    %v2024 = vld [vmem:[#allocation5 + $0x1ae4] sm:$0xf]
    %v2025 = vld [vmem:[#allocation5 + $0x1ae8] sm:$0xf]
    %v2026 = vld [vmem:[#allocation5 + $0x1aec] sm:$0xf]
    %v2027 = vld [vmem:[#allocation5 + $0x1af0] sm:$0xf]
    %v2028 = vld [vmem:[#allocation5 + $0x1af4] sm:$0xf]
    %v2029 = vld [vmem:[#allocation5 + $0x1af8] sm:$0xf]
    %v2030 = vld [vmem:[#allocation5 + $0x1afc] sm:$0xf]
    %v2031 = vld [vmem:[#allocation5 + $0x1b00] sm:$0xf]
    %v2032 = vld [vmem:[#allocation5 + $0x1b04] sm:$0xf]
    %v2033 = vld [vmem:[#allocation5 + $0x1b08] sm:$0xf]
    %v2034 = vld [vmem:[#allocation5 + $0x1b0c] sm:$0xf]
    %v2035 = vld [vmem:[#allocation5 + $0x1b10] sm:$0xf]
    %v2036 = vld [vmem:[#allocation5 + $0x1b14] sm:$0xf]
    %v2037 = vld [vmem:[#allocation5 + $0x1b18] sm:$0xf]
    %v2038 = vld [vmem:[#allocation5 + $0x1b1c] sm:$0xf]
    %v2039 = vld [vmem:[#allocation5 + $0x1b20] sm:$0xf]
    %v2040 = vld [vmem:[#allocation5 + $0x1b24] sm:$0xf]
    %v2041 = vld [vmem:[#allocation5 + $0x1b28] sm:$0xf]
    %v2042 = vld [vmem:[#allocation5 + $0x1b2c] sm:$0xf]
    %v2043 = vld [vmem:[#allocation5 + $0x1b30] sm:$0xf]
    %v2044 = vld [vmem:[#allocation5 + $0x1b34] sm:$0xf]
    %v2045 = vld [vmem:[#allocation5 + $0x1b38] sm:$0xf]
    %v2046 = vld [vmem:[#allocation5 + $0x1b3c] sm:$0xf]
    %v2047 = vld [vmem:[#allocation5 + $0x1b40] sm:$0xf]
    %v2048 = vld [vmem:[#allocation5 + $0x1b44] sm:$0xf]
    %v2049 = vld [vmem:[#allocation5 + $0x1b48] sm:$0xf]
    %v2050 = vld [vmem:[#allocation5 + $0x1b4c] sm:$0xf]
    %v2051 = vld [vmem:[#allocation5 + $0x1b50] sm:$0xf]
    %v2052 = vld [vmem:[#allocation5 + $0x1b54] sm:$0xf]
    %v2053 = vld [vmem:[#allocation5 + $0x1b58] sm:$0xf]
    %v2054 = vld [vmem:[#allocation5 + $0x1b5c] sm:$0xf]
    %v2055 = vld [vmem:[#allocation5 + $0x1b60] sm:$0xf]
    %v2056 = vld [vmem:[#allocation5 + $0x1b64] sm:$0xf]
    %v2057 = vld [vmem:[#allocation5 + $0x1b68] sm:$0xf]
    %v2058 = vld [vmem:[#allocation5 + $0x1b6c] sm:$0xf]
    %v2059 = vld [vmem:[#allocation5 + $0x1b70] sm:$0xf]
    %v2060 = vld [vmem:[#allocation5 + $0x1b74] sm:$0xf]
    %v2061 = vld [vmem:[#allocation5 + $0x1b78] sm:$0xf]
    %v2062 = vld [vmem:[#allocation5 + $0x1b7c] sm:$0xf]
    %v2063 = vld [vmem:[#allocation5 + $0x1b80] sm:$0xf]
    %v2064 = vld [vmem:[#allocation5 + $0x1b84] sm:$0xf]
    %v2065 = vld [vmem:[#allocation5 + $0x1b88] sm:$0xf]
    %v2066 = vld [vmem:[#allocation5 + $0x1b8c] sm:$0xf]
    %v2067 = vld [vmem:[#allocation5 + $0x1b90] sm:$0xf]
    %v2068 = vld [vmem:[#allocation5 + $0x1b94] sm:$0xf]
    %v2069 = vld [vmem:[#allocation5 + $0x1b98] sm:$0xf]
    %v2070 = vld [vmem:[#allocation5 + $0x1b9c] sm:$0xf]
    %v2071 = vld [vmem:[#allocation5 + $0x1ba0] sm:$0xf]
    %v2072 = vld [vmem:[#allocation5 + $0x1ba4] sm:$0xf]
    %v2073 = vld [vmem:[#allocation5 + $0x1ba8] sm:$0xf]
    %v2074 = vld [vmem:[#allocation5 + $0x1bac] sm:$0xf]
    %v2075 = vld [vmem:[#allocation5 + $0x1bb0] sm:$0xf]
    %v2076 = vld [vmem:[#allocation5 + $0x1bb4] sm:$0xf]
    %v2077 = vld [vmem:[#allocation5 + $0x1bb8] sm:$0xf]
    %v2078 = vld [vmem:[#allocation5 + $0x1bbc] sm:$0xf]
    %v2079 = vld [vmem:[#allocation5 + $0x1bc0] sm:$0xf]
    %v2080 = vld [vmem:[#allocation5 + $0x1bc4] sm:$0xf]
    %v2081 = vld [vmem:[#allocation5 + $0x1bc8] sm:$0xf]
    %v2082 = vld [vmem:[#allocation5 + $0x1bcc] sm:$0xf]
    %v2083 = vld [vmem:[#allocation5 + $0x1bd0] sm:$0xf]
    %v2084 = vld [vmem:[#allocation5 + $0x1bd4] sm:$0xf]
    %v2085 = vld [vmem:[#allocation5 + $0x1bd8] sm:$0xf]
    %v2086 = vld [vmem:[#allocation5 + $0x1bdc] sm:$0xf]
    %v2087 = vld [vmem:[#allocation5 + $0x1be0] sm:$0xf]
    %v2088 = vld [vmem:[#allocation5 + $0x1be4] sm:$0xf]
    %v2089 = vld [vmem:[#allocation5 + $0x1be8] sm:$0xf]
    %v2090 = vld [vmem:[#allocation5 + $0x1bec] sm:$0xf]
    %v2091 = vld [vmem:[#allocation5 + $0x1bf0] sm:$0xf]
    %v2092 = vld [vmem:[#allocation5 + $0x1bf4] sm:$0xf]
    %v2093 = vld [vmem:[#allocation5 + $0x1bf8] sm:$0xf]
    %v2094 = vld [vmem:[#allocation5 + $0x1bfc] sm:$0xf]
    %v2095 = vld [vmem:[#allocation5 + $0x1c00] sm:$0xf]
    %v2096 = vld [vmem:[#allocation5 + $0x1c04] sm:$0xf]
    %v2097 = vld [vmem:[#allocation5 + $0x1c08] sm:$0xf]
    %v2098 = vld [vmem:[#allocation5 + $0x1c0c] sm:$0xf]
    %v2099 = vld [vmem:[#allocation5 + $0x1c10] sm:$0xf]
    %v2100 = vld [vmem:[#allocation5 + $0x1c14] sm:$0xf]
    %v2101 = vld [vmem:[#allocation5 + $0x1c18] sm:$0xf]
    %v2102 = vld [vmem:[#allocation5 + $0x1c1c] sm:$0xf]
    %v2103 = vld [vmem:[#allocation5 + $0x1c20] sm:$0xf]
    %v2104 = vld [vmem:[#allocation5 + $0x1c24] sm:$0xf]
    %v2105 = vld [vmem:[#allocation5 + $0x1c28] sm:$0xf]
    %v2106 = vld [vmem:[#allocation5 + $0x1c2c] sm:$0xf]
    %v2107 = vld [vmem:[#allocation5 + $0x1c30] sm:$0xf]
    %v2108 = vld [vmem:[#allocation5 + $0x1c34] sm:$0xf]
    %v2109 = vld [vmem:[#allocation5 + $0x1c38] sm:$0xf]
    %v2110 = vld [vmem:[#allocation5 + $0x1c3c] sm:$0xf]
    %v2111 = vld [vmem:[#allocation5 + $0x1c40] sm:$0xf]
    %v2112 = vld [vmem:[#allocation5 + $0x1c44] sm:$0xf]
    %v2113 = vld [vmem:[#allocation5 + $0x1c48] sm:$0xf]
    %v2114 = vld [vmem:[#allocation5 + $0x1c4c] sm:$0xf]
    %v2115 = vld [vmem:[#allocation5 + $0x1c50] sm:$0xf]
    %v2116 = vld [vmem:[#allocation5 + $0x1c54] sm:$0xf]
    %v2117 = vld [vmem:[#allocation5 + $0x1c58] sm:$0xf]
    %v2118 = vld [vmem:[#allocation5 + $0x1c5c] sm:$0xf]
    %v2119 = vld [vmem:[#allocation5 + $0x1c60] sm:$0xf]
    %v2120 = vld [vmem:[#allocation5 + $0x1c64] sm:$0xf]
    %v2121 = vld [vmem:[#allocation5 + $0x1c68] sm:$0xf]
    %v2122 = vld [vmem:[#allocation5 + $0x1c6c] sm:$0xf]
    %v2123 = vld [vmem:[#allocation5 + $0x1c70] sm:$0xf]
    %v2124 = vld [vmem:[#allocation5 + $0x1c74] sm:$0xf]
    %v2125 = vld [vmem:[#allocation5 + $0x1c78] sm:$0xf]
    %v2126 = vld [vmem:[#allocation5 + $0x1c7c] sm:$0xf]
    %v2127 = vld [vmem:[#allocation5 + $0x1c80] sm:$0xf]
    %v2128 = vld [vmem:[#allocation5 + $0x1c84] sm:$0xf]
    %v2129 = vld [vmem:[#allocation5 + $0x1c88] sm:$0xf]
    %v2130 = vld [vmem:[#allocation5 + $0x1c8c] sm:$0xf]
    %v2131 = vld [vmem:[#allocation5 + $0x1c90] sm:$0xf]
    %v2132 = vld [vmem:[#allocation5 + $0x1c94] sm:$0xf]
    %v2133 = vld [vmem:[#allocation5 + $0x1c98] sm:$0xf]
    %v2134 = vld [vmem:[#allocation5 + $0x1c9c] sm:$0xf]
    %v2135 = vld [vmem:[#allocation5 + $0x1ca0] sm:$0xf]
    %v2136 = vld [vmem:[#allocation5 + $0x1ca4] sm:$0xf]
    %v2137 = vld [vmem:[#allocation5 + $0x1ca8] sm:$0xf]
    %v2138 = vld [vmem:[#allocation5 + $0x1cac] sm:$0xf]
    %v2139 = vld [vmem:[#allocation5 + $0x1cb0] sm:$0xf]
    %v2140 = vld [vmem:[#allocation5 + $0x1cb4] sm:$0xf]
    %v2141 = vld [vmem:[#allocation5 + $0x1cb8] sm:$0xf]
    %v2142 = vld [vmem:[#allocation5 + $0x1cbc] sm:$0xf]
    %v2143 = vld [vmem:[#allocation5 + $0x1cc0] sm:$0xf]
    %v2144 = vld [vmem:[#allocation5 + $0x1cc4] sm:$0xf]
    %v2145 = vld [vmem:[#allocation5 + $0x1cc8] sm:$0xf]
    %v2146 = vld [vmem:[#allocation5 + $0x1ccc] sm:$0xf]
    %v2147 = vld [vmem:[#allocation5 + $0x1cd0] sm:$0xf]
    %v2148 = vld [vmem:[#allocation5 + $0x1cd4] sm:$0xf]
    %v2149 = vld [vmem:[#allocation5 + $0x1cd8] sm:$0xf]
    %v2150 = vld [vmem:[#allocation5 + $0x1cdc] sm:$0xf]
    %v2151 = vld [vmem:[#allocation5 + $0x1ce0] sm:$0xf]
    %v2152 = vld [vmem:[#allocation5 + $0x1ce4] sm:$0xf]
    %v2153 = vld [vmem:[#allocation5 + $0x1ce8] sm:$0xf]
    %v2154 = vld [vmem:[#allocation5 + $0x1cec] sm:$0xf]
    %v2155 = vld [vmem:[#allocation5 + $0x1cf0] sm:$0xf]
    %v2156 = vld [vmem:[#allocation5 + $0x1cf4] sm:$0xf]
    %v2157 = vld [vmem:[#allocation5 + $0x1cf8] sm:$0xf]
    %v2158 = vld [vmem:[#allocation5 + $0x1cfc] sm:$0xf]
    %v2159 = vld [vmem:[#allocation5 + $0x1d00] sm:$0xf]
    %v2160 = vld [vmem:[#allocation5 + $0x1d04] sm:$0xf]
    %v2161 = vld [vmem:[#allocation5 + $0x1d08] sm:$0xf]
    %v2162 = vld [vmem:[#allocation5 + $0x1d0c] sm:$0xf]
    %v2163 = vld [vmem:[#allocation5 + $0x1d10] sm:$0xf]
    %v2164 = vld [vmem:[#allocation5 + $0x1d14] sm:$0xf]
    %v2165 = vld [vmem:[#allocation5 + $0x1d18] sm:$0xf]
    %v2166 = vld [vmem:[#allocation5 + $0x1d1c] sm:$0xf]
    %v2167 = vld [vmem:[#allocation5 + $0x1d20] sm:$0xf]
    %v2168 = vld [vmem:[#allocation5 + $0x1d24] sm:$0xf]
    %v2169 = vld [vmem:[#allocation5 + $0x1d28] sm:$0xf]
    %v2170 = vld [vmem:[#allocation5 + $0x1d2c] sm:$0xf]
    %v2171 = vld [vmem:[#allocation5 + $0x1d30] sm:$0xf]
    %v2172 = vld [vmem:[#allocation5 + $0x1d34] sm:$0xf]
    %v2173 = vld [vmem:[#allocation5 + $0x1d38] sm:$0xf]
    %v2174 = vld [vmem:[#allocation5 + $0x1d3c] sm:$0xf]
    %v2175 = vld [vmem:[#allocation5 + $0x1d40] sm:$0xf]
    %v2176 = vld [vmem:[#allocation5 + $0x1d44] sm:$0xf]
    %v2177 = vld [vmem:[#allocation5 + $0x1d48] sm:$0xf]
    %v2178 = vld [vmem:[#allocation5 + $0x1d4c] sm:$0xf]
    %v2179 = vld [vmem:[#allocation5 + $0x1d50] sm:$0xf]
    %v2180 = vld [vmem:[#allocation5 + $0x1d54] sm:$0xf]
    %v2181 = vld [vmem:[#allocation5 + $0x1d58] sm:$0xf]
    %v2182 = vld [vmem:[#allocation5 + $0x1d5c] sm:$0xf]
    %v2183 = vld [vmem:[#allocation5 + $0x1d60] sm:$0xf]
    %v2184 = vld [vmem:[#allocation5 + $0x1d64] sm:$0xf]
    %v2185 = vld [vmem:[#allocation5 + $0x1d68] sm:$0xf]
    %v2186 = vld [vmem:[#allocation5 + $0x1d6c] sm:$0xf]
    %v2187 = vld [vmem:[#allocation5 + $0x1d70] sm:$0xf]
    %v2188 = vld [vmem:[#allocation5 + $0x1d74] sm:$0xf]
    %v2189 = vld [vmem:[#allocation5 + $0x1d78] sm:$0xf]
    %v2190 = vld [vmem:[#allocation5 + $0x1d7c] sm:$0xf]
    %v2191 = vld [vmem:[#allocation5 + $0x1d80] sm:$0xf]
    %v2192 = vld [vmem:[#allocation5 + $0x1d84] sm:$0xf]
    %v2193 = vld [vmem:[#allocation5 + $0x1d88] sm:$0xf]
    %v2194 = vld [vmem:[#allocation5 + $0x1d8c] sm:$0xf]
    %v2195 = vld [vmem:[#allocation5 + $0x1d90] sm:$0xf]
    %v2196 = vld [vmem:[#allocation5 + $0x1d94] sm:$0xf]
    %v2197 = vld [vmem:[#allocation5 + $0x1d98] sm:$0xf]
    %v2198 = vld [vmem:[#allocation5 + $0x1d9c] sm:$0xf]
    %v2199 = vld [vmem:[#allocation5 + $0x1da0] sm:$0xf]
    %v2200 = vld [vmem:[#allocation5 + $0x1da4] sm:$0xf]
    %v2201 = vld [vmem:[#allocation5 + $0x1da8] sm:$0xf]
    %v2202 = vld [vmem:[#allocation5 + $0x1dac] sm:$0xf]
    %v2203 = vld [vmem:[#allocation5 + $0x1db0] sm:$0xf]
    %v2204 = vld [vmem:[#allocation5 + $0x1db4] sm:$0xf]
    %v2205 = vld [vmem:[#allocation5 + $0x1db8] sm:$0xf]
    %v2206 = vld [vmem:[#allocation5 + $0x1dbc] sm:$0xf]
    %v2207 = vld [vmem:[#allocation5 + $0x1dc0] sm:$0xf]
    %v2208 = vld [vmem:[#allocation5 + $0x1dc4] sm:$0xf]
    %v2209 = vld [vmem:[#allocation5 + $0x1dc8] sm:$0xf]
    %v2210 = vld [vmem:[#allocation5 + $0x1dcc] sm:$0xf]
    %v2211 = vld [vmem:[#allocation5 + $0x1dd0] sm:$0xf]
    %v2212 = vld [vmem:[#allocation5 + $0x1dd4] sm:$0xf]
    %v2213 = vld [vmem:[#allocation5 + $0x1dd8] sm:$0xf]
    %v2214 = vld [vmem:[#allocation5 + $0x1ddc] sm:$0xf]
    %v2215 = vld [vmem:[#allocation5 + $0x1de0] sm:$0xf]
    %v2216 = vld [vmem:[#allocation5 + $0x1de4] sm:$0xf]
    %v2217 = vld [vmem:[#allocation5 + $0x1de8] sm:$0xf]
    %v2218 = vld [vmem:[#allocation5 + $0x1dec] sm:$0xf]
    %v2219 = vld [vmem:[#allocation5 + $0x1df0] sm:$0xf]
    %v2220 = vld [vmem:[#allocation5 + $0x1df4] sm:$0xf]
    %v2221 = vld [vmem:[#allocation5 + $0x1df8] sm:$0xf]
    %v2222 = vld [vmem:[#allocation5 + $0x1dfc] sm:$0xf]
    %v2223 = vld [vmem:[#allocation5 + $0x1e00] sm:$0xf]
    %v2224 = vld [vmem:[#allocation5 + $0x1e04] sm:$0xf]
    %v2225 = vld [vmem:[#allocation5 + $0x1e08] sm:$0xf]
    %v2226 = vld [vmem:[#allocation5 + $0x1e0c] sm:$0xf]
    %v2227 = vld [vmem:[#allocation5 + $0x1e10] sm:$0xf]
    %v2228 = vld [vmem:[#allocation5 + $0x1e14] sm:$0xf]
    %v2229 = vld [vmem:[#allocation5 + $0x1e18] sm:$0xf]
    %v2230 = vld [vmem:[#allocation5 + $0x1e1c] sm:$0xf]
    %v2231 = vld [vmem:[#allocation5 + $0x1e20] sm:$0xf]
    %v2232 = vld [vmem:[#allocation5 + $0x1e24] sm:$0xf]
    %v2233 = vld [vmem:[#allocation5 + $0x1e28] sm:$0xf]
    %v2234 = vld [vmem:[#allocation5 + $0x1e2c] sm:$0xf]
    %v2235 = vld [vmem:[#allocation5 + $0x1e30] sm:$0xf]
    %v2236 = vld [vmem:[#allocation5 + $0x1e34] sm:$0xf]
    %v2237 = vld [vmem:[#allocation5 + $0x1e38] sm:$0xf]
    %v2238 = vld [vmem:[#allocation5 + $0x1e3c] sm:$0xf]
    %v2239 = vld [vmem:[#allocation5 + $0x1e40] sm:$0xf]
    %v2240 = vld [vmem:[#allocation5 + $0x1e44] sm:$0xf]
    %v2241 = vld [vmem:[#allocation5 + $0x1e48] sm:$0xf]
    %v2242 = vld [vmem:[#allocation5 + $0x1e4c] sm:$0xf]
    %v2243 = vld [vmem:[#allocation5 + $0x1e50] sm:$0xf]
    %v2244 = vld [vmem:[#allocation5 + $0x1e54] sm:$0xf]
    %v2245 = vld [vmem:[#allocation5 + $0x1e58] sm:$0xf]
    %v2246 = vld [vmem:[#allocation5 + $0x1e5c] sm:$0xf]
    %v2247 = vld [vmem:[#allocation5 + $0x1e60] sm:$0xf]
    %v2248 = vld [vmem:[#allocation5 + $0x1e64] sm:$0xf]
    %v2249 = vld [vmem:[#allocation5 + $0x1e68] sm:$0xf]
    %v2250 = vld [vmem:[#allocation5 + $0x1e6c] sm:$0xf]
    %v2251 = vld [vmem:[#allocation5 + $0x1e70] sm:$0xf]
    %v2252 = vld [vmem:[#allocation5 + $0x1e74] sm:$0xf]
    %v2253 = vld [vmem:[#allocation5 + $0x1e78] sm:$0xf]
    %v2254 = vld [vmem:[#allocation5 + $0x1e7c] sm:$0xf]
    %v2255 = vld [vmem:[#allocation5 + $0x1e80] sm:$0xf]
    %v2256 = vld [vmem:[#allocation5 + $0x1e84] sm:$0xf]
    %v2257 = vld [vmem:[#allocation5 + $0x1e88] sm:$0xf]
    %v2258 = vld [vmem:[#allocation5 + $0x1e8c] sm:$0xf]
    %v2259 = vld [vmem:[#allocation5 + $0x1e90] sm:$0xf]
    %v2260 = vld [vmem:[#allocation5 + $0x1e94] sm:$0xf]
    %v2261 = vld [vmem:[#allocation5 + $0x1e98] sm:$0xf]
    %v2262 = vld [vmem:[#allocation5 + $0x1e9c] sm:$0xf]
    %v2263 = vld [vmem:[#allocation5 + $0x1ea0] sm:$0xf]
    %v2264 = vld [vmem:[#allocation5 + $0x1ea4] sm:$0xf]
    %v2265 = vld [vmem:[#allocation5 + $0x1ea8] sm:$0xf]
    %v2266 = vld [vmem:[#allocation5 + $0x1eac] sm:$0xf]
    %v2267 = vld [vmem:[#allocation5 + $0x1eb0] sm:$0xf]
    %v2268 = vld [vmem:[#allocation5 + $0x1eb4] sm:$0xf]
    %v2269 = vld [vmem:[#allocation5 + $0x1eb8] sm:$0xf]
    %v2270 = vld [vmem:[#allocation5 + $0x1ebc] sm:$0xf]
    %v2271 = vld [vmem:[#allocation5 + $0x1ec0] sm:$0xf]
    %v2272 = vld [vmem:[#allocation5 + $0x1ec4] sm:$0xf]
    %v2273 = vld [vmem:[#allocation5 + $0x1ec8] sm:$0xf]
    %v2274 = vld [vmem:[#allocation5 + $0x1ecc] sm:$0xf]
    %v2275 = vld [vmem:[#allocation5 + $0x1ed0] sm:$0xf]
    %v2276 = vld [vmem:[#allocation5 + $0x1ed4] sm:$0xf]
    %v2277 = vld [vmem:[#allocation5 + $0x1ed8] sm:$0xf]
    %v2278 = vld [vmem:[#allocation5 + $0x1edc] sm:$0xf]
    %v2279 = vld [vmem:[#allocation5 + $0x1ee0] sm:$0xf]
    %v2280 = vld [vmem:[#allocation5 + $0x1ee4] sm:$0xf]
    %v2281 = vld [vmem:[#allocation5 + $0x1ee8] sm:$0xf]
    %v2282 = vld [vmem:[#allocation5 + $0x1eec] sm:$0xf]
    %v2283 = vld [vmem:[#allocation5 + $0x1ef0] sm:$0xf]
    %v2284 = vld [vmem:[#allocation5 + $0x1ef4] sm:$0xf]
    %v2285 = vld [vmem:[#allocation5 + $0x1ef8] sm:$0xf]
    %v2286 = vld [vmem:[#allocation5 + $0x1efc] sm:$0xf]
    %v2287 = vld [vmem:[#allocation5 + $0x1f00] sm:$0xf]
    %v2288 = vld [vmem:[#allocation5 + $0x1f04] sm:$0xf]
    %v2289 = vld [vmem:[#allocation5 + $0x1f08] sm:$0xf]
    %v2290 = vld [vmem:[#allocation5 + $0x1f0c] sm:$0xf]
    %v2291 = vld [vmem:[#allocation5 + $0x1f10] sm:$0xf]
    %v2292 = vld [vmem:[#allocation5 + $0x1f14] sm:$0xf]
    %v2293 = vld [vmem:[#allocation5 + $0x1f18] sm:$0xf]
    %v2294 = vld [vmem:[#allocation5 + $0x1f1c] sm:$0xf]
    %v2295 = vld [vmem:[#allocation5 + $0x1f20] sm:$0xf]
    %v2296 = vld [vmem:[#allocation5 + $0x1f24] sm:$0xf]
    %v2297 = vld [vmem:[#allocation5 + $0x1f28] sm:$0xf]
    %v2298 = vld [vmem:[#allocation5 + $0x1f2c] sm:$0xf]
    %v2299 = vld [vmem:[#allocation5 + $0x1f30] sm:$0xf]
    %v2300 = vld [vmem:[#allocation5 + $0x1f34] sm:$0xf]
    %v2301 = vld [vmem:[#allocation5 + $0x1f38] sm:$0xf]
    %v2302 = vld [vmem:[#allocation5 + $0x1f3c] sm:$0xf]
    %v2303 = vld [vmem:[#allocation7] sm:$0x1]
    %v2305 = vlaneseq
    %v2306 = vshrl.u32 %v2305, 7
    %v2307 = vsub.s32 0, %v2306
    %v2308 = vrot.slane %v2303, %v2307
    %v4310 = vunpack.c.l.b16 %v303
    %v4311 = vunpack.c.l.b16 %v304
    %v4312 = vunpack.c.l.b16 %v305
    %v4313 = vunpack.c.l.b16 %v306
    %v4314 = vunpack.c.l.b16 %v307
    %v4315 = vunpack.c.l.b16 %v308
    %v4316 = vunpack.c.l.b16 %v309
    %v4317 = vunpack.c.l.b16 %v310
    %v4318 = vunpack.c.l.b16 %v311
    %v4319 = vunpack.c.l.b16 %v312
    %v4320 = vunpack.c.l.b16 %v313
    %v4321 = vunpack.c.l.b16 %v314
    %v4322 = vunpack.c.l.b16 %v315
    %v4323 = vunpack.c.l.b16 %v316
    %v4324 = vunpack.c.l.b16 %v317
    %v4325 = vunpack.c.l.b16 %v318
    %v4326 = vunpack.c.l.b16 %v319
    %v4327 = vunpack.c.l.b16 %v320
    %v4328 = vunpack.c.l.b16 %v321
    %v4329 = vunpack.c.l.b16 %v322
    %v4330 = vunpack.c.l.b16 %v323
    %v4331 = vunpack.c.l.b16 %v324
    %v4332 = vunpack.c.l.b16 %v325
    %v4333 = vunpack.c.l.b16 %v326
    %v4334 = vunpack.c.l.b16 %v327
    %v4335 = vunpack.c.l.b16 %v328
    %v4336 = vunpack.c.l.b16 %v329
    %v4337 = vunpack.c.l.b16 %v330
    %v4338 = vunpack.c.l.b16 %v331
    %v4339 = vunpack.c.l.b16 %v332
    %v4340 = vunpack.c.l.b16 %v333
    %v4341 = vunpack.c.l.b16 %v334
    %v4342 = vunpack.c.l.b16 %v335
    %v4343 = vunpack.c.l.b16 %v336
    %v4344 = vunpack.c.l.b16 %v337
    %v4345 = vunpack.c.l.b16 %v338
    %v4346 = vunpack.c.l.b16 %v339
    %v4347 = vunpack.c.l.b16 %v340
    %v4348 = vunpack.c.l.b16 %v341
    %v4349 = vunpack.c.l.b16 %v342
    %v4350 = vunpack.c.l.b16 %v343
    %v4351 = vunpack.c.l.b16 %v344
    %v4352 = vunpack.c.l.b16 %v345
    %v4353 = vunpack.c.l.b16 %v346
    %v4354 = vunpack.c.l.b16 %v347
    %v4355 = vunpack.c.l.b16 %v348
    %v4356 = vunpack.c.l.b16 %v349
    %v4357 = vunpack.c.l.b16 %v350
    %v4358 = vunpack.c.l.b16 %v351
    %v4359 = vunpack.c.l.b16 %v352
    %v4360 = vunpack.c.l.b16 %v353
    %v4361 = vunpack.c.l.b16 %v354
    %v4362 = vunpack.c.l.b16 %v355
    %v4363 = vunpack.c.l.b16 %v356
    %v4364 = vunpack.c.l.b16 %v357
    %v4365 = vunpack.c.l.b16 %v358
    %v4366 = vunpack.c.l.b16 %v359
    %v4367 = vunpack.c.l.b16 %v360
    %v4368 = vunpack.c.l.b16 %v361
    %v4369 = vunpack.c.l.b16 %v362
    %v4370 = vunpack.c.l.b16 %v363
    %v4371 = vunpack.c.l.b16 %v364
    %v4372 = vunpack.c.l.b16 %v365
    %v4373 = vunpack.c.l.b16 %v366
    %v4374 = vunpack.c.l.b16 %v367
    %v4375 = vunpack.c.l.b16 %v368
    %v4376 = vunpack.c.l.b16 %v369
    %v4377 = vunpack.c.l.b16 %v370
    %v4378 = vunpack.c.l.b16 %v371
    %v4379 = vunpack.c.l.b16 %v372
    %v4380 = vunpack.c.l.b16 %v373
    %v4381 = vunpack.c.l.b16 %v374
    %v4382 = vunpack.c.l.b16 %v375
    %v4383 = vunpack.c.l.b16 %v376
    %v4384 = vunpack.c.l.b16 %v377
    %v4385 = vunpack.c.l.b16 %v378
    %v4386 = vunpack.c.l.b16 %v379
    %v4387 = vunpack.c.l.b16 %v380
    %v4388 = vunpack.c.l.b16 %v381
    %v4389 = vunpack.c.l.b16 %v382
    %v4390 = vunpack.c.l.b16 %v383
    %v4391 = vunpack.c.l.b16 %v384
    %v4392 = vunpack.c.l.b16 %v385
    %v4393 = vunpack.c.l.b16 %v386
    %v4394 = vunpack.c.l.b16 %v387
    %v4395 = vunpack.c.l.b16 %v388
    %v4396 = vunpack.c.l.b16 %v389
    %v4397 = vunpack.c.l.b16 %v390
    %v4398 = vunpack.c.l.b16 %v391
    %v4399 = vunpack.c.l.b16 %v392
    %v4400 = vunpack.c.l.b16 %v393
    %v4401 = vunpack.c.l.b16 %v394
    %v4402 = vunpack.c.l.b16 %v395
    %v4403 = vunpack.c.l.b16 %v396
    %v4404 = vunpack.c.l.b16 %v397
    %v4405 = vunpack.c.l.b16 %v398
    %v4406 = vunpack.c.l.b16 %v399
    %v4407 = vunpack.c.l.b16 %v400
    %v4408 = vunpack.c.l.b16 %v401
    %v4409 = vunpack.c.l.b16 %v402
    %v4410 = vunpack.c.l.b16 %v403
    %v4411 = vunpack.c.l.b16 %v404
    %v4412 = vunpack.c.l.b16 %v405
    %v4413 = vunpack.c.l.b16 %v406
    %v4414 = vunpack.c.l.b16 %v407
    %v4415 = vunpack.c.l.b16 %v408
    %v4416 = vunpack.c.l.b16 %v409
    %v4417 = vunpack.c.l.b16 %v410
    %v4418 = vunpack.c.l.b16 %v411
    %v4419 = vunpack.c.l.b16 %v412
    %v4420 = vunpack.c.l.b16 %v413
    %v4421 = vunpack.c.l.b16 %v414
    %v4422 = vunpack.c.l.b16 %v415
    %v4423 = vunpack.c.l.b16 %v416
    %v4424 = vunpack.c.l.b16 %v417
    %v4425 = vunpack.c.l.b16 %v418
    %v4426 = vunpack.c.l.b16 %v419
    %v4427 = vunpack.c.l.b16 %v420
    %v4428 = vunpack.c.l.b16 %v421
    %v4429 = vunpack.c.l.b16 %v422
    %v4430 = vunpack.c.l.b16 %v423
    %v4431 = vunpack.c.l.b16 %v424
    %v4432 = vunpack.c.l.b16 %v425
    %v4433 = vunpack.c.l.b16 %v426
    %v4434 = vunpack.c.l.b16 %v427
    %v4435 = vunpack.c.l.b16 %v428
    %v4436 = vunpack.c.l.b16 %v429
    %v4437 = vunpack.c.l.b16 %v430
    %v4438 = vunpack.c.l.b16 %v431
    %v4439 = vunpack.c.l.b16 %v432
    %v4440 = vunpack.c.l.b16 %v433
    %v4441 = vunpack.c.l.b16 %v434
    %v4442 = vunpack.c.l.b16 %v435
    %v4443 = vunpack.c.l.b16 %v436
    %v4444 = vunpack.c.l.b16 %v437
    %v4445 = vunpack.c.l.b16 %v438
    %v4446 = vunpack.c.l.b16 %v439
    %v4447 = vunpack.c.l.b16 %v440
    %v4448 = vunpack.c.l.b16 %v441
    %v4449 = vunpack.c.l.b16 %v442
    %v4450 = vunpack.c.l.b16 %v443
    %v4451 = vunpack.c.l.b16 %v444
    %v4452 = vunpack.c.l.b16 %v445
    %v4453 = vunpack.c.l.b16 %v446
    %v4454 = vunpack.c.l.b16 %v447
    %v4455 = vunpack.c.l.b16 %v448
    %v4456 = vunpack.c.l.b16 %v449
    %v4457 = vunpack.c.l.b16 %v450
    %v4458 = vunpack.c.l.b16 %v451
    %v4459 = vunpack.c.l.b16 %v452
    %v4460 = vunpack.c.l.b16 %v453
    %v4461 = vunpack.c.l.b16 %v454
    %v4462 = vunpack.c.l.b16 %v455
    %v4463 = vunpack.c.l.b16 %v456
    %v4464 = vunpack.c.l.b16 %v457
    %v4465 = vunpack.c.l.b16 %v458
    %v4466 = vunpack.c.l.b16 %v459
    %v4467 = vunpack.c.l.b16 %v460
    %v4468 = vunpack.c.l.b16 %v461
    %v4469 = vunpack.c.l.b16 %v462
    %v4470 = vunpack.c.l.b16 %v463
    %v4471 = vunpack.c.l.b16 %v464
    %v4472 = vunpack.c.l.b16 %v465
    %v4473 = vunpack.c.l.b16 %v466
    %v4474 = vunpack.c.l.b16 %v467
    %v4475 = vunpack.c.l.b16 %v468
    %v4476 = vunpack.c.l.b16 %v469
    %v4477 = vunpack.c.l.b16 %v470
    %v4478 = vunpack.c.l.b16 %v471
    %v4479 = vunpack.c.l.b16 %v472
    %v4480 = vunpack.c.l.b16 %v473
    %v4481 = vunpack.c.l.b16 %v474
    %v4482 = vunpack.c.l.b16 %v475
    %v4483 = vunpack.c.l.b16 %v476
    %v4484 = vunpack.c.l.b16 %v477
    %v4485 = vunpack.c.l.b16 %v478
    %v4486 = vunpack.c.l.b16 %v479
    %v4487 = vunpack.c.l.b16 %v480
    %v4488 = vunpack.c.l.b16 %v481
    %v4489 = vunpack.c.l.b16 %v482
    %v4490 = vunpack.c.l.b16 %v483
    %v4491 = vunpack.c.l.b16 %v484
    %v4492 = vunpack.c.l.b16 %v485
    %v4493 = vunpack.c.l.b16 %v486
    %v4494 = vunpack.c.l.b16 %v487
    %v4495 = vunpack.c.l.b16 %v488
    %v4496 = vunpack.c.l.b16 %v489
    %v4497 = vunpack.c.l.b16 %v490
    %v4498 = vunpack.c.l.b16 %v491
    %v4499 = vunpack.c.l.b16 %v492
    %v4500 = vunpack.c.l.b16 %v493
    %v4501 = vunpack.c.l.b16 %v494
    %v4502 = vunpack.c.l.b16 %v495
    %v4503 = vunpack.c.l.b16 %v496
    %v4504 = vunpack.c.l.b16 %v497
    %v4505 = vunpack.c.l.b16 %v498
    %v4506 = vunpack.c.l.b16 %v499
    %v4507 = vunpack.c.l.b16 %v500
    %v4508 = vunpack.c.l.b16 %v501
    %v4509 = vunpack.c.l.b16 %v502
    %v4510 = vunpack.c.l.b16 %v503
    %v4511 = vunpack.c.l.b16 %v504
    %v4512 = vunpack.c.l.b16 %v505
    %v4513 = vunpack.c.l.b16 %v506
    %v4514 = vunpack.c.l.b16 %v507
    %v4515 = vunpack.c.l.b16 %v508
    %v4516 = vunpack.c.l.b16 %v509
    %v4517 = vunpack.c.l.b16 %v510
    %v4518 = vunpack.c.l.b16 %v511
    %v4519 = vunpack.c.l.b16 %v512
    %v4520 = vunpack.c.l.b16 %v513
    %v4521 = vunpack.c.l.b16 %v514
    %v4522 = vunpack.c.l.b16 %v515
    %v4523 = vunpack.c.l.b16 %v516
    %v4524 = vunpack.c.l.b16 %v517
    %v4525 = vunpack.c.l.b16 %v518
    %v4526 = vunpack.c.l.b16 %v519
    %v4527 = vunpack.c.l.b16 %v520
    %v4528 = vunpack.c.l.b16 %v521
    %v4529 = vunpack.c.l.b16 %v522
    %v4530 = vunpack.c.l.b16 %v523
    %v4531 = vunpack.c.l.b16 %v524
    %v4532 = vunpack.c.l.b16 %v525
    %v4533 = vunpack.c.l.b16 %v526
    %v4534 = vunpack.c.l.b16 %v527
    %v4535 = vunpack.c.l.b16 %v528
    %v4536 = vunpack.c.l.b16 %v529
    %v4537 = vunpack.c.l.b16 %v530
    %v4538 = vunpack.c.l.b16 %v531
    %v4539 = vunpack.c.l.b16 %v532
    %v4540 = vunpack.c.l.b16 %v533
    %v4541 = vunpack.c.l.b16 %v534
    %v4542 = vunpack.c.l.b16 %v535
    %v4543 = vunpack.c.l.b16 %v536
    %v4544 = vunpack.c.l.b16 %v537
    %v4545 = vunpack.c.l.b16 %v538
    %v4546 = vunpack.c.l.b16 %v539
    %v4547 = vunpack.c.l.b16 %v540
    %v4548 = vunpack.c.l.b16 %v541
    %v4549 = vunpack.c.l.b16 %v542
    %v4550 = vunpack.c.l.b16 %v543
    %v4551 = vunpack.c.l.b16 %v544
    %v4552 = vunpack.c.l.b16 %v545
    %v4553 = vunpack.c.l.b16 %v546
    %v4554 = vunpack.c.l.b16 %v547
    %v4555 = vunpack.c.l.b16 %v548
    %v4556 = vunpack.c.l.b16 %v549
    %v4557 = vunpack.c.l.b16 %v550
    %v4558 = vunpack.c.l.b16 %v551
    %v4559 = vunpack.c.l.b16 %v552
    %v4560 = vunpack.c.l.b16 %v553
    %v4561 = vunpack.c.l.b16 %v554
    %v4562 = vunpack.c.l.b16 %v555
    %v4563 = vunpack.c.l.b16 %v556
    %v4564 = vunpack.c.l.b16 %v557
    %v4565 = vunpack.c.l.b16 %v558
    %v4566 = vunpack.c.l.b16 %v559
    %v4567 = vunpack.c.l.b16 %v560
    %v4568 = vunpack.c.l.b16 %v561
    %v4569 = vunpack.c.l.b16 %v562
    %v4570 = vunpack.c.l.b16 %v563
    %v4571 = vunpack.c.l.b16 %v564
    %v4572 = vunpack.c.l.b16 %v565
    %v4573 = vunpack.c.l.b16 %v566
    %v4574 = vunpack.c.l.b16 %v567
    %v4575 = vunpack.c.l.b16 %v568
    %v4576 = vunpack.c.l.b16 %v569
    %v4577 = vunpack.c.l.b16 %v570
    %v4578 = vunpack.c.l.b16 %v571
    %v4579 = vunpack.c.l.b16 %v572
    %v4580 = vunpack.c.l.b16 %v573
    %v4581 = vunpack.c.l.b16 %v574
    %v4582 = vunpack.c.l.b16 %v575
    %v4583 = vunpack.c.l.b16 %v576
    %v4584 = vunpack.c.l.b16 %v577
    %v4585 = vunpack.c.l.b16 %v578
    %v4586 = vunpack.c.l.b16 %v579
    %v4587 = vunpack.c.l.b16 %v580
    %v4588 = vunpack.c.l.b16 %v581
    %v4589 = vunpack.c.l.b16 %v582
    %v4590 = vunpack.c.l.b16 %v583
    %v4591 = vunpack.c.l.b16 %v584
    %v4592 = vunpack.c.l.b16 %v585
    %v4593 = vunpack.c.l.b16 %v586
    %v4594 = vunpack.c.l.b16 %v587
    %v4595 = vunpack.c.l.b16 %v588
    %v4596 = vunpack.c.l.b16 %v589
    %v4597 = vunpack.c.l.b16 %v590
    %v4598 = vunpack.c.l.b16 %v591
    %v4599 = vunpack.c.l.b16 %v592
    %v4600 = vunpack.c.l.b16 %v593
    %v4601 = vunpack.c.l.b16 %v594
    %v4602 = vunpack.c.l.b16 %v595
    %v4603 = vunpack.c.l.b16 %v596
    %v4604 = vunpack.c.l.b16 %v597
    %v4605 = vunpack.c.l.b16 %v598
    %v4606 = vunpack.c.l.b16 %v599
    %v4607 = vunpack.c.l.b16 %v600
    %v4608 = vunpack.c.l.b16 %v601
    %v4609 = vunpack.c.l.b16 %v602
    %v4610 = vunpack.c.l.b16 %v603
    %v4611 = vunpack.c.l.b16 %v604
    %v4612 = vunpack.c.l.b16 %v605
    %v4613 = vunpack.c.l.b16 %v606
    %v4614 = vunpack.c.l.b16 %v607
    %v4615 = vunpack.c.l.b16 %v608
    %v4616 = vunpack.c.l.b16 %v609
    %v4617 = vunpack.c.l.b16 %v610
    %v4618 = vunpack.c.l.b16 %v611
    %v4619 = vunpack.c.l.b16 %v612
    %v4620 = vunpack.c.l.b16 %v613
    %v4621 = vunpack.c.l.b16 %v614
    %v4622 = vunpack.c.l.b16 %v615
    %v4623 = vunpack.c.l.b16 %v616
    %v4624 = vunpack.c.l.b16 %v617
    %v4625 = vunpack.c.l.b16 %v618
    %v4626 = vunpack.c.l.b16 %v619
    %v4627 = vunpack.c.l.b16 %v620
    %v4628 = vunpack.c.l.b16 %v621
    %v4629 = vunpack.c.l.b16 %v622
    %v4630 = vunpack.c.l.b16 %v623
    %v4631 = vunpack.c.l.b16 %v624
    %v4632 = vunpack.c.l.b16 %v625
    %v4633 = vunpack.c.l.b16 %v626
    %v4634 = vunpack.c.l.b16 %v627
    %v4635 = vunpack.c.l.b16 %v628
    %v4636 = vunpack.c.l.b16 %v629
    %v4637 = vunpack.c.l.b16 %v630
    %v4638 = vunpack.c.l.b16 %v631
    %v4639 = vunpack.c.l.b16 %v632
    %v4640 = vunpack.c.l.b16 %v633
    %v4641 = vunpack.c.l.b16 %v634
    %v4642 = vunpack.c.l.b16 %v635
    %v4643 = vunpack.c.l.b16 %v636
    %v4644 = vunpack.c.l.b16 %v637
    %v4645 = vunpack.c.l.b16 %v638
    %v4646 = vunpack.c.l.b16 %v639
    %v4647 = vunpack.c.l.b16 %v640
    %v4648 = vunpack.c.l.b16 %v641
    %v4649 = vunpack.c.l.b16 %v642
    %v4650 = vunpack.c.l.b16 %v643
    %v4651 = vunpack.c.l.b16 %v644
    %v4652 = vunpack.c.l.b16 %v645
    %v4653 = vunpack.c.l.b16 %v646
    %v4654 = vunpack.c.l.b16 %v647
    %v4655 = vunpack.c.l.b16 %v648
    %v4656 = vunpack.c.l.b16 %v649
    %v4657 = vunpack.c.l.b16 %v650
    %v4658 = vunpack.c.l.b16 %v651
    %v4659 = vunpack.c.l.b16 %v652
    %v4660 = vunpack.c.l.b16 %v653
    %v4661 = vunpack.c.l.b16 %v654
    %v4662 = vunpack.c.l.b16 %v655
    %v4663 = vunpack.c.l.b16 %v656
    %v4664 = vunpack.c.l.b16 %v657
    %v4665 = vunpack.c.l.b16 %v658
    %v4666 = vunpack.c.l.b16 %v659
    %v4667 = vunpack.c.l.b16 %v660
    %v4668 = vunpack.c.l.b16 %v661
    %v4669 = vunpack.c.l.b16 %v662
    %v4670 = vunpack.c.l.b16 %v663
    %v4671 = vunpack.c.l.b16 %v664
    %v4672 = vunpack.c.l.b16 %v665
    %v4673 = vunpack.c.l.b16 %v666
    %v4674 = vunpack.c.l.b16 %v667
    %v4675 = vunpack.c.l.b16 %v668
    %v4676 = vunpack.c.l.b16 %v669
    %v4677 = vunpack.c.l.b16 %v670
    %v4678 = vunpack.c.l.b16 %v671
    %v4679 = vunpack.c.l.b16 %v672
    %v4680 = vunpack.c.l.b16 %v673
    %v4681 = vunpack.c.l.b16 %v674
    %v4682 = vunpack.c.l.b16 %v675
    %v4683 = vunpack.c.l.b16 %v676
    %v4684 = vunpack.c.l.b16 %v677
    %v4685 = vunpack.c.l.b16 %v678
    %v4686 = vunpack.c.l.b16 %v679
    %v4687 = vunpack.c.l.b16 %v680
    %v4688 = vunpack.c.l.b16 %v681
    %v4689 = vunpack.c.l.b16 %v682
    %v4690 = vunpack.c.l.b16 %v683
    %v4691 = vunpack.c.l.b16 %v684
    %v4692 = vunpack.c.l.b16 %v685
    %v4693 = vunpack.c.l.b16 %v686
    %v4694 = vunpack.c.l.b16 %v687
    %v4695 = vunpack.c.l.b16 %v688
    %v4696 = vunpack.c.l.b16 %v689
    %v4697 = vunpack.c.l.b16 %v690
    %v4698 = vunpack.c.l.b16 %v691
    %v4699 = vunpack.c.l.b16 %v692
    %v4700 = vunpack.c.l.b16 %v693
    %v4701 = vunpack.c.l.b16 %v694
    %v4702 = vunpack.c.l.b16 %v695
    %v4703 = vunpack.c.l.b16 %v696
    %v4704 = vunpack.c.l.b16 %v697
    %v4705 = vunpack.c.l.b16 %v698
    %v4706 = vunpack.c.l.b16 %v699
    %v4707 = vunpack.c.l.b16 %v700
    %v4708 = vunpack.c.l.b16 %v701
    %v4709 = vunpack.c.l.b16 %v702
    %v4710 = vunpack.c.l.b16 %v703
    %v4711 = vunpack.c.l.b16 %v704
    %v4712 = vunpack.c.l.b16 %v705
    %v4713 = vunpack.c.l.b16 %v706
    %v4714 = vunpack.c.l.b16 %v707
    %v4715 = vunpack.c.l.b16 %v708
    %v4716 = vunpack.c.l.b16 %v709
    %v4717 = vunpack.c.l.b16 %v710
    %v4718 = vunpack.c.l.b16 %v711
    %v4719 = vunpack.c.l.b16 %v712
    %v4720 = vunpack.c.l.b16 %v713
    %v4721 = vunpack.c.l.b16 %v714
    %v4722 = vunpack.c.l.b16 %v715
    %v4723 = vunpack.c.l.b16 %v716
    %v4724 = vunpack.c.l.b16 %v717
    %v4725 = vunpack.c.l.b16 %v718
    %v4726 = vunpack.c.l.b16 %v719
    %v4727 = vunpack.c.l.b16 %v720
    %v4728 = vunpack.c.l.b16 %v721
    %v4729 = vunpack.c.l.b16 %v722
    %v4730 = vunpack.c.l.b16 %v723
    %v4731 = vunpack.c.l.b16 %v724
    %v4732 = vunpack.c.l.b16 %v725
    %v4733 = vunpack.c.l.b16 %v726
    %v4734 = vunpack.c.l.b16 %v727
    %v4735 = vunpack.c.l.b16 %v728
    %v4736 = vunpack.c.l.b16 %v729
    %v4737 = vunpack.c.l.b16 %v730
    %v4738 = vunpack.c.l.b16 %v731
    %v4739 = vunpack.c.l.b16 %v732
    %v4740 = vunpack.c.l.b16 %v733
    %v4741 = vunpack.c.l.b16 %v734
    %v4742 = vunpack.c.l.b16 %v735
    %v4743 = vunpack.c.l.b16 %v736
    %v4744 = vunpack.c.l.b16 %v737
    %v4745 = vunpack.c.l.b16 %v738
    %v4746 = vunpack.c.l.b16 %v739
    %v4747 = vunpack.c.l.b16 %v740
    %v4748 = vunpack.c.l.b16 %v741
    %v4749 = vunpack.c.l.b16 %v742
    %v4750 = vunpack.c.l.b16 %v743
    %v4751 = vunpack.c.l.b16 %v744
    %v4752 = vunpack.c.l.b16 %v745
    %v4753 = vunpack.c.l.b16 %v746
    %v4754 = vunpack.c.l.b16 %v747
    %v4755 = vunpack.c.l.b16 %v748
    %v4756 = vunpack.c.l.b16 %v749
    %v4757 = vunpack.c.l.b16 %v750
    %v4758 = vunpack.c.l.b16 %v751
    %v4759 = vunpack.c.l.b16 %v752
    %v4760 = vunpack.c.l.b16 %v753
    %v4761 = vunpack.c.l.b16 %v754
    %v4762 = vunpack.c.l.b16 %v755
    %v4763 = vunpack.c.l.b16 %v756
    %v4764 = vunpack.c.l.b16 %v757
    %v4765 = vunpack.c.l.b16 %v758
    %v4766 = vunpack.c.l.b16 %v759
    %v4767 = vunpack.c.l.b16 %v760
    %v4768 = vunpack.c.l.b16 %v761
    %v4769 = vunpack.c.l.b16 %v762
    %v4770 = vunpack.c.l.b16 %v763
    %v4771 = vunpack.c.l.b16 %v764
    %v4772 = vunpack.c.l.b16 %v765
    %v4773 = vunpack.c.l.b16 %v766
    %v4774 = vunpack.c.l.b16 %v767
    %v4775 = vunpack.c.l.b16 %v768
    %v4776 = vunpack.c.l.b16 %v769
    %v4777 = vunpack.c.l.b16 %v770
    %v4778 = vunpack.c.l.b16 %v771
    %v4779 = vunpack.c.l.b16 %v772
    %v4780 = vunpack.c.l.b16 %v773
    %v4781 = vunpack.c.l.b16 %v774
    %v4782 = vunpack.c.l.b16 %v775
    %v4783 = vunpack.c.l.b16 %v776
    %v4784 = vunpack.c.l.b16 %v777
    %v4785 = vunpack.c.l.b16 %v778
    %v4786 = vunpack.c.l.b16 %v779
    %v4787 = vunpack.c.l.b16 %v780
    %v4788 = vunpack.c.l.b16 %v781
    %v4789 = vunpack.c.l.b16 %v782
    %v4790 = vunpack.c.l.b16 %v783
    %v4791 = vunpack.c.l.b16 %v784
    %v4792 = vunpack.c.l.b16 %v785
    %v4793 = vunpack.c.l.b16 %v786
    %v4794 = vunpack.c.l.b16 %v787
    %v4795 = vunpack.c.l.b16 %v788
    %v4796 = vunpack.c.l.b16 %v789
    %v4797 = vunpack.c.l.b16 %v790
    %v4798 = vunpack.c.l.b16 %v791
    %v4799 = vunpack.c.l.b16 %v792
    %v4800 = vunpack.c.l.b16 %v793
    %v4801 = vunpack.c.l.b16 %v794
    %v4802 = vunpack.c.l.b16 %v795
    %v4803 = vunpack.c.l.b16 %v796
    %v4804 = vunpack.c.l.b16 %v797
    %v4805 = vunpack.c.l.b16 %v798
    %v4806 = vunpack.c.l.b16 %v799
    %v4807 = vunpack.c.l.b16 %v800
    %v4808 = vunpack.c.l.b16 %v801
    %v4809 = vunpack.c.l.b16 %v802
    %v4810 = vunpack.c.l.b16 %v803
    %v4811 = vunpack.c.l.b16 %v804
    %v4812 = vunpack.c.l.b16 %v805
    %v4813 = vunpack.c.l.b16 %v806
    %v4814 = vunpack.c.l.b16 %v807
    %v4815 = vunpack.c.l.b16 %v808
    %v4816 = vunpack.c.l.b16 %v809
    %v4817 = vunpack.c.l.b16 %v810
    %v4818 = vunpack.c.l.b16 %v811
    %v4819 = vunpack.c.l.b16 %v812
    %v4820 = vunpack.c.l.b16 %v813
    %v4821 = vunpack.c.l.b16 %v814
    %v4822 = vunpack.c.l.b16 %v815
    %v4823 = vunpack.c.l.b16 %v816
    %v4824 = vunpack.c.l.b16 %v817
    %v4825 = vunpack.c.l.b16 %v818
    %v4826 = vunpack.c.l.b16 %v819
    %v4827 = vunpack.c.l.b16 %v820
    %v4828 = vunpack.c.l.b16 %v821
    %v4829 = vunpack.c.l.b16 %v822
    %v4830 = vunpack.c.l.b16 %v823
    %v4831 = vunpack.c.l.b16 %v824
    %v4832 = vunpack.c.l.b16 %v825
    %v4833 = vunpack.c.l.b16 %v826
    %v4834 = vunpack.c.l.b16 %v827
    %v4835 = vunpack.c.l.b16 %v828
    %v4836 = vunpack.c.l.b16 %v829
    %v4837 = vunpack.c.l.b16 %v830
    %v4838 = vunpack.c.l.b16 %v831
    %v4839 = vunpack.c.l.b16 %v832
    %v4840 = vunpack.c.l.b16 %v833
    %v4841 = vunpack.c.l.b16 %v834
    %v4842 = vunpack.c.l.b16 %v835
    %v4843 = vunpack.c.l.b16 %v836
    %v4844 = vunpack.c.l.b16 %v837
    %v4845 = vunpack.c.l.b16 %v838
    %v4846 = vunpack.c.l.b16 %v839
    %v4847 = vunpack.c.l.b16 %v840
    %v4848 = vunpack.c.l.b16 %v841
    %v4849 = vunpack.c.l.b16 %v842
    %v4850 = vunpack.c.l.b16 %v843
    %v4851 = vunpack.c.l.b16 %v844
    %v4852 = vunpack.c.l.b16 %v845
    %v4853 = vunpack.c.l.b16 %v846
    %v4854 = vunpack.c.l.b16 %v847
    %v4855 = vunpack.c.l.b16 %v848
    %v4856 = vunpack.c.l.b16 %v849
    %v4857 = vunpack.c.l.b16 %v850
    %v4858 = vunpack.c.l.b16 %v851
    %v4859 = vunpack.c.l.b16 %v852
    %v4860 = vunpack.c.l.b16 %v853
    %v4861 = vunpack.c.l.b16 %v854
    %v4862 = vunpack.c.l.b16 %v855
    %v4863 = vunpack.c.l.b16 %v856
    %v4864 = vunpack.c.l.b16 %v857
    %v4865 = vunpack.c.l.b16 %v858
    %v4866 = vunpack.c.l.b16 %v859
    %v4867 = vunpack.c.l.b16 %v860
    %v4868 = vunpack.c.l.b16 %v861
    %v4869 = vunpack.c.l.b16 %v862
    %v4870 = vunpack.c.l.b16 %v863
    %v4871 = vunpack.c.l.b16 %v864
    %v4872 = vunpack.c.l.b16 %v865
    %v4873 = vunpack.c.l.b16 %v866
    %v4874 = vunpack.c.l.b16 %v867
    %v4875 = vunpack.c.l.b16 %v868
    %v4876 = vunpack.c.l.b16 %v869
    %v4877 = vunpack.c.l.b16 %v870
    %v4878 = vunpack.c.l.b16 %v871
    %v4879 = vunpack.c.l.b16 %v872
    %v4880 = vunpack.c.l.b16 %v873
    %v4881 = vunpack.c.l.b16 %v874
    %v4882 = vunpack.c.l.b16 %v875
    %v4883 = vunpack.c.l.b16 %v876
    %v4884 = vunpack.c.l.b16 %v877
    %v4885 = vunpack.c.l.b16 %v878
    %v4886 = vunpack.c.l.b16 %v879
    %v4887 = vunpack.c.l.b16 %v880
    %v4888 = vunpack.c.l.b16 %v881
    %v4889 = vunpack.c.l.b16 %v882
    %v4890 = vunpack.c.l.b16 %v883
    %v4891 = vunpack.c.l.b16 %v884
    %v4892 = vunpack.c.l.b16 %v885
    %v4893 = vunpack.c.l.b16 %v886
    %v4894 = vunpack.c.l.b16 %v887
    %v4895 = vunpack.c.l.b16 %v888
    %v4896 = vunpack.c.l.b16 %v889
    %v4897 = vunpack.c.l.b16 %v890
    %v4898 = vunpack.c.l.b16 %v891
    %v4899 = vunpack.c.l.b16 %v892
    %v4900 = vunpack.c.l.b16 %v893
    %v4901 = vunpack.c.l.b16 %v894
    %v4902 = vunpack.c.l.b16 %v895
    %v4903 = vunpack.c.l.b16 %v896
    %v4904 = vunpack.c.l.b16 %v897
    %v4905 = vunpack.c.l.b16 %v898
    %v4906 = vunpack.c.l.b16 %v899
    %v4907 = vunpack.c.l.b16 %v900
    %v4908 = vunpack.c.l.b16 %v901
    %v4909 = vunpack.c.l.b16 %v902
    %v4910 = vunpack.c.l.b16 %v903
    %v4911 = vunpack.c.l.b16 %v904
    %v4912 = vunpack.c.l.b16 %v905
    %v4913 = vunpack.c.l.b16 %v906
    %v4914 = vunpack.c.l.b16 %v907
    %v4915 = vunpack.c.l.b16 %v908
    %v4916 = vunpack.c.l.b16 %v909
    %v4917 = vunpack.c.l.b16 %v910
    %v4918 = vunpack.c.l.b16 %v911
    %v4919 = vunpack.c.l.b16 %v912
    %v4920 = vunpack.c.l.b16 %v913
    %v4921 = vunpack.c.l.b16 %v914
    %v4922 = vunpack.c.l.b16 %v915
    %v4923 = vunpack.c.l.b16 %v916
    %v4924 = vunpack.c.l.b16 %v917
    %v4925 = vunpack.c.l.b16 %v918
    %v4926 = vunpack.c.l.b16 %v919
    %v4927 = vunpack.c.l.b16 %v920
    %v4928 = vunpack.c.l.b16 %v921
    %v4929 = vunpack.c.l.b16 %v922
    %v4930 = vunpack.c.l.b16 %v923
    %v4931 = vunpack.c.l.b16 %v924
    %v4932 = vunpack.c.l.b16 %v925
    %v4933 = vunpack.c.l.b16 %v926
    %v4934 = vunpack.c.l.b16 %v927
    %v4935 = vunpack.c.l.b16 %v928
    %v4936 = vunpack.c.l.b16 %v929
    %v4937 = vunpack.c.l.b16 %v930
    %v4938 = vunpack.c.l.b16 %v931
    %v4939 = vunpack.c.l.b16 %v932
    %v4940 = vunpack.c.l.b16 %v933
    %v4941 = vunpack.c.l.b16 %v934
    %v4942 = vunpack.c.l.b16 %v935
    %v4943 = vunpack.c.l.b16 %v936
    %v4944 = vunpack.c.l.b16 %v937
    %v4945 = vunpack.c.l.b16 %v938
    %v4946 = vunpack.c.l.b16 %v939
    %v4947 = vunpack.c.l.b16 %v940
    %v4948 = vunpack.c.l.b16 %v941
    %v4949 = vunpack.c.l.b16 %v942
    %v4950 = vunpack.c.l.b16 %v943
    %v4951 = vunpack.c.l.b16 %v944
    %v4952 = vunpack.c.l.b16 %v945
    %v4953 = vunpack.c.l.b16 %v946
    %v4954 = vunpack.c.l.b16 %v947
    %v4955 = vunpack.c.l.b16 %v948
    %v4956 = vunpack.c.l.b16 %v949
    %v4957 = vunpack.c.l.b16 %v950
    %v4958 = vunpack.c.l.b16 %v951
    %v4959 = vunpack.c.l.b16 %v952
    %v4960 = vunpack.c.l.b16 %v953
    %v4961 = vunpack.c.l.b16 %v954
    %v4962 = vunpack.c.l.b16 %v955
    %v4963 = vunpack.c.l.b16 %v956
    %v4964 = vunpack.c.l.b16 %v957
    %v4965 = vunpack.c.l.b16 %v958
    %v4966 = vunpack.c.l.b16 %v959
    %v4967 = vunpack.c.l.b16 %v960
    %v4968 = vunpack.c.l.b16 %v961
    %v4969 = vunpack.c.l.b16 %v962
    %v4970 = vunpack.c.l.b16 %v963
    %v4971 = vunpack.c.l.b16 %v964
    %v4972 = vunpack.c.l.b16 %v965
    %v4973 = vunpack.c.l.b16 %v966
    %v4974 = vunpack.c.l.b16 %v967
    %v4975 = vunpack.c.l.b16 %v968
    %v4976 = vunpack.c.l.b16 %v969
    %v4977 = vunpack.c.l.b16 %v970
    %v4978 = vunpack.c.l.b16 %v971
    %v4979 = vunpack.c.l.b16 %v972
    %v4980 = vunpack.c.l.b16 %v973
    %v4981 = vunpack.c.l.b16 %v974
    %v4982 = vunpack.c.l.b16 %v975
    %v4983 = vunpack.c.l.b16 %v976
    %v4984 = vunpack.c.l.b16 %v977
    %v4985 = vunpack.c.l.b16 %v978
    %v4986 = vunpack.c.l.b16 %v979
    %v4987 = vunpack.c.l.b16 %v980
    %v4988 = vunpack.c.l.b16 %v981
    %v4989 = vunpack.c.l.b16 %v982
    %v4990 = vunpack.c.l.b16 %v983
    %v4991 = vunpack.c.l.b16 %v984
    %v4992 = vunpack.c.l.b16 %v985
    %v4993 = vunpack.c.l.b16 %v986
    %v4994 = vunpack.c.l.b16 %v987
    %v4995 = vunpack.c.l.b16 %v988
    %v4996 = vunpack.c.l.b16 %v989
    %v4997 = vunpack.c.l.b16 %v990
    %v4998 = vunpack.c.l.b16 %v991
    %v4999 = vunpack.c.l.b16 %v992
    %v5000 = vunpack.c.l.b16 %v993
    %v5001 = vunpack.c.l.b16 %v994
    %v5002 = vunpack.c.l.b16 %v995
    %v5003 = vunpack.c.l.b16 %v996
    %v5004 = vunpack.c.l.b16 %v997
    %v5005 = vunpack.c.l.b16 %v998
    %v5006 = vunpack.c.l.b16 %v999
    %v5007 = vunpack.c.l.b16 %v1000
    %v5008 = vunpack.c.l.b16 %v1001
    %v5009 = vunpack.c.l.b16 %v1002
    %v5010 = vunpack.c.l.b16 %v1003
    %v5011 = vunpack.c.l.b16 %v1004
    %v5012 = vunpack.c.l.b16 %v1005
    %v5013 = vunpack.c.l.b16 %v1006
    %v5014 = vunpack.c.l.b16 %v1007
    %v5015 = vunpack.c.l.b16 %v1008
    %v5016 = vunpack.c.l.b16 %v1009
    %v5017 = vunpack.c.l.b16 %v1010
    %v5018 = vunpack.c.l.b16 %v1011
    %v5019 = vunpack.c.l.b16 %v1012
    %v5020 = vunpack.c.l.b16 %v1013
    %v5021 = vunpack.c.l.b16 %v1014
    %v5022 = vunpack.c.l.b16 %v1015
    %v5023 = vunpack.c.l.b16 %v1016
    %v5024 = vunpack.c.l.b16 %v1017
    %v5025 = vunpack.c.l.b16 %v1018
    %v5026 = vunpack.c.l.b16 %v1019
    %v5027 = vunpack.c.l.b16 %v1020
    %v5028 = vunpack.c.l.b16 %v1021
    %v5029 = vunpack.c.l.b16 %v1022
    %v5030 = vunpack.c.l.b16 %v1023
    %v5031 = vunpack.c.l.b16 %v1024
    %v5032 = vunpack.c.l.b16 %v1025
    %v5033 = vunpack.c.l.b16 %v1026
    %v5034 = vunpack.c.l.b16 %v1027
    %v5035 = vunpack.c.l.b16 %v1028
    %v5036 = vunpack.c.l.b16 %v1029
    %v5037 = vunpack.c.l.b16 %v1030
    %v5038 = vunpack.c.l.b16 %v1031
    %v5039 = vunpack.c.l.b16 %v1032
    %v5040 = vunpack.c.l.b16 %v1033
    %v5041 = vunpack.c.l.b16 %v1034
    %v5042 = vunpack.c.l.b16 %v1035
    %v5043 = vunpack.c.l.b16 %v1036
    %v5044 = vunpack.c.l.b16 %v1037
    %v5045 = vunpack.c.l.b16 %v1038
    %v5046 = vunpack.c.l.b16 %v1039
    %v5047 = vunpack.c.l.b16 %v1040
    %v5048 = vunpack.c.l.b16 %v1041
    %v5049 = vunpack.c.l.b16 %v1042
    %v5050 = vunpack.c.l.b16 %v1043
    %v5051 = vunpack.c.l.b16 %v1044
    %v5052 = vunpack.c.l.b16 %v1045
    %v5053 = vunpack.c.l.b16 %v1046
    %v5054 = vunpack.c.l.b16 %v1047
    %v5055 = vunpack.c.l.b16 %v1048
    %v5056 = vunpack.c.l.b16 %v1049
    %v5057 = vunpack.c.l.b16 %v1050
    %v5058 = vunpack.c.l.b16 %v1051
    %v5059 = vunpack.c.l.b16 %v1052
    %v5060 = vunpack.c.l.b16 %v1053
    %v5061 = vunpack.c.l.b16 %v1054
    %v5062 = vunpack.c.l.b16 %v1055
    %v5063 = vunpack.c.l.b16 %v1056
    %v5064 = vunpack.c.l.b16 %v1057
    %v5065 = vunpack.c.l.b16 %v1058
    %v5066 = vunpack.c.l.b16 %v1059
    %v5067 = vunpack.c.l.b16 %v1060
    %v5068 = vunpack.c.l.b16 %v1061
    %v5069 = vunpack.c.l.b16 %v1062
    %v5070 = vunpack.c.l.b16 %v1063
    %v5071 = vunpack.c.l.b16 %v1064
    %v5072 = vunpack.c.l.b16 %v1065
    %v5073 = vunpack.c.l.b16 %v1066
    %v5074 = vunpack.c.l.b16 %v1067
    %v5075 = vunpack.c.l.b16 %v1068
    %v5076 = vunpack.c.l.b16 %v1069
    %v5077 = vunpack.c.l.b16 %v1070
    %v5078 = vunpack.c.l.b16 %v1071
    %v5079 = vunpack.c.l.b16 %v1072
    %v5080 = vunpack.c.l.b16 %v1073
    %v5081 = vunpack.c.l.b16 %v1074
    %v5082 = vunpack.c.l.b16 %v1075
    %v5083 = vunpack.c.l.b16 %v1076
    %v5084 = vunpack.c.l.b16 %v1077
    %v5085 = vunpack.c.l.b16 %v1078
    %v5086 = vunpack.c.l.b16 %v1079
    %v5087 = vunpack.c.l.b16 %v1080
    %v5088 = vunpack.c.l.b16 %v1081
    %v5089 = vunpack.c.l.b16 %v1082
    %v5090 = vunpack.c.l.b16 %v1083
    %v5091 = vunpack.c.l.b16 %v1084
    %v5092 = vunpack.c.l.b16 %v1085
    %v5093 = vunpack.c.l.b16 %v1086
    %v5094 = vunpack.c.l.b16 %v1087
    %v5095 = vunpack.c.l.b16 %v1088
    %v5096 = vunpack.c.l.b16 %v1089
    %v5097 = vunpack.c.l.b16 %v1090
    %v5098 = vunpack.c.l.b16 %v1091
    %v5099 = vunpack.c.l.b16 %v1092
    %v5100 = vunpack.c.l.b16 %v1093
    %v5101 = vunpack.c.l.b16 %v1094
    %v5102 = vunpack.c.l.b16 %v1095
    %v5103 = vunpack.c.l.b16 %v1096
    %v5104 = vunpack.c.l.b16 %v1097
    %v5105 = vunpack.c.l.b16 %v1098
    %v5106 = vunpack.c.l.b16 %v1099
    %v5107 = vunpack.c.l.b16 %v1100
    %v5108 = vunpack.c.l.b16 %v1101
    %v5109 = vunpack.c.l.b16 %v1102
    %v5110 = vunpack.c.l.b16 %v1103
    %v5111 = vunpack.c.l.b16 %v1104
    %v5112 = vunpack.c.l.b16 %v1105
    %v5113 = vunpack.c.l.b16 %v1106
    %v5114 = vunpack.c.l.b16 %v1107
    %v5115 = vunpack.c.l.b16 %v1108
    %v5116 = vunpack.c.l.b16 %v1109
    %v5117 = vunpack.c.l.b16 %v1110
    %v5118 = vunpack.c.l.b16 %v1111
    %v5119 = vunpack.c.l.b16 %v1112
    %v5120 = vunpack.c.l.b16 %v1113
    %v5121 = vunpack.c.l.b16 %v1114
    %v5122 = vunpack.c.l.b16 %v1115
    %v5123 = vunpack.c.l.b16 %v1116
    %v5124 = vunpack.c.l.b16 %v1117
    %v5125 = vunpack.c.l.b16 %v1118
    %v5126 = vunpack.c.l.b16 %v1119
    %v5127 = vunpack.c.l.b16 %v1120
    %v5128 = vunpack.c.l.b16 %v1121
    %v5129 = vunpack.c.l.b16 %v1122
    %v5130 = vunpack.c.l.b16 %v1123
    %v5131 = vunpack.c.l.b16 %v1124
    %v5132 = vunpack.c.l.b16 %v1125
    %v5133 = vunpack.c.l.b16 %v1126
    %v5134 = vunpack.c.l.b16 %v1127
    %v5135 = vunpack.c.l.b16 %v1128
    %v5136 = vunpack.c.l.b16 %v1129
    %v5137 = vunpack.c.l.b16 %v1130
    %v5138 = vunpack.c.l.b16 %v1131
    %v5139 = vunpack.c.l.b16 %v1132
    %v5140 = vunpack.c.l.b16 %v1133
    %v5141 = vunpack.c.l.b16 %v1134
    %v5142 = vunpack.c.l.b16 %v1135
    %v5143 = vunpack.c.l.b16 %v1136
    %v5144 = vunpack.c.l.b16 %v1137
    %v5145 = vunpack.c.l.b16 %v1138
    %v5146 = vunpack.c.l.b16 %v1139
    %v5147 = vunpack.c.l.b16 %v1140
    %v5148 = vunpack.c.l.b16 %v1141
    %v5149 = vunpack.c.l.b16 %v1142
    %v5150 = vunpack.c.l.b16 %v1143
    %v5151 = vunpack.c.l.b16 %v1144
    %v5152 = vunpack.c.l.b16 %v1145
    %v5153 = vunpack.c.l.b16 %v1146
    %v5154 = vunpack.c.l.b16 %v1147
    %v5155 = vunpack.c.l.b16 %v1148
    %v5156 = vunpack.c.l.b16 %v1149
    %v5157 = vunpack.c.l.b16 %v1150
    %v5158 = vunpack.c.l.b16 %v1151
    %v5159 = vunpack.c.l.b16 %v1152
    %v5160 = vunpack.c.l.b16 %v1153
    %v5161 = vunpack.c.l.b16 %v1154
    %v5162 = vunpack.c.l.b16 %v1155
    %v5163 = vunpack.c.l.b16 %v1156
    %v5164 = vunpack.c.l.b16 %v1157
    %v5165 = vunpack.c.l.b16 %v1158
    %v5166 = vunpack.c.l.b16 %v1159
    %v5167 = vunpack.c.l.b16 %v1160
    %v5168 = vunpack.c.l.b16 %v1161
    %v5169 = vunpack.c.l.b16 %v1162
    %v5170 = vunpack.c.l.b16 %v1163
    %v5171 = vunpack.c.l.b16 %v1164
    %v5172 = vunpack.c.l.b16 %v1165
    %v5173 = vunpack.c.l.b16 %v1166
    %v5174 = vunpack.c.l.b16 %v1167
    %v5175 = vunpack.c.l.b16 %v1168
    %v5176 = vunpack.c.l.b16 %v1169
    %v5177 = vunpack.c.l.b16 %v1170
    %v5178 = vunpack.c.l.b16 %v1171
    %v5179 = vunpack.c.l.b16 %v1172
    %v5180 = vunpack.c.l.b16 %v1173
    %v5181 = vunpack.c.l.b16 %v1174
    %v5182 = vunpack.c.l.b16 %v1175
    %v5183 = vunpack.c.l.b16 %v1176
    %v5184 = vunpack.c.l.b16 %v1177
    %v5185 = vunpack.c.l.b16 %v1178
    %v5186 = vunpack.c.l.b16 %v1179
    %v5187 = vunpack.c.l.b16 %v1180
    %v5188 = vunpack.c.l.b16 %v1181
    %v5189 = vunpack.c.l.b16 %v1182
    %v5190 = vunpack.c.l.b16 %v1183
    %v5191 = vunpack.c.l.b16 %v1184
    %v5192 = vunpack.c.l.b16 %v1185
    %v5193 = vunpack.c.l.b16 %v1186
    %v5194 = vunpack.c.l.b16 %v1187
    %v5195 = vunpack.c.l.b16 %v1188
    %v5196 = vunpack.c.l.b16 %v1189
    %v5197 = vunpack.c.l.b16 %v1190
    %v5198 = vunpack.c.l.b16 %v1191
    %v5199 = vunpack.c.l.b16 %v1192
    %v5200 = vunpack.c.l.b16 %v1193
    %v5201 = vunpack.c.l.b16 %v1194
    %v5202 = vunpack.c.l.b16 %v1195
    %v5203 = vunpack.c.l.b16 %v1196
    %v5204 = vunpack.c.l.b16 %v1197
    %v5205 = vunpack.c.l.b16 %v1198
    %v5206 = vunpack.c.l.b16 %v1199
    %v5207 = vunpack.c.l.b16 %v1200
    %v5208 = vunpack.c.l.b16 %v1201
    %v5209 = vunpack.c.l.b16 %v1202
    %v5210 = vunpack.c.l.b16 %v1203
    %v5211 = vunpack.c.l.b16 %v1204
    %v5212 = vunpack.c.l.b16 %v1205
    %v5213 = vunpack.c.l.b16 %v1206
    %v5214 = vunpack.c.l.b16 %v1207
    %v5215 = vunpack.c.l.b16 %v1208
    %v5216 = vunpack.c.l.b16 %v1209
    %v5217 = vunpack.c.l.b16 %v1210
    %v5218 = vunpack.c.l.b16 %v1211
    %v5219 = vunpack.c.l.b16 %v1212
    %v5220 = vunpack.c.l.b16 %v1213
    %v5221 = vunpack.c.l.b16 %v1214
    %v5222 = vunpack.c.l.b16 %v1215
    %v5223 = vunpack.c.l.b16 %v1216
    %v5224 = vunpack.c.l.b16 %v1217
    %v5225 = vunpack.c.l.b16 %v1218
    %v5226 = vunpack.c.l.b16 %v1219
    %v5227 = vunpack.c.l.b16 %v1220
    %v5228 = vunpack.c.l.b16 %v1221
    %v5229 = vunpack.c.l.b16 %v1222
    %v5230 = vunpack.c.l.b16 %v1223
    %v5231 = vunpack.c.l.b16 %v1224
    %v5232 = vunpack.c.l.b16 %v1225
    %v5233 = vunpack.c.l.b16 %v1226
    %v5234 = vunpack.c.l.b16 %v1227
    %v5235 = vunpack.c.l.b16 %v1228
    %v5236 = vunpack.c.l.b16 %v1229
    %v5237 = vunpack.c.l.b16 %v1230
    %v5238 = vunpack.c.l.b16 %v1231
    %v5239 = vunpack.c.l.b16 %v1232
    %v5240 = vunpack.c.l.b16 %v1233
    %v5241 = vunpack.c.l.b16 %v1234
    %v5242 = vunpack.c.l.b16 %v1235
    %v5243 = vunpack.c.l.b16 %v1236
    %v5244 = vunpack.c.l.b16 %v1237
    %v5245 = vunpack.c.l.b16 %v1238
    %v5246 = vunpack.c.l.b16 %v1239
    %v5247 = vunpack.c.l.b16 %v1240
    %v5248 = vunpack.c.l.b16 %v1241
    %v5249 = vunpack.c.l.b16 %v1242
    %v5250 = vunpack.c.l.b16 %v1243
    %v5251 = vunpack.c.l.b16 %v1244
    %v5252 = vunpack.c.l.b16 %v1245
    %v5253 = vunpack.c.l.b16 %v1246
    %v5254 = vunpack.c.l.b16 %v1247
    %v5255 = vunpack.c.l.b16 %v1248
    %v5256 = vunpack.c.l.b16 %v1249
    %v5257 = vunpack.c.l.b16 %v1250
    %v5258 = vunpack.c.l.b16 %v1251
    %v5259 = vunpack.c.l.b16 %v1252
    %v5260 = vunpack.c.l.b16 %v1253
    %v5261 = vunpack.c.l.b16 %v1254
    %v5262 = vunpack.c.l.b16 %v1255
    %v5263 = vunpack.c.l.b16 %v1256
    %v5264 = vunpack.c.l.b16 %v1257
    %v5265 = vunpack.c.l.b16 %v1258
    %v5266 = vunpack.c.l.b16 %v1259
    %v5267 = vunpack.c.l.b16 %v1260
    %v5268 = vunpack.c.l.b16 %v1261
    %v5269 = vunpack.c.l.b16 %v1262
    %v5270 = vunpack.c.l.b16 %v1263
    %v5271 = vunpack.c.l.b16 %v1264
    %v5272 = vunpack.c.l.b16 %v1265
    %v5273 = vunpack.c.l.b16 %v1266
    %v5274 = vunpack.c.l.b16 %v1267
    %v5275 = vunpack.c.l.b16 %v1268
    %v5276 = vunpack.c.l.b16 %v1269
    %v5277 = vunpack.c.l.b16 %v1270
    %v5278 = vunpack.c.l.b16 %v1271
    %v5279 = vunpack.c.l.b16 %v1272
    %v5280 = vunpack.c.l.b16 %v1273
    %v5281 = vunpack.c.l.b16 %v1274
    %v5282 = vunpack.c.l.b16 %v1275
    %v5283 = vunpack.c.l.b16 %v1276
    %v5284 = vunpack.c.l.b16 %v1277
    %v5285 = vunpack.c.l.b16 %v1278
    %v5286 = vunpack.c.l.b16 %v1279
    %v5287 = vunpack.c.l.b16 %v1280
    %v5288 = vunpack.c.l.b16 %v1281
    %v5289 = vunpack.c.l.b16 %v1282
    %v5290 = vunpack.c.l.b16 %v1283
    %v5291 = vunpack.c.l.b16 %v1284
    %v5292 = vunpack.c.l.b16 %v1285
    %v5293 = vunpack.c.l.b16 %v1286
    %v5294 = vunpack.c.l.b16 %v1287
    %v5295 = vunpack.c.l.b16 %v1288
    %v5296 = vunpack.c.l.b16 %v1289
    %v5297 = vunpack.c.l.b16 %v1290
    %v5298 = vunpack.c.l.b16 %v1291
    %v5299 = vunpack.c.l.b16 %v1292
    %v5300 = vunpack.c.l.b16 %v1293
    %v5301 = vunpack.c.l.b16 %v1294
    %v5302 = vunpack.c.l.b16 %v1295
    %v5303 = vunpack.c.l.b16 %v1296
    %v5304 = vunpack.c.l.b16 %v1297
    %v5305 = vunpack.c.l.b16 %v1298
    %v5306 = vunpack.c.l.b16 %v1299
    %v5307 = vunpack.c.l.b16 %v1300
    %v5308 = vunpack.c.l.b16 %v1301
    %v5309 = vunpack.c.l.b16 %v1302
    %v5310 = vunpack.c.l.b16 %v1303
    %v5311 = vunpack.c.l.b16 %v1304
    %v5312 = vunpack.c.l.b16 %v1305
    %v5313 = vunpack.c.l.b16 %v1306
    %v5314 = vunpack.c.l.b16 %v1307
    %v5315 = vunpack.c.l.b16 %v1308
    %v5316 = vunpack.c.l.b16 %v1309
    %v5317 = vunpack.c.l.b16 %v1310
    %v5318 = vunpack.c.l.b16 %v1311
    %v5319 = vunpack.c.l.b16 %v1312
    %v5320 = vunpack.c.l.b16 %v1313
    %v5321 = vunpack.c.l.b16 %v1314
    %v5322 = vunpack.c.l.b16 %v1315
    %v5323 = vunpack.c.l.b16 %v1316
    %v5324 = vunpack.c.l.b16 %v1317
    %v5325 = vunpack.c.l.b16 %v1318
    %v5326 = vunpack.c.l.b16 %v1319
    %v5327 = vunpack.c.l.b16 %v1320
    %v5328 = vunpack.c.l.b16 %v1321
    %v5329 = vunpack.c.l.b16 %v1322
    %v5330 = vunpack.c.l.b16 %v1323
    %v5331 = vunpack.c.l.b16 %v1324
    %v5332 = vunpack.c.l.b16 %v1325
    %v5333 = vunpack.c.l.b16 %v1326
    %v5334 = vunpack.c.l.b16 %v1327
    %v5335 = vunpack.c.l.b16 %v1328
    %v5336 = vunpack.c.l.b16 %v1329
    %v5337 = vunpack.c.l.b16 %v1330
    %v5338 = vunpack.c.l.b16 %v1331
    %v5339 = vunpack.c.l.b16 %v1332
    %v5340 = vunpack.c.l.b16 %v1333
    %v5341 = vunpack.c.l.b16 %v1334
    %v5342 = vunpack.c.l.b16 %v1335
    %v5343 = vunpack.c.l.b16 %v1336
    %v5344 = vunpack.c.l.b16 %v1337
    %v5345 = vunpack.c.l.b16 %v1338
    %v5346 = vunpack.c.l.b16 %v1339
    %v5347 = vunpack.c.l.b16 %v1340
    %v5348 = vunpack.c.l.b16 %v1341
    %v5349 = vunpack.c.l.b16 %v1342
    %v5350 = vunpack.c.l.b16 %v1343
    %v5351 = vunpack.c.l.b16 %v1344
    %v5352 = vunpack.c.l.b16 %v1345
    %v5353 = vunpack.c.l.b16 %v1346
    %v5354 = vunpack.c.l.b16 %v1347
    %v5355 = vunpack.c.l.b16 %v1348
    %v5356 = vunpack.c.l.b16 %v1349
    %v5357 = vunpack.c.l.b16 %v1350
    %v5358 = vunpack.c.l.b16 %v1351
    %v5359 = vunpack.c.l.b16 %v1352
    %v5360 = vunpack.c.l.b16 %v1353
    %v5361 = vunpack.c.l.b16 %v1354
    %v5362 = vunpack.c.l.b16 %v1355
    %v5363 = vunpack.c.l.b16 %v1356
    %v5364 = vunpack.c.l.b16 %v1357
    %v5365 = vunpack.c.l.b16 %v1358
    %v5366 = vunpack.c.l.b16 %v1359
    %v5367 = vunpack.c.l.b16 %v1360
    %v5368 = vunpack.c.l.b16 %v1361
    %v5369 = vunpack.c.l.b16 %v1362
    %v5370 = vunpack.c.l.b16 %v1363
    %v5371 = vunpack.c.l.b16 %v1364
    %v5372 = vunpack.c.l.b16 %v1365
    %v5373 = vunpack.c.l.b16 %v1366
    %v5374 = vunpack.c.l.b16 %v1367
    %v5375 = vunpack.c.l.b16 %v1368
    %v5376 = vunpack.c.l.b16 %v1369
    %v5377 = vunpack.c.l.b16 %v1370
    %v5378 = vunpack.c.l.b16 %v1371
    %v5379 = vunpack.c.l.b16 %v1372
    %v5380 = vunpack.c.l.b16 %v1373
    %v5381 = vunpack.c.l.b16 %v1374
    %v5382 = vunpack.c.l.b16 %v1375
    %v5383 = vunpack.c.l.b16 %v1376
    %v5384 = vunpack.c.l.b16 %v1377
    %v5385 = vunpack.c.l.b16 %v1378
    %v5386 = vunpack.c.l.b16 %v1379
    %v5387 = vunpack.c.l.b16 %v1380
    %v5388 = vunpack.c.l.b16 %v1381
    %v5389 = vunpack.c.l.b16 %v1382
    %v5390 = vunpack.c.l.b16 %v1383
    %v5391 = vunpack.c.l.b16 %v1384
    %v5392 = vunpack.c.l.b16 %v1385
    %v5393 = vunpack.c.l.b16 %v1386
    %v5394 = vunpack.c.l.b16 %v1387
    %v5395 = vunpack.c.l.b16 %v1388
    %v5396 = vunpack.c.l.b16 %v1389
    %v5397 = vunpack.c.l.b16 %v1390
    %v5398 = vunpack.c.l.b16 %v1391
    %v5399 = vunpack.c.l.b16 %v1392
    %v5400 = vunpack.c.l.b16 %v1393
    %v5401 = vunpack.c.l.b16 %v1394
    %v5402 = vunpack.c.l.b16 %v1395
    %v5403 = vunpack.c.l.b16 %v1396
    %v5404 = vunpack.c.l.b16 %v1397
    %v5405 = vunpack.c.l.b16 %v1398
    %v5406 = vunpack.c.l.b16 %v1399
    %v5407 = vunpack.c.l.b16 %v1400
    %v5408 = vunpack.c.l.b16 %v1401
    %v5409 = vunpack.c.l.b16 %v1402
    %v5410 = vunpack.c.l.b16 %v1403
    %v5411 = vunpack.c.l.b16 %v1404
    %v5412 = vunpack.c.l.b16 %v1405
    %v5413 = vunpack.c.l.b16 %v1406
    %v5414 = vunpack.c.l.b16 %v1407
    %v5415 = vunpack.c.l.b16 %v1408
    %v5416 = vunpack.c.l.b16 %v1409
    %v5417 = vunpack.c.l.b16 %v1410
    %v5418 = vunpack.c.l.b16 %v1411
    %v5419 = vunpack.c.l.b16 %v1412
    %v5420 = vunpack.c.l.b16 %v1413
    %v5421 = vunpack.c.l.b16 %v1414
    %v5422 = vunpack.c.l.b16 %v1415
    %v5423 = vunpack.c.l.b16 %v1416
    %v5424 = vunpack.c.l.b16 %v1417
    %v5425 = vunpack.c.l.b16 %v1418
    %v5426 = vunpack.c.l.b16 %v1419
    %v5427 = vunpack.c.l.b16 %v1420
    %v5428 = vunpack.c.l.b16 %v1421
    %v5429 = vunpack.c.l.b16 %v1422
    %v5430 = vunpack.c.l.b16 %v1423
    %v5431 = vunpack.c.l.b16 %v1424
    %v5432 = vunpack.c.l.b16 %v1425
    %v5433 = vunpack.c.l.b16 %v1426
    %v5434 = vunpack.c.l.b16 %v1427
    %v5435 = vunpack.c.l.b16 %v1428
    %v5436 = vunpack.c.l.b16 %v1429
    %v5437 = vunpack.c.l.b16 %v1430
    %v5438 = vunpack.c.l.b16 %v1431
    %v5439 = vunpack.c.l.b16 %v1432
    %v5440 = vunpack.c.l.b16 %v1433
    %v5441 = vunpack.c.l.b16 %v1434
    %v5442 = vunpack.c.l.b16 %v1435
    %v5443 = vunpack.c.l.b16 %v1436
    %v5444 = vunpack.c.l.b16 %v1437
    %v5445 = vunpack.c.l.b16 %v1438
    %v5446 = vunpack.c.l.b16 %v1439
    %v5447 = vunpack.c.l.b16 %v1440
    %v5448 = vunpack.c.l.b16 %v1441
    %v5449 = vunpack.c.l.b16 %v1442
    %v5450 = vunpack.c.l.b16 %v1443
    %v5451 = vunpack.c.l.b16 %v1444
    %v5452 = vunpack.c.l.b16 %v1445
    %v5453 = vunpack.c.l.b16 %v1446
    %v5454 = vunpack.c.l.b16 %v1447
    %v5455 = vunpack.c.l.b16 %v1448
    %v5456 = vunpack.c.l.b16 %v1449
    %v5457 = vunpack.c.l.b16 %v1450
    %v5458 = vunpack.c.l.b16 %v1451
    %v5459 = vunpack.c.l.b16 %v1452
    %v5460 = vunpack.c.l.b16 %v1453
    %v5461 = vunpack.c.l.b16 %v1454
    %v5462 = vunpack.c.l.b16 %v1455
    %v5463 = vunpack.c.l.b16 %v1456
    %v5464 = vunpack.c.l.b16 %v1457
    %v5465 = vunpack.c.l.b16 %v1458
    %v5466 = vunpack.c.l.b16 %v1459
    %v5467 = vunpack.c.l.b16 %v1460
    %v5468 = vunpack.c.l.b16 %v1461
    %v5469 = vunpack.c.l.b16 %v1462
    %v5470 = vunpack.c.l.b16 %v1463
    %v5471 = vunpack.c.l.b16 %v1464
    %v5472 = vunpack.c.l.b16 %v1465
    %v5473 = vunpack.c.l.b16 %v1466
    %v5474 = vunpack.c.l.b16 %v1467
    %v5475 = vunpack.c.l.b16 %v1468
    %v5476 = vunpack.c.l.b16 %v1469
    %v5477 = vunpack.c.l.b16 %v1470
    %v5478 = vunpack.c.l.b16 %v1471
    %v5479 = vunpack.c.l.b16 %v1472
    %v5480 = vunpack.c.l.b16 %v1473
    %v5481 = vunpack.c.l.b16 %v1474
    %v5482 = vunpack.c.l.b16 %v1475
    %v5483 = vunpack.c.l.b16 %v1476
    %v5484 = vunpack.c.l.b16 %v1477
    %v5485 = vunpack.c.l.b16 %v1478
    %v5486 = vunpack.c.l.b16 %v1479
    %v5487 = vunpack.c.l.b16 %v1480
    %v5488 = vunpack.c.l.b16 %v1481
    %v5489 = vunpack.c.l.b16 %v1482
    %v5490 = vunpack.c.l.b16 %v1483
    %v5491 = vunpack.c.l.b16 %v1484
    %v5492 = vunpack.c.l.b16 %v1485
    %v5493 = vunpack.c.l.b16 %v1486
    %v5494 = vunpack.c.l.b16 %v1487
    %v5495 = vunpack.c.l.b16 %v1488
    %v5496 = vunpack.c.l.b16 %v1489
    %v5497 = vunpack.c.l.b16 %v1490
    %v5498 = vunpack.c.l.b16 %v1491
    %v5499 = vunpack.c.l.b16 %v1492
    %v5500 = vunpack.c.l.b16 %v1493
    %v5501 = vunpack.c.l.b16 %v1494
    %v5502 = vunpack.c.l.b16 %v1495
    %v5503 = vunpack.c.l.b16 %v1496
    %v5504 = vunpack.c.l.b16 %v1497
    %v5505 = vunpack.c.l.b16 %v1498
    %v5506 = vunpack.c.l.b16 %v1499
    %v5507 = vunpack.c.l.b16 %v1500
    %v5508 = vunpack.c.l.b16 %v1501
    %v5509 = vunpack.c.l.b16 %v1502
    %v5510 = vunpack.c.l.b16 %v1503
    %v5511 = vunpack.c.l.b16 %v1504
    %v5512 = vunpack.c.l.b16 %v1505
    %v5513 = vunpack.c.l.b16 %v1506
    %v5514 = vunpack.c.l.b16 %v1507
    %v5515 = vunpack.c.l.b16 %v1508
    %v5516 = vunpack.c.l.b16 %v1509
    %v5517 = vunpack.c.l.b16 %v1510
    %v5518 = vunpack.c.l.b16 %v1511
    %v5519 = vunpack.c.l.b16 %v1512
    %v5520 = vunpack.c.l.b16 %v1513
    %v5521 = vunpack.c.l.b16 %v1514
    %v5522 = vunpack.c.l.b16 %v1515
    %v5523 = vunpack.c.l.b16 %v1516
    %v5524 = vunpack.c.l.b16 %v1517
    %v5525 = vunpack.c.l.b16 %v1518
    %v5526 = vunpack.c.l.b16 %v1519
    %v5527 = vunpack.c.l.b16 %v1520
    %v5528 = vunpack.c.l.b16 %v1521
    %v5529 = vunpack.c.l.b16 %v1522
    %v5530 = vunpack.c.l.b16 %v1523
    %v5531 = vunpack.c.l.b16 %v1524
    %v5532 = vunpack.c.l.b16 %v1525
    %v5533 = vunpack.c.l.b16 %v1526
    %v5534 = vunpack.c.l.b16 %v1527
    %v5535 = vunpack.c.l.b16 %v1528
    %v5536 = vunpack.c.l.b16 %v1529
    %v5537 = vunpack.c.l.b16 %v1530
    %v5538 = vunpack.c.l.b16 %v1531
    %v5539 = vunpack.c.l.b16 %v1532
    %v5540 = vunpack.c.l.b16 %v1533
    %v5541 = vunpack.c.l.b16 %v1534
    %v5542 = vunpack.c.l.b16 %v1535
    %v5543 = vunpack.c.l.b16 %v1536
    %v5544 = vunpack.c.l.b16 %v1537
    %v5545 = vunpack.c.l.b16 %v1538
    %v5546 = vunpack.c.l.b16 %v1539
    %v5547 = vunpack.c.l.b16 %v1540
    %v5548 = vunpack.c.l.b16 %v1541
    %v5549 = vunpack.c.l.b16 %v1542
    %v5550 = vunpack.c.l.b16 %v1543
    %v5551 = vunpack.c.l.b16 %v1544
    %v5552 = vunpack.c.l.b16 %v1545
    %v5553 = vunpack.c.l.b16 %v1546
    %v5554 = vunpack.c.l.b16 %v1547
    %v5555 = vunpack.c.l.b16 %v1548
    %v5556 = vunpack.c.l.b16 %v1549
    %v5557 = vunpack.c.l.b16 %v1550
    %v5558 = vunpack.c.l.b16 %v1551
    %v5559 = vunpack.c.l.b16 %v1552
    %v5560 = vunpack.c.l.b16 %v1553
    %v5561 = vunpack.c.l.b16 %v1554
    %v5562 = vunpack.c.l.b16 %v1555
    %v5563 = vunpack.c.l.b16 %v1556
    %v5564 = vunpack.c.l.b16 %v1557
    %v5565 = vunpack.c.l.b16 %v1558
    %v5566 = vunpack.c.l.b16 %v1559
    %v5567 = vunpack.c.l.b16 %v1560
    %v5568 = vunpack.c.l.b16 %v1561
    %v5569 = vunpack.c.l.b16 %v1562
    %v5570 = vunpack.c.l.b16 %v1563
    %v5571 = vunpack.c.l.b16 %v1564
    %v5572 = vunpack.c.l.b16 %v1565
    %v5573 = vunpack.c.l.b16 %v1566
    %v5574 = vunpack.c.l.b16 %v1567
    %v5575 = vunpack.c.l.b16 %v1568
    %v5576 = vunpack.c.l.b16 %v1569
    %v5577 = vunpack.c.l.b16 %v1570
    %v5578 = vunpack.c.l.b16 %v1571
    %v5579 = vunpack.c.l.b16 %v1572
    %v5580 = vunpack.c.l.b16 %v1573
    %v5581 = vunpack.c.l.b16 %v1574
    %v5582 = vunpack.c.l.b16 %v1575
    %v5583 = vunpack.c.l.b16 %v1576
    %v5584 = vunpack.c.l.b16 %v1577
    %v5585 = vunpack.c.l.b16 %v1578
    %v5586 = vunpack.c.l.b16 %v1579
    %v5587 = vunpack.c.l.b16 %v1580
    %v5588 = vunpack.c.l.b16 %v1581
    %v5589 = vunpack.c.l.b16 %v1582
    %v5590 = vunpack.c.l.b16 %v1583
    %v5591 = vunpack.c.l.b16 %v1584
    %v5592 = vunpack.c.l.b16 %v1585
    %v5593 = vunpack.c.l.b16 %v1586
    %v5594 = vunpack.c.l.b16 %v1587
    %v5595 = vunpack.c.l.b16 %v1588
    %v5596 = vunpack.c.l.b16 %v1589
    %v5597 = vunpack.c.l.b16 %v1590
    %v5598 = vunpack.c.l.b16 %v1591
    %v5599 = vunpack.c.l.b16 %v1592
    %v5600 = vunpack.c.l.b16 %v1593
    %v5601 = vunpack.c.l.b16 %v1594
    %v5602 = vunpack.c.l.b16 %v1595
    %v5603 = vunpack.c.l.b16 %v1596
    %v5604 = vunpack.c.l.b16 %v1597
    %v5605 = vunpack.c.l.b16 %v1598
    %v5606 = vunpack.c.l.b16 %v1599
    %v5607 = vunpack.c.l.b16 %v1600
    %v5608 = vunpack.c.l.b16 %v1601
    %v5609 = vunpack.c.l.b16 %v1602
    %v5610 = vunpack.c.l.b16 %v1603
    %v5611 = vunpack.c.l.b16 %v1604
    %v5612 = vunpack.c.l.b16 %v1605
    %v5613 = vunpack.c.l.b16 %v1606
    %v5614 = vunpack.c.l.b16 %v1607
    %v5615 = vunpack.c.l.b16 %v1608
    %v5616 = vunpack.c.l.b16 %v1609
    %v5617 = vunpack.c.l.b16 %v1610
    %v5618 = vunpack.c.l.b16 %v1611
    %v5619 = vunpack.c.l.b16 %v1612
    %v5620 = vunpack.c.l.b16 %v1613
    %v5621 = vunpack.c.l.b16 %v1614
    %v5622 = vunpack.c.l.b16 %v1615
    %v5623 = vunpack.c.l.b16 %v1616
    %v5624 = vunpack.c.l.b16 %v1617
    %v5625 = vunpack.c.l.b16 %v1618
    %v5626 = vunpack.c.l.b16 %v1619
    %v5627 = vunpack.c.l.b16 %v1620
    %v5628 = vunpack.c.l.b16 %v1621
    %v5629 = vunpack.c.l.b16 %v1622
    %v5630 = vunpack.c.l.b16 %v1623
    %v5631 = vunpack.c.l.b16 %v1624
    %v5632 = vunpack.c.l.b16 %v1625
    %v5633 = vunpack.c.l.b16 %v1626
    %v5634 = vunpack.c.l.b16 %v1627
    %v5635 = vunpack.c.l.b16 %v1628
    %v5636 = vunpack.c.l.b16 %v1629
    %v5637 = vunpack.c.l.b16 %v1630
    %v5638 = vunpack.c.l.b16 %v1631
    %v5639 = vunpack.c.l.b16 %v1632
    %v5640 = vunpack.c.l.b16 %v1633
    %v5641 = vunpack.c.l.b16 %v1634
    %v5642 = vunpack.c.l.b16 %v1635
    %v5643 = vunpack.c.l.b16 %v1636
    %v5644 = vunpack.c.l.b16 %v1637
    %v5645 = vunpack.c.l.b16 %v1638
    %v5646 = vunpack.c.l.b16 %v1639
    %v5647 = vunpack.c.l.b16 %v1640
    %v5648 = vunpack.c.l.b16 %v1641
    %v5649 = vunpack.c.l.b16 %v1642
    %v5650 = vunpack.c.l.b16 %v1643
    %v5651 = vunpack.c.l.b16 %v1644
    %v5652 = vunpack.c.l.b16 %v1645
    %v5653 = vunpack.c.l.b16 %v1646
    %v5654 = vunpack.c.l.b16 %v1647
    %v5655 = vunpack.c.l.b16 %v1648
    %v5656 = vunpack.c.l.b16 %v1649
    %v5657 = vunpack.c.l.b16 %v1650
    %v5658 = vunpack.c.l.b16 %v1651
    %v5659 = vunpack.c.l.b16 %v1652
    %v5660 = vunpack.c.l.b16 %v1653
    %v5661 = vunpack.c.l.b16 %v1654
    %v5662 = vunpack.c.l.b16 %v1655
    %v5663 = vunpack.c.l.b16 %v1656
    %v5664 = vunpack.c.l.b16 %v1657
    %v5665 = vunpack.c.l.b16 %v1658
    %v5666 = vunpack.c.l.b16 %v1659
    %v5667 = vunpack.c.l.b16 %v1660
    %v5668 = vunpack.c.l.b16 %v1661
    %v5669 = vunpack.c.l.b16 %v1662
    %v5670 = vunpack.c.l.b16 %v1663
    %v5671 = vunpack.c.l.b16 %v1664
    %v5672 = vunpack.c.l.b16 %v1665
    %v5673 = vunpack.c.l.b16 %v1666
    %v5674 = vunpack.c.l.b16 %v1667
    %v5675 = vunpack.c.l.b16 %v1668
    %v5676 = vunpack.c.l.b16 %v1669
    %v5677 = vunpack.c.l.b16 %v1670
    %v5678 = vunpack.c.l.b16 %v1671
    %v5679 = vunpack.c.l.b16 %v1672
    %v5680 = vunpack.c.l.b16 %v1673
    %v5681 = vunpack.c.l.b16 %v1674
    %v5682 = vunpack.c.l.b16 %v1675
    %v5683 = vunpack.c.l.b16 %v1676
    %v5684 = vunpack.c.l.b16 %v1677
    %v5685 = vunpack.c.l.b16 %v1678
    %v5686 = vunpack.c.l.b16 %v1679
    %v5687 = vunpack.c.l.b16 %v1680
    %v5688 = vunpack.c.l.b16 %v1681
    %v5689 = vunpack.c.l.b16 %v1682
    %v5690 = vunpack.c.l.b16 %v1683
    %v5691 = vunpack.c.l.b16 %v1684
    %v5692 = vunpack.c.l.b16 %v1685
    %v5693 = vunpack.c.l.b16 %v1686
    %v5694 = vunpack.c.l.b16 %v1687
    %v5695 = vunpack.c.l.b16 %v1688
    %v5696 = vunpack.c.l.b16 %v1689
    %v5697 = vunpack.c.l.b16 %v1690
    %v5698 = vunpack.c.l.b16 %v1691
    %v5699 = vunpack.c.l.b16 %v1692
    %v5700 = vunpack.c.l.b16 %v1693
    %v5701 = vunpack.c.l.b16 %v1694
    %v5702 = vunpack.c.l.b16 %v1695
    %v5703 = vunpack.c.l.b16 %v1696
    %v5704 = vunpack.c.l.b16 %v1697
    %v5705 = vunpack.c.l.b16 %v1698
    %v5706 = vunpack.c.l.b16 %v1699
    %v5707 = vunpack.c.l.b16 %v1700
    %v5708 = vunpack.c.l.b16 %v1701
    %v5709 = vunpack.c.l.b16 %v1702
    %v5710 = vunpack.c.l.b16 %v1703
    %v5711 = vunpack.c.l.b16 %v1704
    %v5712 = vunpack.c.l.b16 %v1705
    %v5713 = vunpack.c.l.b16 %v1706
    %v5714 = vunpack.c.l.b16 %v1707
    %v5715 = vunpack.c.l.b16 %v1708
    %v5716 = vunpack.c.l.b16 %v1709
    %v5717 = vunpack.c.l.b16 %v1710
    %v5718 = vunpack.c.l.b16 %v1711
    %v5719 = vunpack.c.l.b16 %v1712
    %v5720 = vunpack.c.l.b16 %v1713
    %v5721 = vunpack.c.l.b16 %v1714
    %v5722 = vunpack.c.l.b16 %v1715
    %v5723 = vunpack.c.l.b16 %v1716
    %v5724 = vunpack.c.l.b16 %v1717
    %v5725 = vunpack.c.l.b16 %v1718
    %v5726 = vunpack.c.l.b16 %v1719
    %v5727 = vunpack.c.l.b16 %v1720
    %v5728 = vunpack.c.l.b16 %v1721
    %v5729 = vunpack.c.l.b16 %v1722
    %v5730 = vunpack.c.l.b16 %v1723
    %v5731 = vunpack.c.l.b16 %v1724
    %v5732 = vunpack.c.l.b16 %v1725
    %v5733 = vunpack.c.l.b16 %v1726
    %v5734 = vunpack.c.l.b16 %v1727
    %v5735 = vunpack.c.l.b16 %v1728
    %v5736 = vunpack.c.l.b16 %v1729
    %v5737 = vunpack.c.l.b16 %v1730
    %v5738 = vunpack.c.l.b16 %v1731
    %v5739 = vunpack.c.l.b16 %v1732
    %v5740 = vunpack.c.l.b16 %v1733
    %v5741 = vunpack.c.l.b16 %v1734
    %v5742 = vunpack.c.l.b16 %v1735
    %v5743 = vunpack.c.l.b16 %v1736
    %v5744 = vunpack.c.l.b16 %v1737
    %v5745 = vunpack.c.l.b16 %v1738
    %v5746 = vunpack.c.l.b16 %v1739
    %v5747 = vunpack.c.l.b16 %v1740
    %v5748 = vunpack.c.l.b16 %v1741
    %v5749 = vunpack.c.l.b16 %v1742
    %v5750 = vunpack.c.l.b16 %v1743
    %v5751 = vunpack.c.l.b16 %v1744
    %v5752 = vunpack.c.l.b16 %v1745
    %v5753 = vunpack.c.l.b16 %v1746
    %v5754 = vunpack.c.l.b16 %v1747
    %v5755 = vunpack.c.l.b16 %v1748
    %v5756 = vunpack.c.l.b16 %v1749
    %v5757 = vunpack.c.l.b16 %v1750
    %v5758 = vunpack.c.l.b16 %v1751
    %v5759 = vunpack.c.l.b16 %v1752
    %v5760 = vunpack.c.l.b16 %v1753
    %v5761 = vunpack.c.l.b16 %v1754
    %v5762 = vunpack.c.l.b16 %v1755
    %v5763 = vunpack.c.l.b16 %v1756
    %v5764 = vunpack.c.l.b16 %v1757
    %v5765 = vunpack.c.l.b16 %v1758
    %v5766 = vunpack.c.l.b16 %v1759
    %v5767 = vunpack.c.l.b16 %v1760
    %v5768 = vunpack.c.l.b16 %v1761
    %v5769 = vunpack.c.l.b16 %v1762
    %v5770 = vunpack.c.l.b16 %v1763
    %v5771 = vunpack.c.l.b16 %v1764
    %v5772 = vunpack.c.l.b16 %v1765
    %v5773 = vunpack.c.l.b16 %v1766
    %v5774 = vunpack.c.l.b16 %v1767
    %v5775 = vunpack.c.l.b16 %v1768
    %v5776 = vunpack.c.l.b16 %v1769
    %v5777 = vunpack.c.l.b16 %v1770
    %v5778 = vunpack.c.l.b16 %v1771
    %v5779 = vunpack.c.l.b16 %v1772
    %v5780 = vunpack.c.l.b16 %v1773
    %v5781 = vunpack.c.l.b16 %v1774
    %v5782 = vunpack.c.l.b16 %v1775
    %v5783 = vunpack.c.l.b16 %v1776
    %v5784 = vunpack.c.l.b16 %v1777
    %v5785 = vunpack.c.l.b16 %v1778
    %v5786 = vunpack.c.l.b16 %v1779
    %v5787 = vunpack.c.l.b16 %v1780
    %v5788 = vunpack.c.l.b16 %v1781
    %v5789 = vunpack.c.l.b16 %v1782
    %v5790 = vunpack.c.l.b16 %v1783
    %v5791 = vunpack.c.l.b16 %v1784
    %v5792 = vunpack.c.l.b16 %v1785
    %v5793 = vunpack.c.l.b16 %v1786
    %v5794 = vunpack.c.l.b16 %v1787
    %v5795 = vunpack.c.l.b16 %v1788
    %v5796 = vunpack.c.l.b16 %v1789
    %v5797 = vunpack.c.l.b16 %v1790
    %v5798 = vunpack.c.l.b16 %v1791
    %v5799 = vunpack.c.l.b16 %v1792
    %v5800 = vunpack.c.l.b16 %v1793
    %v5801 = vunpack.c.l.b16 %v1794
    %v5802 = vunpack.c.l.b16 %v1795
    %v5803 = vunpack.c.l.b16 %v1796
    %v5804 = vunpack.c.l.b16 %v1797
    %v5805 = vunpack.c.l.b16 %v1798
    %v5806 = vunpack.c.l.b16 %v1799
    %v5807 = vunpack.c.l.b16 %v1800
    %v5808 = vunpack.c.l.b16 %v1801
    %v5809 = vunpack.c.l.b16 %v1802
    %v5810 = vunpack.c.l.b16 %v1803
    %v5811 = vunpack.c.l.b16 %v1804
    %v5812 = vunpack.c.l.b16 %v1805
    %v5813 = vunpack.c.l.b16 %v1806
    %v5814 = vunpack.c.l.b16 %v1807
    %v5815 = vunpack.c.l.b16 %v1808
    %v5816 = vunpack.c.l.b16 %v1809
    %v5817 = vunpack.c.l.b16 %v1810
    %v5818 = vunpack.c.l.b16 %v1811
    %v5819 = vunpack.c.l.b16 %v1812
    %v5820 = vunpack.c.l.b16 %v1813
    %v5821 = vunpack.c.l.b16 %v1814
    %v5822 = vunpack.c.l.b16 %v1815
    %v5823 = vunpack.c.l.b16 %v1816
    %v5824 = vunpack.c.l.b16 %v1817
    %v5825 = vunpack.c.l.b16 %v1818
    %v5826 = vunpack.c.l.b16 %v1819
    %v5827 = vunpack.c.l.b16 %v1820
    %v5828 = vunpack.c.l.b16 %v1821
    %v5829 = vunpack.c.l.b16 %v1822
    %v5830 = vunpack.c.l.b16 %v1823
    %v5831 = vunpack.c.l.b16 %v1824
    %v5832 = vunpack.c.l.b16 %v1825
    %v5833 = vunpack.c.l.b16 %v1826
    %v5834 = vunpack.c.l.b16 %v1827
    %v5835 = vunpack.c.l.b16 %v1828
    %v5836 = vunpack.c.l.b16 %v1829
    %v5837 = vunpack.c.l.b16 %v1830
    %v5838 = vunpack.c.l.b16 %v1831
    %v5839 = vunpack.c.l.b16 %v1832
    %v5840 = vunpack.c.l.b16 %v1833
    %v5841 = vunpack.c.l.b16 %v1834
    %v5842 = vunpack.c.l.b16 %v1835
    %v5843 = vunpack.c.l.b16 %v1836
    %v5844 = vunpack.c.l.b16 %v1837
    %v5845 = vunpack.c.l.b16 %v1838
    %v5846 = vunpack.c.l.b16 %v1839
    %v5847 = vunpack.c.l.b16 %v1840
    %v5848 = vunpack.c.l.b16 %v1841
    %v5849 = vunpack.c.l.b16 %v1842
    %v5850 = vunpack.c.l.b16 %v1843
    %v5851 = vunpack.c.l.b16 %v1844
    %v5852 = vunpack.c.l.b16 %v1845
    %v5853 = vunpack.c.l.b16 %v1846
    %v5854 = vunpack.c.l.b16 %v1847
    %v5855 = vunpack.c.l.b16 %v1848
    %v5856 = vunpack.c.l.b16 %v1849
    %v5857 = vunpack.c.l.b16 %v1850
    %v5858 = vunpack.c.l.b16 %v1851
    %v5859 = vunpack.c.l.b16 %v1852
    %v5860 = vunpack.c.l.b16 %v1853
    %v5861 = vunpack.c.l.b16 %v1854
    %v5862 = vunpack.c.l.b16 %v1855
    %v5863 = vunpack.c.l.b16 %v1856
    %v5864 = vunpack.c.l.b16 %v1857
    %v5865 = vunpack.c.l.b16 %v1858
    %v5866 = vunpack.c.l.b16 %v1859
    %v5867 = vunpack.c.l.b16 %v1860
    %v5868 = vunpack.c.l.b16 %v1861
    %v5869 = vunpack.c.l.b16 %v1862
    %v5870 = vunpack.c.l.b16 %v1863
    %v5871 = vunpack.c.l.b16 %v1864
    %v5872 = vunpack.c.l.b16 %v1865
    %v5873 = vunpack.c.l.b16 %v1866
    %v5874 = vunpack.c.l.b16 %v1867
    %v5875 = vunpack.c.l.b16 %v1868
    %v5876 = vunpack.c.l.b16 %v1869
    %v5877 = vunpack.c.l.b16 %v1870
    %v5878 = vunpack.c.l.b16 %v1871
    %v5879 = vunpack.c.l.b16 %v1872
    %v5880 = vunpack.c.l.b16 %v1873
    %v5881 = vunpack.c.l.b16 %v1874
    %v5882 = vunpack.c.l.b16 %v1875
    %v5883 = vunpack.c.l.b16 %v1876
    %v5884 = vunpack.c.l.b16 %v1877
    %v5885 = vunpack.c.l.b16 %v1878
    %v5886 = vunpack.c.l.b16 %v1879
    %v5887 = vunpack.c.l.b16 %v1880
    %v5888 = vunpack.c.l.b16 %v1881
    %v5889 = vunpack.c.l.b16 %v1882
    %v5890 = vunpack.c.l.b16 %v1883
    %v5891 = vunpack.c.l.b16 %v1884
    %v5892 = vunpack.c.l.b16 %v1885
    %v5893 = vunpack.c.l.b16 %v1886
    %v5894 = vunpack.c.l.b16 %v1887
    %v5895 = vunpack.c.l.b16 %v1888
    %v5896 = vunpack.c.l.b16 %v1889
    %v5897 = vunpack.c.l.b16 %v1890
    %v5898 = vunpack.c.l.b16 %v1891
    %v5899 = vunpack.c.l.b16 %v1892
    %v5900 = vunpack.c.l.b16 %v1893
    %v5901 = vunpack.c.l.b16 %v1894
    %v5902 = vunpack.c.l.b16 %v1895
    %v5903 = vunpack.c.l.b16 %v1896
    %v5904 = vunpack.c.l.b16 %v1897
    %v5905 = vunpack.c.l.b16 %v1898
    %v5906 = vunpack.c.l.b16 %v1899
    %v5907 = vunpack.c.l.b16 %v1900
    %v5908 = vunpack.c.l.b16 %v1901
    %v5909 = vunpack.c.l.b16 %v1902
    %v5910 = vunpack.c.l.b16 %v1903
    %v5911 = vunpack.c.l.b16 %v1904
    %v5912 = vunpack.c.l.b16 %v1905
    %v5913 = vunpack.c.l.b16 %v1906
    %v5914 = vunpack.c.l.b16 %v1907
    %v5915 = vunpack.c.l.b16 %v1908
    %v5916 = vunpack.c.l.b16 %v1909
    %v5917 = vunpack.c.l.b16 %v1910
    %v5918 = vunpack.c.l.b16 %v1911
    %v5919 = vunpack.c.l.b16 %v1912
    %v5920 = vunpack.c.l.b16 %v1913
    %v5921 = vunpack.c.l.b16 %v1914
    %v5922 = vunpack.c.l.b16 %v1915
    %v5923 = vunpack.c.l.b16 %v1916
    %v5924 = vunpack.c.l.b16 %v1917
    %v5925 = vunpack.c.l.b16 %v1918
    %v5926 = vunpack.c.l.b16 %v1919
    %v5927 = vunpack.c.l.b16 %v1920
    %v5928 = vunpack.c.l.b16 %v1921
    %v5929 = vunpack.c.l.b16 %v1922
    %v5930 = vunpack.c.l.b16 %v1923
    %v5931 = vunpack.c.l.b16 %v1924
    %v5932 = vunpack.c.l.b16 %v1925
    %v5933 = vunpack.c.l.b16 %v1926
    %v5934 = vunpack.c.l.b16 %v1927
    %v5935 = vunpack.c.l.b16 %v1928
    %v5936 = vunpack.c.l.b16 %v1929
    %v5937 = vunpack.c.l.b16 %v1930
    %v5938 = vunpack.c.l.b16 %v1931
    %v5939 = vunpack.c.l.b16 %v1932
    %v5940 = vunpack.c.l.b16 %v1933
    %v5941 = vunpack.c.l.b16 %v1934
    %v5942 = vunpack.c.l.b16 %v1935
    %v5943 = vunpack.c.l.b16 %v1936
    %v5944 = vunpack.c.l.b16 %v1937
    %v5945 = vunpack.c.l.b16 %v1938
    %v5946 = vunpack.c.l.b16 %v1939
    %v5947 = vunpack.c.l.b16 %v1940
    %v5948 = vunpack.c.l.b16 %v1941
    %v5949 = vunpack.c.l.b16 %v1942
    %v5950 = vunpack.c.l.b16 %v1943
    %v5951 = vunpack.c.l.b16 %v1944
    %v5952 = vunpack.c.l.b16 %v1945
    %v5953 = vunpack.c.l.b16 %v1946
    %v5954 = vunpack.c.l.b16 %v1947
    %v5955 = vunpack.c.l.b16 %v1948
    %v5956 = vunpack.c.l.b16 %v1949
    %v5957 = vunpack.c.l.b16 %v1950
    %v5958 = vunpack.c.l.b16 %v1951
    %v5959 = vunpack.c.l.b16 %v1952
    %v5960 = vunpack.c.l.b16 %v1953
    %v5961 = vunpack.c.l.b16 %v1954
    %v5962 = vunpack.c.l.b16 %v1955
    %v5963 = vunpack.c.l.b16 %v1956
    %v5964 = vunpack.c.l.b16 %v1957
    %v5965 = vunpack.c.l.b16 %v1958
    %v5966 = vunpack.c.l.b16 %v1959
    %v5967 = vunpack.c.l.b16 %v1960
    %v5968 = vunpack.c.l.b16 %v1961
    %v5969 = vunpack.c.l.b16 %v1962
    %v5970 = vunpack.c.l.b16 %v1963
    %v5971 = vunpack.c.l.b16 %v1964
    %v5972 = vunpack.c.l.b16 %v1965
    %v5973 = vunpack.c.l.b16 %v1966
    %v5974 = vunpack.c.l.b16 %v1967
    %v5975 = vunpack.c.l.b16 %v1968
    %v5976 = vunpack.c.l.b16 %v1969
    %v5977 = vunpack.c.l.b16 %v1970
    %v5978 = vunpack.c.l.b16 %v1971
    %v5979 = vunpack.c.l.b16 %v1972
    %v5980 = vunpack.c.l.b16 %v1973
    %v5981 = vunpack.c.l.b16 %v1974
    %v5982 = vunpack.c.l.b16 %v1975
    %v5983 = vunpack.c.l.b16 %v1976
    %v5984 = vunpack.c.l.b16 %v1977
    %v5985 = vunpack.c.l.b16 %v1978
    %v5986 = vunpack.c.l.b16 %v1979
    %v5987 = vunpack.c.l.b16 %v1980
    %v5988 = vunpack.c.l.b16 %v1981
    %v5989 = vunpack.c.l.b16 %v1982
    %v5990 = vunpack.c.l.b16 %v1983
    %v5991 = vunpack.c.l.b16 %v1984
    %v5992 = vunpack.c.l.b16 %v1985
    %v5993 = vunpack.c.l.b16 %v1986
    %v5994 = vunpack.c.l.b16 %v1987
    %v5995 = vunpack.c.l.b16 %v1988
    %v5996 = vunpack.c.l.b16 %v1989
    %v5997 = vunpack.c.l.b16 %v1990
    %v5998 = vunpack.c.l.b16 %v1991
    %v5999 = vunpack.c.l.b16 %v1992
    %v6000 = vunpack.c.l.b16 %v1993
    %v6001 = vunpack.c.l.b16 %v1994
    %v6002 = vunpack.c.l.b16 %v1995
    %v6003 = vunpack.c.l.b16 %v1996
    %v6004 = vunpack.c.l.b16 %v1997
    %v6005 = vunpack.c.l.b16 %v1998
    %v6006 = vunpack.c.l.b16 %v1999
    %v6007 = vunpack.c.l.b16 %v2000
    %v6008 = vunpack.c.l.b16 %v2001
    %v6009 = vunpack.c.l.b16 %v2002
    %v6010 = vunpack.c.l.b16 %v2003
    %v6011 = vunpack.c.l.b16 %v2004
    %v6012 = vunpack.c.l.b16 %v2005
    %v6013 = vunpack.c.l.b16 %v2006
    %v6014 = vunpack.c.l.b16 %v2007
    %v6015 = vunpack.c.l.b16 %v2008
    %v6016 = vunpack.c.l.b16 %v2009
    %v6017 = vunpack.c.l.b16 %v2010
    %v6018 = vunpack.c.l.b16 %v2011
    %v6019 = vunpack.c.l.b16 %v2012
    %v6020 = vunpack.c.l.b16 %v2013
    %v6021 = vunpack.c.l.b16 %v2014
    %v6022 = vunpack.c.l.b16 %v2015
    %v6023 = vunpack.c.l.b16 %v2016
    %v6024 = vunpack.c.l.b16 %v2017
    %v6025 = vunpack.c.l.b16 %v2018
    %v6026 = vunpack.c.l.b16 %v2019
    %v6027 = vunpack.c.l.b16 %v2020
    %v6028 = vunpack.c.l.b16 %v2021
    %v6029 = vunpack.c.l.b16 %v2022
    %v6030 = vunpack.c.l.b16 %v2023
    %v6031 = vunpack.c.l.b16 %v2024
    %v6032 = vunpack.c.l.b16 %v2025
    %v6033 = vunpack.c.l.b16 %v2026
    %v6034 = vunpack.c.l.b16 %v2027
    %v6035 = vunpack.c.l.b16 %v2028
    %v6036 = vunpack.c.l.b16 %v2029
    %v6037 = vunpack.c.l.b16 %v2030
    %v6038 = vunpack.c.l.b16 %v2031
    %v6039 = vunpack.c.l.b16 %v2032
    %v6040 = vunpack.c.l.b16 %v2033
    %v6041 = vunpack.c.l.b16 %v2034
    %v6042 = vunpack.c.l.b16 %v2035
    %v6043 = vunpack.c.l.b16 %v2036
    %v6044 = vunpack.c.l.b16 %v2037
    %v6045 = vunpack.c.l.b16 %v2038
    %v6046 = vunpack.c.l.b16 %v2039
    %v6047 = vunpack.c.l.b16 %v2040
    %v6048 = vunpack.c.l.b16 %v2041
    %v6049 = vunpack.c.l.b16 %v2042
    %v6050 = vunpack.c.l.b16 %v2043
    %v6051 = vunpack.c.l.b16 %v2044
    %v6052 = vunpack.c.l.b16 %v2045
    %v6053 = vunpack.c.l.b16 %v2046
    %v6054 = vunpack.c.l.b16 %v2047
    %v6055 = vunpack.c.l.b16 %v2048
    %v6056 = vunpack.c.l.b16 %v2049
    %v6057 = vunpack.c.l.b16 %v2050
    %v6058 = vunpack.c.l.b16 %v2051
    %v6059 = vunpack.c.l.b16 %v2052
    %v6060 = vunpack.c.l.b16 %v2053
    %v6061 = vunpack.c.l.b16 %v2054
    %v6062 = vunpack.c.l.b16 %v2055
    %v6063 = vunpack.c.l.b16 %v2056
    %v6064 = vunpack.c.l.b16 %v2057
    %v6065 = vunpack.c.l.b16 %v2058
    %v6066 = vunpack.c.l.b16 %v2059
    %v6067 = vunpack.c.l.b16 %v2060
    %v6068 = vunpack.c.l.b16 %v2061
    %v6069 = vunpack.c.l.b16 %v2062
    %v6070 = vunpack.c.l.b16 %v2063
    %v6071 = vunpack.c.l.b16 %v2064
    %v6072 = vunpack.c.l.b16 %v2065
    %v6073 = vunpack.c.l.b16 %v2066
    %v6074 = vunpack.c.l.b16 %v2067
    %v6075 = vunpack.c.l.b16 %v2068
    %v6076 = vunpack.c.l.b16 %v2069
    %v6077 = vunpack.c.l.b16 %v2070
    %v6078 = vunpack.c.l.b16 %v2071
    %v6079 = vunpack.c.l.b16 %v2072
    %v6080 = vunpack.c.l.b16 %v2073
    %v6081 = vunpack.c.l.b16 %v2074
    %v6082 = vunpack.c.l.b16 %v2075
    %v6083 = vunpack.c.l.b16 %v2076
    %v6084 = vunpack.c.l.b16 %v2077
    %v6085 = vunpack.c.l.b16 %v2078
    %v6086 = vunpack.c.l.b16 %v2079
    %v6087 = vunpack.c.l.b16 %v2080
    %v6088 = vunpack.c.l.b16 %v2081
    %v6089 = vunpack.c.l.b16 %v2082
    %v6090 = vunpack.c.l.b16 %v2083
    %v6091 = vunpack.c.l.b16 %v2084
    %v6092 = vunpack.c.l.b16 %v2085
    %v6093 = vunpack.c.l.b16 %v2086
    %v6094 = vunpack.c.l.b16 %v2087
    %v6095 = vunpack.c.l.b16 %v2088
    %v6096 = vunpack.c.l.b16 %v2089
    %v6097 = vunpack.c.l.b16 %v2090
    %v6098 = vunpack.c.l.b16 %v2091
    %v6099 = vunpack.c.l.b16 %v2092
    %v6100 = vunpack.c.l.b16 %v2093
    %v6101 = vunpack.c.l.b16 %v2094
    %v6102 = vunpack.c.l.b16 %v2095
    %v6103 = vunpack.c.l.b16 %v2096
    %v6104 = vunpack.c.l.b16 %v2097
    %v6105 = vunpack.c.l.b16 %v2098
    %v6106 = vunpack.c.l.b16 %v2099
    %v6107 = vunpack.c.l.b16 %v2100
    %v6108 = vunpack.c.l.b16 %v2101
    %v6109 = vunpack.c.l.b16 %v2102
    %v6110 = vunpack.c.l.b16 %v2103
    %v6111 = vunpack.c.l.b16 %v2104
    %v6112 = vunpack.c.l.b16 %v2105
    %v6113 = vunpack.c.l.b16 %v2106
    %v6114 = vunpack.c.l.b16 %v2107
    %v6115 = vunpack.c.l.b16 %v2108
    %v6116 = vunpack.c.l.b16 %v2109
    %v6117 = vunpack.c.l.b16 %v2110
    %v6118 = vunpack.c.l.b16 %v2111
    %v6119 = vunpack.c.l.b16 %v2112
    %v6120 = vunpack.c.l.b16 %v2113
    %v6121 = vunpack.c.l.b16 %v2114
    %v6122 = vunpack.c.l.b16 %v2115
    %v6123 = vunpack.c.l.b16 %v2116
    %v6124 = vunpack.c.l.b16 %v2117
    %v6125 = vunpack.c.l.b16 %v2118
    %v6126 = vunpack.c.l.b16 %v2119
    %v6127 = vunpack.c.l.b16 %v2120
    %v6128 = vunpack.c.l.b16 %v2121
    %v6129 = vunpack.c.l.b16 %v2122
    %v6130 = vunpack.c.l.b16 %v2123
    %v6131 = vunpack.c.l.b16 %v2124
    %v6132 = vunpack.c.l.b16 %v2125
    %v6133 = vunpack.c.l.b16 %v2126
    %v6134 = vunpack.c.l.b16 %v2127
    %v6135 = vunpack.c.l.b16 %v2128
    %v6136 = vunpack.c.l.b16 %v2129
    %v6137 = vunpack.c.l.b16 %v2130
    %v6138 = vunpack.c.l.b16 %v2131
    %v6139 = vunpack.c.l.b16 %v2132
    %v6140 = vunpack.c.l.b16 %v2133
    %v6141 = vunpack.c.l.b16 %v2134
    %v6142 = vunpack.c.l.b16 %v2135
    %v6143 = vunpack.c.l.b16 %v2136
    %v6144 = vunpack.c.l.b16 %v2137
    %v6145 = vunpack.c.l.b16 %v2138
    %v6146 = vunpack.c.l.b16 %v2139
    %v6147 = vunpack.c.l.b16 %v2140
    %v6148 = vunpack.c.l.b16 %v2141
    %v6149 = vunpack.c.l.b16 %v2142
    %v6150 = vunpack.c.l.b16 %v2143
    %v6151 = vunpack.c.l.b16 %v2144
    %v6152 = vunpack.c.l.b16 %v2145
    %v6153 = vunpack.c.l.b16 %v2146
    %v6154 = vunpack.c.l.b16 %v2147
    %v6155 = vunpack.c.l.b16 %v2148
    %v6156 = vunpack.c.l.b16 %v2149
    %v6157 = vunpack.c.l.b16 %v2150
    %v6158 = vunpack.c.l.b16 %v2151
    %v6159 = vunpack.c.l.b16 %v2152
    %v6160 = vunpack.c.l.b16 %v2153
    %v6161 = vunpack.c.l.b16 %v2154
    %v6162 = vunpack.c.l.b16 %v2155
    %v6163 = vunpack.c.l.b16 %v2156
    %v6164 = vunpack.c.l.b16 %v2157
    %v6165 = vunpack.c.l.b16 %v2158
    %v6166 = vunpack.c.l.b16 %v2159
    %v6167 = vunpack.c.l.b16 %v2160
    %v6168 = vunpack.c.l.b16 %v2161
    %v6169 = vunpack.c.l.b16 %v2162
    %v6170 = vunpack.c.l.b16 %v2163
    %v6171 = vunpack.c.l.b16 %v2164
    %v6172 = vunpack.c.l.b16 %v2165
    %v6173 = vunpack.c.l.b16 %v2166
    %v6174 = vunpack.c.l.b16 %v2167
    %v6175 = vunpack.c.l.b16 %v2168
    %v6176 = vunpack.c.l.b16 %v2169
    %v6177 = vunpack.c.l.b16 %v2170
    %v6178 = vunpack.c.l.b16 %v2171
    %v6179 = vunpack.c.l.b16 %v2172
    %v6180 = vunpack.c.l.b16 %v2173
    %v6181 = vunpack.c.l.b16 %v2174
    %v6182 = vunpack.c.l.b16 %v2175
    %v6183 = vunpack.c.l.b16 %v2176
    %v6184 = vunpack.c.l.b16 %v2177
    %v6185 = vunpack.c.l.b16 %v2178
    %v6186 = vunpack.c.l.b16 %v2179
    %v6187 = vunpack.c.l.b16 %v2180
    %v6188 = vunpack.c.l.b16 %v2181
    %v6189 = vunpack.c.l.b16 %v2182
    %v6190 = vunpack.c.l.b16 %v2183
    %v6191 = vunpack.c.l.b16 %v2184
    %v6192 = vunpack.c.l.b16 %v2185
    %v6193 = vunpack.c.l.b16 %v2186
    %v6194 = vunpack.c.l.b16 %v2187
    %v6195 = vunpack.c.l.b16 %v2188
    %v6196 = vunpack.c.l.b16 %v2189
    %v6197 = vunpack.c.l.b16 %v2190
    %v6198 = vunpack.c.l.b16 %v2191
    %v6199 = vunpack.c.l.b16 %v2192
    %v6200 = vunpack.c.l.b16 %v2193
    %v6201 = vunpack.c.l.b16 %v2194
    %v6202 = vunpack.c.l.b16 %v2195
    %v6203 = vunpack.c.l.b16 %v2196
    %v6204 = vunpack.c.l.b16 %v2197
    %v6205 = vunpack.c.l.b16 %v2198
    %v6206 = vunpack.c.l.b16 %v2199
    %v6207 = vunpack.c.l.b16 %v2200
    %v6208 = vunpack.c.l.b16 %v2201
    %v6209 = vunpack.c.l.b16 %v2202
    %v6210 = vunpack.c.l.b16 %v2203
    %v6211 = vunpack.c.l.b16 %v2204
    %v6212 = vunpack.c.l.b16 %v2205
    %v6213 = vunpack.c.l.b16 %v2206
    %v6214 = vunpack.c.l.b16 %v2207
    %v6215 = vunpack.c.l.b16 %v2208
    %v6216 = vunpack.c.l.b16 %v2209
    %v6217 = vunpack.c.l.b16 %v2210
    %v6218 = vunpack.c.l.b16 %v2211
    %v6219 = vunpack.c.l.b16 %v2212
    %v6220 = vunpack.c.l.b16 %v2213
    %v6221 = vunpack.c.l.b16 %v2214
    %v6222 = vunpack.c.l.b16 %v2215
    %v6223 = vunpack.c.l.b16 %v2216
    %v6224 = vunpack.c.l.b16 %v2217
    %v6225 = vunpack.c.l.b16 %v2218
    %v6226 = vunpack.c.l.b16 %v2219
    %v6227 = vunpack.c.l.b16 %v2220
    %v6228 = vunpack.c.l.b16 %v2221
    %v6229 = vunpack.c.l.b16 %v2222
    %v6230 = vunpack.c.l.b16 %v2223
    %v6231 = vunpack.c.l.b16 %v2224
    %v6232 = vunpack.c.l.b16 %v2225
    %v6233 = vunpack.c.l.b16 %v2226
    %v6234 = vunpack.c.l.b16 %v2227
    %v6235 = vunpack.c.l.b16 %v2228
    %v6236 = vunpack.c.l.b16 %v2229
    %v6237 = vunpack.c.l.b16 %v2230
    %v6238 = vunpack.c.l.b16 %v2231
    %v6239 = vunpack.c.l.b16 %v2232
    %v6240 = vunpack.c.l.b16 %v2233
    %v6241 = vunpack.c.l.b16 %v2234
    %v6242 = vunpack.c.l.b16 %v2235
    %v6243 = vunpack.c.l.b16 %v2236
    %v6244 = vunpack.c.l.b16 %v2237
    %v6245 = vunpack.c.l.b16 %v2238
    %v6246 = vunpack.c.l.b16 %v2239
    %v6247 = vunpack.c.l.b16 %v2240
    %v6248 = vunpack.c.l.b16 %v2241
    %v6249 = vunpack.c.l.b16 %v2242
    %v6250 = vunpack.c.l.b16 %v2243
    %v6251 = vunpack.c.l.b16 %v2244
    %v6252 = vunpack.c.l.b16 %v2245
    %v6253 = vunpack.c.l.b16 %v2246
    %v6254 = vunpack.c.l.b16 %v2247
    %v6255 = vunpack.c.l.b16 %v2248
    %v6256 = vunpack.c.l.b16 %v2249
    %v6257 = vunpack.c.l.b16 %v2250
    %v6258 = vunpack.c.l.b16 %v2251
    %v6259 = vunpack.c.l.b16 %v2252
    %v6260 = vunpack.c.l.b16 %v2253
    %v6261 = vunpack.c.l.b16 %v2254
    %v6262 = vunpack.c.l.b16 %v2255
    %v6263 = vunpack.c.l.b16 %v2256
    %v6264 = vunpack.c.l.b16 %v2257
    %v6265 = vunpack.c.l.b16 %v2258
    %v6266 = vunpack.c.l.b16 %v2259
    %v6267 = vunpack.c.l.b16 %v2260
    %v6268 = vunpack.c.l.b16 %v2261
    %v6269 = vunpack.c.l.b16 %v2262
    %v6270 = vunpack.c.l.b16 %v2263
    %v6271 = vunpack.c.l.b16 %v2264
    %v6272 = vunpack.c.l.b16 %v2265
    %v6273 = vunpack.c.l.b16 %v2266
    %v6274 = vunpack.c.l.b16 %v2267
    %v6275 = vunpack.c.l.b16 %v2268
    %v6276 = vunpack.c.l.b16 %v2269
    %v6277 = vunpack.c.l.b16 %v2270
    %v6278 = vunpack.c.l.b16 %v2271
    %v6279 = vunpack.c.l.b16 %v2272
    %v6280 = vunpack.c.l.b16 %v2273
    %v6281 = vunpack.c.l.b16 %v2274
    %v6282 = vunpack.c.l.b16 %v2275
    %v6283 = vunpack.c.l.b16 %v2276
    %v6284 = vunpack.c.l.b16 %v2277
    %v6285 = vunpack.c.l.b16 %v2278
    %v6286 = vunpack.c.l.b16 %v2279
    %v6287 = vunpack.c.l.b16 %v2280
    %v6288 = vunpack.c.l.b16 %v2281
    %v6289 = vunpack.c.l.b16 %v2282
    %v6290 = vunpack.c.l.b16 %v2283
    %v6291 = vunpack.c.l.b16 %v2284
    %v6292 = vunpack.c.l.b16 %v2285
    %v6293 = vunpack.c.l.b16 %v2286
    %v6294 = vunpack.c.l.b16 %v2287
    %v6295 = vunpack.c.l.b16 %v2288
    %v6296 = vunpack.c.l.b16 %v2289
    %v6297 = vunpack.c.l.b16 %v2290
    %v6298 = vunpack.c.l.b16 %v2291
    %v6299 = vunpack.c.l.b16 %v2292
    %v6300 = vunpack.c.l.b16 %v2293
    %v6301 = vunpack.c.l.b16 %v2294
    %v6302 = vunpack.c.l.b16 %v2295
    %v6303 = vunpack.c.l.b16 %v2296
    %v6304 = vunpack.c.l.b16 %v2297
    %v6305 = vunpack.c.l.b16 %v2298
    %v6306 = vunpack.c.l.b16 %v2299
    %v6307 = vunpack.c.l.b16 %v2300
    %v6308 = vunpack.c.l.b16 %v2301
    %v6309 = vunpack.c.l.b16 %v2302
    %v6310 = vpack.c.b16 %v4311, %v4310
    %v6311 = vpack.c.b16 %v4313, %v4312
    %v6312 = vpack.c.b16 %v4315, %v4314
    %v6313 = vpack.c.b16 %v4317, %v4316
    %v6314 = vpack.c.b16 %v4319, %v4318
    %v6315 = vpack.c.b16 %v4321, %v4320
    %v6316 = vpack.c.b16 %v4323, %v4322
    %v6317 = vpack.c.b16 %v4325, %v4324
    %v6318 = vpack.c.b16 %v4327, %v4326
    %v6319 = vpack.c.b16 %v4329, %v4328
    %v6320 = vpack.c.b16 %v4331, %v4330
    %v6321 = vpack.c.b16 %v4333, %v4332
    %v6322 = vpack.c.b16 %v4335, %v4334
    %v6323 = vpack.c.b16 %v4337, %v4336
    %v6324 = vpack.c.b16 %v4339, %v4338
    %v6325 = vpack.c.b16 %v4341, %v4340
    %v6326 = vpack.c.b16 %v4343, %v4342
    %v6327 = vpack.c.b16 %v4345, %v4344
    %v6328 = vpack.c.b16 %v4347, %v4346
    %v6329 = vpack.c.b16 %v4349, %v4348
    %v6330 = vpack.c.b16 %v4351, %v4350
    %v6331 = vpack.c.b16 %v4353, %v4352
    %v6332 = vpack.c.b16 %v4355, %v4354
    %v6333 = vpack.c.b16 %v4357, %v4356
    %v6334 = vpack.c.b16 %v4359, %v4358
    %v6335 = vpack.c.b16 %v4361, %v4360
    %v6336 = vpack.c.b16 %v4363, %v4362
    %v6337 = vpack.c.b16 %v4365, %v4364
    %v6338 = vpack.c.b16 %v4367, %v4366
    %v6339 = vpack.c.b16 %v4369, %v4368
    %v6340 = vpack.c.b16 %v4371, %v4370
    %v6341 = vpack.c.b16 %v4373, %v4372
    %v6342 = vpack.c.b16 %v4375, %v4374
    %v6343 = vpack.c.b16 %v4377, %v4376
    %v6344 = vpack.c.b16 %v4379, %v4378
    %v6345 = vpack.c.b16 %v4381, %v4380
    %v6346 = vpack.c.b16 %v4383, %v4382
    %v6347 = vpack.c.b16 %v4385, %v4384
    %v6348 = vpack.c.b16 %v4387, %v4386
    %v6349 = vpack.c.b16 %v4389, %v4388
    %v6350 = vpack.c.b16 %v4391, %v4390
    %v6351 = vpack.c.b16 %v4393, %v4392
    %v6352 = vpack.c.b16 %v4395, %v4394
    %v6353 = vpack.c.b16 %v4397, %v4396
    %v6354 = vpack.c.b16 %v4399, %v4398
    %v6355 = vpack.c.b16 %v4401, %v4400
    %v6356 = vpack.c.b16 %v4403, %v4402
    %v6357 = vpack.c.b16 %v4405, %v4404
    %v6358 = vpack.c.b16 %v4407, %v4406
    %v6359 = vpack.c.b16 %v4409, %v4408
    %v6360 = vpack.c.b16 %v4411, %v4410
    %v6361 = vpack.c.b16 %v4413, %v4412
    %v6362 = vpack.c.b16 %v4415, %v4414
    %v6363 = vpack.c.b16 %v4417, %v4416
    %v6364 = vpack.c.b16 %v4419, %v4418
    %v6365 = vpack.c.b16 %v4421, %v4420
    %v6366 = vpack.c.b16 %v4423, %v4422
    %v6367 = vpack.c.b16 %v4425, %v4424
    %v6368 = vpack.c.b16 %v4427, %v4426
    %v6369 = vpack.c.b16 %v4429, %v4428
    %v6370 = vpack.c.b16 %v4431, %v4430
    %v6371 = vpack.c.b16 %v4433, %v4432
    %v6372 = vpack.c.b16 %v4435, %v4434
    %v6373 = vpack.c.b16 %v4437, %v4436
    %v6374 = vpack.c.b16 %v4439, %v4438
    %v6375 = vpack.c.b16 %v4441, %v4440
    %v6376 = vpack.c.b16 %v4443, %v4442
    %v6377 = vpack.c.b16 %v4445, %v4444
    %v6378 = vpack.c.b16 %v4447, %v4446
    %v6379 = vpack.c.b16 %v4449, %v4448
    %v6380 = vpack.c.b16 %v4451, %v4450
    %v6381 = vpack.c.b16 %v4453, %v4452
    %v6382 = vpack.c.b16 %v4455, %v4454
    %v6383 = vpack.c.b16 %v4457, %v4456
    %v6384 = vpack.c.b16 %v4459, %v4458
    %v6385 = vpack.c.b16 %v4461, %v4460
    %v6386 = vpack.c.b16 %v4463, %v4462
    %v6387 = vpack.c.b16 %v4465, %v4464
    %v6388 = vpack.c.b16 %v4467, %v4466
    %v6389 = vpack.c.b16 %v4469, %v4468
    %v6390 = vpack.c.b16 %v4471, %v4470
    %v6391 = vpack.c.b16 %v4473, %v4472
    %v6392 = vpack.c.b16 %v4475, %v4474
    %v6393 = vpack.c.b16 %v4477, %v4476
    %v6394 = vpack.c.b16 %v4479, %v4478
    %v6395 = vpack.c.b16 %v4481, %v4480
    %v6396 = vpack.c.b16 %v4483, %v4482
    %v6397 = vpack.c.b16 %v4485, %v4484
    %v6398 = vpack.c.b16 %v4487, %v4486
    %v6399 = vpack.c.b16 %v4489, %v4488
    %v6400 = vpack.c.b16 %v4491, %v4490
    %v6401 = vpack.c.b16 %v4493, %v4492
    %v6402 = vpack.c.b16 %v4495, %v4494
    %v6403 = vpack.c.b16 %v4497, %v4496
    %v6404 = vpack.c.b16 %v4499, %v4498
    %v6405 = vpack.c.b16 %v4501, %v4500
    %v6406 = vpack.c.b16 %v4503, %v4502
    %v6407 = vpack.c.b16 %v4505, %v4504
    %v6408 = vpack.c.b16 %v4507, %v4506
    %v6409 = vpack.c.b16 %v4509, %v4508
    %v6410 = vpack.c.b16 %v4511, %v4510
    %v6411 = vpack.c.b16 %v4513, %v4512
    %v6412 = vpack.c.b16 %v4515, %v4514
    %v6413 = vpack.c.b16 %v4517, %v4516
    %v6414 = vpack.c.b16 %v4519, %v4518
    %v6415 = vpack.c.b16 %v4521, %v4520
    %v6416 = vpack.c.b16 %v4523, %v4522
    %v6417 = vpack.c.b16 %v4525, %v4524
    %v6418 = vpack.c.b16 %v4527, %v4526
    %v6419 = vpack.c.b16 %v4529, %v4528
    %v6420 = vpack.c.b16 %v4531, %v4530
    %v6421 = vpack.c.b16 %v4533, %v4532
    %v6422 = vpack.c.b16 %v4535, %v4534
    %v6423 = vpack.c.b16 %v4537, %v4536
    %v6424 = vpack.c.b16 %v4539, %v4538
    %v6425 = vpack.c.b16 %v4541, %v4540
    %v6426 = vpack.c.b16 %v4543, %v4542
    %v6427 = vpack.c.b16 %v4545, %v4544
    %v6428 = vpack.c.b16 %v4547, %v4546
    %v6429 = vpack.c.b16 %v4549, %v4548
    %v6430 = vpack.c.b16 %v4551, %v4550
    %v6431 = vpack.c.b16 %v4553, %v4552
    %v6432 = vpack.c.b16 %v4555, %v4554
    %v6433 = vpack.c.b16 %v4557, %v4556
    %v6434 = vpack.c.b16 %v4559, %v4558
    %v6435 = vpack.c.b16 %v4561, %v4560
    %v6436 = vpack.c.b16 %v4563, %v4562
    %v6437 = vpack.c.b16 %v4565, %v4564
    %v6438 = vpack.c.b16 %v4567, %v4566
    %v6439 = vpack.c.b16 %v4569, %v4568
    %v6440 = vpack.c.b16 %v4571, %v4570
    %v6441 = vpack.c.b16 %v4573, %v4572
    %v6442 = vpack.c.b16 %v4575, %v4574
    %v6443 = vpack.c.b16 %v4577, %v4576
    %v6444 = vpack.c.b16 %v4579, %v4578
    %v6445 = vpack.c.b16 %v4581, %v4580
    %v6446 = vpack.c.b16 %v4583, %v4582
    %v6447 = vpack.c.b16 %v4585, %v4584
    %v6448 = vpack.c.b16 %v4587, %v4586
    %v6449 = vpack.c.b16 %v4589, %v4588
    %v6450 = vpack.c.b16 %v4591, %v4590
    %v6451 = vpack.c.b16 %v4593, %v4592
    %v6452 = vpack.c.b16 %v4595, %v4594
    %v6453 = vpack.c.b16 %v4597, %v4596
    %v6454 = vpack.c.b16 %v4599, %v4598
    %v6455 = vpack.c.b16 %v4601, %v4600
    %v6456 = vpack.c.b16 %v4603, %v4602
    %v6457 = vpack.c.b16 %v4605, %v4604
    %v6458 = vpack.c.b16 %v4607, %v4606
    %v6459 = vpack.c.b16 %v4609, %v4608
    %v6460 = vpack.c.b16 %v4611, %v4610
    %v6461 = vpack.c.b16 %v4613, %v4612
    %v6462 = vpack.c.b16 %v4615, %v4614
    %v6463 = vpack.c.b16 %v4617, %v4616
    %v6464 = vpack.c.b16 %v4619, %v4618
    %v6465 = vpack.c.b16 %v4621, %v4620
    %v6466 = vpack.c.b16 %v4623, %v4622
    %v6467 = vpack.c.b16 %v4625, %v4624
    %v6468 = vpack.c.b16 %v4627, %v4626
    %v6469 = vpack.c.b16 %v4629, %v4628
    %v6470 = vpack.c.b16 %v4631, %v4630
    %v6471 = vpack.c.b16 %v4633, %v4632
    %v6472 = vpack.c.b16 %v4635, %v4634
    %v6473 = vpack.c.b16 %v4637, %v4636
    %v6474 = vpack.c.b16 %v4639, %v4638
    %v6475 = vpack.c.b16 %v4641, %v4640
    %v6476 = vpack.c.b16 %v4643, %v4642
    %v6477 = vpack.c.b16 %v4645, %v4644
    %v6478 = vpack.c.b16 %v4647, %v4646
    %v6479 = vpack.c.b16 %v4649, %v4648
    %v6480 = vpack.c.b16 %v4651, %v4650
    %v6481 = vpack.c.b16 %v4653, %v4652
    %v6482 = vpack.c.b16 %v4655, %v4654
    %v6483 = vpack.c.b16 %v4657, %v4656
    %v6484 = vpack.c.b16 %v4659, %v4658
    %v6485 = vpack.c.b16 %v4661, %v4660
    %v6486 = vpack.c.b16 %v4663, %v4662
    %v6487 = vpack.c.b16 %v4665, %v4664
    %v6488 = vpack.c.b16 %v4667, %v4666
    %v6489 = vpack.c.b16 %v4669, %v4668
    %v6490 = vpack.c.b16 %v4671, %v4670
    %v6491 = vpack.c.b16 %v4673, %v4672
    %v6492 = vpack.c.b16 %v4675, %v4674
    %v6493 = vpack.c.b16 %v4677, %v4676
    %v6494 = vpack.c.b16 %v4679, %v4678
    %v6495 = vpack.c.b16 %v4681, %v4680
    %v6496 = vpack.c.b16 %v4683, %v4682
    %v6497 = vpack.c.b16 %v4685, %v4684
    %v6498 = vpack.c.b16 %v4687, %v4686
    %v6499 = vpack.c.b16 %v4689, %v4688
    %v6500 = vpack.c.b16 %v4691, %v4690
    %v6501 = vpack.c.b16 %v4693, %v4692
    %v6502 = vpack.c.b16 %v4695, %v4694
    %v6503 = vpack.c.b16 %v4697, %v4696
    %v6504 = vpack.c.b16 %v4699, %v4698
    %v6505 = vpack.c.b16 %v4701, %v4700
    %v6506 = vpack.c.b16 %v4703, %v4702
    %v6507 = vpack.c.b16 %v4705, %v4704
    %v6508 = vpack.c.b16 %v4707, %v4706
    %v6509 = vpack.c.b16 %v4709, %v4708
    %v6510 = vpack.c.b16 %v4711, %v4710
    %v6511 = vpack.c.b16 %v4713, %v4712
    %v6512 = vpack.c.b16 %v4715, %v4714
    %v6513 = vpack.c.b16 %v4717, %v4716
    %v6514 = vpack.c.b16 %v4719, %v4718
    %v6515 = vpack.c.b16 %v4721, %v4720
    %v6516 = vpack.c.b16 %v4723, %v4722
    %v6517 = vpack.c.b16 %v4725, %v4724
    %v6518 = vpack.c.b16 %v4727, %v4726
    %v6519 = vpack.c.b16 %v4729, %v4728
    %v6520 = vpack.c.b16 %v4731, %v4730
    %v6521 = vpack.c.b16 %v4733, %v4732
    %v6522 = vpack.c.b16 %v4735, %v4734
    %v6523 = vpack.c.b16 %v4737, %v4736
    %v6524 = vpack.c.b16 %v4739, %v4738
    %v6525 = vpack.c.b16 %v4741, %v4740
    %v6526 = vpack.c.b16 %v4743, %v4742
    %v6527 = vpack.c.b16 %v4745, %v4744
    %v6528 = vpack.c.b16 %v4747, %v4746
    %v6529 = vpack.c.b16 %v4749, %v4748
    %v6530 = vpack.c.b16 %v4751, %v4750
    %v6531 = vpack.c.b16 %v4753, %v4752
    %v6532 = vpack.c.b16 %v4755, %v4754
    %v6533 = vpack.c.b16 %v4757, %v4756
    %v6534 = vpack.c.b16 %v4759, %v4758
    %v6535 = vpack.c.b16 %v4761, %v4760
    %v6536 = vpack.c.b16 %v4763, %v4762
    %v6537 = vpack.c.b16 %v4765, %v4764
    %v6538 = vpack.c.b16 %v4767, %v4766
    %v6539 = vpack.c.b16 %v4769, %v4768
    %v6540 = vpack.c.b16 %v4771, %v4770
    %v6541 = vpack.c.b16 %v4773, %v4772
    %v6542 = vpack.c.b16 %v4775, %v4774
    %v6543 = vpack.c.b16 %v4777, %v4776
    %v6544 = vpack.c.b16 %v4779, %v4778
    %v6545 = vpack.c.b16 %v4781, %v4780
    %v6546 = vpack.c.b16 %v4783, %v4782
    %v6547 = vpack.c.b16 %v4785, %v4784
    %v6548 = vpack.c.b16 %v4787, %v4786
    %v6549 = vpack.c.b16 %v4789, %v4788
    %v6550 = vpack.c.b16 %v4791, %v4790
    %v6551 = vpack.c.b16 %v4793, %v4792
    %v6552 = vpack.c.b16 %v4795, %v4794
    %v6553 = vpack.c.b16 %v4797, %v4796
    %v6554 = vpack.c.b16 %v4799, %v4798
    %v6555 = vpack.c.b16 %v4801, %v4800
    %v6556 = vpack.c.b16 %v4803, %v4802
    %v6557 = vpack.c.b16 %v4805, %v4804
    %v6558 = vpack.c.b16 %v4807, %v4806
    %v6559 = vpack.c.b16 %v4809, %v4808
    %v6560 = vpack.c.b16 %v4811, %v4810
    %v6561 = vpack.c.b16 %v4813, %v4812
    %v6562 = vpack.c.b16 %v4815, %v4814
    %v6563 = vpack.c.b16 %v4817, %v4816
    %v6564 = vpack.c.b16 %v4819, %v4818
    %v6565 = vpack.c.b16 %v4821, %v4820
    %v6566 = vpack.c.b16 %v4823, %v4822
    %v6567 = vpack.c.b16 %v4825, %v4824
    %v6568 = vpack.c.b16 %v4827, %v4826
    %v6569 = vpack.c.b16 %v4829, %v4828
    %v6570 = vpack.c.b16 %v4831, %v4830
    %v6571 = vpack.c.b16 %v4833, %v4832
    %v6572 = vpack.c.b16 %v4835, %v4834
    %v6573 = vpack.c.b16 %v4837, %v4836
    %v6574 = vpack.c.b16 %v4839, %v4838
    %v6575 = vpack.c.b16 %v4841, %v4840
    %v6576 = vpack.c.b16 %v4843, %v4842
    %v6577 = vpack.c.b16 %v4845, %v4844
    %v6578 = vpack.c.b16 %v4847, %v4846
    %v6579 = vpack.c.b16 %v4849, %v4848
    %v6580 = vpack.c.b16 %v4851, %v4850
    %v6581 = vpack.c.b16 %v4853, %v4852
    %v6582 = vpack.c.b16 %v4855, %v4854
    %v6583 = vpack.c.b16 %v4857, %v4856
    %v6584 = vpack.c.b16 %v4859, %v4858
    %v6585 = vpack.c.b16 %v4861, %v4860
    %v6586 = vpack.c.b16 %v4863, %v4862
    %v6587 = vpack.c.b16 %v4865, %v4864
    %v6588 = vpack.c.b16 %v4867, %v4866
    %v6589 = vpack.c.b16 %v4869, %v4868
    %v6590 = vpack.c.b16 %v4871, %v4870
    %v6591 = vpack.c.b16 %v4873, %v4872
    %v6592 = vpack.c.b16 %v4875, %v4874
    %v6593 = vpack.c.b16 %v4877, %v4876
    %v6594 = vpack.c.b16 %v4879, %v4878
    %v6595 = vpack.c.b16 %v4881, %v4880
    %v6596 = vpack.c.b16 %v4883, %v4882
    %v6597 = vpack.c.b16 %v4885, %v4884
    %v6598 = vpack.c.b16 %v4887, %v4886
    %v6599 = vpack.c.b16 %v4889, %v4888
    %v6600 = vpack.c.b16 %v4891, %v4890
    %v6601 = vpack.c.b16 %v4893, %v4892
    %v6602 = vpack.c.b16 %v4895, %v4894
    %v6603 = vpack.c.b16 %v4897, %v4896
    %v6604 = vpack.c.b16 %v4899, %v4898
    %v6605 = vpack.c.b16 %v4901, %v4900
    %v6606 = vpack.c.b16 %v4903, %v4902
    %v6607 = vpack.c.b16 %v4905, %v4904
    %v6608 = vpack.c.b16 %v4907, %v4906
    %v6609 = vpack.c.b16 %v4909, %v4908
    %v6610 = vpack.c.b16 %v4911, %v4910
    %v6611 = vpack.c.b16 %v4913, %v4912
    %v6612 = vpack.c.b16 %v4915, %v4914
    %v6613 = vpack.c.b16 %v4917, %v4916
    %v6614 = vpack.c.b16 %v4919, %v4918
    %v6615 = vpack.c.b16 %v4921, %v4920
    %v6616 = vpack.c.b16 %v4923, %v4922
    %v6617 = vpack.c.b16 %v4925, %v4924
    %v6618 = vpack.c.b16 %v4927, %v4926
    %v6619 = vpack.c.b16 %v4929, %v4928
    %v6620 = vpack.c.b16 %v4931, %v4930
    %v6621 = vpack.c.b16 %v4933, %v4932
    %v6622 = vpack.c.b16 %v4935, %v4934
    %v6623 = vpack.c.b16 %v4937, %v4936
    %v6624 = vpack.c.b16 %v4939, %v4938
    %v6625 = vpack.c.b16 %v4941, %v4940
    %v6626 = vpack.c.b16 %v4943, %v4942
    %v6627 = vpack.c.b16 %v4945, %v4944
    %v6628 = vpack.c.b16 %v4947, %v4946
    %v6629 = vpack.c.b16 %v4949, %v4948
    %v6630 = vpack.c.b16 %v4951, %v4950
    %v6631 = vpack.c.b16 %v4953, %v4952
    %v6632 = vpack.c.b16 %v4955, %v4954
    %v6633 = vpack.c.b16 %v4957, %v4956
    %v6634 = vpack.c.b16 %v4959, %v4958
    %v6635 = vpack.c.b16 %v4961, %v4960
    %v6636 = vpack.c.b16 %v4963, %v4962
    %v6637 = vpack.c.b16 %v4965, %v4964
    %v6638 = vpack.c.b16 %v4967, %v4966
    %v6639 = vpack.c.b16 %v4969, %v4968
    %v6640 = vpack.c.b16 %v4971, %v4970
    %v6641 = vpack.c.b16 %v4973, %v4972
    %v6642 = vpack.c.b16 %v4975, %v4974
    %v6643 = vpack.c.b16 %v4977, %v4976
    %v6644 = vpack.c.b16 %v4979, %v4978
    %v6645 = vpack.c.b16 %v4981, %v4980
    %v6646 = vpack.c.b16 %v4983, %v4982
    %v6647 = vpack.c.b16 %v4985, %v4984
    %v6648 = vpack.c.b16 %v4987, %v4986
    %v6649 = vpack.c.b16 %v4989, %v4988
    %v6650 = vpack.c.b16 %v4991, %v4990
    %v6651 = vpack.c.b16 %v4993, %v4992
    %v6652 = vpack.c.b16 %v4995, %v4994
    %v6653 = vpack.c.b16 %v4997, %v4996
    %v6654 = vpack.c.b16 %v4999, %v4998
    %v6655 = vpack.c.b16 %v5001, %v5000
    %v6656 = vpack.c.b16 %v5003, %v5002
    %v6657 = vpack.c.b16 %v5005, %v5004
    %v6658 = vpack.c.b16 %v5007, %v5006
    %v6659 = vpack.c.b16 %v5009, %v5008
    %v6660 = vpack.c.b16 %v5011, %v5010
    %v6661 = vpack.c.b16 %v5013, %v5012
    %v6662 = vpack.c.b16 %v5015, %v5014
    %v6663 = vpack.c.b16 %v5017, %v5016
    %v6664 = vpack.c.b16 %v5019, %v5018
    %v6665 = vpack.c.b16 %v5021, %v5020
    %v6666 = vpack.c.b16 %v5023, %v5022
    %v6667 = vpack.c.b16 %v5025, %v5024
    %v6668 = vpack.c.b16 %v5027, %v5026
    %v6669 = vpack.c.b16 %v5029, %v5028
    %v6670 = vpack.c.b16 %v5031, %v5030
    %v6671 = vpack.c.b16 %v5033, %v5032
    %v6672 = vpack.c.b16 %v5035, %v5034
    %v6673 = vpack.c.b16 %v5037, %v5036
    %v6674 = vpack.c.b16 %v5039, %v5038
    %v6675 = vpack.c.b16 %v5041, %v5040
    %v6676 = vpack.c.b16 %v5043, %v5042
    %v6677 = vpack.c.b16 %v5045, %v5044
    %v6678 = vpack.c.b16 %v5047, %v5046
    %v6679 = vpack.c.b16 %v5049, %v5048
    %v6680 = vpack.c.b16 %v5051, %v5050
    %v6681 = vpack.c.b16 %v5053, %v5052
    %v6682 = vpack.c.b16 %v5055, %v5054
    %v6683 = vpack.c.b16 %v5057, %v5056
    %v6684 = vpack.c.b16 %v5059, %v5058
    %v6685 = vpack.c.b16 %v5061, %v5060
    %v6686 = vpack.c.b16 %v5063, %v5062
    %v6687 = vpack.c.b16 %v5065, %v5064
    %v6688 = vpack.c.b16 %v5067, %v5066
    %v6689 = vpack.c.b16 %v5069, %v5068
    %v6690 = vpack.c.b16 %v5071, %v5070
    %v6691 = vpack.c.b16 %v5073, %v5072
    %v6692 = vpack.c.b16 %v5075, %v5074
    %v6693 = vpack.c.b16 %v5077, %v5076
    %v6694 = vpack.c.b16 %v5079, %v5078
    %v6695 = vpack.c.b16 %v5081, %v5080
    %v6696 = vpack.c.b16 %v5083, %v5082
    %v6697 = vpack.c.b16 %v5085, %v5084
    %v6698 = vpack.c.b16 %v5087, %v5086
    %v6699 = vpack.c.b16 %v5089, %v5088
    %v6700 = vpack.c.b16 %v5091, %v5090
    %v6701 = vpack.c.b16 %v5093, %v5092
    %v6702 = vpack.c.b16 %v5095, %v5094
    %v6703 = vpack.c.b16 %v5097, %v5096
    %v6704 = vpack.c.b16 %v5099, %v5098
    %v6705 = vpack.c.b16 %v5101, %v5100
    %v6706 = vpack.c.b16 %v5103, %v5102
    %v6707 = vpack.c.b16 %v5105, %v5104
    %v6708 = vpack.c.b16 %v5107, %v5106
    %v6709 = vpack.c.b16 %v5109, %v5108
    %v6710 = vpack.c.b16 %v5111, %v5110
    %v6711 = vpack.c.b16 %v5113, %v5112
    %v6712 = vpack.c.b16 %v5115, %v5114
    %v6713 = vpack.c.b16 %v5117, %v5116
    %v6714 = vpack.c.b16 %v5119, %v5118
    %v6715 = vpack.c.b16 %v5121, %v5120
    %v6716 = vpack.c.b16 %v5123, %v5122
    %v6717 = vpack.c.b16 %v5125, %v5124
    %v6718 = vpack.c.b16 %v5127, %v5126
    %v6719 = vpack.c.b16 %v5129, %v5128
    %v6720 = vpack.c.b16 %v5131, %v5130
    %v6721 = vpack.c.b16 %v5133, %v5132
    %v6722 = vpack.c.b16 %v5135, %v5134
    %v6723 = vpack.c.b16 %v5137, %v5136
    %v6724 = vpack.c.b16 %v5139, %v5138
    %v6725 = vpack.c.b16 %v5141, %v5140
    %v6726 = vpack.c.b16 %v5143, %v5142
    %v6727 = vpack.c.b16 %v5145, %v5144
    %v6728 = vpack.c.b16 %v5147, %v5146
    %v6729 = vpack.c.b16 %v5149, %v5148
    %v6730 = vpack.c.b16 %v5151, %v5150
    %v6731 = vpack.c.b16 %v5153, %v5152
    %v6732 = vpack.c.b16 %v5155, %v5154
    %v6733 = vpack.c.b16 %v5157, %v5156
    %v6734 = vpack.c.b16 %v5159, %v5158
    %v6735 = vpack.c.b16 %v5161, %v5160
    %v6736 = vpack.c.b16 %v5163, %v5162
    %v6737 = vpack.c.b16 %v5165, %v5164
    %v6738 = vpack.c.b16 %v5167, %v5166
    %v6739 = vpack.c.b16 %v5169, %v5168
    %v6740 = vpack.c.b16 %v5171, %v5170
    %v6741 = vpack.c.b16 %v5173, %v5172
    %v6742 = vpack.c.b16 %v5175, %v5174
    %v6743 = vpack.c.b16 %v5177, %v5176
    %v6744 = vpack.c.b16 %v5179, %v5178
    %v6745 = vpack.c.b16 %v5181, %v5180
    %v6746 = vpack.c.b16 %v5183, %v5182
    %v6747 = vpack.c.b16 %v5185, %v5184
    %v6748 = vpack.c.b16 %v5187, %v5186
    %v6749 = vpack.c.b16 %v5189, %v5188
    %v6750 = vpack.c.b16 %v5191, %v5190
    %v6751 = vpack.c.b16 %v5193, %v5192
    %v6752 = vpack.c.b16 %v5195, %v5194
    %v6753 = vpack.c.b16 %v5197, %v5196
    %v6754 = vpack.c.b16 %v5199, %v5198
    %v6755 = vpack.c.b16 %v5201, %v5200
    %v6756 = vpack.c.b16 %v5203, %v5202
    %v6757 = vpack.c.b16 %v5205, %v5204
    %v6758 = vpack.c.b16 %v5207, %v5206
    %v6759 = vpack.c.b16 %v5209, %v5208
    %v6760 = vpack.c.b16 %v5211, %v5210
    %v6761 = vpack.c.b16 %v5213, %v5212
    %v6762 = vpack.c.b16 %v5215, %v5214
    %v6763 = vpack.c.b16 %v5217, %v5216
    %v6764 = vpack.c.b16 %v5219, %v5218
    %v6765 = vpack.c.b16 %v5221, %v5220
    %v6766 = vpack.c.b16 %v5223, %v5222
    %v6767 = vpack.c.b16 %v5225, %v5224
    %v6768 = vpack.c.b16 %v5227, %v5226
    %v6769 = vpack.c.b16 %v5229, %v5228
    %v6770 = vpack.c.b16 %v5231, %v5230
    %v6771 = vpack.c.b16 %v5233, %v5232
    %v6772 = vpack.c.b16 %v5235, %v5234
    %v6773 = vpack.c.b16 %v5237, %v5236
    %v6774 = vpack.c.b16 %v5239, %v5238
    %v6775 = vpack.c.b16 %v5241, %v5240
    %v6776 = vpack.c.b16 %v5243, %v5242
    %v6777 = vpack.c.b16 %v5245, %v5244
    %v6778 = vpack.c.b16 %v5247, %v5246
    %v6779 = vpack.c.b16 %v5249, %v5248
    %v6780 = vpack.c.b16 %v5251, %v5250
    %v6781 = vpack.c.b16 %v5253, %v5252
    %v6782 = vpack.c.b16 %v5255, %v5254
    %v6783 = vpack.c.b16 %v5257, %v5256
    %v6784 = vpack.c.b16 %v5259, %v5258
    %v6785 = vpack.c.b16 %v5261, %v5260
    %v6786 = vpack.c.b16 %v5263, %v5262
    %v6787 = vpack.c.b16 %v5265, %v5264
    %v6788 = vpack.c.b16 %v5267, %v5266
    %v6789 = vpack.c.b16 %v5269, %v5268
    %v6790 = vpack.c.b16 %v5271, %v5270
    %v6791 = vpack.c.b16 %v5273, %v5272
    %v6792 = vpack.c.b16 %v5275, %v5274
    %v6793 = vpack.c.b16 %v5277, %v5276
    %v6794 = vpack.c.b16 %v5279, %v5278
    %v6795 = vpack.c.b16 %v5281, %v5280
    %v6796 = vpack.c.b16 %v5283, %v5282
    %v6797 = vpack.c.b16 %v5285, %v5284
    %v6798 = vpack.c.b16 %v5287, %v5286
    %v6799 = vpack.c.b16 %v5289, %v5288
    %v6800 = vpack.c.b16 %v5291, %v5290
    %v6801 = vpack.c.b16 %v5293, %v5292
    %v6802 = vpack.c.b16 %v5295, %v5294
    %v6803 = vpack.c.b16 %v5297, %v5296
    %v6804 = vpack.c.b16 %v5299, %v5298
    %v6805 = vpack.c.b16 %v5301, %v5300
    %v6806 = vpack.c.b16 %v5303, %v5302
    %v6807 = vpack.c.b16 %v5305, %v5304
    %v6808 = vpack.c.b16 %v5307, %v5306
    %v6809 = vpack.c.b16 %v5309, %v5308
    %v6810 = vpack.c.b16 %v5311, %v5310
    %v6811 = vpack.c.b16 %v5313, %v5312
    %v6812 = vpack.c.b16 %v5315, %v5314
    %v6813 = vpack.c.b16 %v5317, %v5316
    %v6814 = vpack.c.b16 %v5319, %v5318
    %v6815 = vpack.c.b16 %v5321, %v5320
    %v6816 = vpack.c.b16 %v5323, %v5322
    %v6817 = vpack.c.b16 %v5325, %v5324
    %v6818 = vpack.c.b16 %v5327, %v5326
    %v6819 = vpack.c.b16 %v5329, %v5328
    %v6820 = vpack.c.b16 %v5331, %v5330
    %v6821 = vpack.c.b16 %v5333, %v5332
    %v6822 = vpack.c.b16 %v5335, %v5334
    %v6823 = vpack.c.b16 %v5337, %v5336
    %v6824 = vpack.c.b16 %v5339, %v5338
    %v6825 = vpack.c.b16 %v5341, %v5340
    %v6826 = vpack.c.b16 %v5343, %v5342
    %v6827 = vpack.c.b16 %v5345, %v5344
    %v6828 = vpack.c.b16 %v5347, %v5346
    %v6829 = vpack.c.b16 %v5349, %v5348
    %v6830 = vpack.c.b16 %v5351, %v5350
    %v6831 = vpack.c.b16 %v5353, %v5352
    %v6832 = vpack.c.b16 %v5355, %v5354
    %v6833 = vpack.c.b16 %v5357, %v5356
    %v6834 = vpack.c.b16 %v5359, %v5358
    %v6835 = vpack.c.b16 %v5361, %v5360
    %v6836 = vpack.c.b16 %v5363, %v5362
    %v6837 = vpack.c.b16 %v5365, %v5364
    %v6838 = vpack.c.b16 %v5367, %v5366
    %v6839 = vpack.c.b16 %v5369, %v5368
    %v6840 = vpack.c.b16 %v5371, %v5370
    %v6841 = vpack.c.b16 %v5373, %v5372
    %v6842 = vpack.c.b16 %v5375, %v5374
    %v6843 = vpack.c.b16 %v5377, %v5376
    %v6844 = vpack.c.b16 %v5379, %v5378
    %v6845 = vpack.c.b16 %v5381, %v5380
    %v6846 = vpack.c.b16 %v5383, %v5382
    %v6847 = vpack.c.b16 %v5385, %v5384
    %v6848 = vpack.c.b16 %v5387, %v5386
    %v6849 = vpack.c.b16 %v5389, %v5388
    %v6850 = vpack.c.b16 %v5391, %v5390
    %v6851 = vpack.c.b16 %v5393, %v5392
    %v6852 = vpack.c.b16 %v5395, %v5394
    %v6853 = vpack.c.b16 %v5397, %v5396
    %v6854 = vpack.c.b16 %v5399, %v5398
    %v6855 = vpack.c.b16 %v5401, %v5400
    %v6856 = vpack.c.b16 %v5403, %v5402
    %v6857 = vpack.c.b16 %v5405, %v5404
    %v6858 = vpack.c.b16 %v5407, %v5406
    %v6859 = vpack.c.b16 %v5409, %v5408
    %v6860 = vpack.c.b16 %v5411, %v5410
    %v6861 = vpack.c.b16 %v5413, %v5412
    %v6862 = vpack.c.b16 %v5415, %v5414
    %v6863 = vpack.c.b16 %v5417, %v5416
    %v6864 = vpack.c.b16 %v5419, %v5418
    %v6865 = vpack.c.b16 %v5421, %v5420
    %v6866 = vpack.c.b16 %v5423, %v5422
    %v6867 = vpack.c.b16 %v5425, %v5424
    %v6868 = vpack.c.b16 %v5427, %v5426
    %v6869 = vpack.c.b16 %v5429, %v5428
    %v6870 = vpack.c.b16 %v5431, %v5430
    %v6871 = vpack.c.b16 %v5433, %v5432
    %v6872 = vpack.c.b16 %v5435, %v5434
    %v6873 = vpack.c.b16 %v5437, %v5436
    %v6874 = vpack.c.b16 %v5439, %v5438
    %v6875 = vpack.c.b16 %v5441, %v5440
    %v6876 = vpack.c.b16 %v5443, %v5442
    %v6877 = vpack.c.b16 %v5445, %v5444
    %v6878 = vpack.c.b16 %v5447, %v5446
    %v6879 = vpack.c.b16 %v5449, %v5448
    %v6880 = vpack.c.b16 %v5451, %v5450
    %v6881 = vpack.c.b16 %v5453, %v5452
    %v6882 = vpack.c.b16 %v5455, %v5454
    %v6883 = vpack.c.b16 %v5457, %v5456
    %v6884 = vpack.c.b16 %v5459, %v5458
    %v6885 = vpack.c.b16 %v5461, %v5460
    %v6886 = vpack.c.b16 %v5463, %v5462
    %v6887 = vpack.c.b16 %v5465, %v5464
    %v6888 = vpack.c.b16 %v5467, %v5466
    %v6889 = vpack.c.b16 %v5469, %v5468
    %v6890 = vpack.c.b16 %v5471, %v5470
    %v6891 = vpack.c.b16 %v5473, %v5472
    %v6892 = vpack.c.b16 %v5475, %v5474
    %v6893 = vpack.c.b16 %v5477, %v5476
    %v6894 = vpack.c.b16 %v5479, %v5478
    %v6895 = vpack.c.b16 %v5481, %v5480
    %v6896 = vpack.c.b16 %v5483, %v5482
    %v6897 = vpack.c.b16 %v5485, %v5484
    %v6898 = vpack.c.b16 %v5487, %v5486
    %v6899 = vpack.c.b16 %v5489, %v5488
    %v6900 = vpack.c.b16 %v5491, %v5490
    %v6901 = vpack.c.b16 %v5493, %v5492
    %v6902 = vpack.c.b16 %v5495, %v5494
    %v6903 = vpack.c.b16 %v5497, %v5496
    %v6904 = vpack.c.b16 %v5499, %v5498
    %v6905 = vpack.c.b16 %v5501, %v5500
    %v6906 = vpack.c.b16 %v5503, %v5502
    %v6907 = vpack.c.b16 %v5505, %v5504
    %v6908 = vpack.c.b16 %v5507, %v5506
    %v6909 = vpack.c.b16 %v5509, %v5508
    %v6910 = vpack.c.b16 %v5511, %v5510
    %v6911 = vpack.c.b16 %v5513, %v5512
    %v6912 = vpack.c.b16 %v5515, %v5514
    %v6913 = vpack.c.b16 %v5517, %v5516
    %v6914 = vpack.c.b16 %v5519, %v5518
    %v6915 = vpack.c.b16 %v5521, %v5520
    %v6916 = vpack.c.b16 %v5523, %v5522
    %v6917 = vpack.c.b16 %v5525, %v5524
    %v6918 = vpack.c.b16 %v5527, %v5526
    %v6919 = vpack.c.b16 %v5529, %v5528
    %v6920 = vpack.c.b16 %v5531, %v5530
    %v6921 = vpack.c.b16 %v5533, %v5532
    %v6922 = vpack.c.b16 %v5535, %v5534
    %v6923 = vpack.c.b16 %v5537, %v5536
    %v6924 = vpack.c.b16 %v5539, %v5538
    %v6925 = vpack.c.b16 %v5541, %v5540
    %v6926 = vpack.c.b16 %v5543, %v5542
    %v6927 = vpack.c.b16 %v5545, %v5544
    %v6928 = vpack.c.b16 %v5547, %v5546
    %v6929 = vpack.c.b16 %v5549, %v5548
    %v6930 = vpack.c.b16 %v5551, %v5550
    %v6931 = vpack.c.b16 %v5553, %v5552
    %v6932 = vpack.c.b16 %v5555, %v5554
    %v6933 = vpack.c.b16 %v5557, %v5556
    %v6934 = vpack.c.b16 %v5559, %v5558
    %v6935 = vpack.c.b16 %v5561, %v5560
    %v6936 = vpack.c.b16 %v5563, %v5562
    %v6937 = vpack.c.b16 %v5565, %v5564
    %v6938 = vpack.c.b16 %v5567, %v5566
    %v6939 = vpack.c.b16 %v5569, %v5568
    %v6940 = vpack.c.b16 %v5571, %v5570
    %v6941 = vpack.c.b16 %v5573, %v5572
    %v6942 = vpack.c.b16 %v5575, %v5574
    %v6943 = vpack.c.b16 %v5577, %v5576
    %v6944 = vpack.c.b16 %v5579, %v5578
    %v6945 = vpack.c.b16 %v5581, %v5580
    %v6946 = vpack.c.b16 %v5583, %v5582
    %v6947 = vpack.c.b16 %v5585, %v5584
    %v6948 = vpack.c.b16 %v5587, %v5586
    %v6949 = vpack.c.b16 %v5589, %v5588
    %v6950 = vpack.c.b16 %v5591, %v5590
    %v6951 = vpack.c.b16 %v5593, %v5592
    %v6952 = vpack.c.b16 %v5595, %v5594
    %v6953 = vpack.c.b16 %v5597, %v5596
    %v6954 = vpack.c.b16 %v5599, %v5598
    %v6955 = vpack.c.b16 %v5601, %v5600
    %v6956 = vpack.c.b16 %v5603, %v5602
    %v6957 = vpack.c.b16 %v5605, %v5604
    %v6958 = vpack.c.b16 %v5607, %v5606
    %v6959 = vpack.c.b16 %v5609, %v5608
    %v6960 = vpack.c.b16 %v5611, %v5610
    %v6961 = vpack.c.b16 %v5613, %v5612
    %v6962 = vpack.c.b16 %v5615, %v5614
    %v6963 = vpack.c.b16 %v5617, %v5616
    %v6964 = vpack.c.b16 %v5619, %v5618
    %v6965 = vpack.c.b16 %v5621, %v5620
    %v6966 = vpack.c.b16 %v5623, %v5622
    %v6967 = vpack.c.b16 %v5625, %v5624
    %v6968 = vpack.c.b16 %v5627, %v5626
    %v6969 = vpack.c.b16 %v5629, %v5628
    %v6970 = vpack.c.b16 %v5631, %v5630
    %v6971 = vpack.c.b16 %v5633, %v5632
    %v6972 = vpack.c.b16 %v5635, %v5634
    %v6973 = vpack.c.b16 %v5637, %v5636
    %v6974 = vpack.c.b16 %v5639, %v5638
    %v6975 = vpack.c.b16 %v5641, %v5640
    %v6976 = vpack.c.b16 %v5643, %v5642
    %v6977 = vpack.c.b16 %v5645, %v5644
    %v6978 = vpack.c.b16 %v5647, %v5646
    %v6979 = vpack.c.b16 %v5649, %v5648
    %v6980 = vpack.c.b16 %v5651, %v5650
    %v6981 = vpack.c.b16 %v5653, %v5652
    %v6982 = vpack.c.b16 %v5655, %v5654
    %v6983 = vpack.c.b16 %v5657, %v5656
    %v6984 = vpack.c.b16 %v5659, %v5658
    %v6985 = vpack.c.b16 %v5661, %v5660
    %v6986 = vpack.c.b16 %v5663, %v5662
    %v6987 = vpack.c.b16 %v5665, %v5664
    %v6988 = vpack.c.b16 %v5667, %v5666
    %v6989 = vpack.c.b16 %v5669, %v5668
    %v6990 = vpack.c.b16 %v5671, %v5670
    %v6991 = vpack.c.b16 %v5673, %v5672
    %v6992 = vpack.c.b16 %v5675, %v5674
    %v6993 = vpack.c.b16 %v5677, %v5676
    %v6994 = vpack.c.b16 %v5679, %v5678
    %v6995 = vpack.c.b16 %v5681, %v5680
    %v6996 = vpack.c.b16 %v5683, %v5682
    %v6997 = vpack.c.b16 %v5685, %v5684
    %v6998 = vpack.c.b16 %v5687, %v5686
    %v6999 = vpack.c.b16 %v5689, %v5688
    %v7000 = vpack.c.b16 %v5691, %v5690
    %v7001 = vpack.c.b16 %v5693, %v5692
    %v7002 = vpack.c.b16 %v5695, %v5694
    %v7003 = vpack.c.b16 %v5697, %v5696
    %v7004 = vpack.c.b16 %v5699, %v5698
    %v7005 = vpack.c.b16 %v5701, %v5700
    %v7006 = vpack.c.b16 %v5703, %v5702
    %v7007 = vpack.c.b16 %v5705, %v5704
    %v7008 = vpack.c.b16 %v5707, %v5706
    %v7009 = vpack.c.b16 %v5709, %v5708
    %v7010 = vpack.c.b16 %v5711, %v5710
    %v7011 = vpack.c.b16 %v5713, %v5712
    %v7012 = vpack.c.b16 %v5715, %v5714
    %v7013 = vpack.c.b16 %v5717, %v5716
    %v7014 = vpack.c.b16 %v5719, %v5718
    %v7015 = vpack.c.b16 %v5721, %v5720
    %v7016 = vpack.c.b16 %v5723, %v5722
    %v7017 = vpack.c.b16 %v5725, %v5724
    %v7018 = vpack.c.b16 %v5727, %v5726
    %v7019 = vpack.c.b16 %v5729, %v5728
    %v7020 = vpack.c.b16 %v5731, %v5730
    %v7021 = vpack.c.b16 %v5733, %v5732
    %v7022 = vpack.c.b16 %v5735, %v5734
    %v7023 = vpack.c.b16 %v5737, %v5736
    %v7024 = vpack.c.b16 %v5739, %v5738
    %v7025 = vpack.c.b16 %v5741, %v5740
    %v7026 = vpack.c.b16 %v5743, %v5742
    %v7027 = vpack.c.b16 %v5745, %v5744
    %v7028 = vpack.c.b16 %v5747, %v5746
    %v7029 = vpack.c.b16 %v5749, %v5748
    %v7030 = vpack.c.b16 %v5751, %v5750
    %v7031 = vpack.c.b16 %v5753, %v5752
    %v7032 = vpack.c.b16 %v5755, %v5754
    %v7033 = vpack.c.b16 %v5757, %v5756
    %v7034 = vpack.c.b16 %v5759, %v5758
    %v7035 = vpack.c.b16 %v5761, %v5760
    %v7036 = vpack.c.b16 %v5763, %v5762
    %v7037 = vpack.c.b16 %v5765, %v5764
    %v7038 = vpack.c.b16 %v5767, %v5766
    %v7039 = vpack.c.b16 %v5769, %v5768
    %v7040 = vpack.c.b16 %v5771, %v5770
    %v7041 = vpack.c.b16 %v5773, %v5772
    %v7042 = vpack.c.b16 %v5775, %v5774
    %v7043 = vpack.c.b16 %v5777, %v5776
    %v7044 = vpack.c.b16 %v5779, %v5778
    %v7045 = vpack.c.b16 %v5781, %v5780
    %v7046 = vpack.c.b16 %v5783, %v5782
    %v7047 = vpack.c.b16 %v5785, %v5784
    %v7048 = vpack.c.b16 %v5787, %v5786
    %v7049 = vpack.c.b16 %v5789, %v5788
    %v7050 = vpack.c.b16 %v5791, %v5790
    %v7051 = vpack.c.b16 %v5793, %v5792
    %v7052 = vpack.c.b16 %v5795, %v5794
    %v7053 = vpack.c.b16 %v5797, %v5796
    %v7054 = vpack.c.b16 %v5799, %v5798
    %v7055 = vpack.c.b16 %v5801, %v5800
    %v7056 = vpack.c.b16 %v5803, %v5802
    %v7057 = vpack.c.b16 %v5805, %v5804
    %v7058 = vpack.c.b16 %v5807, %v5806
    %v7059 = vpack.c.b16 %v5809, %v5808
    %v7060 = vpack.c.b16 %v5811, %v5810
    %v7061 = vpack.c.b16 %v5813, %v5812
    %v7062 = vpack.c.b16 %v5815, %v5814
    %v7063 = vpack.c.b16 %v5817, %v5816
    %v7064 = vpack.c.b16 %v5819, %v5818
    %v7065 = vpack.c.b16 %v5821, %v5820
    %v7066 = vpack.c.b16 %v5823, %v5822
    %v7067 = vpack.c.b16 %v5825, %v5824
    %v7068 = vpack.c.b16 %v5827, %v5826
    %v7069 = vpack.c.b16 %v5829, %v5828
    %v7070 = vpack.c.b16 %v5831, %v5830
    %v7071 = vpack.c.b16 %v5833, %v5832
    %v7072 = vpack.c.b16 %v5835, %v5834
    %v7073 = vpack.c.b16 %v5837, %v5836
    %v7074 = vpack.c.b16 %v5839, %v5838
    %v7075 = vpack.c.b16 %v5841, %v5840
    %v7076 = vpack.c.b16 %v5843, %v5842
    %v7077 = vpack.c.b16 %v5845, %v5844
    %v7078 = vpack.c.b16 %v5847, %v5846
    %v7079 = vpack.c.b16 %v5849, %v5848
    %v7080 = vpack.c.b16 %v5851, %v5850
    %v7081 = vpack.c.b16 %v5853, %v5852
    %v7082 = vpack.c.b16 %v5855, %v5854
    %v7083 = vpack.c.b16 %v5857, %v5856
    %v7084 = vpack.c.b16 %v5859, %v5858
    %v7085 = vpack.c.b16 %v5861, %v5860
    %v7086 = vpack.c.b16 %v5863, %v5862
    %v7087 = vpack.c.b16 %v5865, %v5864
    %v7088 = vpack.c.b16 %v5867, %v5866
    %v7089 = vpack.c.b16 %v5869, %v5868
    %v7090 = vpack.c.b16 %v5871, %v5870
    %v7091 = vpack.c.b16 %v5873, %v5872
    %v7092 = vpack.c.b16 %v5875, %v5874
    %v7093 = vpack.c.b16 %v5877, %v5876
    %v7094 = vpack.c.b16 %v5879, %v5878
    %v7095 = vpack.c.b16 %v5881, %v5880
    %v7096 = vpack.c.b16 %v5883, %v5882
    %v7097 = vpack.c.b16 %v5885, %v5884
    %v7098 = vpack.c.b16 %v5887, %v5886
    %v7099 = vpack.c.b16 %v5889, %v5888
    %v7100 = vpack.c.b16 %v5891, %v5890
    %v7101 = vpack.c.b16 %v5893, %v5892
    %v7102 = vpack.c.b16 %v5895, %v5894
    %v7103 = vpack.c.b16 %v5897, %v5896
    %v7104 = vpack.c.b16 %v5899, %v5898
    %v7105 = vpack.c.b16 %v5901, %v5900
    %v7106 = vpack.c.b16 %v5903, %v5902
    %v7107 = vpack.c.b16 %v5905, %v5904
    %v7108 = vpack.c.b16 %v5907, %v5906
    %v7109 = vpack.c.b16 %v5909, %v5908
    %v7110 = vpack.c.b16 %v5911, %v5910
    %v7111 = vpack.c.b16 %v5913, %v5912
    %v7112 = vpack.c.b16 %v5915, %v5914
    %v7113 = vpack.c.b16 %v5917, %v5916
    %v7114 = vpack.c.b16 %v5919, %v5918
    %v7115 = vpack.c.b16 %v5921, %v5920
    %v7116 = vpack.c.b16 %v5923, %v5922
    %v7117 = vpack.c.b16 %v5925, %v5924
    %v7118 = vpack.c.b16 %v5927, %v5926
    %v7119 = vpack.c.b16 %v5929, %v5928
    %v7120 = vpack.c.b16 %v5931, %v5930
    %v7121 = vpack.c.b16 %v5933, %v5932
    %v7122 = vpack.c.b16 %v5935, %v5934
    %v7123 = vpack.c.b16 %v5937, %v5936
    %v7124 = vpack.c.b16 %v5939, %v5938
    %v7125 = vpack.c.b16 %v5941, %v5940
    %v7126 = vpack.c.b16 %v5943, %v5942
    %v7127 = vpack.c.b16 %v5945, %v5944
    %v7128 = vpack.c.b16 %v5947, %v5946
    %v7129 = vpack.c.b16 %v5949, %v5948
    %v7130 = vpack.c.b16 %v5951, %v5950
    %v7131 = vpack.c.b16 %v5953, %v5952
    %v7132 = vpack.c.b16 %v5955, %v5954
    %v7133 = vpack.c.b16 %v5957, %v5956
    %v7134 = vpack.c.b16 %v5959, %v5958
    %v7135 = vpack.c.b16 %v5961, %v5960
    %v7136 = vpack.c.b16 %v5963, %v5962
    %v7137 = vpack.c.b16 %v5965, %v5964
    %v7138 = vpack.c.b16 %v5967, %v5966
    %v7139 = vpack.c.b16 %v5969, %v5968
    %v7140 = vpack.c.b16 %v5971, %v5970
    %v7141 = vpack.c.b16 %v5973, %v5972
    %v7142 = vpack.c.b16 %v5975, %v5974
    %v7143 = vpack.c.b16 %v5977, %v5976
    %v7144 = vpack.c.b16 %v5979, %v5978
    %v7145 = vpack.c.b16 %v5981, %v5980
    %v7146 = vpack.c.b16 %v5983, %v5982
    %v7147 = vpack.c.b16 %v5985, %v5984
    %v7148 = vpack.c.b16 %v5987, %v5986
    %v7149 = vpack.c.b16 %v5989, %v5988
    %v7150 = vpack.c.b16 %v5991, %v5990
    %v7151 = vpack.c.b16 %v5993, %v5992
    %v7152 = vpack.c.b16 %v5995, %v5994
    %v7153 = vpack.c.b16 %v5997, %v5996
    %v7154 = vpack.c.b16 %v5999, %v5998
    %v7155 = vpack.c.b16 %v6001, %v6000
    %v7156 = vpack.c.b16 %v6003, %v6002
    %v7157 = vpack.c.b16 %v6005, %v6004
    %v7158 = vpack.c.b16 %v6007, %v6006
    %v7159 = vpack.c.b16 %v6009, %v6008
    %v7160 = vpack.c.b16 %v6011, %v6010
    %v7161 = vpack.c.b16 %v6013, %v6012
    %v7162 = vpack.c.b16 %v6015, %v6014
    %v7163 = vpack.c.b16 %v6017, %v6016
    %v7164 = vpack.c.b16 %v6019, %v6018
    %v7165 = vpack.c.b16 %v6021, %v6020
    %v7166 = vpack.c.b16 %v6023, %v6022
    %v7167 = vpack.c.b16 %v6025, %v6024
    %v7168 = vpack.c.b16 %v6027, %v6026
    %v7169 = vpack.c.b16 %v6029, %v6028
    %v7170 = vpack.c.b16 %v6031, %v6030
    %v7171 = vpack.c.b16 %v6033, %v6032
    %v7172 = vpack.c.b16 %v6035, %v6034
    %v7173 = vpack.c.b16 %v6037, %v6036
    %v7174 = vpack.c.b16 %v6039, %v6038
    %v7175 = vpack.c.b16 %v6041, %v6040
    %v7176 = vpack.c.b16 %v6043, %v6042
    %v7177 = vpack.c.b16 %v6045, %v6044
    %v7178 = vpack.c.b16 %v6047, %v6046
    %v7179 = vpack.c.b16 %v6049, %v6048
    %v7180 = vpack.c.b16 %v6051, %v6050
    %v7181 = vpack.c.b16 %v6053, %v6052
    %v7182 = vpack.c.b16 %v6055, %v6054
    %v7183 = vpack.c.b16 %v6057, %v6056
    %v7184 = vpack.c.b16 %v6059, %v6058
    %v7185 = vpack.c.b16 %v6061, %v6060
    %v7186 = vpack.c.b16 %v6063, %v6062
    %v7187 = vpack.c.b16 %v6065, %v6064
    %v7188 = vpack.c.b16 %v6067, %v6066
    %v7189 = vpack.c.b16 %v6069, %v6068
    %v7190 = vpack.c.b16 %v6071, %v6070
    %v7191 = vpack.c.b16 %v6073, %v6072
    %v7192 = vpack.c.b16 %v6075, %v6074
    %v7193 = vpack.c.b16 %v6077, %v6076
    %v7194 = vpack.c.b16 %v6079, %v6078
    %v7195 = vpack.c.b16 %v6081, %v6080
    %v7196 = vpack.c.b16 %v6083, %v6082
    %v7197 = vpack.c.b16 %v6085, %v6084
    %v7198 = vpack.c.b16 %v6087, %v6086
    %v7199 = vpack.c.b16 %v6089, %v6088
    %v7200 = vpack.c.b16 %v6091, %v6090
    %v7201 = vpack.c.b16 %v6093, %v6092
    %v7202 = vpack.c.b16 %v6095, %v6094
    %v7203 = vpack.c.b16 %v6097, %v6096
    %v7204 = vpack.c.b16 %v6099, %v6098
    %v7205 = vpack.c.b16 %v6101, %v6100
    %v7206 = vpack.c.b16 %v6103, %v6102
    %v7207 = vpack.c.b16 %v6105, %v6104
    %v7208 = vpack.c.b16 %v6107, %v6106
    %v7209 = vpack.c.b16 %v6109, %v6108
    %v7210 = vpack.c.b16 %v6111, %v6110
    %v7211 = vpack.c.b16 %v6113, %v6112
    %v7212 = vpack.c.b16 %v6115, %v6114
    %v7213 = vpack.c.b16 %v6117, %v6116
    %v7214 = vpack.c.b16 %v6119, %v6118
    %v7215 = vpack.c.b16 %v6121, %v6120
    %v7216 = vpack.c.b16 %v6123, %v6122
    %v7217 = vpack.c.b16 %v6125, %v6124
    %v7218 = vpack.c.b16 %v6127, %v6126
    %v7219 = vpack.c.b16 %v6129, %v6128
    %v7220 = vpack.c.b16 %v6131, %v6130
    %v7221 = vpack.c.b16 %v6133, %v6132
    %v7222 = vpack.c.b16 %v6135, %v6134
    %v7223 = vpack.c.b16 %v6137, %v6136
    %v7224 = vpack.c.b16 %v6139, %v6138
    %v7225 = vpack.c.b16 %v6141, %v6140
    %v7226 = vpack.c.b16 %v6143, %v6142
    %v7227 = vpack.c.b16 %v6145, %v6144
    %v7228 = vpack.c.b16 %v6147, %v6146
    %v7229 = vpack.c.b16 %v6149, %v6148
    %v7230 = vpack.c.b16 %v6151, %v6150
    %v7231 = vpack.c.b16 %v6153, %v6152
    %v7232 = vpack.c.b16 %v6155, %v6154
    %v7233 = vpack.c.b16 %v6157, %v6156
    %v7234 = vpack.c.b16 %v6159, %v6158
    %v7235 = vpack.c.b16 %v6161, %v6160
    %v7236 = vpack.c.b16 %v6163, %v6162
    %v7237 = vpack.c.b16 %v6165, %v6164
    %v7238 = vpack.c.b16 %v6167, %v6166
    %v7239 = vpack.c.b16 %v6169, %v6168
    %v7240 = vpack.c.b16 %v6171, %v6170
    %v7241 = vpack.c.b16 %v6173, %v6172
    %v7242 = vpack.c.b16 %v6175, %v6174
    %v7243 = vpack.c.b16 %v6177, %v6176
    %v7244 = vpack.c.b16 %v6179, %v6178
    %v7245 = vpack.c.b16 %v6181, %v6180
    %v7246 = vpack.c.b16 %v6183, %v6182
    %v7247 = vpack.c.b16 %v6185, %v6184
    %v7248 = vpack.c.b16 %v6187, %v6186
    %v7249 = vpack.c.b16 %v6189, %v6188
    %v7250 = vpack.c.b16 %v6191, %v6190
    %v7251 = vpack.c.b16 %v6193, %v6192
    %v7252 = vpack.c.b16 %v6195, %v6194
    %v7253 = vpack.c.b16 %v6197, %v6196
    %v7254 = vpack.c.b16 %v6199, %v6198
    %v7255 = vpack.c.b16 %v6201, %v6200
    %v7256 = vpack.c.b16 %v6203, %v6202
    %v7257 = vpack.c.b16 %v6205, %v6204
    %v7258 = vpack.c.b16 %v6207, %v6206
    %v7259 = vpack.c.b16 %v6209, %v6208
    %v7260 = vpack.c.b16 %v6211, %v6210
    %v7261 = vpack.c.b16 %v6213, %v6212
    %v7262 = vpack.c.b16 %v6215, %v6214
    %v7263 = vpack.c.b16 %v6217, %v6216
    %v7264 = vpack.c.b16 %v6219, %v6218
    %v7265 = vpack.c.b16 %v6221, %v6220
    %v7266 = vpack.c.b16 %v6223, %v6222
    %v7267 = vpack.c.b16 %v6225, %v6224
    %v7268 = vpack.c.b16 %v6227, %v6226
    %v7269 = vpack.c.b16 %v6229, %v6228
    %v7270 = vpack.c.b16 %v6231, %v6230
    %v7271 = vpack.c.b16 %v6233, %v6232
    %v7272 = vpack.c.b16 %v6235, %v6234
    %v7273 = vpack.c.b16 %v6237, %v6236
    %v7274 = vpack.c.b16 %v6239, %v6238
    %v7275 = vpack.c.b16 %v6241, %v6240
    %v7276 = vpack.c.b16 %v6243, %v6242
    %v7277 = vpack.c.b16 %v6245, %v6244
    %v7278 = vpack.c.b16 %v6247, %v6246
    %v7279 = vpack.c.b16 %v6249, %v6248
    %v7280 = vpack.c.b16 %v6251, %v6250
    %v7281 = vpack.c.b16 %v6253, %v6252
    %v7282 = vpack.c.b16 %v6255, %v6254
    %v7283 = vpack.c.b16 %v6257, %v6256
    %v7284 = vpack.c.b16 %v6259, %v6258
    %v7285 = vpack.c.b16 %v6261, %v6260
    %v7286 = vpack.c.b16 %v6263, %v6262
    %v7287 = vpack.c.b16 %v6265, %v6264
    %v7288 = vpack.c.b16 %v6267, %v6266
    %v7289 = vpack.c.b16 %v6269, %v6268
    %v7290 = vpack.c.b16 %v6271, %v6270
    %v7291 = vpack.c.b16 %v6273, %v6272
    %v7292 = vpack.c.b16 %v6275, %v6274
    %v7293 = vpack.c.b16 %v6277, %v6276
    %v7294 = vpack.c.b16 %v6279, %v6278
    %v7295 = vpack.c.b16 %v6281, %v6280
    %v7296 = vpack.c.b16 %v6283, %v6282
    %v7297 = vpack.c.b16 %v6285, %v6284
    %v7298 = vpack.c.b16 %v6287, %v6286
    %v7299 = vpack.c.b16 %v6289, %v6288
    %v7300 = vpack.c.b16 %v6291, %v6290
    %v7301 = vpack.c.b16 %v6293, %v6292
    %v7302 = vpack.c.b16 %v6295, %v6294
    %v7303 = vpack.c.b16 %v6297, %v6296
    %v7304 = vpack.c.b16 %v6299, %v6298
    %v7305 = vpack.c.b16 %v6301, %v6300
    %v7306 = vpack.c.b16 %v6303, %v6302
    %v7307 = vpack.c.b16 %v6305, %v6304
    %v7308 = vpack.c.b16 %v6307, %v6306
    %v7309 = vpack.c.b16 %v6309, %v6308
    %8310 = vmatprep.subr.bf16.mxu0 0
    %8311 = vmatpush1.bf16.msra.mxu0 %v6310
    %8312 = vmatprep.subr.bf16.mxu0 0
    %8313 = vmatpush1.bf16.msra.mxu0 %v6311
    %8314 = vmatprep.subr.bf16.mxu0 0
    %8315 = vmatpush1.bf16.msra.mxu0 %v6312
    %8316 = vmatprep.subr.bf16.mxu0 0
    %8317 = vmatpush1.bf16.msra.mxu0 %v6313
    %8318 = vmatprep.subr.bf16.mxu0 0
    %8319 = vmatpush1.bf16.msra.mxu0 %v6314
    %8320 = vmatprep.subr.bf16.mxu0 0
    %8321 = vmatpush1.bf16.msra.mxu0 %v6315
    %8322 = vmatprep.subr.bf16.mxu0 0
    %8323 = vmatpush1.bf16.msra.mxu0 %v6316
    %8324 = vmatprep.subr.bf16.mxu0 0
    %8325 = vmatpush1.bf16.msra.mxu0 %v6317
    %8326 = vmatprep.subr.bf16.mxu0 0
    %8327 = vmatpush1.bf16.msra.mxu0 %v6318
    %8328 = vmatprep.subr.bf16.mxu0 0
    %8329 = vmatpush1.bf16.msra.mxu0 %v6319
    %8330 = vmatprep.subr.bf16.mxu0 0
    %8331 = vmatpush1.bf16.msra.mxu0 %v6320
    %8332 = vmatprep.subr.bf16.mxu0 0
    %8333 = vmatpush1.bf16.msra.mxu0 %v6321
    %8334 = vmatprep.subr.bf16.mxu0 0
    %8335 = vmatpush1.bf16.msra.mxu0 %v6322
    %8336 = vmatprep.subr.bf16.mxu0 0
    %8337 = vmatpush1.bf16.msra.mxu0 %v6323
    %8338 = vmatprep.subr.bf16.mxu0 0
    %8339 = vmatpush1.bf16.msra.mxu0 %v6324
    %8340 = vmatprep.subr.bf16.mxu0 0
    %8341 = vmatpush1.bf16.msra.mxu0 %v6325
    %8342 = vmatprep.mubr.bf16.mxu0 %v179
    %8343 = vmatmul.mubr.bf16.gmra.mrb[0].mxu0 %v178
    %v8344 = vpop.f32.mrb[0].mxu0
    %v8345 = vadd.f32 %v2308, %v8344
    %v8346 = vpop.f32.mrb[0].mxu0
    %v8347 = vpop.f32.mrb[0].mxu0
    %v8348 = vpop.f32.mrb[0].mxu0
    %8349 = vdwg.mxu0
    %8350 = vmatprep.subr.bf16.mxu0 0
    %8351 = vmatpush1.bf16.msra.mxu0 %v6326
    %8352 = vmatprep.subr.bf16.mxu0 0
    %8353 = vmatpush1.bf16.msra.mxu0 %v6327
    %8354 = vmatprep.subr.bf16.mxu0 0
    %8355 = vmatpush1.bf16.msra.mxu0 %v6328
    %8356 = vmatprep.subr.bf16.mxu0 0
    %8357 = vmatpush1.bf16.msra.mxu0 %v6329
    %8358 = vmatprep.subr.bf16.mxu0 0
    %8359 = vmatpush1.bf16.msra.mxu0 %v6330
    %8360 = vmatprep.subr.bf16.mxu0 0
    %8361 = vmatpush1.bf16.msra.mxu0 %v6331
    %8362 = vmatprep.subr.bf16.mxu0 0
    %8363 = vmatpush1.bf16.msra.mxu0 %v6332
    %8364 = vmatprep.subr.bf16.mxu0 0
    %8365 = vmatpush1.bf16.msra.mxu0 %v6333
    %8366 = vmatprep.subr.bf16.mxu0 0
    %8367 = vmatpush1.bf16.msra.mxu0 %v6334
    %8368 = vmatprep.subr.bf16.mxu0 0
    %8369 = vmatpush1.bf16.msra.mxu0 %v6335
    %8370 = vmatprep.subr.bf16.mxu0 0
    %8371 = vmatpush1.bf16.msra.mxu0 %v6336
    %8372 = vmatprep.subr.bf16.mxu0 0
    %8373 = vmatpush1.bf16.msra.mxu0 %v6337
    %8374 = vmatprep.subr.bf16.mxu0 0
    %8375 = vmatpush1.bf16.msra.mxu0 %v6338
    %8376 = vmatprep.subr.bf16.mxu0 0
    %8377 = vmatpush1.bf16.msra.mxu0 %v6339
    %8378 = vmatprep.subr.bf16.mxu0 0
    %8379 = vmatpush1.bf16.msra.mxu0 %v6340
    %8380 = vmatprep.subr.bf16.mxu0 0
    %8381 = vmatpush1.bf16.msra.mxu0 %v6341
    %8382 = vmatprep.mubr.bf16.mxu0 %v181
    %8383 = vmatmul.mubr.bf16.gmra.mrb[0].mxu0 %v180
    %v8384 = vpop.f32.mrb[0].mxu0
    %v8385 = vadd.f32 %v8345, %v8384
    %v8386 = vpop.f32.mrb[0].mxu0
    %v8387 = vpop.f32.mrb[0].mxu0
    %v8388 = vpop.f32.mrb[0].mxu0
    %8389 = vdwg.mxu0
    %8390 = vmatprep.subr.bf16.mxu0 0
    %8391 = vmatpush1.bf16.msra.mxu0 %v6342
    %8392 = vmatprep.subr.bf16.mxu0 0
    %8393 = vmatpush1.bf16.msra.mxu0 %v6343
    %8394 = vmatprep.subr.bf16.mxu0 0
    %8395 = vmatpush1.bf16.msra.mxu0 %v6344
    %8396 = vmatprep.subr.bf16.mxu0 0
    %8397 = vmatpush1.bf16.msra.mxu0 %v6345
    %8398 = vmatprep.subr.bf16.mxu0 0
    %8399 = vmatpush1.bf16.msra.mxu0 %v6346
    %8400 = vmatprep.subr.bf16.mxu0 0
    %8401 = vmatpush1.bf16.msra.mxu0 %v6347
    %8402 = vmatprep.subr.bf16.mxu0 0
    %8403 = vmatpush1.bf16.msra.mxu0 %v6348
    %8404 = vmatprep.subr.bf16.mxu0 0
    %8405 = vmatpush1.bf16.msra.mxu0 %v6349
    %8406 = vmatprep.subr.bf16.mxu0 0
    %8407 = vmatpush1.bf16.msra.mxu0 %v6350
    %8408 = vmatprep.subr.bf16.mxu0 0
    %8409 = vmatpush1.bf16.msra.mxu0 %v6351
    %8410 = vmatprep.subr.bf16.mxu0 0
    %8411 = vmatpush1.bf16.msra.mxu0 %v6352
    %8412 = vmatprep.subr.bf16.mxu0 0
    %8413 = vmatpush1.bf16.msra.mxu0 %v6353
    %8414 = vmatprep.subr.bf16.mxu0 0
    %8415 = vmatpush1.bf16.msra.mxu0 %v6354
    %8416 = vmatprep.subr.bf16.mxu0 0
    %8417 = vmatpush1.bf16.msra.mxu0 %v6355
    %8418 = vmatprep.subr.bf16.mxu0 0
    %8419 = vmatpush1.bf16.msra.mxu0 %v6356
    %8420 = vmatprep.subr.bf16.mxu0 0
    %8421 = vmatpush1.bf16.msra.mxu0 %v6357
    %8422 = vmatprep.mubr.bf16.mxu0 %v183
    %8423 = vmatmul.mubr.bf16.gmra.mrb[0].mxu0 %v182
    %v8424 = vpop.f32.mrb[0].mxu0
    %v8425 = vadd.f32 %v8385, %v8424
    %v8426 = vpop.f32.mrb[0].mxu0
    %v8427 = vpop.f32.mrb[0].mxu0
    %v8428 = vpop.f32.mrb[0].mxu0
    %8429 = vdwg.mxu0
    %8430 = vmatprep.subr.bf16.mxu0 0
    %8431 = vmatpush1.bf16.msra.mxu0 %v6358
    %8432 = vmatprep.subr.bf16.mxu0 0
    %8433 = vmatpush1.bf16.msra.mxu0 %v6359
    %8434 = vmatprep.subr.bf16.mxu0 0
    %8435 = vmatpush1.bf16.msra.mxu0 %v6360
    %8436 = vmatprep.subr.bf16.mxu0 0
    %8437 = vmatpush1.bf16.msra.mxu0 %v6361
    %8438 = vmatprep.subr.bf16.mxu0 0
    %8439 = vmatpush1.bf16.msra.mxu0 %v6362
    %8440 = vmatprep.subr.bf16.mxu0 0
    %8441 = vmatpush1.bf16.msra.mxu0 %v6363
    %8442 = vmatprep.subr.bf16.mxu0 0
    %8443 = vmatpush1.bf16.msra.mxu0 %v6364
    %8444 = vmatprep.subr.bf16.mxu0 0
    %8445 = vmatpush1.bf16.msra.mxu0 %v6365
    %8446 = vmatprep.subr.bf16.mxu0 0
    %8447 = vmatpush1.bf16.msra.mxu0 %v6366
    %8448 = vmatprep.subr.bf16.mxu0 0
    %8449 = vmatpush1.bf16.msra.mxu0 %v6367
    %8450 = vmatprep.subr.bf16.mxu0 0
    %8451 = vmatpush1.bf16.msra.mxu0 %v6368
    %8452 = vmatprep.subr.bf16.mxu0 0
    %8453 = vmatpush1.bf16.msra.mxu0 %v6369
    %8454 = vmatprep.subr.bf16.mxu0 0
    %8455 = vmatpush1.bf16.msra.mxu0 %v6370
    %8456 = vmatprep.subr.bf16.mxu0 0
    %8457 = vmatpush1.bf16.msra.mxu0 %v6371
    %8458 = vmatprep.subr.bf16.mxu0 0
    %8459 = vmatpush1.bf16.msra.mxu0 %v6372
    %8460 = vmatprep.subr.bf16.mxu0 0
    %8461 = vmatpush1.bf16.msra.mxu0 %v6373
    %8462 = vmatprep.mubr.bf16.mxu0 %v185
    %8463 = vmatmul.mubr.bf16.gmra.mrb[0].mxu0 %v184
    %v8464 = vpop.f32.mrb[0].mxu0
    %v8465 = vadd.f32 %v8425, %v8464
    %v8466 = vpop.f32.mrb[0].mxu0
    %v8467 = vpop.f32.mrb[0].mxu0
    %v8468 = vpop.f32.mrb[0].mxu0
    %8469 = vdwg.mxu0
    %8470 = vmatprep.subr.bf16.mxu0 0
    %8471 = vmatpush1.bf16.msra.mxu0 %v6374
    %8472 = vmatprep.subr.bf16.mxu0 0
    %8473 = vmatpush1.bf16.msra.mxu0 %v6375
    %8474 = vmatprep.subr.bf16.mxu0 0
    %8475 = vmatpush1.bf16.msra.mxu0 %v6376
    %8476 = vmatprep.subr.bf16.mxu0 0
    %8477 = vmatpush1.bf16.msra.mxu0 %v6377
    %8478 = vmatprep.subr.bf16.mxu0 0
    %8479 = vmatpush1.bf16.msra.mxu0 %v6378
    %8480 = vmatprep.subr.bf16.mxu0 0
    %8481 = vmatpush1.bf16.msra.mxu0 %v6379
    %8482 = vmatprep.subr.bf16.mxu0 0
    %8483 = vmatpush1.bf16.msra.mxu0 %v6380
    %8484 = vmatprep.subr.bf16.mxu0 0
    %8485 = vmatpush1.bf16.msra.mxu0 %v6381
    %8486 = vmatprep.subr.bf16.mxu0 0
    %8487 = vmatpush1.bf16.msra.mxu0 %v6382
    %8488 = vmatprep.subr.bf16.mxu0 0
    %8489 = vmatpush1.bf16.msra.mxu0 %v6383
    %8490 = vmatprep.subr.bf16.mxu0 0
    %8491 = vmatpush1.bf16.msra.mxu0 %v6384
    %8492 = vmatprep.subr.bf16.mxu0 0
    %8493 = vmatpush1.bf16.msra.mxu0 %v6385
    %8494 = vmatprep.subr.bf16.mxu0 0
    %8495 = vmatpush1.bf16.msra.mxu0 %v6386
    %8496 = vmatprep.subr.bf16.mxu0 0
    %8497 = vmatpush1.bf16.msra.mxu0 %v6387
    %8498 = vmatprep.subr.bf16.mxu0 0
    %8499 = vmatpush1.bf16.msra.mxu0 %v6388
    %8500 = vmatprep.subr.bf16.mxu0 0
    %8501 = vmatpush1.bf16.msra.mxu0 %v6389
    %8502 = vmatprep.mubr.bf16.mxu0 %v187
    %8503 = vmatmul.mubr.bf16.gmra.mrb[0].mxu0 %v186
    %v8504 = vpop.f32.mrb[0].mxu0
    %v8505 = vadd.f32 %v8465, %v8504
    %v8506 = vpop.f32.mrb[0].mxu0
    %v8507 = vpop.f32.mrb[0].mxu0
    %v8508 = vpop.f32.mrb[0].mxu0
    %8509 = vdwg.mxu0
    %8510 = vmatprep.subr.bf16.mxu0 0
    %8511 = vmatpush1.bf16.msra.mxu0 %v6390
    %8512 = vmatprep.subr.bf16.mxu0 0
    %8513 = vmatpush1.bf16.msra.mxu0 %v6391
    %8514 = vmatprep.subr.bf16.mxu0 0
    %8515 = vmatpush1.bf16.msra.mxu0 %v6392
    %8516 = vmatprep.subr.bf16.mxu0 0
    %8517 = vmatpush1.bf16.msra.mxu0 %v6393
    %8518 = vmatprep.subr.bf16.mxu0 0
    %8519 = vmatpush1.bf16.msra.mxu0 %v6394
    %8520 = vmatprep.subr.bf16.mxu0 0
    %8521 = vmatpush1.bf16.msra.mxu0 %v6395
    %8522 = vmatprep.subr.bf16.mxu0 0
    %8523 = vmatpush1.bf16.msra.mxu0 %v6396
    %8524 = vmatprep.subr.bf16.mxu0 0
    %8525 = vmatpush1.bf16.msra.mxu0 %v6397
    %8526 = vmatprep.subr.bf16.mxu0 0
    %8527 = vmatpush1.bf16.msra.mxu0 %v6398
    %8528 = vmatprep.subr.bf16.mxu0 0
    %8529 = vmatpush1.bf16.msra.mxu0 %v6399
    %8530 = vmatprep.subr.bf16.mxu0 0
    %8531 = vmatpush1.bf16.msra.mxu0 %v6400
    %8532 = vmatprep.subr.bf16.mxu0 0
    %8533 = vmatpush1.bf16.msra.mxu0 %v6401
    %8534 = vmatprep.subr.bf16.mxu0 0
    %8535 = vmatpush1.bf16.msra.mxu0 %v6402
    %8536 = vmatprep.subr.bf16.mxu0 0
    %8537 = vmatpush1.bf16.msra.mxu0 %v6403
    %8538 = vmatprep.subr.bf16.mxu0 0
    %8539 = vmatpush1.bf16.msra.mxu0 %v6404
    %8540 = vmatprep.subr.bf16.mxu0 0
    %8541 = vmatpush1.bf16.msra.mxu0 %v6405
    %8542 = vmatprep.mubr.bf16.mxu0 %v189
    %8543 = vmatmul.mubr.bf16.gmra.mrb[0].mxu0 %v188
    %v8544 = vpop.f32.mrb[0].mxu0
    %v8545 = vadd.f32 %v8505, %v8544
    %v8546 = vpop.f32.mrb[0].mxu0
    %v8547 = vpop.f32.mrb[0].mxu0
    %v8548 = vpop.f32.mrb[0].mxu0
    %8549 = vdwg.mxu0
    %8550 = vmatprep.subr.bf16.mxu0 0
    %8551 = vmatpush1.bf16.msra.mxu0 %v6406
    %8552 = vmatprep.subr.bf16.mxu0 0
    %8553 = vmatpush1.bf16.msra.mxu0 %v6407
    %8554 = vmatprep.subr.bf16.mxu0 0
    %8555 = vmatpush1.bf16.msra.mxu0 %v6408
    %8556 = vmatprep.subr.bf16.mxu0 0
    %8557 = vmatpush1.bf16.msra.mxu0 %v6409
    %8558 = vmatprep.subr.bf16.mxu0 0
    %8559 = vmatpush1.bf16.msra.mxu0 %v6410
    %8560 = vmatprep.subr.bf16.mxu0 0
    %8561 = vmatpush1.bf16.msra.mxu0 %v6411
    %8562 = vmatprep.subr.bf16.mxu0 0
    %8563 = vmatpush1.bf16.msra.mxu0 %v6412
    %8564 = vmatprep.subr.bf16.mxu0 0
    %8565 = vmatpush1.bf16.msra.mxu0 %v6413
    %8566 = vmatprep.subr.bf16.mxu0 0
    %8567 = vmatpush1.bf16.msra.mxu0 %v6414
    %8568 = vmatprep.subr.bf16.mxu0 0
    %8569 = vmatpush1.bf16.msra.mxu0 %v6415
    %8570 = vmatprep.subr.bf16.mxu0 0
    %8571 = vmatpush1.bf16.msra.mxu0 %v6416
    %8572 = vmatprep.subr.bf16.mxu0 0
    %8573 = vmatpush1.bf16.msra.mxu0 %v6417
    %8574 = vmatprep.subr.bf16.mxu0 0
    %8575 = vmatpush1.bf16.msra.mxu0 %v6418
    %8576 = vmatprep.subr.bf16.mxu0 0
    %8577 = vmatpush1.bf16.msra.mxu0 %v6419
    %8578 = vmatprep.subr.bf16.mxu0 0
    %8579 = vmatpush1.bf16.msra.mxu0 %v6420
    %8580 = vmatprep.subr.bf16.mxu0 0
    %8581 = vmatpush1.bf16.msra.mxu0 %v6421
    %8582 = vmatprep.mubr.bf16.mxu0 %v191
    %8583 = vmatmul.mubr.bf16.gmra.mrb[0].mxu0 %v190
    %v8584 = vpop.f32.mrb[0].mxu0
    %v8585 = vadd.f32 %v8545, %v8584
    %v8586 = vpop.f32.mrb[0].mxu0
    %v8587 = vpop.f32.mrb[0].mxu0
    %v8588 = vpop.f32.mrb[0].mxu0
    %8589 = vdwg.mxu0
    %8590 = vmatprep.subr.bf16.mxu0 0
    %8591 = vmatpush1.bf16.msra.mxu0 %v6422
    %8592 = vmatprep.subr.bf16.mxu0 0
    %8593 = vmatpush1.bf16.msra.mxu0 %v6423
    %8594 = vmatprep.subr.bf16.mxu0 0
    %8595 = vmatpush1.bf16.msra.mxu0 %v6424
    %8596 = vmatprep.subr.bf16.mxu0 0
    %8597 = vmatpush1.bf16.msra.mxu0 %v6425
    %8598 = vmatprep.subr.bf16.mxu0 0
    %8599 = vmatpush1.bf16.msra.mxu0 %v6426
    %8600 = vmatprep.subr.bf16.mxu0 0
    %8601 = vmatpush1.bf16.msra.mxu0 %v6427
    %8602 = vmatprep.subr.bf16.mxu0 0
    %8603 = vmatpush1.bf16.msra.mxu0 %v6428
    %8604 = vmatprep.subr.bf16.mxu0 0
    %8605 = vmatpush1.bf16.msra.mxu0 %v6429
    %8606 = vmatprep.subr.bf16.mxu0 0
    %8607 = vmatpush1.bf16.msra.mxu0 %v6430
    %8608 = vmatprep.subr.bf16.mxu0 0
    %8609 = vmatpush1.bf16.msra.mxu0 %v6431
    %8610 = vmatprep.subr.bf16.mxu0 0
    %8611 = vmatpush1.bf16.msra.mxu0 %v6432
    %8612 = vmatprep.subr.bf16.mxu0 0
    %8613 = vmatpush1.bf16.msra.mxu0 %v6433
    %8614 = vmatprep.subr.bf16.mxu0 0
    %8615 = vmatpush1.bf16.msra.mxu0 %v6434
    %8616 = vmatprep.subr.bf16.mxu0 0
    %8617 = vmatpush1.bf16.msra.mxu0 %v6435
    %8618 = vmatprep.subr.bf16.mxu0 0
    %8619 = vmatpush1.bf16.msra.mxu0 %v6436
    %8620 = vmatprep.subr.bf16.mxu0 0
    %8621 = vmatpush1.bf16.msra.mxu0 %v6437
    %8622 = vmatprep.mubr.bf16.mxu0 %v193
    %8623 = vmatmul.mubr.bf16.gmra.mrb[0].mxu0 %v192
    %v8624 = vpop.f32.mrb[0].mxu0
    %v8625 = vadd.f32 %v8585, %v8624
    %v8626 = vpop.f32.mrb[0].mxu0
    %v8627 = vpop.f32.mrb[0].mxu0
    %v8628 = vpop.f32.mrb[0].mxu0
    %8629 = vdwg.mxu0
    %8630 = vmatprep.subr.bf16.mxu0 0
    %8631 = vmatpush1.bf16.msra.mxu0 %v6438
    %8632 = vmatprep.subr.bf16.mxu0 0
    %8633 = vmatpush1.bf16.msra.mxu0 %v6439
    %8634 = vmatprep.subr.bf16.mxu0 0
    %8635 = vmatpush1.bf16.msra.mxu0 %v6440
    %8636 = vmatprep.subr.bf16.mxu0 0
    %8637 = vmatpush1.bf16.msra.mxu0 %v6441
    %8638 = vmatprep.subr.bf16.mxu0 0
    %8639 = vmatpush1.bf16.msra.mxu0 %v6442
    %8640 = vmatprep.subr.bf16.mxu0 0
    %8641 = vmatpush1.bf16.msra.mxu0 %v6443
    %8642 = vmatprep.subr.bf16.mxu0 0
    %8643 = vmatpush1.bf16.msra.mxu0 %v6444
    %8644 = vmatprep.subr.bf16.mxu0 0
    %8645 = vmatpush1.bf16.msra.mxu0 %v6445
    %8646 = vmatprep.subr.bf16.mxu0 0
    %8647 = vmatpush1.bf16.msra.mxu0 %v6446
    %8648 = vmatprep.subr.bf16.mxu0 0
    %8649 = vmatpush1.bf16.msra.mxu0 %v6447
    %8650 = vmatprep.subr.bf16.mxu0 0
    %8651 = vmatpush1.bf16.msra.mxu0 %v6448
    %8652 = vmatprep.subr.bf16.mxu0 0
    %8653 = vmatpush1.bf16.msra.mxu0 %v6449
    %8654 = vmatprep.subr.bf16.mxu0 0
    %8655 = vmatpush1.bf16.msra.mxu0 %v6450
    %8656 = vmatprep.subr.bf16.mxu0 0
    %8657 = vmatpush1.bf16.msra.mxu0 %v6451
    %8658 = vmatprep.subr.bf16.mxu0 0
    %8659 = vmatpush1.bf16.msra.mxu0 %v6452
    %8660 = vmatprep.subr.bf16.mxu0 0
    %8661 = vmatpush1.bf16.msra.mxu0 %v6453
    %8662 = vmatprep.mubr.bf16.mxu0 %v195
    %8663 = vmatmul.mubr.bf16.gmra.mrb[0].mxu0 %v194
    %v8664 = vpop.f32.mrb[0].mxu0
    %v8665 = vadd.f32 %v8625, %v8664
    %v8666 = vpop.f32.mrb[0].mxu0
    %v8667 = vpop.f32.mrb[0].mxu0
    %v8668 = vpop.f32.mrb[0].mxu0
    %8669 = vdwg.mxu0
    %8670 = vmatprep.subr.bf16.mxu0 0
    %8671 = vmatpush1.bf16.msra.mxu0 %v6454
    %8672 = vmatprep.subr.bf16.mxu0 0
    %8673 = vmatpush1.bf16.msra.mxu0 %v6455
    %8674 = vmatprep.subr.bf16.mxu0 0
    %8675 = vmatpush1.bf16.msra.mxu0 %v6456
    %8676 = vmatprep.subr.bf16.mxu0 0
    %8677 = vmatpush1.bf16.msra.mxu0 %v6457
    %8678 = vmatprep.subr.bf16.mxu0 0
    %8679 = vmatpush1.bf16.msra.mxu0 %v6458
    %8680 = vmatprep.subr.bf16.mxu0 0
    %8681 = vmatpush1.bf16.msra.mxu0 %v6459
    %8682 = vmatprep.subr.bf16.mxu0 0
    %8683 = vmatpush1.bf16.msra.mxu0 %v6460
    %8684 = vmatprep.subr.bf16.mxu0 0
    %8685 = vmatpush1.bf16.msra.mxu0 %v6461
    %8686 = vmatprep.subr.bf16.mxu0 0
    %8687 = vmatpush1.bf16.msra.mxu0 %v6462
    %8688 = vmatprep.subr.bf16.mxu0 0
    %8689 = vmatpush1.bf16.msra.mxu0 %v6463
    %8690 = vmatprep.subr.bf16.mxu0 0
    %8691 = vmatpush1.bf16.msra.mxu0 %v6464
    %8692 = vmatprep.subr.bf16.mxu0 0
    %8693 = vmatpush1.bf16.msra.mxu0 %v6465
    %8694 = vmatprep.subr.bf16.mxu0 0
    %8695 = vmatpush1.bf16.msra.mxu0 %v6466
    %8696 = vmatprep.subr.bf16.mxu0 0
    %8697 = vmatpush1.bf16.msra.mxu0 %v6467
    %8698 = vmatprep.subr.bf16.mxu0 0
    %8699 = vmatpush1.bf16.msra.mxu0 %v6468
    %8700 = vmatprep.subr.bf16.mxu0 0
    %8701 = vmatpush1.bf16.msra.mxu0 %v6469
    %8702 = vmatprep.mubr.bf16.mxu0 %v197
    %8703 = vmatmul.mubr.bf16.gmra.mrb[0].mxu0 %v196
    %v8704 = vpop.f32.mrb[0].mxu0
    %v8705 = vadd.f32 %v8665, %v8704
    %v8706 = vpop.f32.mrb[0].mxu0
    %v8707 = vpop.f32.mrb[0].mxu0
    %v8708 = vpop.f32.mrb[0].mxu0
    %8709 = vdwg.mxu0
    %8710 = vmatprep.subr.bf16.mxu0 0
    %8711 = vmatpush1.bf16.msra.mxu0 %v6470
    %8712 = vmatprep.subr.bf16.mxu0 0
    %8713 = vmatpush1.bf16.msra.mxu0 %v6471
    %8714 = vmatprep.subr.bf16.mxu0 0
    %8715 = vmatpush1.bf16.msra.mxu0 %v6472
    %8716 = vmatprep.subr.bf16.mxu0 0
    %8717 = vmatpush1.bf16.msra.mxu0 %v6473
    %8718 = vmatprep.subr.bf16.mxu0 0
    %8719 = vmatpush1.bf16.msra.mxu0 %v6474
    %8720 = vmatprep.subr.bf16.mxu0 0
    %8721 = vmatpush1.bf16.msra.mxu0 %v6475
    %8722 = vmatprep.subr.bf16.mxu0 0
    %8723 = vmatpush1.bf16.msra.mxu0 %v6476
    %8724 = vmatprep.subr.bf16.mxu0 0
    %8725 = vmatpush1.bf16.msra.mxu0 %v6477
    %8726 = vmatprep.subr.bf16.mxu0 0
    %8727 = vmatpush1.bf16.msra.mxu0 %v6478
    %8728 = vmatprep.subr.bf16.mxu0 0
    %8729 = vmatpush1.bf16.msra.mxu0 %v6479
    %8730 = vmatprep.subr.bf16.mxu0 0
    %8731 = vmatpush1.bf16.msra.mxu0 %v6480
    %8732 = vmatprep.subr.bf16.mxu0 0
    %8733 = vmatpush1.bf16.msra.mxu0 %v6481
    %8734 = vmatprep.subr.bf16.mxu0 0
    %8735 = vmatpush1.bf16.msra.mxu0 %v6482
    %8736 = vmatprep.subr.bf16.mxu0 0
    %8737 = vmatpush1.bf16.msra.mxu0 %v6483
    %8738 = vmatprep.subr.bf16.mxu0 0
    %8739 = vmatpush1.bf16.msra.mxu0 %v6484
    %8740 = vmatprep.subr.bf16.mxu0 0
    %8741 = vmatpush1.bf16.msra.mxu0 %v6485
    %8742 = vmatprep.mubr.bf16.mxu0 %v199
    %8743 = vmatmul.mubr.bf16.gmra.mrb[0].mxu0 %v198
    %v8744 = vpop.f32.mrb[0].mxu0
    %v8745 = vadd.f32 %v8705, %v8744
    %v8746 = vpop.f32.mrb[0].mxu0
    %v8747 = vpop.f32.mrb[0].mxu0
    %v8748 = vpop.f32.mrb[0].mxu0
    %8749 = vdwg.mxu0
    %8750 = vmatprep.subr.bf16.mxu0 0
    %8751 = vmatpush1.bf16.msra.mxu0 %v6486
    %8752 = vmatprep.subr.bf16.mxu0 0
    %8753 = vmatpush1.bf16.msra.mxu0 %v6487
    %8754 = vmatprep.subr.bf16.mxu0 0
    %8755 = vmatpush1.bf16.msra.mxu0 %v6488
    %8756 = vmatprep.subr.bf16.mxu0 0
    %8757 = vmatpush1.bf16.msra.mxu0 %v6489
    %8758 = vmatprep.subr.bf16.mxu0 0
    %8759 = vmatpush1.bf16.msra.mxu0 %v6490
    %8760 = vmatprep.subr.bf16.mxu0 0
    %8761 = vmatpush1.bf16.msra.mxu0 %v6491
    %8762 = vmatprep.subr.bf16.mxu0 0
    %8763 = vmatpush1.bf16.msra.mxu0 %v6492
    %8764 = vmatprep.subr.bf16.mxu0 0
    %8765 = vmatpush1.bf16.msra.mxu0 %v6493
    %8766 = vmatprep.subr.bf16.mxu0 0
    %8767 = vmatpush1.bf16.msra.mxu0 %v6494
    %8768 = vmatprep.subr.bf16.mxu0 0
    %8769 = vmatpush1.bf16.msra.mxu0 %v6495
    %8770 = vmatprep.subr.bf16.mxu0 0
    %8771 = vmatpush1.bf16.msra.mxu0 %v6496
    %8772 = vmatprep.subr.bf16.mxu0 0
    %8773 = vmatpush1.bf16.msra.mxu0 %v6497
    %8774 = vmatprep.subr.bf16.mxu0 0
    %8775 = vmatpush1.bf16.msra.mxu0 %v6498
    %8776 = vmatprep.subr.bf16.mxu0 0
    %8777 = vmatpush1.bf16.msra.mxu0 %v6499
    %8778 = vmatprep.subr.bf16.mxu0 0
    %8779 = vmatpush1.bf16.msra.mxu0 %v6500
    %8780 = vmatprep.subr.bf16.mxu0 0
    %8781 = vmatpush1.bf16.msra.mxu0 %v6501
    %8782 = vmatprep.mubr.bf16.mxu0 %v201
    %8783 = vmatmul.mubr.bf16.gmra.mrb[0].mxu0 %v200
    %v8784 = vpop.f32.mrb[0].mxu0
    %v8785 = vadd.f32 %v8745, %v8784
    %v8786 = vpop.f32.mrb[0].mxu0
    %v8787 = vpop.f32.mrb[0].mxu0
    %v8788 = vpop.f32.mrb[0].mxu0
    %8789 = vdwg.mxu0
    %8790 = vmatprep.subr.bf16.mxu0 0
    %8791 = vmatpush1.bf16.msra.mxu0 %v6502
    %8792 = vmatprep.subr.bf16.mxu0 0
    %8793 = vmatpush1.bf16.msra.mxu0 %v6503
    %8794 = vmatprep.subr.bf16.mxu0 0
    %8795 = vmatpush1.bf16.msra.mxu0 %v6504
    %8796 = vmatprep.subr.bf16.mxu0 0
    %8797 = vmatpush1.bf16.msra.mxu0 %v6505
    %8798 = vmatprep.subr.bf16.mxu0 0
    %8799 = vmatpush1.bf16.msra.mxu0 %v6506
    %8800 = vmatprep.subr.bf16.mxu0 0
    %8801 = vmatpush1.bf16.msra.mxu0 %v6507
    %8802 = vmatprep.subr.bf16.mxu0 0
    %8803 = vmatpush1.bf16.msra.mxu0 %v6508
    %8804 = vmatprep.subr.bf16.mxu0 0
    %8805 = vmatpush1.bf16.msra.mxu0 %v6509
    %8806 = vmatprep.subr.bf16.mxu0 0
    %8807 = vmatpush1.bf16.msra.mxu0 %v6510
    %8808 = vmatprep.subr.bf16.mxu0 0
    %8809 = vmatpush1.bf16.msra.mxu0 %v6511
    %8810 = vmatprep.subr.bf16.mxu0 0
    %8811 = vmatpush1.bf16.msra.mxu0 %v6512
    %8812 = vmatprep.subr.bf16.mxu0 0
    %8813 = vmatpush1.bf16.msra.mxu0 %v6513
    %8814 = vmatprep.subr.bf16.mxu0 0
    %8815 = vmatpush1.bf16.msra.mxu0 %v6514
    %8816 = vmatprep.subr.bf16.mxu0 0
    %8817 = vmatpush1.bf16.msra.mxu0 %v6515
    %8818 = vmatprep.subr.bf16.mxu0 0
    %8819 = vmatpush1.bf16.msra.mxu0 %v6516
    %8820 = vmatprep.subr.bf16.mxu0 0
    %8821 = vmatpush1.bf16.msra.mxu0 %v6517
    %8822 = vmatprep.mubr.bf16.mxu0 %v203
    %8823 = vmatmul.mubr.bf16.gmra.mrb[0].mxu0 %v202
    %v8824 = vpop.f32.mrb[0].mxu0
    %v8825 = vadd.f32 %v8785, %v8824
    %v8826 = vpop.f32.mrb[0].mxu0
    %v8827 = vpop.f32.mrb[0].mxu0
    %v8828 = vpop.f32.mrb[0].mxu0
    %8829 = vdwg.mxu0
    %8830 = vmatprep.subr.bf16.mxu0 0
    %8831 = vmatpush1.bf16.msra.mxu0 %v6518
    %8832 = vmatprep.subr.bf16.mxu0 0
    %8833 = vmatpush1.bf16.msra.mxu0 %v6519
    %8834 = vmatprep.subr.bf16.mxu0 0
    %8835 = vmatpush1.bf16.msra.mxu0 %v6520
    %8836 = vmatprep.subr.bf16.mxu0 0
    %8837 = vmatpush1.bf16.msra.mxu0 %v6521
    %8838 = vmatprep.subr.bf16.mxu0 0
    %8839 = vmatpush1.bf16.msra.mxu0 %v6522
    %8840 = vmatprep.subr.bf16.mxu0 0
    %8841 = vmatpush1.bf16.msra.mxu0 %v6523
    %8842 = vmatprep.subr.bf16.mxu0 0
    %8843 = vmatpush1.bf16.msra.mxu0 %v6524
    %8844 = vmatprep.subr.bf16.mxu0 0
    %8845 = vmatpush1.bf16.msra.mxu0 %v6525
    %8846 = vmatprep.subr.bf16.mxu0 0
    %8847 = vmatpush1.bf16.msra.mxu0 %v6526
    %8848 = vmatprep.subr.bf16.mxu0 0
    %8849 = vmatpush1.bf16.msra.mxu0 %v6527
    %8850 = vmatprep.subr.bf16.mxu0 0
    %8851 = vmatpush1.bf16.msra.mxu0 %v6528
    %8852 = vmatprep.subr.bf16.mxu0 0
    %8853 = vmatpush1.bf16.msra.mxu0 %v6529
    %8854 = vmatprep.subr.bf16.mxu0 0
    %8855 = vmatpush1.bf16.msra.mxu0 %v6530
    %8856 = vmatprep.subr.bf16.mxu0 0
    %8857 = vmatpush1.bf16.msra.mxu0 %v6531
    %8858 = vmatprep.subr.bf16.mxu0 0
    %8859 = vmatpush1.bf16.msra.mxu0 %v6532
    %8860 = vmatprep.subr.bf16.mxu0 0
    %8861 = vmatpush1.bf16.msra.mxu0 %v6533
    %8862 = vmatprep.mubr.bf16.mxu0 %v205
    %8863 = vmatmul.mubr.bf16.gmra.mrb[0].mxu0 %v204
    %v8864 = vpop.f32.mrb[0].mxu0
    %v8865 = vadd.f32 %v8825, %v8864
    %v8866 = vpop.f32.mrb[0].mxu0
    %v8867 = vpop.f32.mrb[0].mxu0
    %v8868 = vpop.f32.mrb[0].mxu0
    %8869 = vdwg.mxu0
    %8870 = vmatprep.subr.bf16.mxu0 0
    %8871 = vmatpush1.bf16.msra.mxu0 %v6534
    %8872 = vmatprep.subr.bf16.mxu0 0
    %8873 = vmatpush1.bf16.msra.mxu0 %v6535
    %8874 = vmatprep.subr.bf16.mxu0 0
    %8875 = vmatpush1.bf16.msra.mxu0 %v6536
    %8876 = vmatprep.subr.bf16.mxu0 0
    %8877 = vmatpush1.bf16.msra.mxu0 %v6537
    %8878 = vmatprep.subr.bf16.mxu0 0
    %8879 = vmatpush1.bf16.msra.mxu0 %v6538
    %8880 = vmatprep.subr.bf16.mxu0 0
    %8881 = vmatpush1.bf16.msra.mxu0 %v6539
    %8882 = vmatprep.subr.bf16.mxu0 0
    %8883 = vmatpush1.bf16.msra.mxu0 %v6540
    %8884 = vmatprep.subr.bf16.mxu0 0
    %8885 = vmatpush1.bf16.msra.mxu0 %v6541
    %8886 = vmatprep.subr.bf16.mxu0 0
    %8887 = vmatpush1.bf16.msra.mxu0 %v6542
    %8888 = vmatprep.subr.bf16.mxu0 0
    %8889 = vmatpush1.bf16.msra.mxu0 %v6543
    %8890 = vmatprep.subr.bf16.mxu0 0
    %8891 = vmatpush1.bf16.msra.mxu0 %v6544
    %8892 = vmatprep.subr.bf16.mxu0 0
    %8893 = vmatpush1.bf16.msra.mxu0 %v6545
    %8894 = vmatprep.subr.bf16.mxu0 0
    %8895 = vmatpush1.bf16.msra.mxu0 %v6546
    %8896 = vmatprep.subr.bf16.mxu0 0
    %8897 = vmatpush1.bf16.msra.mxu0 %v6547
    %8898 = vmatprep.subr.bf16.mxu0 0
    %8899 = vmatpush1.bf16.msra.mxu0 %v6548
    %8900 = vmatprep.subr.bf16.mxu0 0
    %8901 = vmatpush1.bf16.msra.mxu0 %v6549
    %8902 = vmatprep.mubr.bf16.mxu0 %v207
    %8903 = vmatmul.mubr.bf16.gmra.mrb[0].mxu0 %v206
    %v8904 = vpop.f32.mrb[0].mxu0
    %v8905 = vadd.f32 %v8865, %v8904
    %v8906 = vpop.f32.mrb[0].mxu0
    %v8907 = vpop.f32.mrb[0].mxu0
    %v8908 = vpop.f32.mrb[0].mxu0
    %8909 = vdwg.mxu0
    %8910 = vmatprep.subr.bf16.mxu0 0
    %8911 = vmatpush1.bf16.msra.mxu0 %v6550
    %8912 = vmatprep.subr.bf16.mxu0 0
    %8913 = vmatpush1.bf16.msra.mxu0 %v6551
    %8914 = vmatprep.subr.bf16.mxu0 0
    %8915 = vmatpush1.bf16.msra.mxu0 %v6552
    %8916 = vmatprep.subr.bf16.mxu0 0
    %8917 = vmatpush1.bf16.msra.mxu0 %v6553
    %8918 = vmatprep.subr.bf16.mxu0 0
    %8919 = vmatpush1.bf16.msra.mxu0 %v6554
    %8920 = vmatprep.subr.bf16.mxu0 0
    %8921 = vmatpush1.bf16.msra.mxu0 %v6555
    %8922 = vmatprep.subr.bf16.mxu0 0
    %8923 = vmatpush1.bf16.msra.mxu0 %v6556
    %8924 = vmatprep.subr.bf16.mxu0 0
    %8925 = vmatpush1.bf16.msra.mxu0 %v6557
    %8926 = vmatprep.subr.bf16.mxu0 0
    %8927 = vmatpush1.bf16.msra.mxu0 %v6558
    %8928 = vmatprep.subr.bf16.mxu0 0
    %8929 = vmatpush1.bf16.msra.mxu0 %v6559
    %8930 = vmatprep.subr.bf16.mxu0 0
    %8931 = vmatpush1.bf16.msra.mxu0 %v6560
    %8932 = vmatprep.subr.bf16.mxu0 0
    %8933 = vmatpush1.bf16.msra.mxu0 %v6561
    %8934 = vmatprep.subr.bf16.mxu0 0
    %8935 = vmatpush1.bf16.msra.mxu0 %v6562
    %8936 = vmatprep.subr.bf16.mxu0 0
    %8937 = vmatpush1.bf16.msra.mxu0 %v6563
    %8938 = vmatprep.subr.bf16.mxu0 0
    %8939 = vmatpush1.bf16.msra.mxu0 %v6564
    %8940 = vmatprep.subr.bf16.mxu0 0
    %8941 = vmatpush1.bf16.msra.mxu0 %v6565
    %8942 = vmatprep.mubr.bf16.mxu0 %v209
    %8943 = vmatmul.mubr.bf16.gmra.mrb[0].mxu0 %v208
    %v8944 = vpop.f32.mrb[0].mxu0
    %v8945 = vadd.f32 %v8905, %v8944
    %v8946 = vpop.f32.mrb[0].mxu0
    %v8947 = vpop.f32.mrb[0].mxu0
    %v8948 = vpop.f32.mrb[0].mxu0
    %8949 = vdwg.mxu0
    %8950 = vmatprep.subr.bf16.mxu0 0
    %8951 = vmatpush1.bf16.msra.mxu0 %v6566
    %8952 = vmatprep.subr.bf16.mxu0 0
    %8953 = vmatpush1.bf16.msra.mxu0 %v6567
    %8954 = vmatprep.subr.bf16.mxu0 0
    %8955 = vmatpush1.bf16.msra.mxu0 %v6568
    %8956 = vmatprep.subr.bf16.mxu0 0
    %8957 = vmatpush1.bf16.msra.mxu0 %v6569
    %8958 = vmatprep.subr.bf16.mxu0 0
    %8959 = vmatpush1.bf16.msra.mxu0 %v6570
    %8960 = vmatprep.subr.bf16.mxu0 0
    %8961 = vmatpush1.bf16.msra.mxu0 %v6571
    %8962 = vmatprep.subr.bf16.mxu0 0
    %8963 = vmatpush1.bf16.msra.mxu0 %v6572
    %8964 = vmatprep.subr.bf16.mxu0 0
    %8965 = vmatpush1.bf16.msra.mxu0 %v6573
    %8966 = vmatprep.subr.bf16.mxu0 0
    %8967 = vmatpush1.bf16.msra.mxu0 %v6574
    %8968 = vmatprep.subr.bf16.mxu0 0
    %8969 = vmatpush1.bf16.msra.mxu0 %v6575
    %8970 = vmatprep.subr.bf16.mxu0 0
    %8971 = vmatpush1.bf16.msra.mxu0 %v6576
    %8972 = vmatprep.subr.bf16.mxu0 0
    %8973 = vmatpush1.bf16.msra.mxu0 %v6577
    %8974 = vmatprep.subr.bf16.mxu0 0
    %8975 = vmatpush1.bf16.msra.mxu0 %v6578
    %8976 = vmatprep.subr.bf16.mxu0 0
    %8977 = vmatpush1.bf16.msra.mxu0 %v6579
    %8978 = vmatprep.subr.bf16.mxu0 0
    %8979 = vmatpush1.bf16.msra.mxu0 %v6580
    %8980 = vmatprep.subr.bf16.mxu0 0
    %8981 = vmatpush1.bf16.msra.mxu0 %v6581
    %8982 = vmatprep.mubr.bf16.mxu0 %v211
    %8983 = vmatmul.mubr.bf16.gmra.mrb[0].mxu0 %v210
    %v8984 = vpop.f32.mrb[0].mxu0
    %v8985 = vadd.f32 %v8945, %v8984
    %v8986 = vpop.f32.mrb[0].mxu0
    %v8987 = vpop.f32.mrb[0].mxu0
    %v8988 = vpop.f32.mrb[0].mxu0
    %8989 = vdwg.mxu0
    %8990 = vmatprep.subr.bf16.mxu0 0
    %8991 = vmatpush1.bf16.msra.mxu0 %v6582
    %8992 = vmatprep.subr.bf16.mxu0 0
    %8993 = vmatpush1.bf16.msra.mxu0 %v6583
    %8994 = vmatprep.subr.bf16.mxu0 0
    %8995 = vmatpush1.bf16.msra.mxu0 %v6584
    %8996 = vmatprep.subr.bf16.mxu0 0
    %8997 = vmatpush1.bf16.msra.mxu0 %v6585
    %8998 = vmatprep.subr.bf16.mxu0 0
    %8999 = vmatpush1.bf16.msra.mxu0 %v6586
    %9000 = vmatprep.subr.bf16.mxu0 0
    %9001 = vmatpush1.bf16.msra.mxu0 %v6587
    %9002 = vmatprep.subr.bf16.mxu0 0
    %9003 = vmatpush1.bf16.msra.mxu0 %v6588
    %9004 = vmatprep.subr.bf16.mxu0 0
    %9005 = vmatpush1.bf16.msra.mxu0 %v6589
    %9006 = vmatprep.subr.bf16.mxu0 0
    %9007 = vmatpush1.bf16.msra.mxu0 %v6590
    %9008 = vmatprep.subr.bf16.mxu0 0
    %9009 = vmatpush1.bf16.msra.mxu0 %v6591
    %9010 = vmatprep.subr.bf16.mxu0 0
    %9011 = vmatpush1.bf16.msra.mxu0 %v6592
    %9012 = vmatprep.subr.bf16.mxu0 0
    %9013 = vmatpush1.bf16.msra.mxu0 %v6593
    %9014 = vmatprep.subr.bf16.mxu0 0
    %9015 = vmatpush1.bf16.msra.mxu0 %v6594
    %9016 = vmatprep.subr.bf16.mxu0 0
    %9017 = vmatpush1.bf16.msra.mxu0 %v6595
    %9018 = vmatprep.subr.bf16.mxu0 0
    %9019 = vmatpush1.bf16.msra.mxu0 %v6596
    %9020 = vmatprep.subr.bf16.mxu0 0
    %9021 = vmatpush1.bf16.msra.mxu0 %v6597
    %9022 = vmatprep.mubr.bf16.mxu0 %v213
    %9023 = vmatmul.mubr.bf16.gmra.mrb[0].mxu0 %v212
    %v9024 = vpop.f32.mrb[0].mxu0
    %v9025 = vadd.f32 %v8985, %v9024
    %v9026 = vpop.f32.mrb[0].mxu0
    %v9027 = vpop.f32.mrb[0].mxu0
    %v9028 = vpop.f32.mrb[0].mxu0
    %9029 = vdwg.mxu0
    %9030 = vmatprep.subr.bf16.mxu0 0
    %9031 = vmatpush1.bf16.msra.mxu0 %v6598
    %9032 = vmatprep.subr.bf16.mxu0 0
    %9033 = vmatpush1.bf16.msra.mxu0 %v6599
    %9034 = vmatprep.subr.bf16.mxu0 0
    %9035 = vmatpush1.bf16.msra.mxu0 %v6600
    %9036 = vmatprep.subr.bf16.mxu0 0
    %9037 = vmatpush1.bf16.msra.mxu0 %v6601
    %9038 = vmatprep.subr.bf16.mxu0 0
    %9039 = vmatpush1.bf16.msra.mxu0 %v6602
    %9040 = vmatprep.subr.bf16.mxu0 0
    %9041 = vmatpush1.bf16.msra.mxu0 %v6603
    %9042 = vmatprep.subr.bf16.mxu0 0
    %9043 = vmatpush1.bf16.msra.mxu0 %v6604
    %9044 = vmatprep.subr.bf16.mxu0 0
    %9045 = vmatpush1.bf16.msra.mxu0 %v6605
    %9046 = vmatprep.subr.bf16.mxu0 0
    %9047 = vmatpush1.bf16.msra.mxu0 %v6606
    %9048 = vmatprep.subr.bf16.mxu0 0
    %9049 = vmatpush1.bf16.msra.mxu0 %v6607
    %9050 = vmatprep.subr.bf16.mxu0 0
    %9051 = vmatpush1.bf16.msra.mxu0 %v6608
    %9052 = vmatprep.subr.bf16.mxu0 0
    %9053 = vmatpush1.bf16.msra.mxu0 %v6609
    %9054 = vmatprep.subr.bf16.mxu0 0
    %9055 = vmatpush1.bf16.msra.mxu0 %v6610
    %9056 = vmatprep.subr.bf16.mxu0 0
    %9057 = vmatpush1.bf16.msra.mxu0 %v6611
    %9058 = vmatprep.subr.bf16.mxu0 0
    %9059 = vmatpush1.bf16.msra.mxu0 %v6612
    %9060 = vmatprep.subr.bf16.mxu0 0
    %9061 = vmatpush1.bf16.msra.mxu0 %v6613
    %9062 = vmatprep.mubr.bf16.mxu0 %v215
    %9063 = vmatmul.mubr.bf16.gmra.mrb[0].mxu0 %v214
    %v9064 = vpop.f32.mrb[0].mxu0
    %v9065 = vadd.f32 %v9025, %v9064
    %v9066 = vpop.f32.mrb[0].mxu0
    %v9067 = vpop.f32.mrb[0].mxu0
    %v9068 = vpop.f32.mrb[0].mxu0
    %9069 = vdwg.mxu0
    %9070 = vmatprep.subr.bf16.mxu0 0
    %9071 = vmatpush1.bf16.msra.mxu0 %v6614
    %9072 = vmatprep.subr.bf16.mxu0 0
    %9073 = vmatpush1.bf16.msra.mxu0 %v6615
    %9074 = vmatprep.subr.bf16.mxu0 0
    %9075 = vmatpush1.bf16.msra.mxu0 %v6616
    %9076 = vmatprep.subr.bf16.mxu0 0
    %9077 = vmatpush1.bf16.msra.mxu0 %v6617
    %9078 = vmatprep.subr.bf16.mxu0 0
    %9079 = vmatpush1.bf16.msra.mxu0 %v6618
    %9080 = vmatprep.subr.bf16.mxu0 0
    %9081 = vmatpush1.bf16.msra.mxu0 %v6619
    %9082 = vmatprep.subr.bf16.mxu0 0
    %9083 = vmatpush1.bf16.msra.mxu0 %v6620
    %9084 = vmatprep.subr.bf16.mxu0 0
    %9085 = vmatpush1.bf16.msra.mxu0 %v6621
    %9086 = vmatprep.subr.bf16.mxu0 0
    %9087 = vmatpush1.bf16.msra.mxu0 %v6622
    %9088 = vmatprep.subr.bf16.mxu0 0
    %9089 = vmatpush1.bf16.msra.mxu0 %v6623
    %9090 = vmatprep.subr.bf16.mxu0 0
    %9091 = vmatpush1.bf16.msra.mxu0 %v6624
    %9092 = vmatprep.subr.bf16.mxu0 0
    %9093 = vmatpush1.bf16.msra.mxu0 %v6625
    %9094 = vmatprep.subr.bf16.mxu0 0
    %9095 = vmatpush1.bf16.msra.mxu0 %v6626
    %9096 = vmatprep.subr.bf16.mxu0 0
    %9097 = vmatpush1.bf16.msra.mxu0 %v6627
    %9098 = vmatprep.subr.bf16.mxu0 0
    %9099 = vmatpush1.bf16.msra.mxu0 %v6628
    %9100 = vmatprep.subr.bf16.mxu0 0
    %9101 = vmatpush1.bf16.msra.mxu0 %v6629
    %9102 = vmatprep.mubr.bf16.mxu0 %v217
    %9103 = vmatmul.mubr.bf16.gmra.mrb[0].mxu0 %v216
    %v9104 = vpop.f32.mrb[0].mxu0
    %v9105 = vadd.f32 %v9065, %v9104
    %v9106 = vpop.f32.mrb[0].mxu0
    %v9107 = vpop.f32.mrb[0].mxu0
    %v9108 = vpop.f32.mrb[0].mxu0
    %9109 = vdwg.mxu0
    %9110 = vmatprep.subr.bf16.mxu0 0
    %9111 = vmatpush1.bf16.msra.mxu0 %v6630
    %9112 = vmatprep.subr.bf16.mxu0 0
    %9113 = vmatpush1.bf16.msra.mxu0 %v6631
    %9114 = vmatprep.subr.bf16.mxu0 0
    %9115 = vmatpush1.bf16.msra.mxu0 %v6632
    %9116 = vmatprep.subr.bf16.mxu0 0
    %9117 = vmatpush1.bf16.msra.mxu0 %v6633
    %9118 = vmatprep.subr.bf16.mxu0 0
    %9119 = vmatpush1.bf16.msra.mxu0 %v6634
    %9120 = vmatprep.subr.bf16.mxu0 0
    %9121 = vmatpush1.bf16.msra.mxu0 %v6635
    %9122 = vmatprep.subr.bf16.mxu0 0
    %9123 = vmatpush1.bf16.msra.mxu0 %v6636
    %9124 = vmatprep.subr.bf16.mxu0 0
    %9125 = vmatpush1.bf16.msra.mxu0 %v6637
    %9126 = vmatprep.subr.bf16.mxu0 0
    %9127 = vmatpush1.bf16.msra.mxu0 %v6638
    %9128 = vmatprep.subr.bf16.mxu0 0
    %9129 = vmatpush1.bf16.msra.mxu0 %v6639
    %9130 = vmatprep.subr.bf16.mxu0 0
    %9131 = vmatpush1.bf16.msra.mxu0 %v6640
    %9132 = vmatprep.subr.bf16.mxu0 0
    %9133 = vmatpush1.bf16.msra.mxu0 %v6641
    %9134 = vmatprep.subr.bf16.mxu0 0
    %9135 = vmatpush1.bf16.msra.mxu0 %v6642
    %9136 = vmatprep.subr.bf16.mxu0 0
    %9137 = vmatpush1.bf16.msra.mxu0 %v6643
    %9138 = vmatprep.subr.bf16.mxu0 0
    %9139 = vmatpush1.bf16.msra.mxu0 %v6644
    %9140 = vmatprep.subr.bf16.mxu0 0
    %9141 = vmatpush1.bf16.msra.mxu0 %v6645
    %9142 = vmatprep.mubr.bf16.mxu0 %v219
    %9143 = vmatmul.mubr.bf16.gmra.mrb[0].mxu0 %v218
    %v9144 = vpop.f32.mrb[0].mxu0
    %v9145 = vadd.f32 %v9105, %v9144
    %v9146 = vpop.f32.mrb[0].mxu0
    %v9147 = vpop.f32.mrb[0].mxu0
    %v9148 = vpop.f32.mrb[0].mxu0
    %9149 = vdwg.mxu0
    %9150 = vmatprep.subr.bf16.mxu0 0
    %9151 = vmatpush1.bf16.msra.mxu0 %v6646
    %9152 = vmatprep.subr.bf16.mxu0 0
    %9153 = vmatpush1.bf16.msra.mxu0 %v6647
    %9154 = vmatprep.subr.bf16.mxu0 0
    %9155 = vmatpush1.bf16.msra.mxu0 %v6648
    %9156 = vmatprep.subr.bf16.mxu0 0
    %9157 = vmatpush1.bf16.msra.mxu0 %v6649
    %9158 = vmatprep.subr.bf16.mxu0 0
    %9159 = vmatpush1.bf16.msra.mxu0 %v6650
    %9160 = vmatprep.subr.bf16.mxu0 0
    %9161 = vmatpush1.bf16.msra.mxu0 %v6651
    %9162 = vmatprep.subr.bf16.mxu0 0
    %9163 = vmatpush1.bf16.msra.mxu0 %v6652
    %9164 = vmatprep.subr.bf16.mxu0 0
    %9165 = vmatpush1.bf16.msra.mxu0 %v6653
    %9166 = vmatprep.subr.bf16.mxu0 0
    %9167 = vmatpush1.bf16.msra.mxu0 %v6654
    %9168 = vmatprep.subr.bf16.mxu0 0
    %9169 = vmatpush1.bf16.msra.mxu0 %v6655
    %9170 = vmatprep.subr.bf16.mxu0 0
    %9171 = vmatpush1.bf16.msra.mxu0 %v6656
    %9172 = vmatprep.subr.bf16.mxu0 0
    %9173 = vmatpush1.bf16.msra.mxu0 %v6657
    %9174 = vmatprep.subr.bf16.mxu0 0
    %9175 = vmatpush1.bf16.msra.mxu0 %v6658
    %9176 = vmatprep.subr.bf16.mxu0 0
    %9177 = vmatpush1.bf16.msra.mxu0 %v6659
    %9178 = vmatprep.subr.bf16.mxu0 0
    %9179 = vmatpush1.bf16.msra.mxu0 %v6660
    %9180 = vmatprep.subr.bf16.mxu0 0
    %9181 = vmatpush1.bf16.msra.mxu0 %v6661
    %9182 = vmatprep.mubr.bf16.mxu0 %v221
    %9183 = vmatmul.mubr.bf16.gmra.mrb[0].mxu0 %v220
    %v9184 = vpop.f32.mrb[0].mxu0
    %v9185 = vadd.f32 %v9145, %v9184
    %v9186 = vpop.f32.mrb[0].mxu0
    %v9187 = vpop.f32.mrb[0].mxu0
    %v9188 = vpop.f32.mrb[0].mxu0
    %9189 = vdwg.mxu0
    %9190 = vmatprep.subr.bf16.mxu0 0
    %9191 = vmatpush1.bf16.msra.mxu0 %v6662
    %9192 = vmatprep.subr.bf16.mxu0 0
    %9193 = vmatpush1.bf16.msra.mxu0 %v6663
    %9194 = vmatprep.subr.bf16.mxu0 0
    %9195 = vmatpush1.bf16.msra.mxu0 %v6664
    %9196 = vmatprep.subr.bf16.mxu0 0
    %9197 = vmatpush1.bf16.msra.mxu0 %v6665
    %9198 = vmatprep.subr.bf16.mxu0 0
    %9199 = vmatpush1.bf16.msra.mxu0 %v6666
    %9200 = vmatprep.subr.bf16.mxu0 0
    %9201 = vmatpush1.bf16.msra.mxu0 %v6667
    %9202 = vmatprep.subr.bf16.mxu0 0
    %9203 = vmatpush1.bf16.msra.mxu0 %v6668
    %9204 = vmatprep.subr.bf16.mxu0 0
    %9205 = vmatpush1.bf16.msra.mxu0 %v6669
    %9206 = vmatprep.subr.bf16.mxu0 0
    %9207 = vmatpush1.bf16.msra.mxu0 %v6670
    %9208 = vmatprep.subr.bf16.mxu0 0
    %9209 = vmatpush1.bf16.msra.mxu0 %v6671
    %9210 = vmatprep.subr.bf16.mxu0 0
    %9211 = vmatpush1.bf16.msra.mxu0 %v6672
    %9212 = vmatprep.subr.bf16.mxu0 0
    %9213 = vmatpush1.bf16.msra.mxu0 %v6673
    %9214 = vmatprep.subr.bf16.mxu0 0
    %9215 = vmatpush1.bf16.msra.mxu0 %v6674
    %9216 = vmatprep.subr.bf16.mxu0 0
    %9217 = vmatpush1.bf16.msra.mxu0 %v6675
    %9218 = vmatprep.subr.bf16.mxu0 0
    %9219 = vmatpush1.bf16.msra.mxu0 %v6676
    %9220 = vmatprep.subr.bf16.mxu0 0
    %9221 = vmatpush1.bf16.msra.mxu0 %v6677
    %9222 = vmatprep.mubr.bf16.mxu0 %v223
    %9223 = vmatmul.mubr.bf16.gmra.mrb[0].mxu0 %v222
    %v9224 = vpop.f32.mrb[0].mxu0
    %v9225 = vadd.f32 %v9185, %v9224
    %v9226 = vpop.f32.mrb[0].mxu0
    %v9227 = vpop.f32.mrb[0].mxu0
    %v9228 = vpop.f32.mrb[0].mxu0
    %9229 = vdwg.mxu0
    %9230 = vmatprep.subr.bf16.mxu0 0
    %9231 = vmatpush1.bf16.msra.mxu0 %v6678
    %9232 = vmatprep.subr.bf16.mxu0 0
    %9233 = vmatpush1.bf16.msra.mxu0 %v6679
    %9234 = vmatprep.subr.bf16.mxu0 0
    %9235 = vmatpush1.bf16.msra.mxu0 %v6680
    %9236 = vmatprep.subr.bf16.mxu0 0
    %9237 = vmatpush1.bf16.msra.mxu0 %v6681
    %9238 = vmatprep.subr.bf16.mxu0 0
    %9239 = vmatpush1.bf16.msra.mxu0 %v6682
    %9240 = vmatprep.subr.bf16.mxu0 0
    %9241 = vmatpush1.bf16.msra.mxu0 %v6683
    %9242 = vmatprep.subr.bf16.mxu0 0
    %9243 = vmatpush1.bf16.msra.mxu0 %v6684
    %9244 = vmatprep.subr.bf16.mxu0 0
    %9245 = vmatpush1.bf16.msra.mxu0 %v6685
    %9246 = vmatprep.subr.bf16.mxu0 0
    %9247 = vmatpush1.bf16.msra.mxu0 %v6686
    %9248 = vmatprep.subr.bf16.mxu0 0
    %9249 = vmatpush1.bf16.msra.mxu0 %v6687
    %9250 = vmatprep.subr.bf16.mxu0 0
    %9251 = vmatpush1.bf16.msra.mxu0 %v6688
    %9252 = vmatprep.subr.bf16.mxu0 0
    %9253 = vmatpush1.bf16.msra.mxu0 %v6689
    %9254 = vmatprep.subr.bf16.mxu0 0
    %9255 = vmatpush1.bf16.msra.mxu0 %v6690
    %9256 = vmatprep.subr.bf16.mxu0 0
    %9257 = vmatpush1.bf16.msra.mxu0 %v6691
    %9258 = vmatprep.subr.bf16.mxu0 0
    %9259 = vmatpush1.bf16.msra.mxu0 %v6692
    %9260 = vmatprep.subr.bf16.mxu0 0
    %9261 = vmatpush1.bf16.msra.mxu0 %v6693
    %9262 = vmatprep.mubr.bf16.mxu0 %v225
    %9263 = vmatmul.mubr.bf16.gmra.mrb[0].mxu0 %v224
    %v9264 = vpop.f32.mrb[0].mxu0
    %v9265 = vadd.f32 %v9225, %v9264
    %v9266 = vpop.f32.mrb[0].mxu0
    %v9267 = vpop.f32.mrb[0].mxu0
    %v9268 = vpop.f32.mrb[0].mxu0
    %9269 = vdwg.mxu0
    %9270 = vmatprep.subr.bf16.mxu0 0
    %9271 = vmatpush1.bf16.msra.mxu0 %v6694
    %9272 = vmatprep.subr.bf16.mxu0 0
    %9273 = vmatpush1.bf16.msra.mxu0 %v6695
    %9274 = vmatprep.subr.bf16.mxu0 0
    %9275 = vmatpush1.bf16.msra.mxu0 %v6696
    %9276 = vmatprep.subr.bf16.mxu0 0
    %9277 = vmatpush1.bf16.msra.mxu0 %v6697
    %9278 = vmatprep.subr.bf16.mxu0 0
    %9279 = vmatpush1.bf16.msra.mxu0 %v6698
    %9280 = vmatprep.subr.bf16.mxu0 0
    %9281 = vmatpush1.bf16.msra.mxu0 %v6699
    %9282 = vmatprep.subr.bf16.mxu0 0
    %9283 = vmatpush1.bf16.msra.mxu0 %v6700
    %9284 = vmatprep.subr.bf16.mxu0 0
    %9285 = vmatpush1.bf16.msra.mxu0 %v6701
    %9286 = vmatprep.subr.bf16.mxu0 0
    %9287 = vmatpush1.bf16.msra.mxu0 %v6702
    %9288 = vmatprep.subr.bf16.mxu0 0
    %9289 = vmatpush1.bf16.msra.mxu0 %v6703
    %9290 = vmatprep.subr.bf16.mxu0 0
    %9291 = vmatpush1.bf16.msra.mxu0 %v6704
    %9292 = vmatprep.subr.bf16.mxu0 0
    %9293 = vmatpush1.bf16.msra.mxu0 %v6705
    %9294 = vmatprep.subr.bf16.mxu0 0
    %9295 = vmatpush1.bf16.msra.mxu0 %v6706
    %9296 = vmatprep.subr.bf16.mxu0 0
    %9297 = vmatpush1.bf16.msra.mxu0 %v6707
    %9298 = vmatprep.subr.bf16.mxu0 0
    %9299 = vmatpush1.bf16.msra.mxu0 %v6708
    %9300 = vmatprep.subr.bf16.mxu0 0
    %9301 = vmatpush1.bf16.msra.mxu0 %v6709
    %9302 = vmatprep.mubr.bf16.mxu0 %v227
    %9303 = vmatmul.mubr.bf16.gmra.mrb[0].mxu0 %v226
    %v9304 = vpop.f32.mrb[0].mxu0
    %v9305 = vadd.f32 %v9265, %v9304
    %v9306 = vpop.f32.mrb[0].mxu0
    %v9307 = vpop.f32.mrb[0].mxu0
    %v9308 = vpop.f32.mrb[0].mxu0
    %9309 = vdwg.mxu0
    %9310 = vmatprep.subr.bf16.mxu0 0
    %9311 = vmatpush1.bf16.msra.mxu0 %v6710
    %9312 = vmatprep.subr.bf16.mxu0 0
    %9313 = vmatpush1.bf16.msra.mxu0 %v6711
    %9314 = vmatprep.subr.bf16.mxu0 0
    %9315 = vmatpush1.bf16.msra.mxu0 %v6712
    %9316 = vmatprep.subr.bf16.mxu0 0
    %9317 = vmatpush1.bf16.msra.mxu0 %v6713
    %9318 = vmatprep.subr.bf16.mxu0 0
    %9319 = vmatpush1.bf16.msra.mxu0 %v6714
    %9320 = vmatprep.subr.bf16.mxu0 0
    %9321 = vmatpush1.bf16.msra.mxu0 %v6715
    %9322 = vmatprep.subr.bf16.mxu0 0
    %9323 = vmatpush1.bf16.msra.mxu0 %v6716
    %9324 = vmatprep.subr.bf16.mxu0 0
    %9325 = vmatpush1.bf16.msra.mxu0 %v6717
    %9326 = vmatprep.subr.bf16.mxu0 0
    %9327 = vmatpush1.bf16.msra.mxu0 %v6718
    %9328 = vmatprep.subr.bf16.mxu0 0
    %9329 = vmatpush1.bf16.msra.mxu0 %v6719
    %9330 = vmatprep.subr.bf16.mxu0 0
    %9331 = vmatpush1.bf16.msra.mxu0 %v6720
    %9332 = vmatprep.subr.bf16.mxu0 0
    %9333 = vmatpush1.bf16.msra.mxu0 %v6721
    %9334 = vmatprep.subr.bf16.mxu0 0
    %9335 = vmatpush1.bf16.msra.mxu0 %v6722
    %9336 = vmatprep.subr.bf16.mxu0 0
    %9337 = vmatpush1.bf16.msra.mxu0 %v6723
    %9338 = vmatprep.subr.bf16.mxu0 0
    %9339 = vmatpush1.bf16.msra.mxu0 %v6724
    %9340 = vmatprep.subr.bf16.mxu0 0
    %9341 = vmatpush1.bf16.msra.mxu0 %v6725
    %9342 = vmatprep.mubr.bf16.mxu0 %v229
    %9343 = vmatmul.mubr.bf16.gmra.mrb[0].mxu0 %v228
    %v9344 = vpop.f32.mrb[0].mxu0
    %v9345 = vadd.f32 %v9305, %v9344
    %v9346 = vpop.f32.mrb[0].mxu0
    %v9347 = vpop.f32.mrb[0].mxu0
    %v9348 = vpop.f32.mrb[0].mxu0
    %9349 = vdwg.mxu0
    %9350 = vmatprep.subr.bf16.mxu0 0
    %9351 = vmatpush1.bf16.msra.mxu0 %v6726
    %9352 = vmatprep.subr.bf16.mxu0 0
    %9353 = vmatpush1.bf16.msra.mxu0 %v6727
    %9354 = vmatprep.subr.bf16.mxu0 0
    %9355 = vmatpush1.bf16.msra.mxu0 %v6728
    %9356 = vmatprep.subr.bf16.mxu0 0
    %9357 = vmatpush1.bf16.msra.mxu0 %v6729
    %9358 = vmatprep.subr.bf16.mxu0 0
    %9359 = vmatpush1.bf16.msra.mxu0 %v6730
    %9360 = vmatprep.subr.bf16.mxu0 0
    %9361 = vmatpush1.bf16.msra.mxu0 %v6731
    %9362 = vmatprep.subr.bf16.mxu0 0
    %9363 = vmatpush1.bf16.msra.mxu0 %v6732
    %9364 = vmatprep.subr.bf16.mxu0 0
    %9365 = vmatpush1.bf16.msra.mxu0 %v6733
    %9366 = vmatprep.subr.bf16.mxu0 0
    %9367 = vmatpush1.bf16.msra.mxu0 %v6734
    %9368 = vmatprep.subr.bf16.mxu0 0
    %9369 = vmatpush1.bf16.msra.mxu0 %v6735
    %9370 = vmatprep.subr.bf16.mxu0 0
    %9371 = vmatpush1.bf16.msra.mxu0 %v6736
    %9372 = vmatprep.subr.bf16.mxu0 0
    %9373 = vmatpush1.bf16.msra.mxu0 %v6737
    %9374 = vmatprep.subr.bf16.mxu0 0
    %9375 = vmatpush1.bf16.msra.mxu0 %v6738
    %9376 = vmatprep.subr.bf16.mxu0 0
    %9377 = vmatpush1.bf16.msra.mxu0 %v6739
    %9378 = vmatprep.subr.bf16.mxu0 0
    %9379 = vmatpush1.bf16.msra.mxu0 %v6740
    %9380 = vmatprep.subr.bf16.mxu0 0
    %9381 = vmatpush1.bf16.msra.mxu0 %v6741
    %9382 = vmatprep.mubr.bf16.mxu0 %v231
    %9383 = vmatmul.mubr.bf16.gmra.mrb[0].mxu0 %v230
    %v9384 = vpop.f32.mrb[0].mxu0
    %v9385 = vadd.f32 %v9345, %v9384
    %v9386 = vpop.f32.mrb[0].mxu0
    %v9387 = vpop.f32.mrb[0].mxu0
    %v9388 = vpop.f32.mrb[0].mxu0
    %9389 = vdwg.mxu0
    %9390 = vmatprep.subr.bf16.mxu0 0
    %9391 = vmatpush1.bf16.msra.mxu0 %v6742
    %9392 = vmatprep.subr.bf16.mxu0 0
    %9393 = vmatpush1.bf16.msra.mxu0 %v6743
    %9394 = vmatprep.subr.bf16.mxu0 0
    %9395 = vmatpush1.bf16.msra.mxu0 %v6744
    %9396 = vmatprep.subr.bf16.mxu0 0
    %9397 = vmatpush1.bf16.msra.mxu0 %v6745
    %9398 = vmatprep.subr.bf16.mxu0 0
    %9399 = vmatpush1.bf16.msra.mxu0 %v6746
    %9400 = vmatprep.subr.bf16.mxu0 0
    %9401 = vmatpush1.bf16.msra.mxu0 %v6747
    %9402 = vmatprep.subr.bf16.mxu0 0
    %9403 = vmatpush1.bf16.msra.mxu0 %v6748
    %9404 = vmatprep.subr.bf16.mxu0 0
    %9405 = vmatpush1.bf16.msra.mxu0 %v6749
    %9406 = vmatprep.subr.bf16.mxu0 0
    %9407 = vmatpush1.bf16.msra.mxu0 %v6750
    %9408 = vmatprep.subr.bf16.mxu0 0
    %9409 = vmatpush1.bf16.msra.mxu0 %v6751
    %9410 = vmatprep.subr.bf16.mxu0 0
    %9411 = vmatpush1.bf16.msra.mxu0 %v6752
    %9412 = vmatprep.subr.bf16.mxu0 0
    %9413 = vmatpush1.bf16.msra.mxu0 %v6753
    %9414 = vmatprep.subr.bf16.mxu0 0
    %9415 = vmatpush1.bf16.msra.mxu0 %v6754
    %9416 = vmatprep.subr.bf16.mxu0 0
    %9417 = vmatpush1.bf16.msra.mxu0 %v6755
    %9418 = vmatprep.subr.bf16.mxu0 0
    %9419 = vmatpush1.bf16.msra.mxu0 %v6756
    %9420 = vmatprep.subr.bf16.mxu0 0
    %9421 = vmatpush1.bf16.msra.mxu0 %v6757
    %9422 = vmatprep.mubr.bf16.mxu0 %v233
    %9423 = vmatmul.mubr.bf16.gmra.mrb[0].mxu0 %v232
    %v9424 = vpop.f32.mrb[0].mxu0
    %v9425 = vadd.f32 %v9385, %v9424
    %v9426 = vpop.f32.mrb[0].mxu0
    %v9427 = vpop.f32.mrb[0].mxu0
    %v9428 = vpop.f32.mrb[0].mxu0
    %9429 = vdwg.mxu0
    %9430 = vmatprep.subr.bf16.mxu0 0
    %9431 = vmatpush1.bf16.msra.mxu0 %v6758
    %9432 = vmatprep.subr.bf16.mxu0 0
    %9433 = vmatpush1.bf16.msra.mxu0 %v6759
    %9434 = vmatprep.subr.bf16.mxu0 0
    %9435 = vmatpush1.bf16.msra.mxu0 %v6760
    %9436 = vmatprep.subr.bf16.mxu0 0
    %9437 = vmatpush1.bf16.msra.mxu0 %v6761
    %9438 = vmatprep.subr.bf16.mxu0 0
    %9439 = vmatpush1.bf16.msra.mxu0 %v6762
    %9440 = vmatprep.subr.bf16.mxu0 0
    %9441 = vmatpush1.bf16.msra.mxu0 %v6763
    %9442 = vmatprep.subr.bf16.mxu0 0
    %9443 = vmatpush1.bf16.msra.mxu0 %v6764
    %9444 = vmatprep.subr.bf16.mxu0 0
    %9445 = vmatpush1.bf16.msra.mxu0 %v6765
    %9446 = vmatprep.subr.bf16.mxu0 0
    %9447 = vmatpush1.bf16.msra.mxu0 %v6766
    %9448 = vmatprep.subr.bf16.mxu0 0
    %9449 = vmatpush1.bf16.msra.mxu0 %v6767
    %9450 = vmatprep.subr.bf16.mxu0 0
    %9451 = vmatpush1.bf16.msra.mxu0 %v6768
    %9452 = vmatprep.subr.bf16.mxu0 0
    %9453 = vmatpush1.bf16.msra.mxu0 %v6769
    %9454 = vmatprep.subr.bf16.mxu0 0
    %9455 = vmatpush1.bf16.msra.mxu0 %v6770
    %9456 = vmatprep.subr.bf16.mxu0 0
    %9457 = vmatpush1.bf16.msra.mxu0 %v6771
    %9458 = vmatprep.subr.bf16.mxu0 0
    %9459 = vmatpush1.bf16.msra.mxu0 %v6772
    %9460 = vmatprep.subr.bf16.mxu0 0
    %9461 = vmatpush1.bf16.msra.mxu0 %v6773
    %9462 = vmatprep.mubr.bf16.mxu0 %v235
    %9463 = vmatmul.mubr.bf16.gmra.mrb[0].mxu0 %v234
    %v9464 = vpop.f32.mrb[0].mxu0
    %v9465 = vadd.f32 %v9425, %v9464
    %v9466 = vpop.f32.mrb[0].mxu0
    %v9467 = vpop.f32.mrb[0].mxu0
    %v9468 = vpop.f32.mrb[0].mxu0
    %9469 = vdwg.mxu0
    %9470 = vmatprep.subr.bf16.mxu0 0
    %9471 = vmatpush1.bf16.msra.mxu0 %v6774
    %9472 = vmatprep.subr.bf16.mxu0 0
    %9473 = vmatpush1.bf16.msra.mxu0 %v6775
    %9474 = vmatprep.subr.bf16.mxu0 0
    %9475 = vmatpush1.bf16.msra.mxu0 %v6776
    %9476 = vmatprep.subr.bf16.mxu0 0
    %9477 = vmatpush1.bf16.msra.mxu0 %v6777
    %9478 = vmatprep.subr.bf16.mxu0 0
    %9479 = vmatpush1.bf16.msra.mxu0 %v6778
    %9480 = vmatprep.subr.bf16.mxu0 0
    %9481 = vmatpush1.bf16.msra.mxu0 %v6779
    %9482 = vmatprep.subr.bf16.mxu0 0
    %9483 = vmatpush1.bf16.msra.mxu0 %v6780
    %9484 = vmatprep.subr.bf16.mxu0 0
    %9485 = vmatpush1.bf16.msra.mxu0 %v6781
    %9486 = vmatprep.subr.bf16.mxu0 0
    %9487 = vmatpush1.bf16.msra.mxu0 %v6782
    %9488 = vmatprep.subr.bf16.mxu0 0
    %9489 = vmatpush1.bf16.msra.mxu0 %v6783
    %9490 = vmatprep.subr.bf16.mxu0 0
    %9491 = vmatpush1.bf16.msra.mxu0 %v6784
    %9492 = vmatprep.subr.bf16.mxu0 0
    %9493 = vmatpush1.bf16.msra.mxu0 %v6785
    %9494 = vmatprep.subr.bf16.mxu0 0
    %9495 = vmatpush1.bf16.msra.mxu0 %v6786
    %9496 = vmatprep.subr.bf16.mxu0 0
    %9497 = vmatpush1.bf16.msra.mxu0 %v6787
    %9498 = vmatprep.subr.bf16.mxu0 0
    %9499 = vmatpush1.bf16.msra.mxu0 %v6788
    %9500 = vmatprep.subr.bf16.mxu0 0
    %9501 = vmatpush1.bf16.msra.mxu0 %v6789
    %9502 = vmatprep.mubr.bf16.mxu0 %v237
    %9503 = vmatmul.mubr.bf16.gmra.mrb[0].mxu0 %v236
    %v9504 = vpop.f32.mrb[0].mxu0
    %v9505 = vadd.f32 %v9465, %v9504
    %v9506 = vpop.f32.mrb[0].mxu0
    %v9507 = vpop.f32.mrb[0].mxu0
    %v9508 = vpop.f32.mrb[0].mxu0
    %9509 = vdwg.mxu0
    %9510 = vmatprep.subr.bf16.mxu0 0
    %9511 = vmatpush1.bf16.msra.mxu0 %v6790
    %9512 = vmatprep.subr.bf16.mxu0 0
    %9513 = vmatpush1.bf16.msra.mxu0 %v6791
    %9514 = vmatprep.subr.bf16.mxu0 0
    %9515 = vmatpush1.bf16.msra.mxu0 %v6792
    %9516 = vmatprep.subr.bf16.mxu0 0
    %9517 = vmatpush1.bf16.msra.mxu0 %v6793
    %9518 = vmatprep.subr.bf16.mxu0 0
    %9519 = vmatpush1.bf16.msra.mxu0 %v6794
    %9520 = vmatprep.subr.bf16.mxu0 0
    %9521 = vmatpush1.bf16.msra.mxu0 %v6795
    %9522 = vmatprep.subr.bf16.mxu0 0
    %9523 = vmatpush1.bf16.msra.mxu0 %v6796
    %9524 = vmatprep.subr.bf16.mxu0 0
    %9525 = vmatpush1.bf16.msra.mxu0 %v6797
    %9526 = vmatprep.subr.bf16.mxu0 0
    %9527 = vmatpush1.bf16.msra.mxu0 %v6798
    %9528 = vmatprep.subr.bf16.mxu0 0
    %9529 = vmatpush1.bf16.msra.mxu0 %v6799
    %9530 = vmatprep.subr.bf16.mxu0 0
    %9531 = vmatpush1.bf16.msra.mxu0 %v6800
    %9532 = vmatprep.subr.bf16.mxu0 0
    %9533 = vmatpush1.bf16.msra.mxu0 %v6801
    %9534 = vmatprep.subr.bf16.mxu0 0
    %9535 = vmatpush1.bf16.msra.mxu0 %v6802
    %9536 = vmatprep.subr.bf16.mxu0 0
    %9537 = vmatpush1.bf16.msra.mxu0 %v6803
    %9538 = vmatprep.subr.bf16.mxu0 0
    %9539 = vmatpush1.bf16.msra.mxu0 %v6804
    %9540 = vmatprep.subr.bf16.mxu0 0
    %9541 = vmatpush1.bf16.msra.mxu0 %v6805
    %9542 = vmatprep.mubr.bf16.mxu0 %v239
    %9543 = vmatmul.mubr.bf16.gmra.mrb[0].mxu0 %v238
    %v9544 = vpop.f32.mrb[0].mxu0
    %v9545 = vadd.f32 %v9505, %v9544
    %v9546 = vpop.f32.mrb[0].mxu0
    %v9547 = vpop.f32.mrb[0].mxu0
    %v9548 = vpop.f32.mrb[0].mxu0
    %9549 = vdwg.mxu0
    %9550 = vmatprep.subr.bf16.mxu0 0
    %9551 = vmatpush1.bf16.msra.mxu0 %v6806
    %9552 = vmatprep.subr.bf16.mxu0 0
    %9553 = vmatpush1.bf16.msra.mxu0 %v6807
    %9554 = vmatprep.subr.bf16.mxu0 0
    %9555 = vmatpush1.bf16.msra.mxu0 %v6808
    %9556 = vmatprep.subr.bf16.mxu0 0
    %9557 = vmatpush1.bf16.msra.mxu0 %v6809
    %9558 = vmatprep.subr.bf16.mxu0 0
    %9559 = vmatpush1.bf16.msra.mxu0 %v6810
    %9560 = vmatprep.subr.bf16.mxu0 0
    %9561 = vmatpush1.bf16.msra.mxu0 %v6811
    %9562 = vmatprep.subr.bf16.mxu0 0
    %9563 = vmatpush1.bf16.msra.mxu0 %v6812
    %9564 = vmatprep.subr.bf16.mxu0 0
    %9565 = vmatpush1.bf16.msra.mxu0 %v6813
    %9566 = vmatprep.subr.bf16.mxu0 0
    %9567 = vmatpush1.bf16.msra.mxu0 %v6814
    %9568 = vmatprep.subr.bf16.mxu0 0
    %9569 = vmatpush1.bf16.msra.mxu0 %v6815
    %9570 = vmatprep.subr.bf16.mxu0 0
    %9571 = vmatpush1.bf16.msra.mxu0 %v6816
    %9572 = vmatprep.subr.bf16.mxu0 0
    %9573 = vmatpush1.bf16.msra.mxu0 %v6817
    %9574 = vmatprep.subr.bf16.mxu0 0
    %9575 = vmatpush1.bf16.msra.mxu0 %v6818
    %9576 = vmatprep.subr.bf16.mxu0 0
    %9577 = vmatpush1.bf16.msra.mxu0 %v6819
    %9578 = vmatprep.subr.bf16.mxu0 0
    %9579 = vmatpush1.bf16.msra.mxu0 %v6820
    %9580 = vmatprep.subr.bf16.mxu0 0
    %9581 = vmatpush1.bf16.msra.mxu0 %v6821
    %9582 = vmatprep.mubr.bf16.mxu0 %v241
    %9583 = vmatmul.mubr.bf16.gmra.mrb[0].mxu0 %v240
    %v9584 = vpop.f32.mrb[0].mxu0
    %v9585 = vadd.f32 %v9545, %v9584
    %v9586 = vpop.f32.mrb[0].mxu0
    %v9587 = vpop.f32.mrb[0].mxu0
    %v9588 = vpop.f32.mrb[0].mxu0
    %9589 = vdwg.mxu0
    %9590 = vmatprep.subr.bf16.mxu0 0
    %9591 = vmatpush1.bf16.msra.mxu0 %v6822
    %9592 = vmatprep.subr.bf16.mxu0 0
    %9593 = vmatpush1.bf16.msra.mxu0 %v6823
    %9594 = vmatprep.subr.bf16.mxu0 0
    %9595 = vmatpush1.bf16.msra.mxu0 %v6824
    %9596 = vmatprep.subr.bf16.mxu0 0
    %9597 = vmatpush1.bf16.msra.mxu0 %v6825
    %9598 = vmatprep.subr.bf16.mxu0 0
    %9599 = vmatpush1.bf16.msra.mxu0 %v6826
    %9600 = vmatprep.subr.bf16.mxu0 0
    %9601 = vmatpush1.bf16.msra.mxu0 %v6827
    %9602 = vmatprep.subr.bf16.mxu0 0
    %9603 = vmatpush1.bf16.msra.mxu0 %v6828
    %9604 = vmatprep.subr.bf16.mxu0 0
    %9605 = vmatpush1.bf16.msra.mxu0 %v6829
    %9606 = vmatprep.subr.bf16.mxu0 0
    %9607 = vmatpush1.bf16.msra.mxu0 %v6830
    %9608 = vmatprep.subr.bf16.mxu0 0
    %9609 = vmatpush1.bf16.msra.mxu0 %v6831
    %9610 = vmatprep.subr.bf16.mxu0 0
    %9611 = vmatpush1.bf16.msra.mxu0 %v6832
    %9612 = vmatprep.subr.bf16.mxu0 0
    %9613 = vmatpush1.bf16.msra.mxu0 %v6833
    %9614 = vmatprep.subr.bf16.mxu0 0
    %9615 = vmatpush1.bf16.msra.mxu0 %v6834
    %9616 = vmatprep.subr.bf16.mxu0 0
    %9617 = vmatpush1.bf16.msra.mxu0 %v6835
    %9618 = vmatprep.subr.bf16.mxu0 0
    %9619 = vmatpush1.bf16.msra.mxu0 %v6836
    %9620 = vmatprep.subr.bf16.mxu0 0
    %9621 = vmatpush1.bf16.msra.mxu0 %v6837
    %9622 = vmatprep.mubr.bf16.mxu0 %v243
    %9623 = vmatmul.mubr.bf16.gmra.mrb[0].mxu0 %v242
    %v9624 = vpop.f32.mrb[0].mxu0
    %v9625 = vadd.f32 %v9585, %v9624
    %v9626 = vpop.f32.mrb[0].mxu0
    %v9627 = vpop.f32.mrb[0].mxu0
    %v9628 = vpop.f32.mrb[0].mxu0
    %9629 = vdwg.mxu0
    %9630 = vmatprep.subr.bf16.mxu0 0
    %9631 = vmatpush1.bf16.msra.mxu0 %v6838
    %9632 = vmatprep.subr.bf16.mxu0 0
    %9633 = vmatpush1.bf16.msra.mxu0 %v6839
    %9634 = vmatprep.subr.bf16.mxu0 0
    %9635 = vmatpush1.bf16.msra.mxu0 %v6840
    %9636 = vmatprep.subr.bf16.mxu0 0
    %9637 = vmatpush1.bf16.msra.mxu0 %v6841
    %9638 = vmatprep.subr.bf16.mxu0 0
    %9639 = vmatpush1.bf16.msra.mxu0 %v6842
    %9640 = vmatprep.subr.bf16.mxu0 0
    %9641 = vmatpush1.bf16.msra.mxu0 %v6843
    %9642 = vmatprep.subr.bf16.mxu0 0
    %9643 = vmatpush1.bf16.msra.mxu0 %v6844
    %9644 = vmatprep.subr.bf16.mxu0 0
    %9645 = vmatpush1.bf16.msra.mxu0 %v6845
    %9646 = vmatprep.subr.bf16.mxu0 0
    %9647 = vmatpush1.bf16.msra.mxu0 %v6846
    %9648 = vmatprep.subr.bf16.mxu0 0
    %9649 = vmatpush1.bf16.msra.mxu0 %v6847
    %9650 = vmatprep.subr.bf16.mxu0 0
    %9651 = vmatpush1.bf16.msra.mxu0 %v6848
    %9652 = vmatprep.subr.bf16.mxu0 0
    %9653 = vmatpush1.bf16.msra.mxu0 %v6849
    %9654 = vmatprep.subr.bf16.mxu0 0
    %9655 = vmatpush1.bf16.msra.mxu0 %v6850
    %9656 = vmatprep.subr.bf16.mxu0 0
    %9657 = vmatpush1.bf16.msra.mxu0 %v6851
    %9658 = vmatprep.subr.bf16.mxu0 0
    %9659 = vmatpush1.bf16.msra.mxu0 %v6852
    %9660 = vmatprep.subr.bf16.mxu0 0
    %9661 = vmatpush1.bf16.msra.mxu0 %v6853
    %9662 = vmatprep.mubr.bf16.mxu0 %v245
    %9663 = vmatmul.mubr.bf16.gmra.mrb[0].mxu0 %v244
    %v9664 = vpop.f32.mrb[0].mxu0
    %v9665 = vadd.f32 %v9625, %v9664
    %v9666 = vpop.f32.mrb[0].mxu0
    %v9667 = vpop.f32.mrb[0].mxu0
    %v9668 = vpop.f32.mrb[0].mxu0
    %9669 = vdwg.mxu0
    %9670 = vmatprep.subr.bf16.mxu0 0
    %9671 = vmatpush1.bf16.msra.mxu0 %v6854
    %9672 = vmatprep.subr.bf16.mxu0 0
    %9673 = vmatpush1.bf16.msra.mxu0 %v6855
    %9674 = vmatprep.subr.bf16.mxu0 0
    %9675 = vmatpush1.bf16.msra.mxu0 %v6856
    %9676 = vmatprep.subr.bf16.mxu0 0
    %9677 = vmatpush1.bf16.msra.mxu0 %v6857
    %9678 = vmatprep.subr.bf16.mxu0 0
    %9679 = vmatpush1.bf16.msra.mxu0 %v6858
    %9680 = vmatprep.subr.bf16.mxu0 0
    %9681 = vmatpush1.bf16.msra.mxu0 %v6859
    %9682 = vmatprep.subr.bf16.mxu0 0
    %9683 = vmatpush1.bf16.msra.mxu0 %v6860
    %9684 = vmatprep.subr.bf16.mxu0 0
    %9685 = vmatpush1.bf16.msra.mxu0 %v6861
    %9686 = vmatprep.subr.bf16.mxu0 0
    %9687 = vmatpush1.bf16.msra.mxu0 %v6862
    %9688 = vmatprep.subr.bf16.mxu0 0
    %9689 = vmatpush1.bf16.msra.mxu0 %v6863
    %9690 = vmatprep.subr.bf16.mxu0 0
    %9691 = vmatpush1.bf16.msra.mxu0 %v6864
    %9692 = vmatprep.subr.bf16.mxu0 0
    %9693 = vmatpush1.bf16.msra.mxu0 %v6865
    %9694 = vmatprep.subr.bf16.mxu0 0
    %9695 = vmatpush1.bf16.msra.mxu0 %v6866
    %9696 = vmatprep.subr.bf16.mxu0 0
    %9697 = vmatpush1.bf16.msra.mxu0 %v6867
    %9698 = vmatprep.subr.bf16.mxu0 0
    %9699 = vmatpush1.bf16.msra.mxu0 %v6868
    %9700 = vmatprep.subr.bf16.mxu0 0
    %9701 = vmatpush1.bf16.msra.mxu0 %v6869
    %9702 = vmatprep.mubr.bf16.mxu0 %v247
    %9703 = vmatmul.mubr.bf16.gmra.mrb[0].mxu0 %v246
    %v9704 = vpop.f32.mrb[0].mxu0
    %v9705 = vadd.f32 %v9665, %v9704
    %v9706 = vpop.f32.mrb[0].mxu0
    %v9707 = vpop.f32.mrb[0].mxu0
    %v9708 = vpop.f32.mrb[0].mxu0
    %9709 = vdwg.mxu0
    %9710 = vmatprep.subr.bf16.mxu0 0
    %9711 = vmatpush1.bf16.msra.mxu0 %v6870
    %9712 = vmatprep.subr.bf16.mxu0 0
    %9713 = vmatpush1.bf16.msra.mxu0 %v6871
    %9714 = vmatprep.subr.bf16.mxu0 0
    %9715 = vmatpush1.bf16.msra.mxu0 %v6872
    %9716 = vmatprep.subr.bf16.mxu0 0
    %9717 = vmatpush1.bf16.msra.mxu0 %v6873
    %9718 = vmatprep.subr.bf16.mxu0 0
    %9719 = vmatpush1.bf16.msra.mxu0 %v6874
    %9720 = vmatprep.subr.bf16.mxu0 0
    %9721 = vmatpush1.bf16.msra.mxu0 %v6875
    %9722 = vmatprep.subr.bf16.mxu0 0
    %9723 = vmatpush1.bf16.msra.mxu0 %v6876
    %9724 = vmatprep.subr.bf16.mxu0 0
    %9725 = vmatpush1.bf16.msra.mxu0 %v6877
    %9726 = vmatprep.subr.bf16.mxu0 0
    %9727 = vmatpush1.bf16.msra.mxu0 %v6878
    %9728 = vmatprep.subr.bf16.mxu0 0
    %9729 = vmatpush1.bf16.msra.mxu0 %v6879
    %9730 = vmatprep.subr.bf16.mxu0 0
    %9731 = vmatpush1.bf16.msra.mxu0 %v6880
    %9732 = vmatprep.subr.bf16.mxu0 0
    %9733 = vmatpush1.bf16.msra.mxu0 %v6881
    %9734 = vmatprep.subr.bf16.mxu0 0
    %9735 = vmatpush1.bf16.msra.mxu0 %v6882
    %9736 = vmatprep.subr.bf16.mxu0 0
    %9737 = vmatpush1.bf16.msra.mxu0 %v6883
    %9738 = vmatprep.subr.bf16.mxu0 0
    %9739 = vmatpush1.bf16.msra.mxu0 %v6884
    %9740 = vmatprep.subr.bf16.mxu0 0
    %9741 = vmatpush1.bf16.msra.mxu0 %v6885
    %9742 = vmatprep.mubr.bf16.mxu0 %v249
    %9743 = vmatmul.mubr.bf16.gmra.mrb[0].mxu0 %v248
    %v9744 = vpop.f32.mrb[0].mxu0
    %v9745 = vadd.f32 %v9705, %v9744
    %v9746 = vpop.f32.mrb[0].mxu0
    %v9747 = vpop.f32.mrb[0].mxu0
    %v9748 = vpop.f32.mrb[0].mxu0
    %9749 = vdwg.mxu0
    %9750 = vmatprep.subr.bf16.mxu0 0
    %9751 = vmatpush1.bf16.msra.mxu0 %v6886
    %9752 = vmatprep.subr.bf16.mxu0 0
    %9753 = vmatpush1.bf16.msra.mxu0 %v6887
    %9754 = vmatprep.subr.bf16.mxu0 0
    %9755 = vmatpush1.bf16.msra.mxu0 %v6888
    %9756 = vmatprep.subr.bf16.mxu0 0
    %9757 = vmatpush1.bf16.msra.mxu0 %v6889
    %9758 = vmatprep.subr.bf16.mxu0 0
    %9759 = vmatpush1.bf16.msra.mxu0 %v6890
    %9760 = vmatprep.subr.bf16.mxu0 0
    %9761 = vmatpush1.bf16.msra.mxu0 %v6891
    %9762 = vmatprep.subr.bf16.mxu0 0
    %9763 = vmatpush1.bf16.msra.mxu0 %v6892
    %9764 = vmatprep.subr.bf16.mxu0 0
    %9765 = vmatpush1.bf16.msra.mxu0 %v6893
    %9766 = vmatprep.subr.bf16.mxu0 0
    %9767 = vmatpush1.bf16.msra.mxu0 %v6894
    %9768 = vmatprep.subr.bf16.mxu0 0
    %9769 = vmatpush1.bf16.msra.mxu0 %v6895
    %9770 = vmatprep.subr.bf16.mxu0 0
    %9771 = vmatpush1.bf16.msra.mxu0 %v6896
    %9772 = vmatprep.subr.bf16.mxu0 0
    %9773 = vmatpush1.bf16.msra.mxu0 %v6897
    %9774 = vmatprep.subr.bf16.mxu0 0
    %9775 = vmatpush1.bf16.msra.mxu0 %v6898
    %9776 = vmatprep.subr.bf16.mxu0 0
    %9777 = vmatpush1.bf16.msra.mxu0 %v6899
    %9778 = vmatprep.subr.bf16.mxu0 0
    %9779 = vmatpush1.bf16.msra.mxu0 %v6900
    %9780 = vmatprep.subr.bf16.mxu0 0
    %9781 = vmatpush1.bf16.msra.mxu0 %v6901
    %9782 = vmatprep.mubr.bf16.mxu0 %v251
    %9783 = vmatmul.mubr.bf16.gmra.mrb[0].mxu0 %v250
    %v9784 = vpop.f32.mrb[0].mxu0
    %v9785 = vadd.f32 %v9745, %v9784
    %v9786 = vpop.f32.mrb[0].mxu0
    %v9787 = vpop.f32.mrb[0].mxu0
    %v9788 = vpop.f32.mrb[0].mxu0
    %9789 = vdwg.mxu0
    %9790 = vmatprep.subr.bf16.mxu0 0
    %9791 = vmatpush1.bf16.msra.mxu0 %v6902
    %9792 = vmatprep.subr.bf16.mxu0 0
    %9793 = vmatpush1.bf16.msra.mxu0 %v6903
    %9794 = vmatprep.subr.bf16.mxu0 0
    %9795 = vmatpush1.bf16.msra.mxu0 %v6904
    %9796 = vmatprep.subr.bf16.mxu0 0
    %9797 = vmatpush1.bf16.msra.mxu0 %v6905
    %9798 = vmatprep.subr.bf16.mxu0 0
    %9799 = vmatpush1.bf16.msra.mxu0 %v6906
    %9800 = vmatprep.subr.bf16.mxu0 0
    %9801 = vmatpush1.bf16.msra.mxu0 %v6907
    %9802 = vmatprep.subr.bf16.mxu0 0
    %9803 = vmatpush1.bf16.msra.mxu0 %v6908
    %9804 = vmatprep.subr.bf16.mxu0 0
    %9805 = vmatpush1.bf16.msra.mxu0 %v6909
    %9806 = vmatprep.subr.bf16.mxu0 0
    %9807 = vmatpush1.bf16.msra.mxu0 %v6910
    %9808 = vmatprep.subr.bf16.mxu0 0
    %9809 = vmatpush1.bf16.msra.mxu0 %v6911
    %9810 = vmatprep.subr.bf16.mxu0 0
    %9811 = vmatpush1.bf16.msra.mxu0 %v6912
    %9812 = vmatprep.subr.bf16.mxu0 0
    %9813 = vmatpush1.bf16.msra.mxu0 %v6913
    %9814 = vmatprep.subr.bf16.mxu0 0
    %9815 = vmatpush1.bf16.msra.mxu0 %v6914
    %9816 = vmatprep.subr.bf16.mxu0 0
    %9817 = vmatpush1.bf16.msra.mxu0 %v6915
    %9818 = vmatprep.subr.bf16.mxu0 0
    %9819 = vmatpush1.bf16.msra.mxu0 %v6916
    %9820 = vmatprep.subr.bf16.mxu0 0
    %9821 = vmatpush1.bf16.msra.mxu0 %v6917
    %9822 = vmatprep.mubr.bf16.mxu0 %v253
    %9823 = vmatmul.mubr.bf16.gmra.mrb[0].mxu0 %v252
    %v9824 = vpop.f32.mrb[0].mxu0
    %v9825 = vadd.f32 %v9785, %v9824
    %v9826 = vpop.f32.mrb[0].mxu0
    %v9827 = vpop.f32.mrb[0].mxu0
    %v9828 = vpop.f32.mrb[0].mxu0
    %9829 = vdwg.mxu0
    %9830 = vmatprep.subr.bf16.mxu0 0
    %9831 = vmatpush1.bf16.msra.mxu0 %v6918
    %9832 = vmatprep.subr.bf16.mxu0 0
    %9833 = vmatpush1.bf16.msra.mxu0 %v6919
    %9834 = vmatprep.subr.bf16.mxu0 0
    %9835 = vmatpush1.bf16.msra.mxu0 %v6920
    %9836 = vmatprep.subr.bf16.mxu0 0
    %9837 = vmatpush1.bf16.msra.mxu0 %v6921
    %9838 = vmatprep.subr.bf16.mxu0 0
    %9839 = vmatpush1.bf16.msra.mxu0 %v6922
    %9840 = vmatprep.subr.bf16.mxu0 0
    %9841 = vmatpush1.bf16.msra.mxu0 %v6923
    %9842 = vmatprep.subr.bf16.mxu0 0
    %9843 = vmatpush1.bf16.msra.mxu0 %v6924
    %9844 = vmatprep.subr.bf16.mxu0 0
    %9845 = vmatpush1.bf16.msra.mxu0 %v6925
    %9846 = vmatprep.subr.bf16.mxu0 0
    %9847 = vmatpush1.bf16.msra.mxu0 %v6926
    %9848 = vmatprep.subr.bf16.mxu0 0
    %9849 = vmatpush1.bf16.msra.mxu0 %v6927
    %9850 = vmatprep.subr.bf16.mxu0 0
    %9851 = vmatpush1.bf16.msra.mxu0 %v6928
    %9852 = vmatprep.subr.bf16.mxu0 0
    %9853 = vmatpush1.bf16.msra.mxu0 %v6929
    %9854 = vmatprep.subr.bf16.mxu0 0
    %9855 = vmatpush1.bf16.msra.mxu0 %v6930
    %9856 = vmatprep.subr.bf16.mxu0 0
    %9857 = vmatpush1.bf16.msra.mxu0 %v6931
    %9858 = vmatprep.subr.bf16.mxu0 0
    %9859 = vmatpush1.bf16.msra.mxu0 %v6932
    %9860 = vmatprep.subr.bf16.mxu0 0
    %9861 = vmatpush1.bf16.msra.mxu0 %v6933
    %9862 = vmatprep.mubr.bf16.mxu0 %v255
    %9863 = vmatmul.mubr.bf16.gmra.mrb[0].mxu0 %v254
    %v9864 = vpop.f32.mrb[0].mxu0
    %v9865 = vadd.f32 %v9825, %v9864
    %v9866 = vpop.f32.mrb[0].mxu0
    %v9867 = vpop.f32.mrb[0].mxu0
    %v9868 = vpop.f32.mrb[0].mxu0
    %9869 = vdwg.mxu0
    %9870 = vmatprep.subr.bf16.mxu0 0
    %9871 = vmatpush1.bf16.msra.mxu0 %v6934
    %9872 = vmatprep.subr.bf16.mxu0 0
    %9873 = vmatpush1.bf16.msra.mxu0 %v6935
    %9874 = vmatprep.subr.bf16.mxu0 0
    %9875 = vmatpush1.bf16.msra.mxu0 %v6936
    %9876 = vmatprep.subr.bf16.mxu0 0
    %9877 = vmatpush1.bf16.msra.mxu0 %v6937
    %9878 = vmatprep.subr.bf16.mxu0 0
    %9879 = vmatpush1.bf16.msra.mxu0 %v6938
    %9880 = vmatprep.subr.bf16.mxu0 0
    %9881 = vmatpush1.bf16.msra.mxu0 %v6939
    %9882 = vmatprep.subr.bf16.mxu0 0
    %9883 = vmatpush1.bf16.msra.mxu0 %v6940
    %9884 = vmatprep.subr.bf16.mxu0 0
    %9885 = vmatpush1.bf16.msra.mxu0 %v6941
    %9886 = vmatprep.subr.bf16.mxu0 0
    %9887 = vmatpush1.bf16.msra.mxu0 %v6942
    %9888 = vmatprep.subr.bf16.mxu0 0
    %9889 = vmatpush1.bf16.msra.mxu0 %v6943
    %9890 = vmatprep.subr.bf16.mxu0 0
    %9891 = vmatpush1.bf16.msra.mxu0 %v6944
    %9892 = vmatprep.subr.bf16.mxu0 0
    %9893 = vmatpush1.bf16.msra.mxu0 %v6945
    %9894 = vmatprep.subr.bf16.mxu0 0
    %9895 = vmatpush1.bf16.msra.mxu0 %v6946
    %9896 = vmatprep.subr.bf16.mxu0 0
    %9897 = vmatpush1.bf16.msra.mxu0 %v6947
    %9898 = vmatprep.subr.bf16.mxu0 0
    %9899 = vmatpush1.bf16.msra.mxu0 %v6948
    %9900 = vmatprep.subr.bf16.mxu0 0
    %9901 = vmatpush1.bf16.msra.mxu0 %v6949
    %9902 = vmatprep.mubr.bf16.mxu0 %v257
    %9903 = vmatmul.mubr.bf16.gmra.mrb[0].mxu0 %v256
    %v9904 = vpop.f32.mrb[0].mxu0
    %v9905 = vadd.f32 %v9865, %v9904
    %v9906 = vpop.f32.mrb[0].mxu0
    %v9907 = vpop.f32.mrb[0].mxu0
    %v9908 = vpop.f32.mrb[0].mxu0
    %9909 = vdwg.mxu0
    %9910 = vmatprep.subr.bf16.mxu0 0
    %9911 = vmatpush1.bf16.msra.mxu0 %v6950
    %9912 = vmatprep.subr.bf16.mxu0 0
    %9913 = vmatpush1.bf16.msra.mxu0 %v6951
    %9914 = vmatprep.subr.bf16.mxu0 0
    %9915 = vmatpush1.bf16.msra.mxu0 %v6952
    %9916 = vmatprep.subr.bf16.mxu0 0
    %9917 = vmatpush1.bf16.msra.mxu0 %v6953
    %9918 = vmatprep.subr.bf16.mxu0 0
    %9919 = vmatpush1.bf16.msra.mxu0 %v6954
    %9920 = vmatprep.subr.bf16.mxu0 0
    %9921 = vmatpush1.bf16.msra.mxu0 %v6955
    %9922 = vmatprep.subr.bf16.mxu0 0
    %9923 = vmatpush1.bf16.msra.mxu0 %v6956
    %9924 = vmatprep.subr.bf16.mxu0 0
    %9925 = vmatpush1.bf16.msra.mxu0 %v6957
    %9926 = vmatprep.subr.bf16.mxu0 0
    %9927 = vmatpush1.bf16.msra.mxu0 %v6958
    %9928 = vmatprep.subr.bf16.mxu0 0
    %9929 = vmatpush1.bf16.msra.mxu0 %v6959
    %9930 = vmatprep.subr.bf16.mxu0 0
    %9931 = vmatpush1.bf16.msra.mxu0 %v6960
    %9932 = vmatprep.subr.bf16.mxu0 0
    %9933 = vmatpush1.bf16.msra.mxu0 %v6961
    %9934 = vmatprep.subr.bf16.mxu0 0
    %9935 = vmatpush1.bf16.msra.mxu0 %v6962
    %9936 = vmatprep.subr.bf16.mxu0 0
    %9937 = vmatpush1.bf16.msra.mxu0 %v6963
    %9938 = vmatprep.subr.bf16.mxu0 0
    %9939 = vmatpush1.bf16.msra.mxu0 %v6964
    %9940 = vmatprep.subr.bf16.mxu0 0
    %9941 = vmatpush1.bf16.msra.mxu0 %v6965
    %9942 = vmatprep.mubr.bf16.mxu0 %v259
    %9943 = vmatmul.mubr.bf16.gmra.mrb[0].mxu0 %v258
    %v9944 = vpop.f32.mrb[0].mxu0
    %v9945 = vadd.f32 %v9905, %v9944
    %v9946 = vpop.f32.mrb[0].mxu0
    %v9947 = vpop.f32.mrb[0].mxu0
    %v9948 = vpop.f32.mrb[0].mxu0
    %9949 = vdwg.mxu0
    %9950 = vmatprep.subr.bf16.mxu0 0
    %9951 = vmatpush1.bf16.msra.mxu0 %v6966
    %9952 = vmatprep.subr.bf16.mxu0 0
    %9953 = vmatpush1.bf16.msra.mxu0 %v6967
    %9954 = vmatprep.subr.bf16.mxu0 0
    %9955 = vmatpush1.bf16.msra.mxu0 %v6968
    %9956 = vmatprep.subr.bf16.mxu0 0
    %9957 = vmatpush1.bf16.msra.mxu0 %v6969
    %9958 = vmatprep.subr.bf16.mxu0 0
    %9959 = vmatpush1.bf16.msra.mxu0 %v6970
    %9960 = vmatprep.subr.bf16.mxu0 0
    %9961 = vmatpush1.bf16.msra.mxu0 %v6971
    %9962 = vmatprep.subr.bf16.mxu0 0
    %9963 = vmatpush1.bf16.msra.mxu0 %v6972
    %9964 = vmatprep.subr.bf16.mxu0 0
    %9965 = vmatpush1.bf16.msra.mxu0 %v6973
    %9966 = vmatprep.subr.bf16.mxu0 0
    %9967 = vmatpush1.bf16.msra.mxu0 %v6974
    %9968 = vmatprep.subr.bf16.mxu0 0
    %9969 = vmatpush1.bf16.msra.mxu0 %v6975
    %9970 = vmatprep.subr.bf16.mxu0 0
    %9971 = vmatpush1.bf16.msra.mxu0 %v6976
    %9972 = vmatprep.subr.bf16.mxu0 0
    %9973 = vmatpush1.bf16.msra.mxu0 %v6977
    %9974 = vmatprep.subr.bf16.mxu0 0
    %9975 = vmatpush1.bf16.msra.mxu0 %v6978
    %9976 = vmatprep.subr.bf16.mxu0 0
    %9977 = vmatpush1.bf16.msra.mxu0 %v6979
    %9978 = vmatprep.subr.bf16.mxu0 0
    %9979 = vmatpush1.bf16.msra.mxu0 %v6980
    %9980 = vmatprep.subr.bf16.mxu0 0
    %9981 = vmatpush1.bf16.msra.mxu0 %v6981
    %9982 = vmatprep.mubr.bf16.mxu0 %v261
    %9983 = vmatmul.mubr.bf16.gmra.mrb[0].mxu0 %v260
    %v9984 = vpop.f32.mrb[0].mxu0
    %v9985 = vadd.f32 %v9945, %v9984
    %v9986 = vpop.f32.mrb[0].mxu0
    %v9987 = vpop.f32.mrb[0].mxu0
    %v9988 = vpop.f32.mrb[0].mxu0
    %9989 = vdwg.mxu0
    %9990 = vmatprep.subr.bf16.mxu0 0
    %9991 = vmatpush1.bf16.msra.mxu0 %v6982
    %9992 = vmatprep.subr.bf16.mxu0 0
    %9993 = vmatpush1.bf16.msra.mxu0 %v6983
    %9994 = vmatprep.subr.bf16.mxu0 0
    %9995 = vmatpush1.bf16.msra.mxu0 %v6984
    %9996 = vmatprep.subr.bf16.mxu0 0
    %9997 = vmatpush1.bf16.msra.mxu0 %v6985
    %9998 = vmatprep.subr.bf16.mxu0 0
    %9999 = vmatpush1.bf16.msra.mxu0 %v6986
    %10000 = vmatprep.subr.bf16.mxu0 0
    %10001 = vmatpush1.bf16.msra.mxu0 %v6987
    %10002 = vmatprep.subr.bf16.mxu0 0
    %10003 = vmatpush1.bf16.msra.mxu0 %v6988
    %10004 = vmatprep.subr.bf16.mxu0 0
    %10005 = vmatpush1.bf16.msra.mxu0 %v6989
    %10006 = vmatprep.subr.bf16.mxu0 0
    %10007 = vmatpush1.bf16.msra.mxu0 %v6990
    %10008 = vmatprep.subr.bf16.mxu0 0
    %10009 = vmatpush1.bf16.msra.mxu0 %v6991
    %10010 = vmatprep.subr.bf16.mxu0 0
    %10011 = vmatpush1.bf16.msra.mxu0 %v6992
    %10012 = vmatprep.subr.bf16.mxu0 0
    %10013 = vmatpush1.bf16.msra.mxu0 %v6993
    %10014 = vmatprep.subr.bf16.mxu0 0
    %10015 = vmatpush1.bf16.msra.mxu0 %v6994
    %10016 = vmatprep.subr.bf16.mxu0 0
    %10017 = vmatpush1.bf16.msra.mxu0 %v6995
    %10018 = vmatprep.subr.bf16.mxu0 0
    %10019 = vmatpush1.bf16.msra.mxu0 %v6996
    %10020 = vmatprep.subr.bf16.mxu0 0
    %10021 = vmatpush1.bf16.msra.mxu0 %v6997
    %10022 = vmatprep.mubr.bf16.mxu0 %v263
    %10023 = vmatmul.mubr.bf16.gmra.mrb[0].mxu0 %v262
    %v10024 = vpop.f32.mrb[0].mxu0
    %v10025 = vadd.f32 %v9985, %v10024
    %v10026 = vpop.f32.mrb[0].mxu0
    %v10027 = vpop.f32.mrb[0].mxu0
    %v10028 = vpop.f32.mrb[0].mxu0
    %10029 = vdwg.mxu0
    %10030 = vmatprep.subr.bf16.mxu0 0
    %10031 = vmatpush1.bf16.msra.mxu0 %v6998
    %10032 = vmatprep.subr.bf16.mxu0 0
    %10033 = vmatpush1.bf16.msra.mxu0 %v6999
    %10034 = vmatprep.subr.bf16.mxu0 0
    %10035 = vmatpush1.bf16.msra.mxu0 %v7000
    %10036 = vmatprep.subr.bf16.mxu0 0
    %10037 = vmatpush1.bf16.msra.mxu0 %v7001
    %10038 = vmatprep.subr.bf16.mxu0 0
    %10039 = vmatpush1.bf16.msra.mxu0 %v7002
    %10040 = vmatprep.subr.bf16.mxu0 0
    %10041 = vmatpush1.bf16.msra.mxu0 %v7003
    %10042 = vmatprep.subr.bf16.mxu0 0
    %10043 = vmatpush1.bf16.msra.mxu0 %v7004
    %10044 = vmatprep.subr.bf16.mxu0 0
    %10045 = vmatpush1.bf16.msra.mxu0 %v7005
    %10046 = vmatprep.subr.bf16.mxu0 0
    %10047 = vmatpush1.bf16.msra.mxu0 %v7006
    %10048 = vmatprep.subr.bf16.mxu0 0
    %10049 = vmatpush1.bf16.msra.mxu0 %v7007
    %10050 = vmatprep.subr.bf16.mxu0 0
    %10051 = vmatpush1.bf16.msra.mxu0 %v7008
    %10052 = vmatprep.subr.bf16.mxu0 0
    %10053 = vmatpush1.bf16.msra.mxu0 %v7009
    %10054 = vmatprep.subr.bf16.mxu0 0
    %10055 = vmatpush1.bf16.msra.mxu0 %v7010
    %10056 = vmatprep.subr.bf16.mxu0 0
    %10057 = vmatpush1.bf16.msra.mxu0 %v7011
    %10058 = vmatprep.subr.bf16.mxu0 0
    %10059 = vmatpush1.bf16.msra.mxu0 %v7012
    %10060 = vmatprep.subr.bf16.mxu0 0
    %10061 = vmatpush1.bf16.msra.mxu0 %v7013
    %10062 = vmatprep.mubr.bf16.mxu0 %v265
    %10063 = vmatmul.mubr.bf16.gmra.mrb[0].mxu0 %v264
    %v10064 = vpop.f32.mrb[0].mxu0
    %v10065 = vadd.f32 %v10025, %v10064
    %v10066 = vpop.f32.mrb[0].mxu0
    %v10067 = vpop.f32.mrb[0].mxu0
    %v10068 = vpop.f32.mrb[0].mxu0
    %10069 = vdwg.mxu0
    %10070 = vmatprep.subr.bf16.mxu0 0
    %10071 = vmatpush1.bf16.msra.mxu0 %v7014
    %10072 = vmatprep.subr.bf16.mxu0 0
    %10073 = vmatpush1.bf16.msra.mxu0 %v7015
    %10074 = vmatprep.subr.bf16.mxu0 0
    %10075 = vmatpush1.bf16.msra.mxu0 %v7016
    %10076 = vmatprep.subr.bf16.mxu0 0
    %10077 = vmatpush1.bf16.msra.mxu0 %v7017
    %10078 = vmatprep.subr.bf16.mxu0 0
    %10079 = vmatpush1.bf16.msra.mxu0 %v7018
    %10080 = vmatprep.subr.bf16.mxu0 0
    %10081 = vmatpush1.bf16.msra.mxu0 %v7019
    %10082 = vmatprep.subr.bf16.mxu0 0
    %10083 = vmatpush1.bf16.msra.mxu0 %v7020
    %10084 = vmatprep.subr.bf16.mxu0 0
    %10085 = vmatpush1.bf16.msra.mxu0 %v7021
    %10086 = vmatprep.subr.bf16.mxu0 0
    %10087 = vmatpush1.bf16.msra.mxu0 %v7022
    %10088 = vmatprep.subr.bf16.mxu0 0
    %10089 = vmatpush1.bf16.msra.mxu0 %v7023
    %10090 = vmatprep.subr.bf16.mxu0 0
    %10091 = vmatpush1.bf16.msra.mxu0 %v7024
    %10092 = vmatprep.subr.bf16.mxu0 0
    %10093 = vmatpush1.bf16.msra.mxu0 %v7025
    %10094 = vmatprep.subr.bf16.mxu0 0
    %10095 = vmatpush1.bf16.msra.mxu0 %v7026
    %10096 = vmatprep.subr.bf16.mxu0 0
    %10097 = vmatpush1.bf16.msra.mxu0 %v7027
    %10098 = vmatprep.subr.bf16.mxu0 0
    %10099 = vmatpush1.bf16.msra.mxu0 %v7028
    %10100 = vmatprep.subr.bf16.mxu0 0
    %10101 = vmatpush1.bf16.msra.mxu0 %v7029
    %10102 = vmatprep.mubr.bf16.mxu0 %v267
    %10103 = vmatmul.mubr.bf16.gmra.mrb[0].mxu0 %v266
    %v10104 = vpop.f32.mrb[0].mxu0
    %v10105 = vadd.f32 %v10065, %v10104
    %v10106 = vpop.f32.mrb[0].mxu0
    %v10107 = vpop.f32.mrb[0].mxu0
    %v10108 = vpop.f32.mrb[0].mxu0
    %10109 = vdwg.mxu0
    %10110 = vmatprep.subr.bf16.mxu0 0
    %10111 = vmatpush1.bf16.msra.mxu0 %v7030
    %10112 = vmatprep.subr.bf16.mxu0 0
    %10113 = vmatpush1.bf16.msra.mxu0 %v7031
    %10114 = vmatprep.subr.bf16.mxu0 0
    %10115 = vmatpush1.bf16.msra.mxu0 %v7032
    %10116 = vmatprep.subr.bf16.mxu0 0
    %10117 = vmatpush1.bf16.msra.mxu0 %v7033
    %10118 = vmatprep.subr.bf16.mxu0 0
    %10119 = vmatpush1.bf16.msra.mxu0 %v7034
    %10120 = vmatprep.subr.bf16.mxu0 0
    %10121 = vmatpush1.bf16.msra.mxu0 %v7035
    %10122 = vmatprep.subr.bf16.mxu0 0
    %10123 = vmatpush1.bf16.msra.mxu0 %v7036
    %10124 = vmatprep.subr.bf16.mxu0 0
    %10125 = vmatpush1.bf16.msra.mxu0 %v7037
    %10126 = vmatprep.subr.bf16.mxu0 0
    %10127 = vmatpush1.bf16.msra.mxu0 %v7038
    %10128 = vmatprep.subr.bf16.mxu0 0
    %10129 = vmatpush1.bf16.msra.mxu0 %v7039
    %10130 = vmatprep.subr.bf16.mxu0 0
    %10131 = vmatpush1.bf16.msra.mxu0 %v7040
    %10132 = vmatprep.subr.bf16.mxu0 0
    %10133 = vmatpush1.bf16.msra.mxu0 %v7041
    %10134 = vmatprep.subr.bf16.mxu0 0
    %10135 = vmatpush1.bf16.msra.mxu0 %v7042
    %10136 = vmatprep.subr.bf16.mxu0 0
    %10137 = vmatpush1.bf16.msra.mxu0 %v7043
    %10138 = vmatprep.subr.bf16.mxu0 0
    %10139 = vmatpush1.bf16.msra.mxu0 %v7044
    %10140 = vmatprep.subr.bf16.mxu0 0
    %10141 = vmatpush1.bf16.msra.mxu0 %v7045
    %10142 = vmatprep.mubr.bf16.mxu0 %v269
    %10143 = vmatmul.mubr.bf16.gmra.mrb[0].mxu0 %v268
    %v10144 = vpop.f32.mrb[0].mxu0
    %v10145 = vadd.f32 %v10105, %v10144
    %v10146 = vpop.f32.mrb[0].mxu0
    %v10147 = vpop.f32.mrb[0].mxu0
    %v10148 = vpop.f32.mrb[0].mxu0
    %10149 = vdwg.mxu0
    %10150 = vmatprep.subr.bf16.mxu0 0
    %10151 = vmatpush1.bf16.msra.mxu0 %v7046
    %10152 = vmatprep.subr.bf16.mxu0 0
    %10153 = vmatpush1.bf16.msra.mxu0 %v7047
    %10154 = vmatprep.subr.bf16.mxu0 0
    %10155 = vmatpush1.bf16.msra.mxu0 %v7048
    %10156 = vmatprep.subr.bf16.mxu0 0
    %10157 = vmatpush1.bf16.msra.mxu0 %v7049
    %10158 = vmatprep.subr.bf16.mxu0 0
    %10159 = vmatpush1.bf16.msra.mxu0 %v7050
    %10160 = vmatprep.subr.bf16.mxu0 0
    %10161 = vmatpush1.bf16.msra.mxu0 %v7051
    %10162 = vmatprep.subr.bf16.mxu0 0
    %10163 = vmatpush1.bf16.msra.mxu0 %v7052
    %10164 = vmatprep.subr.bf16.mxu0 0
    %10165 = vmatpush1.bf16.msra.mxu0 %v7053
    %10166 = vmatprep.subr.bf16.mxu0 0
    %10167 = vmatpush1.bf16.msra.mxu0 %v7054
    %10168 = vmatprep.subr.bf16.mxu0 0
    %10169 = vmatpush1.bf16.msra.mxu0 %v7055
    %10170 = vmatprep.subr.bf16.mxu0 0
    %10171 = vmatpush1.bf16.msra.mxu0 %v7056
    %10172 = vmatprep.subr.bf16.mxu0 0
    %10173 = vmatpush1.bf16.msra.mxu0 %v7057
    %10174 = vmatprep.subr.bf16.mxu0 0
    %10175 = vmatpush1.bf16.msra.mxu0 %v7058
    %10176 = vmatprep.subr.bf16.mxu0 0
    %10177 = vmatpush1.bf16.msra.mxu0 %v7059
    %10178 = vmatprep.subr.bf16.mxu0 0
    %10179 = vmatpush1.bf16.msra.mxu0 %v7060
    %10180 = vmatprep.subr.bf16.mxu0 0
    %10181 = vmatpush1.bf16.msra.mxu0 %v7061
    %10182 = vmatprep.mubr.bf16.mxu0 %v271
    %10183 = vmatmul.mubr.bf16.gmra.mrb[0].mxu0 %v270
    %v10184 = vpop.f32.mrb[0].mxu0
    %v10185 = vadd.f32 %v10145, %v10184
    %v10186 = vpop.f32.mrb[0].mxu0
    %v10187 = vpop.f32.mrb[0].mxu0
    %v10188 = vpop.f32.mrb[0].mxu0
    %10189 = vdwg.mxu0
    %10190 = vmatprep.subr.bf16.mxu0 0
    %10191 = vmatpush1.bf16.msra.mxu0 %v7062
    %10192 = vmatprep.subr.bf16.mxu0 0
    %10193 = vmatpush1.bf16.msra.mxu0 %v7063
    %10194 = vmatprep.subr.bf16.mxu0 0
    %10195 = vmatpush1.bf16.msra.mxu0 %v7064
    %10196 = vmatprep.subr.bf16.mxu0 0
    %10197 = vmatpush1.bf16.msra.mxu0 %v7065
    %10198 = vmatprep.subr.bf16.mxu0 0
    %10199 = vmatpush1.bf16.msra.mxu0 %v7066
    %10200 = vmatprep.subr.bf16.mxu0 0
    %10201 = vmatpush1.bf16.msra.mxu0 %v7067
    %10202 = vmatprep.subr.bf16.mxu0 0
    %10203 = vmatpush1.bf16.msra.mxu0 %v7068
    %10204 = vmatprep.subr.bf16.mxu0 0
    %10205 = vmatpush1.bf16.msra.mxu0 %v7069
    %10206 = vmatprep.subr.bf16.mxu0 0
    %10207 = vmatpush1.bf16.msra.mxu0 %v7070
    %10208 = vmatprep.subr.bf16.mxu0 0
    %10209 = vmatpush1.bf16.msra.mxu0 %v7071
    %10210 = vmatprep.subr.bf16.mxu0 0
    %10211 = vmatpush1.bf16.msra.mxu0 %v7072
    %10212 = vmatprep.subr.bf16.mxu0 0
    %10213 = vmatpush1.bf16.msra.mxu0 %v7073
    %10214 = vmatprep.subr.bf16.mxu0 0
    %10215 = vmatpush1.bf16.msra.mxu0 %v7074
    %10216 = vmatprep.subr.bf16.mxu0 0
    %10217 = vmatpush1.bf16.msra.mxu0 %v7075
    %10218 = vmatprep.subr.bf16.mxu0 0
    %10219 = vmatpush1.bf16.msra.mxu0 %v7076
    %10220 = vmatprep.subr.bf16.mxu0 0
    %10221 = vmatpush1.bf16.msra.mxu0 %v7077
    %10222 = vmatprep.mubr.bf16.mxu0 %v273
    %10223 = vmatmul.mubr.bf16.gmra.mrb[0].mxu0 %v272
    %v10224 = vpop.f32.mrb[0].mxu0
    %v10225 = vadd.f32 %v10185, %v10224
    %v10226 = vpop.f32.mrb[0].mxu0
    %v10227 = vpop.f32.mrb[0].mxu0
    %v10228 = vpop.f32.mrb[0].mxu0
    %10229 = vdwg.mxu0
    %10230 = vmatprep.subr.bf16.mxu0 0
    %10231 = vmatpush1.bf16.msra.mxu0 %v7078
    %10232 = vmatprep.subr.bf16.mxu0 0
    %10233 = vmatpush1.bf16.msra.mxu0 %v7079
    %10234 = vmatprep.subr.bf16.mxu0 0
    %10235 = vmatpush1.bf16.msra.mxu0 %v7080
    %10236 = vmatprep.subr.bf16.mxu0 0
    %10237 = vmatpush1.bf16.msra.mxu0 %v7081
    %10238 = vmatprep.subr.bf16.mxu0 0
    %10239 = vmatpush1.bf16.msra.mxu0 %v7082
    %10240 = vmatprep.subr.bf16.mxu0 0
    %10241 = vmatpush1.bf16.msra.mxu0 %v7083
    %10242 = vmatprep.subr.bf16.mxu0 0
    %10243 = vmatpush1.bf16.msra.mxu0 %v7084
    %10244 = vmatprep.subr.bf16.mxu0 0
    %10245 = vmatpush1.bf16.msra.mxu0 %v7085
    %10246 = vmatprep.subr.bf16.mxu0 0
    %10247 = vmatpush1.bf16.msra.mxu0 %v7086
    %10248 = vmatprep.subr.bf16.mxu0 0
    %10249 = vmatpush1.bf16.msra.mxu0 %v7087
    %10250 = vmatprep.subr.bf16.mxu0 0
    %10251 = vmatpush1.bf16.msra.mxu0 %v7088
    %10252 = vmatprep.subr.bf16.mxu0 0
    %10253 = vmatpush1.bf16.msra.mxu0 %v7089
    %10254 = vmatprep.subr.bf16.mxu0 0
    %10255 = vmatpush1.bf16.msra.mxu0 %v7090
    %10256 = vmatprep.subr.bf16.mxu0 0
    %10257 = vmatpush1.bf16.msra.mxu0 %v7091
    %10258 = vmatprep.subr.bf16.mxu0 0
    %10259 = vmatpush1.bf16.msra.mxu0 %v7092
    %10260 = vmatprep.subr.bf16.mxu0 0
    %10261 = vmatpush1.bf16.msra.mxu0 %v7093
    %10262 = vmatprep.mubr.bf16.mxu0 %v275
    %10263 = vmatmul.mubr.bf16.gmra.mrb[0].mxu0 %v274
    %v10264 = vpop.f32.mrb[0].mxu0
    %v10265 = vadd.f32 %v10225, %v10264
    %v10266 = vpop.f32.mrb[0].mxu0
    %v10267 = vpop.f32.mrb[0].mxu0
    %v10268 = vpop.f32.mrb[0].mxu0
    %10269 = vdwg.mxu0
    %10270 = vmatprep.subr.bf16.mxu0 0
    %10271 = vmatpush1.bf16.msra.mxu0 %v7094
    %10272 = vmatprep.subr.bf16.mxu0 0
    %10273 = vmatpush1.bf16.msra.mxu0 %v7095
    %10274 = vmatprep.subr.bf16.mxu0 0
    %10275 = vmatpush1.bf16.msra.mxu0 %v7096
    %10276 = vmatprep.subr.bf16.mxu0 0
    %10277 = vmatpush1.bf16.msra.mxu0 %v7097
    %10278 = vmatprep.subr.bf16.mxu0 0
    %10279 = vmatpush1.bf16.msra.mxu0 %v7098
    %10280 = vmatprep.subr.bf16.mxu0 0
    %10281 = vmatpush1.bf16.msra.mxu0 %v7099
    %10282 = vmatprep.subr.bf16.mxu0 0
    %10283 = vmatpush1.bf16.msra.mxu0 %v7100
    %10284 = vmatprep.subr.bf16.mxu0 0
    %10285 = vmatpush1.bf16.msra.mxu0 %v7101
    %10286 = vmatprep.subr.bf16.mxu0 0
    %10287 = vmatpush1.bf16.msra.mxu0 %v7102
    %10288 = vmatprep.subr.bf16.mxu0 0
    %10289 = vmatpush1.bf16.msra.mxu0 %v7103
    %10290 = vmatprep.subr.bf16.mxu0 0
    %10291 = vmatpush1.bf16.msra.mxu0 %v7104
    %10292 = vmatprep.subr.bf16.mxu0 0
    %10293 = vmatpush1.bf16.msra.mxu0 %v7105
    %10294 = vmatprep.subr.bf16.mxu0 0
    %10295 = vmatpush1.bf16.msra.mxu0 %v7106
    %10296 = vmatprep.subr.bf16.mxu0 0
    %10297 = vmatpush1.bf16.msra.mxu0 %v7107
    %10298 = vmatprep.subr.bf16.mxu0 0
    %10299 = vmatpush1.bf16.msra.mxu0 %v7108
    %10300 = vmatprep.subr.bf16.mxu0 0
    %10301 = vmatpush1.bf16.msra.mxu0 %v7109
    %10302 = vmatprep.mubr.bf16.mxu0 %v277
    %10303 = vmatmul.mubr.bf16.gmra.mrb[0].mxu0 %v276
    %v10304 = vpop.f32.mrb[0].mxu0
    %v10305 = vadd.f32 %v10265, %v10304
    %v10306 = vpop.f32.mrb[0].mxu0
    %v10307 = vpop.f32.mrb[0].mxu0
    %v10308 = vpop.f32.mrb[0].mxu0
    %10309 = vdwg.mxu0
    %10310 = vmatprep.subr.bf16.mxu0 0
    %10311 = vmatpush1.bf16.msra.mxu0 %v7110
    %10312 = vmatprep.subr.bf16.mxu0 0
    %10313 = vmatpush1.bf16.msra.mxu0 %v7111
    %10314 = vmatprep.subr.bf16.mxu0 0
    %10315 = vmatpush1.bf16.msra.mxu0 %v7112
    %10316 = vmatprep.subr.bf16.mxu0 0
    %10317 = vmatpush1.bf16.msra.mxu0 %v7113
    %10318 = vmatprep.subr.bf16.mxu0 0
    %10319 = vmatpush1.bf16.msra.mxu0 %v7114
    %10320 = vmatprep.subr.bf16.mxu0 0
    %10321 = vmatpush1.bf16.msra.mxu0 %v7115
    %10322 = vmatprep.subr.bf16.mxu0 0
    %10323 = vmatpush1.bf16.msra.mxu0 %v7116
    %10324 = vmatprep.subr.bf16.mxu0 0
    %10325 = vmatpush1.bf16.msra.mxu0 %v7117
    %10326 = vmatprep.subr.bf16.mxu0 0
    %10327 = vmatpush1.bf16.msra.mxu0 %v7118
    %10328 = vmatprep.subr.bf16.mxu0 0
    %10329 = vmatpush1.bf16.msra.mxu0 %v7119
    %10330 = vmatprep.subr.bf16.mxu0 0
    %10331 = vmatpush1.bf16.msra.mxu0 %v7120
    %10332 = vmatprep.subr.bf16.mxu0 0
    %10333 = vmatpush1.bf16.msra.mxu0 %v7121
    %10334 = vmatprep.subr.bf16.mxu0 0
    %10335 = vmatpush1.bf16.msra.mxu0 %v7122
    %10336 = vmatprep.subr.bf16.mxu0 0
    %10337 = vmatpush1.bf16.msra.mxu0 %v7123
    %10338 = vmatprep.subr.bf16.mxu0 0
    %10339 = vmatpush1.bf16.msra.mxu0 %v7124
    %10340 = vmatprep.subr.bf16.mxu0 0
    %10341 = vmatpush1.bf16.msra.mxu0 %v7125
    %10342 = vmatprep.mubr.bf16.mxu0 %v279
    %10343 = vmatmul.mubr.bf16.gmra.mrb[0].mxu0 %v278
    %v10344 = vpop.f32.mrb[0].mxu0
    %v10345 = vadd.f32 %v10305, %v10344
    %v10346 = vpop.f32.mrb[0].mxu0
    %v10347 = vpop.f32.mrb[0].mxu0
    %v10348 = vpop.f32.mrb[0].mxu0
    %10349 = vdwg.mxu0
    %10350 = vmatprep.subr.bf16.mxu0 0
    %10351 = vmatpush1.bf16.msra.mxu0 %v7126
    %10352 = vmatprep.subr.bf16.mxu0 0
    %10353 = vmatpush1.bf16.msra.mxu0 %v7127
    %10354 = vmatprep.subr.bf16.mxu0 0
    %10355 = vmatpush1.bf16.msra.mxu0 %v7128
    %10356 = vmatprep.subr.bf16.mxu0 0
    %10357 = vmatpush1.bf16.msra.mxu0 %v7129
    %10358 = vmatprep.subr.bf16.mxu0 0
    %10359 = vmatpush1.bf16.msra.mxu0 %v7130
    %10360 = vmatprep.subr.bf16.mxu0 0
    %10361 = vmatpush1.bf16.msra.mxu0 %v7131
    %10362 = vmatprep.subr.bf16.mxu0 0
    %10363 = vmatpush1.bf16.msra.mxu0 %v7132
    %10364 = vmatprep.subr.bf16.mxu0 0
    %10365 = vmatpush1.bf16.msra.mxu0 %v7133
    %10366 = vmatprep.subr.bf16.mxu0 0
    %10367 = vmatpush1.bf16.msra.mxu0 %v7134
    %10368 = vmatprep.subr.bf16.mxu0 0
    %10369 = vmatpush1.bf16.msra.mxu0 %v7135
    %10370 = vmatprep.subr.bf16.mxu0 0
    %10371 = vmatpush1.bf16.msra.mxu0 %v7136
    %10372 = vmatprep.subr.bf16.mxu0 0
    %10373 = vmatpush1.bf16.msra.mxu0 %v7137
    %10374 = vmatprep.subr.bf16.mxu0 0
    %10375 = vmatpush1.bf16.msra.mxu0 %v7138
    %10376 = vmatprep.subr.bf16.mxu0 0
    %10377 = vmatpush1.bf16.msra.mxu0 %v7139
    %10378 = vmatprep.subr.bf16.mxu0 0
    %10379 = vmatpush1.bf16.msra.mxu0 %v7140
    %10380 = vmatprep.subr.bf16.mxu0 0
    %10381 = vmatpush1.bf16.msra.mxu0 %v7141
    %10382 = vmatprep.mubr.bf16.mxu0 %v281
    %10383 = vmatmul.mubr.bf16.gmra.mrb[0].mxu0 %v280
    %v10384 = vpop.f32.mrb[0].mxu0
    %v10385 = vadd.f32 %v10345, %v10384
    %v10386 = vpop.f32.mrb[0].mxu0
    %v10387 = vpop.f32.mrb[0].mxu0
    %v10388 = vpop.f32.mrb[0].mxu0
    %10389 = vdwg.mxu0
    %10390 = vmatprep.subr.bf16.mxu0 0
    %10391 = vmatpush1.bf16.msra.mxu0 %v7142
    %10392 = vmatprep.subr.bf16.mxu0 0
    %10393 = vmatpush1.bf16.msra.mxu0 %v7143
    %10394 = vmatprep.subr.bf16.mxu0 0
    %10395 = vmatpush1.bf16.msra.mxu0 %v7144
    %10396 = vmatprep.subr.bf16.mxu0 0
    %10397 = vmatpush1.bf16.msra.mxu0 %v7145
    %10398 = vmatprep.subr.bf16.mxu0 0
    %10399 = vmatpush1.bf16.msra.mxu0 %v7146
    %10400 = vmatprep.subr.bf16.mxu0 0
    %10401 = vmatpush1.bf16.msra.mxu0 %v7147
    %10402 = vmatprep.subr.bf16.mxu0 0
    %10403 = vmatpush1.bf16.msra.mxu0 %v7148
    %10404 = vmatprep.subr.bf16.mxu0 0
    %10405 = vmatpush1.bf16.msra.mxu0 %v7149
    %10406 = vmatprep.subr.bf16.mxu0 0
    %10407 = vmatpush1.bf16.msra.mxu0 %v7150
    %10408 = vmatprep.subr.bf16.mxu0 0
    %10409 = vmatpush1.bf16.msra.mxu0 %v7151
    %10410 = vmatprep.subr.bf16.mxu0 0
    %10411 = vmatpush1.bf16.msra.mxu0 %v7152
    %10412 = vmatprep.subr.bf16.mxu0 0
    %10413 = vmatpush1.bf16.msra.mxu0 %v7153
    %10414 = vmatprep.subr.bf16.mxu0 0
    %10415 = vmatpush1.bf16.msra.mxu0 %v7154
    %10416 = vmatprep.subr.bf16.mxu0 0
    %10417 = vmatpush1.bf16.msra.mxu0 %v7155
    %10418 = vmatprep.subr.bf16.mxu0 0
    %10419 = vmatpush1.bf16.msra.mxu0 %v7156
    %10420 = vmatprep.subr.bf16.mxu0 0
    %10421 = vmatpush1.bf16.msra.mxu0 %v7157
    %10422 = vmatprep.mubr.bf16.mxu0 %v283
    %10423 = vmatmul.mubr.bf16.gmra.mrb[0].mxu0 %v282
    %v10424 = vpop.f32.mrb[0].mxu0
    %v10425 = vadd.f32 %v10385, %v10424
    %v10426 = vpop.f32.mrb[0].mxu0
    %v10427 = vpop.f32.mrb[0].mxu0
    %v10428 = vpop.f32.mrb[0].mxu0
    %10429 = vdwg.mxu0
    %10430 = vmatprep.subr.bf16.mxu0 0
    %10431 = vmatpush1.bf16.msra.mxu0 %v7158
    %10432 = vmatprep.subr.bf16.mxu0 0
    %10433 = vmatpush1.bf16.msra.mxu0 %v7159
    %10434 = vmatprep.subr.bf16.mxu0 0
    %10435 = vmatpush1.bf16.msra.mxu0 %v7160
    %10436 = vmatprep.subr.bf16.mxu0 0
    %10437 = vmatpush1.bf16.msra.mxu0 %v7161
    %10438 = vmatprep.subr.bf16.mxu0 0
    %10439 = vmatpush1.bf16.msra.mxu0 %v7162
    %10440 = vmatprep.subr.bf16.mxu0 0
    %10441 = vmatpush1.bf16.msra.mxu0 %v7163
    %10442 = vmatprep.subr.bf16.mxu0 0
    %10443 = vmatpush1.bf16.msra.mxu0 %v7164
    %10444 = vmatprep.subr.bf16.mxu0 0
    %10445 = vmatpush1.bf16.msra.mxu0 %v7165
    %10446 = vmatprep.subr.bf16.mxu0 0
    %10447 = vmatpush1.bf16.msra.mxu0 %v7166
    %10448 = vmatprep.subr.bf16.mxu0 0
    %10449 = vmatpush1.bf16.msra.mxu0 %v7167
    %10450 = vmatprep.subr.bf16.mxu0 0
    %10451 = vmatpush1.bf16.msra.mxu0 %v7168
    %10452 = vmatprep.subr.bf16.mxu0 0
    %10453 = vmatpush1.bf16.msra.mxu0 %v7169
    %10454 = vmatprep.subr.bf16.mxu0 0
    %10455 = vmatpush1.bf16.msra.mxu0 %v7170
    %10456 = vmatprep.subr.bf16.mxu0 0
    %10457 = vmatpush1.bf16.msra.mxu0 %v7171
    %10458 = vmatprep.subr.bf16.mxu0 0
    %10459 = vmatpush1.bf16.msra.mxu0 %v7172
    %10460 = vmatprep.subr.bf16.mxu0 0
    %10461 = vmatpush1.bf16.msra.mxu0 %v7173
    %10462 = vmatprep.mubr.bf16.mxu0 %v285
    %10463 = vmatmul.mubr.bf16.gmra.mrb[0].mxu0 %v284
    %v10464 = vpop.f32.mrb[0].mxu0
    %v10465 = vadd.f32 %v10425, %v10464
    %v10466 = vpop.f32.mrb[0].mxu0
    %v10467 = vpop.f32.mrb[0].mxu0
    %v10468 = vpop.f32.mrb[0].mxu0
    %10469 = vdwg.mxu0
    %10470 = vmatprep.subr.bf16.mxu0 0
    %10471 = vmatpush1.bf16.msra.mxu0 %v7174
    %10472 = vmatprep.subr.bf16.mxu0 0
    %10473 = vmatpush1.bf16.msra.mxu0 %v7175
    %10474 = vmatprep.subr.bf16.mxu0 0
    %10475 = vmatpush1.bf16.msra.mxu0 %v7176
    %10476 = vmatprep.subr.bf16.mxu0 0
    %10477 = vmatpush1.bf16.msra.mxu0 %v7177
    %10478 = vmatprep.subr.bf16.mxu0 0
    %10479 = vmatpush1.bf16.msra.mxu0 %v7178
    %10480 = vmatprep.subr.bf16.mxu0 0
    %10481 = vmatpush1.bf16.msra.mxu0 %v7179
    %10482 = vmatprep.subr.bf16.mxu0 0
    %10483 = vmatpush1.bf16.msra.mxu0 %v7180
    %10484 = vmatprep.subr.bf16.mxu0 0
    %10485 = vmatpush1.bf16.msra.mxu0 %v7181
    %10486 = vmatprep.subr.bf16.mxu0 0
    %10487 = vmatpush1.bf16.msra.mxu0 %v7182
    %10488 = vmatprep.subr.bf16.mxu0 0
    %10489 = vmatpush1.bf16.msra.mxu0 %v7183
    %10490 = vmatprep.subr.bf16.mxu0 0
    %10491 = vmatpush1.bf16.msra.mxu0 %v7184
    %10492 = vmatprep.subr.bf16.mxu0 0
    %10493 = vmatpush1.bf16.msra.mxu0 %v7185
    %10494 = vmatprep.subr.bf16.mxu0 0
    %10495 = vmatpush1.bf16.msra.mxu0 %v7186
    %10496 = vmatprep.subr.bf16.mxu0 0
    %10497 = vmatpush1.bf16.msra.mxu0 %v7187
    %10498 = vmatprep.subr.bf16.mxu0 0
    %10499 = vmatpush1.bf16.msra.mxu0 %v7188
    %10500 = vmatprep.subr.bf16.mxu0 0
    %10501 = vmatpush1.bf16.msra.mxu0 %v7189
    %10502 = vmatprep.mubr.bf16.mxu0 %v287
    %10503 = vmatmul.mubr.bf16.gmra.mrb[0].mxu0 %v286
    %v10504 = vpop.f32.mrb[0].mxu0
    %v10505 = vadd.f32 %v10465, %v10504
    %v10506 = vpop.f32.mrb[0].mxu0
    %v10507 = vpop.f32.mrb[0].mxu0
    %v10508 = vpop.f32.mrb[0].mxu0
    %10509 = vdwg.mxu0
    %10510 = vmatprep.subr.bf16.mxu0 0
    %10511 = vmatpush1.bf16.msra.mxu0 %v7190
    %10512 = vmatprep.subr.bf16.mxu0 0
    %10513 = vmatpush1.bf16.msra.mxu0 %v7191
    %10514 = vmatprep.subr.bf16.mxu0 0
    %10515 = vmatpush1.bf16.msra.mxu0 %v7192
    %10516 = vmatprep.subr.bf16.mxu0 0
    %10517 = vmatpush1.bf16.msra.mxu0 %v7193
    %10518 = vmatprep.subr.bf16.mxu0 0
    %10519 = vmatpush1.bf16.msra.mxu0 %v7194
    %10520 = vmatprep.subr.bf16.mxu0 0
    %10521 = vmatpush1.bf16.msra.mxu0 %v7195
    %10522 = vmatprep.subr.bf16.mxu0 0
    %10523 = vmatpush1.bf16.msra.mxu0 %v7196
    %10524 = vmatprep.subr.bf16.mxu0 0
    %10525 = vmatpush1.bf16.msra.mxu0 %v7197
    %10526 = vmatprep.subr.bf16.mxu0 0
    %10527 = vmatpush1.bf16.msra.mxu0 %v7198
    %10528 = vmatprep.subr.bf16.mxu0 0
    %10529 = vmatpush1.bf16.msra.mxu0 %v7199
    %10530 = vmatprep.subr.bf16.mxu0 0
    %10531 = vmatpush1.bf16.msra.mxu0 %v7200
    %10532 = vmatprep.subr.bf16.mxu0 0
    %10533 = vmatpush1.bf16.msra.mxu0 %v7201
    %10534 = vmatprep.subr.bf16.mxu0 0
    %10535 = vmatpush1.bf16.msra.mxu0 %v7202
    %10536 = vmatprep.subr.bf16.mxu0 0
    %10537 = vmatpush1.bf16.msra.mxu0 %v7203
    %10538 = vmatprep.subr.bf16.mxu0 0
    %10539 = vmatpush1.bf16.msra.mxu0 %v7204
    %10540 = vmatprep.subr.bf16.mxu0 0
    %10541 = vmatpush1.bf16.msra.mxu0 %v7205
    %10542 = vmatprep.mubr.bf16.mxu0 %v289
    %10543 = vmatmul.mubr.bf16.gmra.mrb[0].mxu0 %v288
    %v10544 = vpop.f32.mrb[0].mxu0
    %v10545 = vadd.f32 %v10505, %v10544
    %v10546 = vpop.f32.mrb[0].mxu0
    %v10547 = vpop.f32.mrb[0].mxu0
    %v10548 = vpop.f32.mrb[0].mxu0
    %10549 = vdwg.mxu0
    %10550 = vmatprep.subr.bf16.mxu0 0
    %10551 = vmatpush1.bf16.msra.mxu0 %v7206
    %10552 = vmatprep.subr.bf16.mxu0 0
    %10553 = vmatpush1.bf16.msra.mxu0 %v7207
    %10554 = vmatprep.subr.bf16.mxu0 0
    %10555 = vmatpush1.bf16.msra.mxu0 %v7208
    %10556 = vmatprep.subr.bf16.mxu0 0
    %10557 = vmatpush1.bf16.msra.mxu0 %v7209
    %10558 = vmatprep.subr.bf16.mxu0 0
    %10559 = vmatpush1.bf16.msra.mxu0 %v7210
    %10560 = vmatprep.subr.bf16.mxu0 0
    %10561 = vmatpush1.bf16.msra.mxu0 %v7211
    %10562 = vmatprep.subr.bf16.mxu0 0
    %10563 = vmatpush1.bf16.msra.mxu0 %v7212
    %10564 = vmatprep.subr.bf16.mxu0 0
    %10565 = vmatpush1.bf16.msra.mxu0 %v7213
    %10566 = vmatprep.subr.bf16.mxu0 0
    %10567 = vmatpush1.bf16.msra.mxu0 %v7214
    %10568 = vmatprep.subr.bf16.mxu0 0
    %10569 = vmatpush1.bf16.msra.mxu0 %v7215
    %10570 = vmatprep.subr.bf16.mxu0 0
    %10571 = vmatpush1.bf16.msra.mxu0 %v7216
    %10572 = vmatprep.subr.bf16.mxu0 0
    %10573 = vmatpush1.bf16.msra.mxu0 %v7217
    %10574 = vmatprep.subr.bf16.mxu0 0
    %10575 = vmatpush1.bf16.msra.mxu0 %v7218
    %10576 = vmatprep.subr.bf16.mxu0 0
    %10577 = vmatpush1.bf16.msra.mxu0 %v7219
    %10578 = vmatprep.subr.bf16.mxu0 0
    %10579 = vmatpush1.bf16.msra.mxu0 %v7220
    %10580 = vmatprep.subr.bf16.mxu0 0
    %10581 = vmatpush1.bf16.msra.mxu0 %v7221
    %10582 = vmatprep.mubr.bf16.mxu0 %v291
    %10583 = vmatmul.mubr.bf16.gmra.mrb[0].mxu0 %v290
    %v10584 = vpop.f32.mrb[0].mxu0
    %v10585 = vadd.f32 %v10545, %v10584
    %v10586 = vpop.f32.mrb[0].mxu0
    %v10587 = vpop.f32.mrb[0].mxu0
    %v10588 = vpop.f32.mrb[0].mxu0
    %10589 = vdwg.mxu0
    %10590 = vmatprep.subr.bf16.mxu0 0
    %10591 = vmatpush1.bf16.msra.mxu0 %v7222
    %10592 = vmatprep.subr.bf16.mxu0 0
    %10593 = vmatpush1.bf16.msra.mxu0 %v7223
    %10594 = vmatprep.subr.bf16.mxu0 0
    %10595 = vmatpush1.bf16.msra.mxu0 %v7224
    %10596 = vmatprep.subr.bf16.mxu0 0
    %10597 = vmatpush1.bf16.msra.mxu0 %v7225
    %10598 = vmatprep.subr.bf16.mxu0 0
    %10599 = vmatpush1.bf16.msra.mxu0 %v7226
    %10600 = vmatprep.subr.bf16.mxu0 0
    %10601 = vmatpush1.bf16.msra.mxu0 %v7227
    %10602 = vmatprep.subr.bf16.mxu0 0
    %10603 = vmatpush1.bf16.msra.mxu0 %v7228
    %10604 = vmatprep.subr.bf16.mxu0 0
    %10605 = vmatpush1.bf16.msra.mxu0 %v7229
    %10606 = vmatprep.subr.bf16.mxu0 0
    %10607 = vmatpush1.bf16.msra.mxu0 %v7230
    %10608 = vmatprep.subr.bf16.mxu0 0
    %10609 = vmatpush1.bf16.msra.mxu0 %v7231
    %10610 = vmatprep.subr.bf16.mxu0 0
    %10611 = vmatpush1.bf16.msra.mxu0 %v7232
    %10612 = vmatprep.subr.bf16.mxu0 0
    %10613 = vmatpush1.bf16.msra.mxu0 %v7233
    %10614 = vmatprep.subr.bf16.mxu0 0
    %10615 = vmatpush1.bf16.msra.mxu0 %v7234
    %10616 = vmatprep.subr.bf16.mxu0 0
    %10617 = vmatpush1.bf16.msra.mxu0 %v7235
    %10618 = vmatprep.subr.bf16.mxu0 0
    %10619 = vmatpush1.bf16.msra.mxu0 %v7236
    %10620 = vmatprep.subr.bf16.mxu0 0
    %10621 = vmatpush1.bf16.msra.mxu0 %v7237
    %10622 = vmatprep.mubr.bf16.mxu0 %v293
    %10623 = vmatmul.mubr.bf16.gmra.mrb[0].mxu0 %v292
    %v10624 = vpop.f32.mrb[0].mxu0
    %v10625 = vadd.f32 %v10585, %v10624
    %v10626 = vpop.f32.mrb[0].mxu0
    %v10627 = vpop.f32.mrb[0].mxu0
    %v10628 = vpop.f32.mrb[0].mxu0
    %10629 = vdwg.mxu0
    %10630 = vmatprep.subr.bf16.mxu0 0
    %10631 = vmatpush1.bf16.msra.mxu0 %v7238
    %10632 = vmatprep.subr.bf16.mxu0 0
    %10633 = vmatpush1.bf16.msra.mxu0 %v7239
    %10634 = vmatprep.subr.bf16.mxu0 0
    %10635 = vmatpush1.bf16.msra.mxu0 %v7240
    %10636 = vmatprep.subr.bf16.mxu0 0
    %10637 = vmatpush1.bf16.msra.mxu0 %v7241
    %10638 = vmatprep.subr.bf16.mxu0 0
    %10639 = vmatpush1.bf16.msra.mxu0 %v7242
    %10640 = vmatprep.subr.bf16.mxu0 0
    %10641 = vmatpush1.bf16.msra.mxu0 %v7243
    %10642 = vmatprep.subr.bf16.mxu0 0
    %10643 = vmatpush1.bf16.msra.mxu0 %v7244
    %10644 = vmatprep.subr.bf16.mxu0 0
    %10645 = vmatpush1.bf16.msra.mxu0 %v7245
    %10646 = vmatprep.subr.bf16.mxu0 0
    %10647 = vmatpush1.bf16.msra.mxu0 %v7246
    %10648 = vmatprep.subr.bf16.mxu0 0
    %10649 = vmatpush1.bf16.msra.mxu0 %v7247
    %10650 = vmatprep.subr.bf16.mxu0 0
    %10651 = vmatpush1.bf16.msra.mxu0 %v7248
    %10652 = vmatprep.subr.bf16.mxu0 0
    %10653 = vmatpush1.bf16.msra.mxu0 %v7249
    %10654 = vmatprep.subr.bf16.mxu0 0
    %10655 = vmatpush1.bf16.msra.mxu0 %v7250
    %10656 = vmatprep.subr.bf16.mxu0 0
    %10657 = vmatpush1.bf16.msra.mxu0 %v7251
    %10658 = vmatprep.subr.bf16.mxu0 0
    %10659 = vmatpush1.bf16.msra.mxu0 %v7252
    %10660 = vmatprep.subr.bf16.mxu0 0
    %10661 = vmatpush1.bf16.msra.mxu0 %v7253
    %10662 = vmatprep.mubr.bf16.mxu0 %v295
    %10663 = vmatmul.mubr.bf16.gmra.mrb[0].mxu0 %v294
    %v10664 = vpop.f32.mrb[0].mxu0
    %v10665 = vadd.f32 %v10625, %v10664
    %v10666 = vpop.f32.mrb[0].mxu0
    %v10667 = vpop.f32.mrb[0].mxu0
    %v10668 = vpop.f32.mrb[0].mxu0
    %10669 = vdwg.mxu0
    %10670 = vmatprep.subr.bf16.mxu0 0
    %10671 = vmatpush1.bf16.msra.mxu0 %v7254
    %10672 = vmatprep.subr.bf16.mxu0 0
    %10673 = vmatpush1.bf16.msra.mxu0 %v7255
    %10674 = vmatprep.subr.bf16.mxu0 0
    %10675 = vmatpush1.bf16.msra.mxu0 %v7256
    %10676 = vmatprep.subr.bf16.mxu0 0
    %10677 = vmatpush1.bf16.msra.mxu0 %v7257
    %10678 = vmatprep.subr.bf16.mxu0 0
    %10679 = vmatpush1.bf16.msra.mxu0 %v7258
    %10680 = vmatprep.subr.bf16.mxu0 0
    %10681 = vmatpush1.bf16.msra.mxu0 %v7259
    %10682 = vmatprep.subr.bf16.mxu0 0
    %10683 = vmatpush1.bf16.msra.mxu0 %v7260
    %10684 = vmatprep.subr.bf16.mxu0 0
    %10685 = vmatpush1.bf16.msra.mxu0 %v7261
    %10686 = vmatprep.subr.bf16.mxu0 0
    %10687 = vmatpush1.bf16.msra.mxu0 %v7262
    %10688 = vmatprep.subr.bf16.mxu0 0
    %10689 = vmatpush1.bf16.msra.mxu0 %v7263
    %10690 = vmatprep.subr.bf16.mxu0 0
    %10691 = vmatpush1.bf16.msra.mxu0 %v7264
    %10692 = vmatprep.subr.bf16.mxu0 0
    %10693 = vmatpush1.bf16.msra.mxu0 %v7265
    %10694 = vmatprep.subr.bf16.mxu0 0
    %10695 = vmatpush1.bf16.msra.mxu0 %v7266
    %10696 = vmatprep.subr.bf16.mxu0 0
    %10697 = vmatpush1.bf16.msra.mxu0 %v7267
    %10698 = vmatprep.subr.bf16.mxu0 0
    %10699 = vmatpush1.bf16.msra.mxu0 %v7268
    %10700 = vmatprep.subr.bf16.mxu0 0
    %10701 = vmatpush1.bf16.msra.mxu0 %v7269
    %10702 = vmatprep.mubr.bf16.mxu0 %v297
    %10703 = vmatmul.mubr.bf16.gmra.mrb[0].mxu0 %v296
    %v10704 = vpop.f32.mrb[0].mxu0
    %v10705 = vadd.f32 %v10665, %v10704
    %v10706 = vpop.f32.mrb[0].mxu0
    %v10707 = vpop.f32.mrb[0].mxu0
    %v10708 = vpop.f32.mrb[0].mxu0
    %10709 = vdwg.mxu0
    %10710 = vmatprep.subr.bf16.mxu0 0
    %10711 = vmatpush1.bf16.msra.mxu0 %v7270
    %10712 = vmatprep.subr.bf16.mxu0 0
    %10713 = vmatpush1.bf16.msra.mxu0 %v7271
    %10714 = vmatprep.subr.bf16.mxu0 0
    %10715 = vmatpush1.bf16.msra.mxu0 %v7272
    %10716 = vmatprep.subr.bf16.mxu0 0
    %10717 = vmatpush1.bf16.msra.mxu0 %v7273
    %10718 = vmatprep.subr.bf16.mxu0 0
    %10719 = vmatpush1.bf16.msra.mxu0 %v7274
    %10720 = vmatprep.subr.bf16.mxu0 0
    %10721 = vmatpush1.bf16.msra.mxu0 %v7275
    %10722 = vmatprep.subr.bf16.mxu0 0
    %10723 = vmatpush1.bf16.msra.mxu0 %v7276
    %10724 = vmatprep.subr.bf16.mxu0 0
    %10725 = vmatpush1.bf16.msra.mxu0 %v7277
    %10726 = vmatprep.subr.bf16.mxu0 0
    %10727 = vmatpush1.bf16.msra.mxu0 %v7278
    %10728 = vmatprep.subr.bf16.mxu0 0
    %10729 = vmatpush1.bf16.msra.mxu0 %v7279
    %10730 = vmatprep.subr.bf16.mxu0 0
    %10731 = vmatpush1.bf16.msra.mxu0 %v7280
    %10732 = vmatprep.subr.bf16.mxu0 0
    %10733 = vmatpush1.bf16.msra.mxu0 %v7281
    %10734 = vmatprep.subr.bf16.mxu0 0
    %10735 = vmatpush1.bf16.msra.mxu0 %v7282
    %10736 = vmatprep.subr.bf16.mxu0 0
    %10737 = vmatpush1.bf16.msra.mxu0 %v7283
    %10738 = vmatprep.subr.bf16.mxu0 0
    %10739 = vmatpush1.bf16.msra.mxu0 %v7284
    %10740 = vmatprep.subr.bf16.mxu0 0
    %10741 = vmatpush1.bf16.msra.mxu0 %v7285
    %10742 = vmatprep.mubr.bf16.mxu0 %v299
    %10743 = vmatmul.mubr.bf16.gmra.mrb[0].mxu0 %v298
    %v10744 = vpop.f32.mrb[0].mxu0
    %v10745 = vadd.f32 %v10705, %v10744
    %v10746 = vpop.f32.mrb[0].mxu0
    %v10747 = vpop.f32.mrb[0].mxu0
    %v10748 = vpop.f32.mrb[0].mxu0
    %10749 = vdwg.mxu0
    %10750 = vmatprep.subr.bf16.mxu0 0
    %10751 = vmatpush1.bf16.msra.mxu0 %v7286
    %10752 = vmatprep.subr.bf16.mxu0 0
    %10753 = vmatpush1.bf16.msra.mxu0 %v7287
    %10754 = vmatprep.subr.bf16.mxu0 0
    %10755 = vmatpush1.bf16.msra.mxu0 %v7288
    %10756 = vmatprep.subr.bf16.mxu0 0
    %10757 = vmatpush1.bf16.msra.mxu0 %v7289
    %10758 = vmatprep.subr.bf16.mxu0 0
    %10759 = vmatpush1.bf16.msra.mxu0 %v7290
    %10760 = vmatprep.subr.bf16.mxu0 0
    %10761 = vmatpush1.bf16.msra.mxu0 %v7291
    %10762 = vmatprep.subr.bf16.mxu0 0
    %10763 = vmatpush1.bf16.msra.mxu0 %v7292
    %10764 = vmatprep.subr.bf16.mxu0 0
    %10765 = vmatpush1.bf16.msra.mxu0 %v7293
    %10766 = vmatprep.subr.bf16.mxu0 0
    %10767 = vmatpush1.bf16.msra.mxu0 %v7294
    %10768 = vmatprep.subr.bf16.mxu0 0
    %10769 = vmatpush1.bf16.msra.mxu0 %v7295
    %10770 = vmatprep.subr.bf16.mxu0 0
    %10771 = vmatpush1.bf16.msra.mxu0 %v7296
    %10772 = vmatprep.subr.bf16.mxu0 0
    %10773 = vmatpush1.bf16.msra.mxu0 %v7297
    %10774 = vmatprep.subr.bf16.mxu0 0
    %10775 = vmatpush1.bf16.msra.mxu0 %v7298
    %10776 = vmatprep.subr.bf16.mxu0 0
    %10777 = vmatpush1.bf16.msra.mxu0 %v7299
    %10778 = vmatprep.subr.bf16.mxu0 0
    %10779 = vmatpush1.bf16.msra.mxu0 %v7300
    %10780 = vmatprep.subr.bf16.mxu0 0
    %10781 = vmatpush1.bf16.msra.mxu0 %v7301
    %10782 = vmatprep.mubr.bf16.mxu0 %v301
    %10783 = vmatmul.mubr.bf16.gmra.mrb[0].mxu0 %v300
    %v10784 = vpop.f32.mrb[0].mxu0
    %v10785 = vadd.f32 %v10745, %v10784
    %v10786 = vpop.f32.mrb[0].mxu0
    %v10787 = vpop.f32.mrb[0].mxu0
    %v10788 = vpop.f32.mrb[0].mxu0
    %10789 = vdwg.mxu0
    %10790 = vmatprep.subr.bf16.mxu0 0
    %10791 = vmatpush1.bf16.msra.mxu0 %v7302
    %10792 = vmatprep.subr.bf16.mxu0 0
    %10793 = vmatpush1.bf16.msra.mxu0 %v7303
    %10794 = vmatprep.subr.bf16.mxu0 0
    %10795 = vmatpush1.bf16.msra.mxu0 %v7304
    %10796 = vmatprep.subr.bf16.mxu0 0
    %10797 = vmatpush1.bf16.msra.mxu0 %v7305
    %10798 = vmatprep.subr.bf16.mxu0 0
    %10799 = vmatpush1.bf16.msra.mxu0 %v7306
    %10800 = vmatprep.subr.bf16.mxu0 0
    %10801 = vmatpush1.bf16.msra.mxu0 %v7307
    %10802 = vmatprep.subr.bf16.mxu0 0
    %10803 = vmatpush1.bf16.msra.mxu0 %v7308
    %10804 = vmatprep.subr.bf16.mxu0 0
    %10805 = vmatpush1.bf16.msra.mxu0 %v7309
    %10806 = vmatprep.subr.bf16.mxu0 0
    %10807 = vmatpush1.bf16.msra.mxu0 0
    %10808 = vmatprep.subr.bf16.mxu0 0
    %10809 = vmatpush1.bf16.msra.mxu0 0
    %10810 = vmatprep.subr.bf16.mxu0 0
    %10811 = vmatpush1.bf16.msra.mxu0 0
    %10812 = vmatprep.subr.bf16.mxu0 0
    %10813 = vmatpush1.bf16.msra.mxu0 0
    %10814 = vmatprep.subr.bf16.mxu0 0
    %10815 = vmatpush1.bf16.msra.mxu0 0
    %10816 = vmatprep.subr.bf16.mxu0 0
    %10817 = vmatpush1.bf16.msra.mxu0 0
    %10818 = vmatprep.subr.bf16.mxu0 0
    %10819 = vmatpush1.bf16.msra.mxu0 0
    %10820 = vmatprep.subr.bf16.mxu0 0
    %10821 = vmatpush1.bf16.msra.mxu0 0
    %10822 = vmatprep.mubr.bf16.mxu0 0
    %10823 = vmatmul.mubr.bf16.gmra.mrb[0].mxu0 %v302
    %v10824 = vpop.f32.mrb[0].mxu0
    %v10825 = vadd.f32 %v10785, %v10824
    %v10826 = vpop.f32.mrb[0].mxu0
    %v10827 = vpop.f32.mrb[0].mxu0
    %v10828 = vpop.f32.mrb[0].mxu0
    %10829 = vdwg.mxu0
    %10830 = vst [vmem:[#allocation8] sm:$0xff] %v10825
    // Predicated region
    $region26: #{speaker_encoder_forward.1} parent=1 // pred_check
      _
    $region27: #{speaker_encoder_forward.1} parent=1 // pred_check_branch
      %10832 = sbr.rel (0) target = $region29
    $region28: #{speaker_encoder_forward.1} parent=1 // pred_region
      %s10834 = ssub.s32 128, 128
      %10835 = vsyncadd [#allocation4], %s10834
      %s10837 = sshll.u32 [#allocation8], 4
      %s10838 = int_to_ptr.vmem [resolvable:$true] %s10837
      %10840 = dma.vmem_to_hbm [thread:$0]  %s10838, 128, %s3, [#allocation4]
    $region29: #{speaker_encoder_forward.1} parent=1 // pred_fallthru
      _
    // Predicated region
    $region30: #{speaker_encoder_forward.1} parent=1 // pred_check
      _
    $region31: #{speaker_encoder_forward.1} parent=1 // pred_check_branch
      %10842 = sbr.rel (0) target = $region33
    $region32: #{speaker_encoder_forward.1} parent=1 // pred_region
      %10843 = dma.done [#allocation4], 128
    $region33: #{speaker_encoder_forward.1} parent=1 // pred_fallthru
      _
    %10844 = vsyncpa [#allocation3], 1
    %10845 = vsyncpa [#allocation6], 1
    %10846 = vsyncpa [#allocation4], 1

</llo_original>
